<compile_context>
chip_gen: v7x
topology: tpu7x:2x2x1
jax: 0.10.0
libtpu: 0.0.40
codegen_flags: <defaults>
</compile_context>

<pallas_src>
import functools

import numpy as np
import jax
import jax.numpy as jnp
from jax import lax
from jax.experimental import pallas as pl
from jax.experimental.pallas import tpu as pltpu


# ------------------------------------------------------------------
# In-kernel helper: conv / conv-transpose in "sum_i R_i @ X @ N_i" form.
#   x      : (H, W*C) f32 value in VMEM
#   r_ref  : (kh, Ho, H)  0/1 row-selection matrices (padding/stride folded in)
#   n_ref  : (n_off + kh, W*C, Wo*O) per-tap weight matrices
#   bias   : (1, Wo*O) value or None
# ------------------------------------------------------------------
def _conv_apply(x, r_ref, n_ref, bias, *, kh, n_off=0, relu_in=False,
                relu_out=False):
    if relu_in:
        x = jnp.maximum(x, 0.0)
    acc = None
    for i in range(kh):
        t = jnp.dot(r_ref[i], x, preferred_element_type=jnp.float32)
        t = jnp.dot(t, n_ref[n_off + i], preferred_element_type=jnp.float32)
        acc = t if acc is None else acc + t
    if bias is not None:
        acc = acc + bias
    if relu_out:
        acc = jnp.maximum(acc, 0.0)
    return acc


# ------------------------------------------------------------------
# Pallas kernel 1: fused encoder + pre_vq + downsample.  One grid step per
# batch element; all weights resident in VMEM; activations never leave VMEM.
# ------------------------------------------------------------------
def _encoder_kernel(x_ref, r1, n1, b1, r2, n2, b2, rres, n3, b3,
                    nres3, nres1, npv, bpv, z_ref, *, num_res_layers):
    h = _conv_apply(x_ref[0], r1, n1, b1[...], kh=r1.shape[0], relu_out=True)
    h = _conv_apply(h, r2, n2, b2[...], kh=r2.shape[0], relu_out=True)
    h = _conv_apply(h, rres, n3, b3[...], kh=3)
    for l in range(num_res_layers):
        # Residual: h + conv1x1(relu(conv3x3(relu(h)))), all in VMEM.
        t = _conv_apply(h, rres, nres3, None, kh=3, n_off=3 * l,
                        relu_in=True, relu_out=True)
        h = h + jnp.dot(t, nres1[l], preferred_element_type=jnp.float32)
    h = jnp.maximum(h, 0.0)                              # ResidualStack final relu
    # fused pre_vq (1x1) + downsample (1x1) as one block-diagonal matmul
    z_ref[0] = jnp.dot(h, npv[...], preferred_element_type=jnp.float32) + bpv[...]


# ------------------------------------------------------------------
# Pallas kernel 2: vector quantizer (+ folded 1x1 ConvTranspose upsample).
# Single invocation (M = N*H*W = 32 rows); emits one-hot encodings directly.
# ------------------------------------------------------------------
def _vq_kernel(z_ref, e_ref, et_ref, e2_ref, wup_ref, bup_ref,
               qup_ref, enc_ref, loss_ref, perp_ref, *, commitment_cost):
    x = z_ref[...]                                        # (M, D) f32
    # distances up to the argmin-invariant per-row ||x||^2; codebook passed
    # pre-transposed so this is a plain (M,D)@(D,K) contraction.
    xe = jnp.dot(x, et_ref[...], preferred_element_type=jnp.float32)   # (M, K)
    d = e2_ref[...] - 2.0 * xe
    K = d.shape[1]
    iota = lax.broadcasted_iota(jnp.int32, d.shape, 1)
    dmin = jnp.min(d, axis=1, keepdims=True)
    cand = jnp.where(d <= dmin, iota, K)
    idx = jnp.min(cand, axis=1, keepdims=True)            # first-min tie-break
    enc = (iota == idx).astype(jnp.float32)                # (M, K) one-hot
    q = jnp.dot(enc, e_ref[...], preferred_element_type=jnp.float32)   # (M, D)

    m, dfeat = x.shape
    diff = q - x
    sse = jnp.sum(jnp.sum(diff * diff, axis=1, keepdims=True),
                  axis=0, keepdims=True)                   # (1, 1)
    # forward value of q_latent_loss + commitment_cost * e_latent_loss
    loss_ref[...] = (1.0 + commitment_cost) * sse / float(m * dfeat)
    avg = jnp.sum(enc, axis=0, keepdims=True) / float(m)   # (1, K)
    ent = -jnp.sum(avg * jnp.log(avg + 1e-10), axis=1, keepdims=True)
    perp_ref[...] = jnp.exp(ent)

    enc_ref[...] = enc
    # fused 1x1 ConvTranspose upsample; straight-through forward value == q
    qup_ref[...] = jnp.dot(q, wup_ref[...],
                           preferred_element_type=jnp.float32) + bup_ref[...]


# ------------------------------------------------------------------
# Pallas kernel 3: fused decoder (sub-pixel-style transposed convs expressed
# in the same R_i @ X @ N_i matmul form, so no zero-insertion / dilation).
# ------------------------------------------------------------------
def _decoder_kernel(q_ref, rres, nd1, bd1, nres3, nres1,
                    rt1, nt1, bt1, rt2, nt2, bt2, y_ref, *, num_res_layers):
    h = _conv_apply(q_ref[0], rres, nd1, bd1[...], kh=3)
    for l in range(num_res_layers):
        t = _conv_apply(h, rres, nres3, None, kh=3, n_off=3 * l,
                        relu_in=True, relu_out=True)
        h = h + jnp.dot(t, nres1[l], preferred_element_type=jnp.float32)
    h = jnp.maximum(h, 0.0)                               # ResidualStack final relu
    h = _conv_apply(h, rt1, nt1, bt1[...], kh=rt1.shape[0], relu_out=True)
    y_ref[0] = _conv_apply(h, rt2, nt2, bt2[...], kh=rt2.shape[0])


# ------------------------------------------------------------------
# Trace-time weight folding: conv / conv-transpose -> (R, N, bias-row).
# Layout convention: a (H, W, C) activation is stored as a (H, W*C) matrix.
# ------------------------------------------------------------------
def _conv_rn(w, b, H, W, stride, pad):
    # w: (O, C, kh, kw) PyTorch Conv2d layout
    O, C, kh, kw = w.shape
    Ho = (H + 2 * pad - kh) // stride + 1
    Wo = (W + 2 * pad - kw) // stride + 1
    R = np.zeros((kh, Ho, H), np.float32)
    for i in range(kh):
        for ho in range(Ho):
            h = stride * ho + i - pad
            if 0 <= h < H:
                R[i, ho, h] = 1.0
    A = np.zeros((kw, W, Wo), np.float32)
    for j in range(kw):
        for wo in range(Wo):
            wi = stride * wo + j - pad
            if 0 <= wi < W:
                A[j, wi, wo] = 1.0
    wt = jnp.transpose(w.astype(jnp.float32), (2, 3, 1, 0))       # (kh,kw,C,O)
    N = jnp.einsum('jwv,ijco->iwcvo', A, wt).reshape(kh, W * C, Wo * O)
    brow = (jnp.tile(b.astype(jnp.float32), Wo).reshape(1, Wo * O)
            if b is not None else None)
    return jnp.asarray(R), N, brow, Ho, Wo


def _convT_rn(w, b, H, W, stride, pad):
    # w: (Cin, Cout, kh, kw) PyTorch ConvTranspose2d layout
    Cin, Cout, kh, kw = w.shape
    Ho = (H - 1) * stride - 2 * pad + kh
    Wo = (W - 1) * stride - 2 * pad + kw
    R = np.zeros((kh, Ho, H), np.float32)
    for i in range(kh):
        for h in range(H):
            ho = stride * h + i - pad
            if 0 <= ho < Ho:
                R[i, ho, h] = 1.0
    A = np.zeros((kw, W, Wo), np.float32)
    for j in range(kw):
        for wi in range(W):
            wo = stride * wi + j - pad
            if 0 <= wo < Wo:
                A[j, wi, wo] = 1.0
    wt = jnp.transpose(w.astype(jnp.float32), (2, 3, 0, 1))       # (kh,kw,Cin,Cout)
    N = jnp.einsum('jwv,ijco->iwcvo', A, wt).reshape(kh, W * Cin, Wo * Cout)
    brow = (jnp.tile(b.astype(jnp.float32), Wo).reshape(1, Wo * Cout)
            if b is not None else None)
    return jnp.asarray(R), N, brow, Ho, Wo


def _full_spec(shape):
    nd = len(shape)
    return pl.BlockSpec(tuple(shape), lambda *_, _nd=nd: (0,) * _nd)


# ------------------------------------------------------------------
# VQ-VAE forward (decay=0, shrink_factor=0, fc=False)
# ------------------------------------------------------------------
def vqvae_forward(params, x, *, commitment_cost):
    p = params
    N, _, Himg, Wimg = x.shape
    L = len(p["enc_res"])

    # ----- fold encoder weights into matmul form (tiny, trace-time only) -----
    r1, n1, b1, H1, W1 = _conv_rn(p["enc_c1_w"], p["enc_c1_b"], Himg, Wimg, 2, 1)
    r2, n2, b2, H2, W2 = _conv_rn(p["enc_c2_w"], p["enc_c2_b"], H1, W1, 2, 1)
    rres, n3, b3, Hq, Wq = _conv_rn(p["enc_c3_w"], p["enc_c3_b"], H2, W2, 1, 1)

    def res_stacks(res_params):
        n3s, n1s = [], []
        for (w3, w1) in res_params:
            _, nn, _, _, _ = _conv_rn(w3, None, Hq, Wq, 1, 1)
            n3s.append(nn)                                         # (3, Wq*Ch, Wq*Cr)
            a = w1.reshape(w1.shape[0], w1.shape[1]).T.astype(jnp.float32)
            n1s.append(jnp.kron(jnp.eye(Wq, dtype=jnp.float32), a))  # (Wq*Cr, Wq*Ch)
        return jnp.concatenate(n3s, axis=0), jnp.stack(n1s)

    nres3_e, nres1_e = res_stacks(p["enc_res"])

    # fused pre_vq (1x1) + downsample (1x1): exact, no nonlinearity in between.
    E = p["pre_vq_w"].shape[0]
    Hc = p["pre_vq_w"].shape[1]
    wpre = p["pre_vq_w"].reshape(E, Hc).astype(jnp.float32)
    wdown = p["down_w"].reshape(E, E).astype(jnp.float32)
    a_pv = wpre.T @ wdown.T                                         # (Hc, E)
    b_pv = p["pre_vq_b"].astype(jnp.float32) @ wdown.T + p["down_b"].astype(jnp.float32)
    npv = jnp.kron(jnp.eye(Wq, dtype=jnp.float32), a_pv)            # (Wq*Hc, Wq*E)
    bpv = jnp.tile(b_pv, Wq).reshape(1, Wq * E)

    # ----- fused encoder kernel (grid over batch -> both TCs on v7x) -----
    xin = x[:, 0, :, :].astype(jnp.float32)                         # in_channels == 1
    enc_in = [xin, r1, n1, b1, r2, n2, b2, rres, n3, b3, nres3_e, nres1_e, npv, bpv]
    enc_specs = [pl.BlockSpec((1, Himg, Wimg), lambda n: (n, 0, 0))]
    enc_specs += [_full_spec(a.shape) for a in enc_in[1:]]
    z = pl.pallas_call(
        functools.partial(_encoder_kernel, num_res_layers=L),
        out_shape=jax.ShapeDtypeStruct((N, Hq, Wq * E), jnp.float32),
        grid=(N,),
        in_specs=enc_specs,
        out_specs=pl.BlockSpec((1, Hq, Wq * E), lambda n: (n, 0, 0)),
        compiler_params=pltpu.CompilerParams(dimension_semantics=("parallel",)),
    )(*enc_in)

    # ----- vector quantizer (+ folded 1x1 ConvTranspose upsample) -----
    M = N * Hq * Wq
    K = p["emb_w"].shape[0]
    z_flat = z.reshape(M, E)                                        # rows in (n,h,w) order
    emb = p["emb_w"].astype(jnp.float32)
    embT = emb.T                                                    # (D, K) pre-transposed
    e2 = jnp.sum(emb * emb, axis=1).reshape(1, K)
    wup = p["up_w"].reshape(E, E).astype(jnp.float32)               # ConvT 1x1: (Cin, Cout)
    bup = p["up_b"].astype(jnp.float32).reshape(1, E)
    vq_in = [z_flat, emb, embT, e2, wup, bup]
    q_up, enc_oh, loss, perp = pl.pallas_call(
        functools.partial(_vq_kernel, commitment_cost=commitment_cost),
        out_shape=(jax.ShapeDtypeStruct((M, E), jnp.float32),
                   jax.ShapeDtypeStruct((M, K), jnp.float32),
                   jax.ShapeDtypeStruct((1, 1), jnp.float32),
                   jax.ShapeDtypeStruct((1, 1), jnp.float32)),
        grid=(1,),
        in_specs=[_full_spec(a.shape) for a in vq_in],
        out_specs=(_full_spec((M, E)), _full_spec((M, K)),
                   _full_spec((1, 1)), _full_spec((1, 1))),
    )(*vq_in)
    encodings = enc_oh.reshape(N, Hq * Wq, K)

    # ----- fold decoder weights -----
    rd_r, nd1, bd1, _, _ = _conv_rn(p["dec_c1_w"], p["dec_c1_b"], Hq, Wq, 1, 1)
    nres3_d, nres1_d = res_stacks(p["dec_res"])
    rt1, nt1, bt1, Ht1, Wt1 = _convT_rn(p["dec_t1_w"], p["dec_t1_b"], Hq, Wq, 2, 1)
    rt2, nt2, bt2, Ho, Wo = _convT_rn(p["dec_t2_w"], p["dec_t2_b"], Ht1, Wt1, 2, 1)
    Cout = p["dec_t2_w"].shape[1]

    # ----- fused decoder kernel -----
    qu = q_up.reshape(N, Hq, Wq * E)
    dec_in = [qu, rd_r, nd1, bd1, nres3_d, nres1_d, rt1, nt1, bt1, rt2, nt2, bt2]
    dec_specs = [pl.BlockSpec((1, Hq, Wq * E), lambda n: (n, 0, 0))]
    dec_specs += [_full_spec(a.shape) for a in dec_in[1:]]
    y = pl.pallas_call(
        functools.partial(_decoder_kernel, num_res_layers=L),
        out_shape=jax.ShapeDtypeStruct((N, Ho, Wo * Cout), jnp.float32),
        grid=(N,),
        in_specs=dec_specs,
        out_specs=pl.BlockSpec((1, Ho, Wo * Cout), lambda n: (n, 0, 0)),
        compiler_params=pltpu.CompilerParams(dimension_semantics=("parallel",)),
    )(*dec_in)

    x_recon = jnp.transpose(y.reshape(N, Ho, Wo, Cout), (0, 3, 1, 2))  # NCHW
    return loss[0, 0], x_recon, perp[0, 0], encodings


# ------------------------------------------------------------------
# Deterministic parameter initialization (shapes per the PyTorch __init__)
# ------------------------------------------------------------------
def init_params(key, num_hiddens, num_residual_layers, num_residual_hiddens,
                num_embeddings, embedding_dim):
    keys = iter(jax.random.split(key, 64))

    def conv_init(cin, cout, k, bias=True):
        s = 1.0 / float(cin * k * k) ** 0.5
        w = jax.random.uniform(next(keys), (cout, cin, k, k), jnp.float32, -s, s)
        b = jax.random.uniform(next(keys), (cout,), jnp.float32, -s, s) if bias else None
        return w, b

    def convT_init(cin, cout, k):
        s = 1.0 / float(cout * k * k) ** 0.5
        w = jax.random.uniform(next(keys), (cin, cout, k, k), jnp.float32, -s, s)
        b = jax.random.uniform(next(keys), (cout,), jnp.float32, -s, s)
        return w, b

    p = {}
    p["enc_c1_w"], p["enc_c1_b"] = conv_init(1, num_hiddens // 2, 4)
    p["enc_c2_w"], p["enc_c2_b"] = conv_init(num_hiddens // 2, num_hiddens, 4)
    p["enc_c3_w"], p["enc_c3_b"] = conv_init(num_hiddens, num_hiddens, 3)
    p["enc_res"] = []
    for _ in range(num_residual_layers):
        w3, _ = conv_init(num_hiddens, num_residual_hiddens, 3, bias=False)
        w1, _ = conv_init(num_residual_hiddens, num_hiddens, 1, bias=False)
        p["enc_res"].append((w3, w1))
    p["pre_vq_w"], p["pre_vq_b"] = conv_init(num_hiddens, embedding_dim, 1)
    p["down_w"], p["down_b"] = conv_init(embedding_dim, embedding_dim, 1)
    p["emb_w"] = jax.random.uniform(next(keys), (num_embeddings, embedding_dim),
                                    jnp.float32,
                                    -1.0 / num_embeddings, 1.0 / num_embeddings)
    p["up_w"], p["up_b"] = convT_init(embedding_dim, embedding_dim, 1)
    p["dec_c1_w"], p["dec_c1_b"] = conv_init(embedding_dim, num_hiddens, 3)
    p["dec_res"] = []
    for _ in range(num_residual_layers):
        w3, _ = conv_init(num_hiddens, num_residual_hiddens, 3, bias=False)
        w1, _ = conv_init(num_residual_hiddens, num_hiddens, 1, bias=False)
        p["dec_res"].append((w3, w1))
    p["dec_t1_w"], p["dec_t1_b"] = convT_init(num_hiddens, num_hiddens // 2, 4)
    p["dec_t2_w"], p["dec_t2_b"] = convT_init(num_hiddens // 2, 1, 4)
    return p


# TODO(synk): VectorQuantizerEMA's training-mode in-place EMA buffer updates are
# not exercised (decay=0 selects the plain VectorQuantizer path).
# TODO(synk): loss is the forward value (q_latent == e_latent); a training path
# (custom_vjp) must keep the two MSE terms separate for correct gradients.

if __name__ == "__main__":
    num_hiddens = 32
    num_residual_layers = 2
    num_residual_hiddens = 16
    num_embeddings = 32
    embedding_dim = 16
    commitment_cost = 0.25

    key = jax.random.PRNGKey(0)
    kp, kx = jax.random.split(key)
    params = init_params(kp, num_hiddens, num_residual_layers,
                         num_residual_hiddens, num_embeddings, embedding_dim)
    x = jax.random.normal(kx, (2, 1, 16, 16), jnp.float32)   # NCHW, 1 input channel

    fwd = jax.jit(functools.partial(vqvae_forward, commitment_cost=commitment_cost))
    loss, x_recon, perplexity, encodings = fwd(params, x)
    jax.block_until_ready((loss, x_recon, perplexity, encodings))

    assert x_recon.shape == (2, 1, 16, 16)
    assert encodings.shape == (2, 4 * 4, num_embeddings)
    assert loss.shape == () and perplexity.shape == ()
    assert bool(jnp.isfinite(loss)) and bool(jnp.isfinite(perplexity))
    print("KERNEL_OK")
</pallas_src>

<mosaic_0001>
module attributes {stable_mosaic.version = 11 : i64} {
  func.func @_encoder_kernel(%arg0: i32, %arg1: memref<1x16x16xf32, #tpu.memory_space<vmem>>, %arg2: memref<4x8x16xf32, #tpu.memory_space<vmem>>, %arg3: memref<4x16x128xf32, #tpu.memory_space<vmem>>, %arg4: memref<1x128xf32, #tpu.memory_space<vmem>>, %arg5: memref<4x4x8xf32, #tpu.memory_space<vmem>>, %arg6: memref<4x128x128xf32, #tpu.memory_space<vmem>>, %arg7: memref<1x128xf32, #tpu.memory_space<vmem>>, %arg8: memref<3x4x4xf32, #tpu.memory_space<vmem>>, %arg9: memref<3x128x128xf32, #tpu.memory_space<vmem>>, %arg10: memref<1x128xf32, #tpu.memory_space<vmem>>, %arg11: memref<6x128x64xf32, #tpu.memory_space<vmem>>, %arg12: memref<2x64x128xf32, #tpu.memory_space<vmem>>, %arg13: memref<128x64xf32, #tpu.memory_space<vmem>>, %arg14: memref<1x64xf32, #tpu.memory_space<vmem>>, %arg15: memref<1x4x64xf32, #tpu.memory_space<vmem>>) attributes {dimension_semantics = [#tpu.dimension_semantics<parallel>], iteration_bounds = array<i64: 2>, scalar_prefetch = 0 : i64, scratch_operands = 0 : i64, tpu.core_type = #tpu.core_type<tc>, window_params = [{transform_indices = @transform_0, window_bounds = array<i64: 1, 16, 16>}, {pipeline_mode = #tpu.pipeline_mode<synchronous>, transform_indices = @transform_1, window_bounds = array<i64: 4, 8, 16>}, {pipeline_mode = #tpu.pipeline_mode<synchronous>, transform_indices = @transform_2, window_bounds = array<i64: 4, 16, 128>}, {pipeline_mode = #tpu.pipeline_mode<synchronous>, transform_indices = @transform_3, window_bounds = array<i64: 1, 128>}, {pipeline_mode = #tpu.pipeline_mode<synchronous>, transform_indices = @transform_4, window_bounds = array<i64: 4, 4, 8>}, {pipeline_mode = #tpu.pipeline_mode<synchronous>, transform_indices = @transform_5, window_bounds = array<i64: 4, 128, 128>}, {pipeline_mode = #tpu.pipeline_mode<synchronous>, transform_indices = @transform_6, window_bounds = array<i64: 1, 128>}, {pipeline_mode = #tpu.pipeline_mode<synchronous>, transform_indices = @transform_7, window_bounds = array<i64: 3, 4, 4>}, {pipeline_mode = #tpu.pipeline_mode<synchronous>, transform_indices = @transform_8, window_bounds = array<i64: 3, 128, 128>}, {pipeline_mode = #tpu.pipeline_mode<synchronous>, transform_indices = @transform_9, window_bounds = array<i64: 1, 128>}, {pipeline_mode = #tpu.pipeline_mode<synchronous>, transform_indices = @transform_10, window_bounds = array<i64: 6, 128, 64>}, {pipeline_mode = #tpu.pipeline_mode<synchronous>, transform_indices = @transform_11, window_bounds = array<i64: 2, 64, 128>}, {pipeline_mode = #tpu.pipeline_mode<synchronous>, transform_indices = @transform_12, window_bounds = array<i64: 128, 64>}, {pipeline_mode = #tpu.pipeline_mode<synchronous>, transform_indices = @transform_13, window_bounds = array<i64: 1, 64>}, {transform_indices = @transform_14, window_bounds = array<i64: 1, 4, 64>}]} {
    %c0 = arith.constant 0 : index
    %c0_0 = arith.constant 0 : index
    %c0_1 = arith.constant 0 : index
    %0 = vector.load %arg1[%c0, %c0_0, %c0_1] : memref<1x16x16xf32, #tpu.memory_space<vmem>>, vector<1x16x16xf32>
    %1 = vector.shape_cast %0 : vector<1x16x16xf32> to vector<16x16xf32>
    %c0_2 = arith.constant 0 : index
    %c0_3 = arith.constant 0 : index
    %2 = vector.load %arg4[%c0_2, %c0_3] : memref<1x128xf32, #tpu.memory_space<vmem>>, vector<1x128xf32>
    %c0_4 = arith.constant 0 : index
    %c0_5 = arith.constant 0 : index
    %c0_6 = arith.constant 0 : index
    %3 = vector.load %arg2[%c0_4, %c0_5, %c0_6] : memref<4x8x16xf32, #tpu.memory_space<vmem>>, vector<1x8x16xf32>
    %4 = vector.shape_cast %3 : vector<1x8x16xf32> to vector<8x16xf32>
    %cst = arith.constant dense<0.000000e+00> : vector<8x16xf32>
    %5 = tpu.matmul %4, %1, %cst {dimension_numbers = #tpu.dot_dimension_numbers<[1], [0], [0], [1], [0, 0, 1, 1], [], []>} : vector<8x16xf32>, vector<16x16xf32>, vector<8x16xf32> -> vector<8x16xf32>
    %c0_7 = arith.constant 0 : index
    %c0_8 = arith.constant 0 : index
    %c0_9 = arith.constant 0 : index
    %6 = vector.load %arg3[%c0_7, %c0_8, %c0_9] : memref<4x16x128xf32, #tpu.memory_space<vmem>>, vector<1x16x128xf32>
    %7 = vector.shape_cast %6 : vector<1x16x128xf32> to vector<16x128xf32>
    %cst_10 = arith.constant dense<0.000000e+00> : vector<8x128xf32>
    %8 = tpu.matmul %5, %7, %cst_10 {dimension_numbers = #tpu.dot_dimension_numbers<[1], [0], [0], [1], [0, 0, 1, 1], [], []>} : vector<8x16xf32>, vector<16x128xf32>, vector<8x128xf32> -> vector<8x128xf32>
    %c1 = arith.constant 1 : index
    %c0_11 = arith.constant 0 : index
    %c0_12 = arith.constant 0 : index
    %9 = vector.load %arg2[%c1, %c0_11, %c0_12] : memref<4x8x16xf32, #tpu.memory_space<vmem>>, vector<1x8x16xf32>
    %10 = vector.shape_cast %9 : vector<1x8x16xf32> to vector<8x16xf32>
    %cst_13 = arith.constant dense<0.000000e+00> : vector<8x16xf32>
    %11 = tpu.matmul %10, %1, %cst_13 {dimension_numbers = #tpu.dot_dimension_numbers<[1], [0], [0], [1], [0, 0, 1, 1], [], []>} : vector<8x16xf32>, vector<16x16xf32>, vector<8x16xf32> -> vector<8x16xf32>
    %c1_14 = arith.constant 1 : index
    %c0_15 = arith.constant 0 : index
    %c0_16 = arith.constant 0 : index
    %12 = vector.load %arg3[%c1_14, %c0_15, %c0_16] : memref<4x16x128xf32, #tpu.memory_space<vmem>>, vector<1x16x128xf32>
    %13 = vector.shape_cast %12 : vector<1x16x128xf32> to vector<16x128xf32>
    %cst_17 = arith.constant dense<0.000000e+00> : vector<8x128xf32>
    %14 = tpu.matmul %11, %13, %cst_17 {dimension_numbers = #tpu.dot_dimension_numbers<[1], [0], [0], [1], [0, 0, 1, 1], [], []>} : vector<8x16xf32>, vector<16x128xf32>, vector<8x128xf32> -> vector<8x128xf32>
    %15 = arith.addf %8, %14 : vector<8x128xf32>
    %c2 = arith.constant 2 : index
    %c0_18 = arith.constant 0 : index
    %c0_19 = arith.constant 0 : index
    %16 = vector.load %arg2[%c2, %c0_18, %c0_19] : memref<4x8x16xf32, #tpu.memory_space<vmem>>, vector<1x8x16xf32>
    %17 = vector.shape_cast %16 : vector<1x8x16xf32> to vector<8x16xf32>
    %cst_20 = arith.constant dense<0.000000e+00> : vector<8x16xf32>
    %18 = tpu.matmul %17, %1, %cst_20 {dimension_numbers = #tpu.dot_dimension_numbers<[1], [0], [0], [1], [0, 0, 1, 1], [], []>} : vector<8x16xf32>, vector<16x16xf32>, vector<8x16xf32> -> vector<8x16xf32>
    %c2_21 = arith.constant 2 : index
    %c0_22 = arith.constant 0 : index
    %c0_23 = arith.constant 0 : index
    %19 = vector.load %arg3[%c2_21, %c0_22, %c0_23] : memref<4x16x128xf32, #tpu.memory_space<vmem>>, vector<1x16x128xf32>
    %20 = vector.shape_cast %19 : vector<1x16x128xf32> to vector<16x128xf32>
    %cst_24 = arith.constant dense<0.000000e+00> : vector<8x128xf32>
    %21 = tpu.matmul %18, %20, %cst_24 {dimension_numbers = #tpu.dot_dimension_numbers<[1], [0], [0], [1], [0, 0, 1, 1], [], []>} : vector<8x16xf32>, vector<16x128xf32>, vector<8x128xf32> -> vector<8x128xf32>
    %22 = arith.addf %15, %21 : vector<8x128xf32>
    %c3 = arith.constant 3 : index
    %c0_25 = arith.constant 0 : index
    %c0_26 = arith.constant 0 : index
    %23 = vector.load %arg2[%c3, %c0_25, %c0_26] : memref<4x8x16xf32, #tpu.memory_space<vmem>>, vector<1x8x16xf32>
    %24 = vector.shape_cast %23 : vector<1x8x16xf32> to vector<8x16xf32>
    %cst_27 = arith.constant dense<0.000000e+00> : vector<8x16xf32>
    %25 = tpu.matmul %24, %1, %cst_27 {dimension_numbers = #tpu.dot_dimension_numbers<[1], [0], [0], [1], [0, 0, 1, 1], [], []>} : vector<8x16xf32>, vector<16x16xf32>, vector<8x16xf32> -> vector<8x16xf32>
    %c3_28 = arith.constant 3 : index
    %c0_29 = arith.constant 0 : index
    %c0_30 = arith.constant 0 : index
    %26 = vector.load %arg3[%c3_28, %c0_29, %c0_30] : memref<4x16x128xf32, #tpu.memory_space<vmem>>, vector<1x16x128xf32>
    %27 = vector.shape_cast %26 : vector<1x16x128xf32> to vector<16x128xf32>
    %cst_31 = arith.constant dense<0.000000e+00> : vector<8x128xf32>
    %28 = tpu.matmul %25, %27, %cst_31 {dimension_numbers = #tpu.dot_dimension_numbers<[1], [0], [0], [1], [0, 0, 1, 1], [], []>} : vector<8x16xf32>, vector<16x128xf32>, vector<8x128xf32> -> vector<8x128xf32>
    %29 = arith.addf %22, %28 : vector<8x128xf32>
    %30 = vector.broadcast %2 : vector<1x128xf32> to vector<8x128xf32>
    %31 = arith.addf %29, %30 : vector<8x128xf32>
    %cst_32 = arith.constant 0.000000e+00 : f32
    %32 = vector.broadcast %cst_32 : f32 to vector<8x128xf32>
    %33 = arith.maximumf %31, %32 : vector<8x128xf32>
    %c0_33 = arith.constant 0 : index
    %c0_34 = arith.constant 0 : index
    %34 = vector.load %arg7[%c0_33, %c0_34] : memref<1x128xf32, #tpu.memory_space<vmem>>, vector<1x128xf32>
    %c0_35 = arith.constant 0 : index
    %c0_36 = arith.constant 0 : index
    %c0_37 = arith.constant 0 : index
    %35 = vector.load %arg5[%c0_35, %c0_36, %c0_37] : memref<4x4x8xf32, #tpu.memory_space<vmem>>, vector<1x4x8xf32>
    %36 = vector.shape_cast %35 : vector<1x4x8xf32> to vector<4x8xf32>
    %cst_38 = arith.constant dense<0.000000e+00> : vector<4x128xf32>
    %37 = tpu.matmul %36, %33, %cst_38 {dimension_numbers = #tpu.dot_dimension_numbers<[1], [0], [0], [1], [0, 0, 1, 1], [], []>} : vector<4x8xf32>, vector<8x128xf32>, vector<4x128xf32> -> vector<4x128xf32>
    %c0_39 = arith.constant 0 : index
    %c0_40 = arith.constant 0 : index
    %c0_41 = arith.constant 0 : index
    %38 = vector.load %arg6[%c0_39, %c0_40, %c0_41] : memref<4x128x128xf32, #tpu.memory_space<vmem>>, vector<1x128x128xf32>
    %39 = vector.shape_cast %38 : vector<1x128x128xf32> to vector<128x128xf32>
    %cst_42 = arith.constant dense<0.000000e+00> : vector<4x128xf32>
    %40 = tpu.matmul %37, %39, %cst_42 {dimension_numbers = #tpu.dot_dimension_numbers<[1], [0], [0], [1], [0, 0, 1, 1], [], []>} : vector<4x128xf32>, vector<128x128xf32>, vector<4x128xf32> -> vector<4x128xf32>
    %c1_43 = arith.constant 1 : index
    %c0_44 = arith.constant 0 : index
    %c0_45 = arith.constant 0 : index
    %41 = vector.load %arg5[%c1_43, %c0_44, %c0_45] : memref<4x4x8xf32, #tpu.memory_space<vmem>>, vector<1x4x8xf32>
    %42 = vector.shape_cast %41 : vector<1x4x8xf32> to vector<4x8xf32>
    %cst_46 = arith.constant dense<0.000000e+00> : vector<4x128xf32>
    %43 = tpu.matmul %42, %33, %cst_46 {dimension_numbers = #tpu.dot_dimension_numbers<[1], [0], [0], [1], [0, 0, 1, 1], [], []>} : vector<4x8xf32>, vector<8x128xf32>, vector<4x128xf32> -> vector<4x128xf32>
    %c1_47 = arith.constant 1 : index
    %c0_48 = arith.constant 0 : index
    %c0_49 = arith.constant 0 : index
    %44 = vector.load %arg6[%c1_47, %c0_48, %c0_49] : memref<4x128x128xf32, #tpu.memory_space<vmem>>, vector<1x128x128xf32>
    %45 = vector.shape_cast %44 : vector<1x128x128xf32> to vector<128x128xf32>
    %cst_50 = arith.constant dense<0.000000e+00> : vector<4x128xf32>
    %46 = tpu.matmul %43, %45, %cst_50 {dimension_numbers = #tpu.dot_dimension_numbers<[1], [0], [0], [1], [0, 0, 1, 1], [], []>} : vector<4x128xf32>, vector<128x128xf32>, vector<4x128xf32> -> vector<4x128xf32>
    %47 = arith.addf %40, %46 : vector<4x128xf32>
    %c2_51 = arith.constant 2 : index
    %c0_52 = arith.constant 0 : index
    %c0_53 = arith.constant 0 : index
    %48 = vector.load %arg5[%c2_51, %c0_52, %c0_53] : memref<4x4x8xf32, #tpu.memory_space<vmem>>, vector<1x4x8xf32>
    %49 = vector.shape_cast %48 : vector<1x4x8xf32> to vector<4x8xf32>
    %cst_54 = arith.constant dense<0.000000e+00> : vector<4x128xf32>
    %50 = tpu.matmul %49, %33, %cst_54 {dimension_numbers = #tpu.dot_dimension_numbers<[1], [0], [0], [1], [0, 0, 1, 1], [], []>} : vector<4x8xf32>, vector<8x128xf32>, vector<4x128xf32> -> vector<4x128xf32>
    %c2_55 = arith.constant 2 : index
    %c0_56 = arith.constant 0 : index
    %c0_57 = arith.constant 0 : index
    %51 = vector.load %arg6[%c2_55, %c0_56, %c0_57] : memref<4x128x128xf32, #tpu.memory_space<vmem>>, vector<1x128x128xf32>
    %52 = vector.shape_cast %51 : vector<1x128x128xf32> to vector<128x128xf32>
    %cst_58 = arith.constant dense<0.000000e+00> : vector<4x128xf32>
    %53 = tpu.matmul %50, %52, %cst_58 {dimension_numbers = #tpu.dot_dimension_numbers<[1], [0], [0], [1], [0, 0, 1, 1], [], []>} : vector<4x128xf32>, vector<128x128xf32>, vector<4x128xf32> -> vector<4x128xf32>
    %54 = arith.addf %47, %53 : vector<4x128xf32>
    %c3_59 = arith.constant 3 : index
    %c0_60 = arith.constant 0 : index
    %c0_61 = arith.constant 0 : index
    %55 = vector.load %arg5[%c3_59, %c0_60, %c0_61] : memref<4x4x8xf32, #tpu.memory_space<vmem>>, vector<1x4x8xf32>
    %56 = vector.shape_cast %55 : vector<1x4x8xf32> to vector<4x8xf32>
    %cst_62 = arith.constant dense<0.000000e+00> : vector<4x128xf32>
    %57 = tpu.matmul %56, %33, %cst_62 {dimension_numbers = #tpu.dot_dimension_numbers<[1], [0], [0], [1], [0, 0, 1, 1], [], []>} : vector<4x8xf32>, vector<8x128xf32>, vector<4x128xf32> -> vector<4x128xf32>
    %c3_63 = arith.constant 3 : index
    %c0_64 = arith.constant 0 : index
    %c0_65 = arith.constant 0 : index
    %58 = vector.load %arg6[%c3_63, %c0_64, %c0_65] : memref<4x128x128xf32, #tpu.memory_space<vmem>>, vector<1x128x128xf32>
    %59 = vector.shape_cast %58 : vector<1x128x128xf32> to vector<128x128xf32>
    %cst_66 = arith.constant dense<0.000000e+00> : vector<4x128xf32>
    %60 = tpu.matmul %57, %59, %cst_66 {dimension_numbers = #tpu.dot_dimension_numbers<[1], [0], [0], [1], [0, 0, 1, 1], [], []>} : vector<4x128xf32>, vector<128x128xf32>, vector<4x128xf32> -> vector<4x128xf32>
    %61 = arith.addf %54, %60 : vector<4x128xf32>
    %62 = vector.broadcast %34 : vector<1x128xf32> to vector<4x128xf32>
    %63 = arith.addf %61, %62 : vector<4x128xf32>
    %cst_67 = arith.constant 0.000000e+00 : f32
    %64 = vector.broadcast %cst_67 : f32 to vector<4x128xf32>
    %65 = arith.maximumf %63, %64 : vector<4x128xf32>
    %c0_68 = arith.constant 0 : index
    %c0_69 = arith.constant 0 : index
    %66 = vector.load %arg10[%c0_68, %c0_69] : memref<1x128xf32, #tpu.memory_space<vmem>>, vector<1x128xf32>
    %c0_70 = arith.constant 0 : index
    %c0_71 = arith.constant 0 : index
    %c0_72 = arith.constant 0 : index
    %67 = vector.load %arg8[%c0_70, %c0_71, %c0_72] : memref<3x4x4xf32, #tpu.memory_space<vmem>>, vector<1x4x4xf32>
    %68 = vector.shape_cast %67 : vector<1x4x4xf32> to vector<4x4xf32>
    %cst_73 = arith.constant dense<0.000000e+00> : vector<4x128xf32>
    %69 = tpu.matmul %68, %65, %cst_73 {dimension_numbers = #tpu.dot_dimension_numbers<[1], [0], [0], [1], [0, 0, 1, 1], [], []>} : vector<4x4xf32>, vector<4x128xf32>, vector<4x128xf32> -> vector<4x128xf32>
    %c0_74 = arith.constant 0 : index
    %c0_75 = arith.constant 0 : index
    %c0_76 = arith.constant 0 : index
    %70 = vector.load %arg9[%c0_74, %c0_75, %c0_76] : memref<3x128x128xf32, #tpu.memory_space<vmem>>, vector<1x128x128xf32>
    %71 = vector.shape_cast %70 : vector<1x128x128xf32> to vector<128x128xf32>
    %cst_77 = arith.constant dense<0.000000e+00> : vector<4x128xf32>
    %72 = tpu.matmul %69, %71, %cst_77 {dimension_numbers = #tpu.dot_dimension_numbers<[1], [0], [0], [1], [0, 0, 1, 1], [], []>} : vector<4x128xf32>, vector<128x128xf32>, vector<4x128xf32> -> vector<4x128xf32>
    %c1_78 = arith.constant 1 : index
    %c0_79 = arith.constant 0 : index
    %c0_80 = arith.constant 0 : index
    %73 = vector.load %arg8[%c1_78, %c0_79, %c0_80] : memref<3x4x4xf32, #tpu.memory_space<vmem>>, vector<1x4x4xf32>
    %74 = vector.shape_cast %73 : vector<1x4x4xf32> to vector<4x4xf32>
    %cst_81 = arith.constant dense<0.000000e+00> : vector<4x128xf32>
    %75 = tpu.matmul %74, %65, %cst_81 {dimension_numbers = #tpu.dot_dimension_numbers<[1], [0], [0], [1], [0, 0, 1, 1], [], []>} : vector<4x4xf32>, vector<4x128xf32>, vector<4x128xf32> -> vector<4x128xf32>
    %c1_82 = arith.constant 1 : index
    %c0_83 = arith.constant 0 : index
    %c0_84 = arith.constant 0 : index
    %76 = vector.load %arg9[%c1_82, %c0_83, %c0_84] : memref<3x128x128xf32, #tpu.memory_space<vmem>>, vector<1x128x128xf32>
    %77 = vector.shape_cast %76 : vector<1x128x128xf32> to vector<128x128xf32>
    %cst_85 = arith.constant dense<0.000000e+00> : vector<4x128xf32>
    %78 = tpu.matmul %75, %77, %cst_85 {dimension_numbers = #tpu.dot_dimension_numbers<[1], [0], [0], [1], [0, 0, 1, 1], [], []>} : vector<4x128xf32>, vector<128x128xf32>, vector<4x128xf32> -> vector<4x128xf32>
    %79 = arith.addf %72, %78 : vector<4x128xf32>
    %c2_86 = arith.constant 2 : index
    %c0_87 = arith.constant 0 : index
    %c0_88 = arith.constant 0 : index
    %80 = vector.load %arg8[%c2_86, %c0_87, %c0_88] : memref<3x4x4xf32, #tpu.memory_space<vmem>>, vector<1x4x4xf32>
    %81 = vector.shape_cast %80 : vector<1x4x4xf32> to vector<4x4xf32>
    %cst_89 = arith.constant dense<0.000000e+00> : vector<4x128xf32>
    %82 = tpu.matmul %81, %65, %cst_89 {dimension_numbers = #tpu.dot_dimension_numbers<[1], [0], [0], [1], [0, 0, 1, 1], [], []>} : vector<4x4xf32>, vector<4x128xf32>, vector<4x128xf32> -> vector<4x128xf32>
    %c2_90 = arith.constant 2 : index
    %c0_91 = arith.constant 0 : index
    %c0_92 = arith.constant 0 : index
    %83 = vector.load %arg9[%c2_90, %c0_91, %c0_92] : memref<3x128x128xf32, #tpu.memory_space<vmem>>, vector<1x128x128xf32>
    %84 = vector.shape_cast %83 : vector<1x128x128xf32> to vector<128x128xf32>
    %cst_93 = arith.constant dense<0.000000e+00> : vector<4x128xf32>
    %85 = tpu.matmul %82, %84, %cst_93 {dimension_numbers = #tpu.dot_dimension_numbers<[1], [0], [0], [1], [0, 0, 1, 1], [], []>} : vector<4x128xf32>, vector<128x128xf32>, vector<4x128xf32> -> vector<4x128xf32>
    %86 = arith.addf %79, %85 : vector<4x128xf32>
    %87 = vector.broadcast %66 : vector<1x128xf32> to vector<4x128xf32>
    %88 = arith.addf %86, %87 : vector<4x128xf32>
    %cst_94 = arith.constant 0.000000e+00 : f32
    %89 = vector.broadcast %cst_94 : f32 to vector<4x128xf32>
    %90 = arith.maximumf %88, %89 : vector<4x128xf32>
    %c0_95 = arith.constant 0 : index
    %c0_96 = arith.constant 0 : index
    %c0_97 = arith.constant 0 : index
    %91 = vector.load %arg8[%c0_95, %c0_96, %c0_97] : memref<3x4x4xf32, #tpu.memory_space<vmem>>, vector<1x4x4xf32>
    %92 = vector.shape_cast %91 : vector<1x4x4xf32> to vector<4x4xf32>
    %cst_98 = arith.constant dense<0.000000e+00> : vector<4x128xf32>
    %93 = tpu.matmul %92, %90, %cst_98 {dimension_numbers = #tpu.dot_dimension_numbers<[1], [0], [0], [1], [0, 0, 1, 1], [], []>} : vector<4x4xf32>, vector<4x128xf32>, vector<4x128xf32> -> vector<4x128xf32>
    %c0_99 = arith.constant 0 : index
    %c0_100 = arith.constant 0 : index
    %c0_101 = arith.constant 0 : index
    %94 = vector.load %arg11[%c0_99, %c0_100, %c0_101] : memref<6x128x64xf32, #tpu.memory_space<vmem>>, vector<1x128x64xf32>
    %95 = vector.shape_cast %94 : vector<1x128x64xf32> to vector<128x64xf32>
    %cst_102 = arith.constant dense<0.000000e+00> : vector<4x64xf32>
    %96 = tpu.matmul %93, %95, %cst_102 {dimension_numbers = #tpu.dot_dimension_numbers<[1], [0], [0], [1], [0, 0, 1, 1], [], []>} : vector<4x128xf32>, vector<128x64xf32>, vector<4x64xf32> -> vector<4x64xf32>
    %c1_103 = arith.constant 1 : index
    %c0_104 = arith.constant 0 : index
    %c0_105 = arith.constant 0 : index
    %97 = vector.load %arg8[%c1_103, %c0_104, %c0_105] : memref<3x4x4xf32, #tpu.memory_space<vmem>>, vector<1x4x4xf32>
    %98 = vector.shape_cast %97 : vector<1x4x4xf32> to vector<4x4xf32>
    %cst_106 = arith.constant dense<0.000000e+00> : vector<4x128xf32>
    %99 = tpu.matmul %98, %90, %cst_106 {dimension_numbers = #tpu.dot_dimension_numbers<[1], [0], [0], [1], [0, 0, 1, 1], [], []>} : vector<4x4xf32>, vector<4x128xf32>, vector<4x128xf32> -> vector<4x128xf32>
    %c1_107 = arith.constant 1 : index
    %c0_108 = arith.constant 0 : index
    %c0_109 = arith.constant 0 : index
    %100 = vector.load %arg11[%c1_107, %c0_108, %c0_109] : memref<6x128x64xf32, #tpu.memory_space<vmem>>, vector<1x128x64xf32>
    %101 = vector.shape_cast %100 : vector<1x128x64xf32> to vector<128x64xf32>
    %cst_110 = arith.constant dense<0.000000e+00> : vector<4x64xf32>
    %102 = tpu.matmul %99, %101, %cst_110 {dimension_numbers = #tpu.dot_dimension_numbers<[1], [0], [0], [1], [0, 0, 1, 1], [], []>} : vector<4x128xf32>, vector<128x64xf32>, vector<4x64xf32> -> vector<4x64xf32>
    %103 = arith.addf %96, %102 : vector<4x64xf32>
    %c2_111 = arith.constant 2 : index
    %c0_112 = arith.constant 0 : index
    %c0_113 = arith.constant 0 : index
    %104 = vector.load %arg8[%c2_111, %c0_112, %c0_113] : memref<3x4x4xf32, #tpu.memory_space<vmem>>, vector<1x4x4xf32>
    %105 = vector.shape_cast %104 : vector<1x4x4xf32> to vector<4x4xf32>
    %cst_114 = arith.constant dense<0.000000e+00> : vector<4x128xf32>
    %106 = tpu.matmul %105, %90, %cst_114 {dimension_numbers = #tpu.dot_dimension_numbers<[1], [0], [0], [1], [0, 0, 1, 1], [], []>} : vector<4x4xf32>, vector<4x128xf32>, vector<4x128xf32> -> vector<4x128xf32>
    %c2_115 = arith.constant 2 : index
    %c0_116 = arith.constant 0 : index
    %c0_117 = arith.constant 0 : index
    %107 = vector.load %arg11[%c2_115, %c0_116, %c0_117] : memref<6x128x64xf32, #tpu.memory_space<vmem>>, vector<1x128x64xf32>
    %108 = vector.shape_cast %107 : vector<1x128x64xf32> to vector<128x64xf32>
    %cst_118 = arith.constant dense<0.000000e+00> : vector<4x64xf32>
    %109 = tpu.matmul %106, %108, %cst_118 {dimension_numbers = #tpu.dot_dimension_numbers<[1], [0], [0], [1], [0, 0, 1, 1], [], []>} : vector<4x128xf32>, vector<128x64xf32>, vector<4x64xf32> -> vector<4x64xf32>
    %110 = arith.addf %103, %109 : vector<4x64xf32>
    %cst_119 = arith.constant 0.000000e+00 : f32
    %111 = vector.broadcast %cst_119 : f32 to vector<4x64xf32>
    %112 = arith.maximumf %110, %111 : vector<4x64xf32>
    %c0_120 = arith.constant 0 : index
    %c0_121 = arith.constant 0 : index
    %c0_122 = arith.constant 0 : index
    %113 = vector.load %arg12[%c0_120, %c0_121, %c0_122] : memref<2x64x128xf32, #tpu.memory_space<vmem>>, vector<1x64x128xf32>
    %114 = vector.shape_cast %113 : vector<1x64x128xf32> to vector<64x128xf32>
    %cst_123 = arith.constant dense<0.000000e+00> : vector<4x128xf32>
    %115 = tpu.matmul %112, %114, %cst_123 {dimension_numbers = #tpu.dot_dimension_numbers<[1], [0], [0], [1], [0, 0, 1, 1], [], []>} : vector<4x64xf32>, vector<64x128xf32>, vector<4x128xf32> -> vector<4x128xf32>
    %116 = arith.addf %88, %115 : vector<4x128xf32>
    %cst_124 = arith.constant 0.000000e+00 : f32
    %117 = vector.broadcast %cst_124 : f32 to vector<4x128xf32>
    %118 = arith.maximumf %116, %117 : vector<4x128xf32>
    %c0_125 = arith.constant 0 : index
    %c0_126 = arith.constant 0 : index
    %c0_127 = arith.constant 0 : index
    %119 = vector.load %arg8[%c0_125, %c0_126, %c0_127] : memref<3x4x4xf32, #tpu.memory_space<vmem>>, vector<1x4x4xf32>
    %120 = vector.shape_cast %119 : vector<1x4x4xf32> to vector<4x4xf32>
    %cst_128 = arith.constant dense<0.000000e+00> : vector<4x128xf32>
    %121 = tpu.matmul %120, %118, %cst_128 {dimension_numbers = #tpu.dot_dimension_numbers<[1], [0], [0], [1], [0, 0, 1, 1], [], []>} : vector<4x4xf32>, vector<4x128xf32>, vector<4x128xf32> -> vector<4x128xf32>
    %c3_129 = arith.constant 3 : index
    %c0_130 = arith.constant 0 : index
    %c0_131 = arith.constant 0 : index
    %122 = vector.load %arg11[%c3_129, %c0_130, %c0_131] : memref<6x128x64xf32, #tpu.memory_space<vmem>>, vector<1x128x64xf32>
    %123 = vector.shape_cast %122 : vector<1x128x64xf32> to vector<128x64xf32>
    %cst_132 = arith.constant dense<0.000000e+00> : vector<4x64xf32>
    %124 = tpu.matmul %121, %123, %cst_132 {dimension_numbers = #tpu.dot_dimension_numbers<[1], [0], [0], [1], [0, 0, 1, 1], [], []>} : vector<4x128xf32>, vector<128x64xf32>, vector<4x64xf32> -> vector<4x64xf32>
    %c1_133 = arith.constant 1 : index
    %c0_134 = arith.constant 0 : index
    %c0_135 = arith.constant 0 : index
    %125 = vector.load %arg8[%c1_133, %c0_134, %c0_135] : memref<3x4x4xf32, #tpu.memory_space<vmem>>, vector<1x4x4xf32>
    %126 = vector.shape_cast %125 : vector<1x4x4xf32> to vector<4x4xf32>
    %cst_136 = arith.constant dense<0.000000e+00> : vector<4x128xf32>
    %127 = tpu.matmul %126, %118, %cst_136 {dimension_numbers = #tpu.dot_dimension_numbers<[1], [0], [0], [1], [0, 0, 1, 1], [], []>} : vector<4x4xf32>, vector<4x128xf32>, vector<4x128xf32> -> vector<4x128xf32>
    %c4 = arith.constant 4 : index
    %c0_137 = arith.constant 0 : index
    %c0_138 = arith.constant 0 : index
    %128 = vector.load %arg11[%c4, %c0_137, %c0_138] : memref<6x128x64xf32, #tpu.memory_space<vmem>>, vector<1x128x64xf32>
    %129 = vector.shape_cast %128 : vector<1x128x64xf32> to vector<128x64xf32>
    %cst_139 = arith.constant dense<0.000000e+00> : vector<4x64xf32>
    %130 = tpu.matmul %127, %129, %cst_139 {dimension_numbers = #tpu.dot_dimension_numbers<[1], [0], [0], [1], [0, 0, 1, 1], [], []>} : vector<4x128xf32>, vector<128x64xf32>, vector<4x64xf32> -> vector<4x64xf32>
    %131 = arith.addf %124, %130 : vector<4x64xf32>
    %c2_140 = arith.constant 2 : index
    %c0_141 = arith.constant 0 : index
    %c0_142 = arith.constant 0 : index
    %132 = vector.load %arg8[%c2_140, %c0_141, %c0_142] : memref<3x4x4xf32, #tpu.memory_space<vmem>>, vector<1x4x4xf32>
    %133 = vector.shape_cast %132 : vector<1x4x4xf32> to vector<4x4xf32>
    %cst_143 = arith.constant dense<0.000000e+00> : vector<4x128xf32>
    %134 = tpu.matmul %133, %118, %cst_143 {dimension_numbers = #tpu.dot_dimension_numbers<[1], [0], [0], [1], [0, 0, 1, 1], [], []>} : vector<4x4xf32>, vector<4x128xf32>, vector<4x128xf32> -> vector<4x128xf32>
    %c5 = arith.constant 5 : index
    %c0_144 = arith.constant 0 : index
    %c0_145 = arith.constant 0 : index
    %135 = vector.load %arg11[%c5, %c0_144, %c0_145] : memref<6x128x64xf32, #tpu.memory_space<vmem>>, vector<1x128x64xf32>
    %136 = vector.shape_cast %135 : vector<1x128x64xf32> to vector<128x64xf32>
    %cst_146 = arith.constant dense<0.000000e+00> : vector<4x64xf32>
    %137 = tpu.matmul %134, %136, %cst_146 {dimension_numbers = #tpu.dot_dimension_numbers<[1], [0], [0], [1], [0, 0, 1, 1], [], []>} : vector<4x128xf32>, vector<128x64xf32>, vector<4x64xf32> -> vector<4x64xf32>
    %138 = arith.addf %131, %137 : vector<4x64xf32>
    %cst_147 = arith.constant 0.000000e+00 : f32
    %139 = vector.broadcast %cst_147 : f32 to vector<4x64xf32>
    %140 = arith.maximumf %138, %139 : vector<4x64xf32>
    %c1_148 = arith.constant 1 : index
    %c0_149 = arith.constant 0 : index
    %c0_150 = arith.constant 0 : index
    %141 = vector.load %arg12[%c1_148, %c0_149, %c0_150] : memref<2x64x128xf32, #tpu.memory_space<vmem>>, vector<1x64x128xf32>
    %142 = vector.shape_cast %141 : vector<1x64x128xf32> to vector<64x128xf32>
    %cst_151 = arith.constant dense<0.000000e+00> : vector<4x128xf32>
    %143 = tpu.matmul %140, %142, %cst_151 {dimension_numbers = #tpu.dot_dimension_numbers<[1], [0], [0], [1], [0, 0, 1, 1], [], []>} : vector<4x64xf32>, vector<64x128xf32>, vector<4x128xf32> -> vector<4x128xf32>
    %144 = arith.addf %116, %143 : vector<4x128xf32>
    %cst_152 = arith.constant 0.000000e+00 : f32
    %145 = vector.broadcast %cst_152 : f32 to vector<4x128xf32>
    %146 = arith.maximumf %144, %145 : vector<4x128xf32>
    %c0_153 = arith.constant 0 : index
    %c0_154 = arith.constant 0 : index
    %147 = vector.load %arg13[%c0_153, %c0_154] : memref<128x64xf32, #tpu.memory_space<vmem>>, vector<128x64xf32>
    %cst_155 = arith.constant dense<0.000000e+00> : vector<4x64xf32>
    %148 = tpu.matmul %146, %147, %cst_155 {dimension_numbers = #tpu.dot_dimension_numbers<[1], [0], [0], [1], [0, 0, 1, 1], [], []>} : vector<4x128xf32>, vector<128x64xf32>, vector<4x64xf32> -> vector<4x64xf32>
    %c0_156 = arith.constant 0 : index
    %c0_157 = arith.constant 0 : index
    %149 = vector.load %arg14[%c0_156, %c0_157] : memref<1x64xf32, #tpu.memory_space<vmem>>, vector<1x64xf32>
    %150 = vector.broadcast %149 : vector<1x64xf32> to vector<4x64xf32>
    %151 = arith.addf %148, %150 : vector<4x64xf32>
    %c0_158 = arith.constant 0 : index
    %c0_159 = arith.constant 0 : index
    %c0_160 = arith.constant 0 : index
    %152 = vector.load %arg15[%c0_158, %c0_159, %c0_160] : memref<1x4x64xf32, #tpu.memory_space<vmem>>, vector<1x4x64xf32>
    %153 = vector.shape_cast %152 : vector<1x4x64xf32> to vector<4x64xf32>
    %154 = vector.shape_cast %151 : vector<4x64xf32> to vector<1x4x64xf32>
    tpu.vector_store %arg15[%c0_158, %c0_159, %c0_160], %154 {strides = array<i32>} : memref<1x4x64xf32, #tpu.memory_space<vmem>>, vector<1x4x64xf32>,
    return
  }
  func.func @transform_0(%arg0: i32) -> (i32, i32, i32) {
    %c0_i32 = arith.constant 0 : i32
    %c0_i32_0 = arith.constant 0 : i32
    %c0_i32_1 = arith.constant 0 : i32
    return %arg0, %c0_i32, %c0_i32_0 : i32, i32, i32
  }
  func.func @transform_1(%arg0: i32) -> (i32, i32, i32) {
    %c0_i32 = arith.constant 0 : i32
    %c0_i32_0 = arith.constant 0 : i32
    %c0_i32_1 = arith.constant 0 : i32
    %c0_i32_2 = arith.constant 0 : i32
    return %c0_i32, %c0_i32_0, %c0_i32_1 : i32, i32, i32
  }
  func.func @transform_2(%arg0: i32) -> (i32, i32, i32) {
    %c0_i32 = arith.constant 0 : i32
    %c0_i32_0 = arith.constant 0 : i32
    %c0_i32_1 = arith.constant 0 : i32
    %c0_i32_2 = arith.constant 0 : i32
    return %c0_i32, %c0_i32_0, %c0_i32_1 : i32, i32, i32
  }
  func.func @transform_3(%arg0: i32) -> (i32, i32) {
    %c0_i32 = arith.constant 0 : i32
    %c0_i32_0 = arith.constant 0 : i32
    %c0_i32_1 = arith.constant 0 : i32
    return %c0_i32, %c0_i32_0 : i32, i32
  }
  func.func @transform_4(%arg0: i32) -> (i32, i32, i32) {
    %c0_i32 = arith.constant 0 : i32
    %c0_i32_0 = arith.constant 0 : i32
    %c0_i32_1 = arith.constant 0 : i32
    %c0_i32_2 = arith.constant 0 : i32
    return %c0_i32, %c0_i32_0, %c0_i32_1 : i32, i32, i32
  }
  func.func @transform_5(%arg0: i32) -> (i32, i32, i32) {
    %c0_i32 = arith.constant 0 : i32
    %c0_i32_0 = arith.constant 0 : i32
    %c0_i32_1 = arith.constant 0 : i32
    %c0_i32_2 = arith.constant 0 : i32
    return %c0_i32, %c0_i32_0, %c0_i32_1 : i32, i32, i32
  }
  func.func @transform_6(%arg0: i32) -> (i32, i32) {
    %c0_i32 = arith.constant 0 : i32
    %c0_i32_0 = arith.constant 0 : i32
    %c0_i32_1 = arith.constant 0 : i32
    return %c0_i32, %c0_i32_0 : i32, i32
  }
  func.func @transform_7(%arg0: i32) -> (i32, i32, i32) {
    %c0_i32 = arith.constant 0 : i32
    %c0_i32_0 = arith.constant 0 : i32
    %c0_i32_1 = arith.constant 0 : i32
    %c0_i32_2 = arith.constant 0 : i32
    return %c0_i32, %c0_i32_0, %c0_i32_1 : i32, i32, i32
  }
  func.func @transform_8(%arg0: i32) -> (i32, i32, i32) {
    %c0_i32 = arith.constant 0 : i32
    %c0_i32_0 = arith.constant 0 : i32
    %c0_i32_1 = arith.constant 0 : i32
    %c0_i32_2 = arith.constant 0 : i32
    return %c0_i32, %c0_i32_0, %c0_i32_1 : i32, i32, i32
  }
  func.func @transform_9(%arg0: i32) -> (i32, i32) {
    %c0_i32 = arith.constant 0 : i32
    %c0_i32_0 = arith.constant 0 : i32
    %c0_i32_1 = arith.constant 0 : i32
    return %c0_i32, %c0_i32_0 : i32, i32
  }
  func.func @transform_10(%arg0: i32) -> (i32, i32, i32) {
    %c0_i32 = arith.constant 0 : i32
    %c0_i32_0 = arith.constant 0 : i32
    %c0_i32_1 = arith.constant 0 : i32
    %c0_i32_2 = arith.constant 0 : i32
    return %c0_i32, %c0_i32_0, %c0_i32_1 : i32, i32, i32
  }
  func.func @transform_11(%arg0: i32) -> (i32, i32, i32) {
    %c0_i32 = arith.constant 0 : i32
    %c0_i32_0 = arith.constant 0 : i32
    %c0_i32_1 = arith.constant 0 : i32
    %c0_i32_2 = arith.constant 0 : i32
    return %c0_i32, %c0_i32_0, %c0_i32_1 : i32, i32, i32
  }
  func.func @transform_12(%arg0: i32) -> (i32, i32) {
    %c0_i32 = arith.constant 0 : i32
    %c0_i32_0 = arith.constant 0 : i32
    %c0_i32_1 = arith.constant 0 : i32
    return %c0_i32, %c0_i32_0 : i32, i32
  }
  func.func @transform_13(%arg0: i32) -> (i32, i32) {
    %c0_i32 = arith.constant 0 : i32
    %c0_i32_0 = arith.constant 0 : i32
    %c0_i32_1 = arith.constant 0 : i32
    return %c0_i32, %c0_i32_0 : i32, i32
  }
  func.func @transform_14(%arg0: i32) -> (i32, i32, i32) {
    %c0_i32 = arith.constant 0 : i32
    %c0_i32_0 = arith.constant 0 : i32
    %c0_i32_1 = arith.constant 0 : i32
    return %arg0, %c0_i32, %c0_i32_0 : i32, i32, i32
  }
}

module attributes {stable_mosaic.version = 11 : i64} {
  func.func @_vq_kernel(%arg0: i32, %arg1: memref<32x16xf32, #tpu.memory_space<vmem>>, %arg2: memref<32x16xf32, #tpu.memory_space<vmem>>, %arg3: memref<16x32xf32, #tpu.memory_space<vmem>>, %arg4: memref<1x32xf32, #tpu.memory_space<vmem>>, %arg5: memref<16x16xf32, #tpu.memory_space<vmem>>, %arg6: memref<1x16xf32, #tpu.memory_space<vmem>>, %arg7: memref<32x16xf32, #tpu.memory_space<vmem>>, %arg8: memref<32x32xf32, #tpu.memory_space<vmem>>, %arg9: memref<1x1xf32, #tpu.memory_space<vmem>>, %arg10: memref<1x1xf32, #tpu.memory_space<vmem>>) attributes {dimension_semantics = [#tpu.dimension_semantics<arbitrary>], iteration_bounds = array<i64: 1>, scalar_prefetch = 0 : i64, scratch_operands = 0 : i64, tpu.core_type = #tpu.core_type<tc>, window_params = [{pipeline_mode = #tpu.pipeline_mode<synchronous>, transform_indices = @transform_0, window_bounds = array<i64: 32, 16>}, {pipeline_mode = #tpu.pipeline_mode<synchronous>, transform_indices = @transform_1, window_bounds = array<i64: 32, 16>}, {pipeline_mode = #tpu.pipeline_mode<synchronous>, transform_indices = @transform_2, window_bounds = array<i64: 16, 32>}, {pipeline_mode = #tpu.pipeline_mode<synchronous>, transform_indices = @transform_3, window_bounds = array<i64: 1, 32>}, {pipeline_mode = #tpu.pipeline_mode<synchronous>, transform_indices = @transform_4, window_bounds = array<i64: 16, 16>}, {pipeline_mode = #tpu.pipeline_mode<synchronous>, transform_indices = @transform_5, window_bounds = array<i64: 1, 16>}, {pipeline_mode = #tpu.pipeline_mode<synchronous>, transform_indices = @transform_6, window_bounds = array<i64: 32, 16>}, {pipeline_mode = #tpu.pipeline_mode<synchronous>, transform_indices = @transform_7, window_bounds = array<i64: 32, 32>}, {pipeline_mode = #tpu.pipeline_mode<synchronous>, transform_indices = @transform_8, window_bounds = array<i64: 1, 1>}, {pipeline_mode = #tpu.pipeline_mode<synchronous>, transform_indices = @transform_9, window_bounds = array<i64: 1, 1>}]} {
    %c0 = arith.constant 0 : index
    %c0_0 = arith.constant 0 : index
    %0 = vector.load %arg1[%c0, %c0_0] : memref<32x16xf32, #tpu.memory_space<vmem>>, vector<32x16xf32>
    %c0_1 = arith.constant 0 : index
    %c0_2 = arith.constant 0 : index
    %1 = vector.load %arg3[%c0_1, %c0_2] : memref<16x32xf32, #tpu.memory_space<vmem>>, vector<16x32xf32>
    %cst = arith.constant dense<0.000000e+00> : vector<32x32xf32>
    %2 = tpu.matmul %0, %1, %cst {dimension_numbers = #tpu.dot_dimension_numbers<[1], [0], [0], [1], [0, 0, 1, 1], [], []>} : vector<32x16xf32>, vector<16x32xf32>, vector<32x32xf32> -> vector<32x32xf32>
    %c0_3 = arith.constant 0 : index
    %c0_4 = arith.constant 0 : index
    %3 = vector.load %arg4[%c0_3, %c0_4] : memref<1x32xf32, #tpu.memory_space<vmem>>, vector<1x32xf32>
    %cst_5 = arith.constant 2.000000e+00 : f32
    %4 = vector.broadcast %cst_5 : f32 to vector<32x32xf32>
    %5 = arith.mulf %4, %2 : vector<32x32xf32>
    %6 = vector.broadcast %3 : vector<1x32xf32> to vector<32x32xf32>
    %7 = arith.subf %6, %5 : vector<32x32xf32>
    %8 = tpu.iota {dimensions = array<i32: 1>} : vector<32x32xi32>
    %cst_6 = arith.constant dense<0x7F800000> : vector<32xf32>
    %9 = vector.multi_reduction <minimumf>, %7, %cst_6 [1] : vector<32x32xf32> to vector<32xf32>
    %10 = vector.shape_cast %9 : vector<32xf32> to vector<32x1xf32>
    %11 = vector.broadcast %10 : vector<32x1xf32> to vector<32x32xf32>
    %12 = arith.cmpf ole, %7, %11 : vector<32x32xf32>
    %c32_i32 = arith.constant 32 : i32
    %13 = vector.broadcast %c32_i32 : i32 to vector<32x32xi32>
    %14 = arith.select %12, %8, %13 : vector<32x32xi1>, vector<32x32xi32>
    %cst_7 = arith.constant dense<2147483647> : vector<32xi32>
    %15 = vector.multi_reduction <minsi>, %14, %cst_7 [1] : vector<32x32xi32> to vector<32xi32>
    %16 = vector.shape_cast %15 : vector<32xi32> to vector<32x1xi32>
    %17 = vector.broadcast %16 : vector<32x1xi32> to vector<32x32xi32>
    %18 = arith.cmpi eq, %8, %17 : vector<32x32xi32>
    %19 = arith.extui %18 : vector<32x32xi1> to vector<32x32xi32>
    %20 = arith.sitofp %19 : vector<32x32xi32> to vector<32x32xf32>
    %c0_8 = arith.constant 0 : index
    %c0_9 = arith.constant 0 : index
    %21 = vector.load %arg2[%c0_8, %c0_9] : memref<32x16xf32, #tpu.memory_space<vmem>>, vector<32x16xf32>
    %cst_10 = arith.constant dense<0.000000e+00> : vector<32x16xf32>
    %22 = tpu.matmul %20, %21, %cst_10 {dimension_numbers = #tpu.dot_dimension_numbers<[1], [0], [0], [1], [0, 0, 1, 1], [], []>} : vector<32x32xf32>, vector<32x16xf32>, vector<32x16xf32> -> vector<32x16xf32>
    %23 = arith.subf %22, %0 : vector<32x16xf32>
    %24 = arith.mulf %23, %23 : vector<32x16xf32>
    %cst_11 = arith.constant dense<0.000000e+00> : vector<32xf32>
    %25 = vector.multi_reduction <add>, %24, %cst_11 [1] : vector<32x16xf32> to vector<32xf32>
    %26 = vector.shape_cast %25 : vector<32xf32> to vector<32x1xf32>
    %cst_12 = arith.constant dense<0.000000e+00> : vector<1xf32>
    %27 = vector.multi_reduction <add>, %26, %cst_12 [0] : vector<32x1xf32> to vector<1xf32>
    %28 = vector.shape_cast %27 : vector<1xf32> to vector<1x1xf32>
    %cst_13 = arith.constant 1.250000e+00 : f32
    %29 = vector.broadcast %cst_13 : f32 to vector<1x1xf32>
    %30 = arith.mulf %29, %28 : vector<1x1xf32>
    %cst_14 = arith.constant 5.120000e+02 : f32
    %31 = vector.broadcast %cst_14 : f32 to vector<1x1xf32>
    %32 = arith.divf %30, %31 : vector<1x1xf32>
    %c0_15 = arith.constant 0 : index
    %c0_16 = arith.constant 0 : index
    %33 = vector.load %arg9[%c0_15, %c0_16] : memref<1x1xf32, #tpu.memory_space<vmem>>, vector<1x1xf32>
    tpu.vector_store %arg9[%c0_15, %c0_16], %32 {strides = array<i32>} : memref<1x1xf32, #tpu.memory_space<vmem>>, vector<1x1xf32>,
    %cst_17 = arith.constant dense<0.000000e+00> : vector<32xf32>
    %34 = vector.multi_reduction <add>, %20, %cst_17 [0] : vector<32x32xf32> to vector<32xf32>
    %35 = vector.shape_cast %34 : vector<32xf32> to vector<1x32xf32>
    %cst_18 = arith.constant 3.200000e+01 : f32
    %36 = vector.broadcast %cst_18 : f32 to vector<1x32xf32>
    %37 = arith.divf %35, %36 : vector<1x32xf32>
    %cst_19 = arith.constant 1.000000e-10 : f32
    %38 = vector.broadcast %cst_19 : f32 to vector<1x32xf32>
    %39 = arith.addf %37, %38 : vector<1x32xf32>
    %40 = math.log %39 : vector<1x32xf32>
    %41 = arith.mulf %37, %40 : vector<1x32xf32>
    %cst_20 = arith.constant dense<0.000000e+00> : vector<1xf32>
    %42 = vector.multi_reduction <add>, %41, %cst_20 [1] : vector<1x32xf32> to vector<1xf32>
    %43 = vector.shape_cast %42 : vector<1xf32> to vector<1x1xf32>
    %cst_21 = arith.constant 0.000000e+00 : f32
    %44 = vector.broadcast %cst_21 : f32 to vector<1x1xf32>
    %45 = arith.subf %44, %43 : vector<1x1xf32>
    %46 = math.exp %45 : vector<1x1xf32>
    %c0_22 = arith.constant 0 : index
    %c0_23 = arith.constant 0 : index
    %47 = vector.load %arg10[%c0_22, %c0_23] : memref<1x1xf32, #tpu.memory_space<vmem>>, vector<1x1xf32>
    tpu.vector_store %arg10[%c0_22, %c0_23], %46 {strides = array<i32>} : memref<1x1xf32, #tpu.memory_space<vmem>>, vector<1x1xf32>,
    %c0_24 = arith.constant 0 : index
    %c0_25 = arith.constant 0 : index
    %48 = vector.load %arg8[%c0_24, %c0_25] : memref<32x32xf32, #tpu.memory_space<vmem>>, vector<32x32xf32>
    tpu.vector_store %arg8[%c0_24, %c0_25], %20 {strides = array<i32>} : memref<32x32xf32, #tpu.memory_space<vmem>>, vector<32x32xf32>,
    %c0_26 = arith.constant 0 : index
    %c0_27 = arith.constant 0 : index
    %49 = vector.load %arg5[%c0_26, %c0_27] : memref<16x16xf32, #tpu.memory_space<vmem>>, vector<16x16xf32>
    %cst_28 = arith.constant dense<0.000000e+00> : vector<32x16xf32>
    %50 = tpu.matmul %22, %49, %cst_28 {dimension_numbers = #tpu.dot_dimension_numbers<[1], [0], [0], [1], [0, 0, 1, 1], [], []>} : vector<32x16xf32>, vector<16x16xf32>, vector<32x16xf32> -> vector<32x16xf32>
    %c0_29 = arith.constant 0 : index
    %c0_30 = arith.constant 0 : index
    %51 = vector.load %arg6[%c0_29, %c0_30] : memref<1x16xf32, #tpu.memory_space<vmem>>, vector<1x16xf32>
    %52 = vector.broadcast %51 : vector<1x16xf32> to vector<32x16xf32>
    %53 = arith.addf %50, %52 : vector<32x16xf32>
    %c0_31 = arith.constant 0 : index
    %c0_32 = arith.constant 0 : index
    %54 = vector.load %arg7[%c0_31, %c0_32] : memref<32x16xf32, #tpu.memory_space<vmem>>, vector<32x16xf32>
    tpu.vector_store %arg7[%c0_31, %c0_32], %53 {strides = array<i32>} : memref<32x16xf32, #tpu.memory_space<vmem>>, vector<32x16xf32>,
    return
  }
  func.func @transform_0(%arg0: i32) -> (i32, i32) {
    %c0_i32 = arith.constant 0 : i32
    %c0_i32_0 = arith.constant 0 : i32
    %c0_i32_1 = arith.constant 0 : i32
    return %c0_i32, %c0_i32_0 : i32, i32
  }
  func.func @transform_1(%arg0: i32) -> (i32, i32) {
    %c0_i32 = arith.constant 0 : i32
    %c0_i32_0 = arith.constant 0 : i32
    %c0_i32_1 = arith.constant 0 : i32
    return %c0_i32, %c0_i32_0 : i32, i32
  }
  func.func @transform_2(%arg0: i32) -> (i32, i32) {
    %c0_i32 = arith.constant 0 : i32
    %c0_i32_0 = arith.constant 0 : i32
    %c0_i32_1 = arith.constant 0 : i32
    return %c0_i32, %c0_i32_0 : i32, i32
  }
  func.func @transform_3(%arg0: i32) -> (i32, i32) {
    %c0_i32 = arith.constant 0 : i32
    %c0_i32_0 = arith.constant 0 : i32
    %c0_i32_1 = arith.constant 0 : i32
    return %c0_i32, %c0_i32_0 : i32, i32
  }
  func.func @transform_4(%arg0: i32) -> (i32, i32) {
    %c0_i32 = arith.constant 0 : i32
    %c0_i32_0 = arith.constant 0 : i32
    %c0_i32_1 = arith.constant 0 : i32
    return %c0_i32, %c0_i32_0 : i32, i32
  }
  func.func @transform_5(%arg0: i32) -> (i32, i32) {
    %c0_i32 = arith.constant 0 : i32
    %c0_i32_0 = arith.constant 0 : i32
    %c0_i32_1 = arith.constant 0 : i32
    return %c0_i32, %c0_i32_0 : i32, i32
  }
  func.func @transform_6(%arg0: i32) -> (i32, i32) {
    %c0_i32 = arith.constant 0 : i32
    %c0_i32_0 = arith.constant 0 : i32
    %c0_i32_1 = arith.constant 0 : i32
    return %c0_i32, %c0_i32_0 : i32, i32
  }
  func.func @transform_7(%arg0: i32) -> (i32, i32) {
    %c0_i32 = arith.constant 0 : i32
    %c0_i32_0 = arith.constant 0 : i32
    %c0_i32_1 = arith.constant 0 : i32
    return %c0_i32, %c0_i32_0 : i32, i32
  }
  func.func @transform_8(%arg0: i32) -> (i32, i32) {
    %c0_i32 = arith.constant 0 : i32
    %c0_i32_0 = arith.constant 0 : i32
    %c0_i32_1 = arith.constant 0 : i32
    return %c0_i32, %c0_i32_0 : i32, i32
  }
  func.func @transform_9(%arg0: i32) -> (i32, i32) {
    %c0_i32 = arith.constant 0 : i32
    %c0_i32_0 = arith.constant 0 : i32
    %c0_i32_1 = arith.constant 0 : i32
    return %c0_i32, %c0_i32_0 : i32, i32
  }
}

module attributes {stable_mosaic.version = 11 : i64} {
  func.func @_decoder_kernel(%arg0: i32, %arg1: memref<1x4x64xf32, #tpu.memory_space<vmem>>, %arg2: memref<3x4x4xf32, #tpu.memory_space<vmem>>, %arg3: memref<3x64x128xf32, #tpu.memory_space<vmem>>, %arg4: memref<1x128xf32, #tpu.memory_space<vmem>>, %arg5: memref<6x128x64xf32, #tpu.memory_space<vmem>>, %arg6: memref<2x64x128xf32, #tpu.memory_space<vmem>>, %arg7: memref<4x8x4xf32, #tpu.memory_space<vmem>>, %arg8: memref<4x128x128xf32, #tpu.memory_space<vmem>>, %arg9: memref<1x128xf32, #tpu.memory_space<vmem>>, %arg10: memref<4x16x8xf32, #tpu.memory_space<vmem>>, %arg11: memref<4x128x16xf32, #tpu.memory_space<vmem>>, %arg12: memref<1x16xf32, #tpu.memory_space<vmem>>, %arg13: memref<1x16x16xf32, #tpu.memory_space<vmem>>) attributes {dimension_semantics = [#tpu.dimension_semantics<parallel>], iteration_bounds = array<i64: 2>, scalar_prefetch = 0 : i64, scratch_operands = 0 : i64, tpu.core_type = #tpu.core_type<tc>, window_params = [{transform_indices = @transform_0, window_bounds = array<i64: 1, 4, 64>}, {pipeline_mode = #tpu.pipeline_mode<synchronous>, transform_indices = @transform_1, window_bounds = array<i64: 3, 4, 4>}, {pipeline_mode = #tpu.pipeline_mode<synchronous>, transform_indices = @transform_2, window_bounds = array<i64: 3, 64, 128>}, {pipeline_mode = #tpu.pipeline_mode<synchronous>, transform_indices = @transform_3, window_bounds = array<i64: 1, 128>}, {pipeline_mode = #tpu.pipeline_mode<synchronous>, transform_indices = @transform_4, window_bounds = array<i64: 6, 128, 64>}, {pipeline_mode = #tpu.pipeline_mode<synchronous>, transform_indices = @transform_5, window_bounds = array<i64: 2, 64, 128>}, {pipeline_mode = #tpu.pipeline_mode<synchronous>, transform_indices = @transform_6, window_bounds = array<i64: 4, 8, 4>}, {pipeline_mode = #tpu.pipeline_mode<synchronous>, transform_indices = @transform_7, window_bounds = array<i64: 4, 128, 128>}, {pipeline_mode = #tpu.pipeline_mode<synchronous>, transform_indices = @transform_8, window_bounds = array<i64: 1, 128>}, {pipeline_mode = #tpu.pipeline_mode<synchronous>, transform_indices = @transform_9, window_bounds = array<i64: 4, 16, 8>}, {pipeline_mode = #tpu.pipeline_mode<synchronous>, transform_indices = @transform_10, window_bounds = array<i64: 4, 128, 16>}, {pipeline_mode = #tpu.pipeline_mode<synchronous>, transform_indices = @transform_11, window_bounds = array<i64: 1, 16>}, {transform_indices = @transform_12, window_bounds = array<i64: 1, 16, 16>}]} {
    %c0 = arith.constant 0 : index
    %c0_0 = arith.constant 0 : index
    %c0_1 = arith.constant 0 : index
    %0 = vector.load %arg1[%c0, %c0_0, %c0_1] : memref<1x4x64xf32, #tpu.memory_space<vmem>>, vector<1x4x64xf32>
    %1 = vector.shape_cast %0 : vector<1x4x64xf32> to vector<4x64xf32>
    %c0_2 = arith.constant 0 : index
    %c0_3 = arith.constant 0 : index
    %2 = vector.load %arg4[%c0_2, %c0_3] : memref<1x128xf32, #tpu.memory_space<vmem>>, vector<1x128xf32>
    %c0_4 = arith.constant 0 : index
    %c0_5 = arith.constant 0 : index
    %c0_6 = arith.constant 0 : index
    %3 = vector.load %arg2[%c0_4, %c0_5, %c0_6] : memref<3x4x4xf32, #tpu.memory_space<vmem>>, vector<1x4x4xf32>
    %4 = vector.shape_cast %3 : vector<1x4x4xf32> to vector<4x4xf32>
    %cst = arith.constant dense<0.000000e+00> : vector<4x64xf32>
    %5 = tpu.matmul %4, %1, %cst {dimension_numbers = #tpu.dot_dimension_numbers<[1], [0], [0], [1], [0, 0, 1, 1], [], []>} : vector<4x4xf32>, vector<4x64xf32>, vector<4x64xf32> -> vector<4x64xf32>
    %c0_7 = arith.constant 0 : index
    %c0_8 = arith.constant 0 : index
    %c0_9 = arith.constant 0 : index
    %6 = vector.load %arg3[%c0_7, %c0_8, %c0_9] : memref<3x64x128xf32, #tpu.memory_space<vmem>>, vector<1x64x128xf32>
    %7 = vector.shape_cast %6 : vector<1x64x128xf32> to vector<64x128xf32>
    %cst_10 = arith.constant dense<0.000000e+00> : vector<4x128xf32>
    %8 = tpu.matmul %5, %7, %cst_10 {dimension_numbers = #tpu.dot_dimension_numbers<[1], [0], [0], [1], [0, 0, 1, 1], [], []>} : vector<4x64xf32>, vector<64x128xf32>, vector<4x128xf32> -> vector<4x128xf32>
    %c1 = arith.constant 1 : index
    %c0_11 = arith.constant 0 : index
    %c0_12 = arith.constant 0 : index
    %9 = vector.load %arg2[%c1, %c0_11, %c0_12] : memref<3x4x4xf32, #tpu.memory_space<vmem>>, vector<1x4x4xf32>
    %10 = vector.shape_cast %9 : vector<1x4x4xf32> to vector<4x4xf32>
    %cst_13 = arith.constant dense<0.000000e+00> : vector<4x64xf32>
    %11 = tpu.matmul %10, %1, %cst_13 {dimension_numbers = #tpu.dot_dimension_numbers<[1], [0], [0], [1], [0, 0, 1, 1], [], []>} : vector<4x4xf32>, vector<4x64xf32>, vector<4x64xf32> -> vector<4x64xf32>
    %c1_14 = arith.constant 1 : index
    %c0_15 = arith.constant 0 : index
    %c0_16 = arith.constant 0 : index
    %12 = vector.load %arg3[%c1_14, %c0_15, %c0_16] : memref<3x64x128xf32, #tpu.memory_space<vmem>>, vector<1x64x128xf32>
    %13 = vector.shape_cast %12 : vector<1x64x128xf32> to vector<64x128xf32>
    %cst_17 = arith.constant dense<0.000000e+00> : vector<4x128xf32>
    %14 = tpu.matmul %11, %13, %cst_17 {dimension_numbers = #tpu.dot_dimension_numbers<[1], [0], [0], [1], [0, 0, 1, 1], [], []>} : vector<4x64xf32>, vector<64x128xf32>, vector<4x128xf32> -> vector<4x128xf32>
    %15 = arith.addf %8, %14 : vector<4x128xf32>
    %c2 = arith.constant 2 : index
    %c0_18 = arith.constant 0 : index
    %c0_19 = arith.constant 0 : index
    %16 = vector.load %arg2[%c2, %c0_18, %c0_19] : memref<3x4x4xf32, #tpu.memory_space<vmem>>, vector<1x4x4xf32>
    %17 = vector.shape_cast %16 : vector<1x4x4xf32> to vector<4x4xf32>
    %cst_20 = arith.constant dense<0.000000e+00> : vector<4x64xf32>
    %18 = tpu.matmul %17, %1, %cst_20 {dimension_numbers = #tpu.dot_dimension_numbers<[1], [0], [0], [1], [0, 0, 1, 1], [], []>} : vector<4x4xf32>, vector<4x64xf32>, vector<4x64xf32> -> vector<4x64xf32>
    %c2_21 = arith.constant 2 : index
    %c0_22 = arith.constant 0 : index
    %c0_23 = arith.constant 0 : index
    %19 = vector.load %arg3[%c2_21, %c0_22, %c0_23] : memref<3x64x128xf32, #tpu.memory_space<vmem>>, vector<1x64x128xf32>
    %20 = vector.shape_cast %19 : vector<1x64x128xf32> to vector<64x128xf32>
    %cst_24 = arith.constant dense<0.000000e+00> : vector<4x128xf32>
    %21 = tpu.matmul %18, %20, %cst_24 {dimension_numbers = #tpu.dot_dimension_numbers<[1], [0], [0], [1], [0, 0, 1, 1], [], []>} : vector<4x64xf32>, vector<64x128xf32>, vector<4x128xf32> -> vector<4x128xf32>
    %22 = arith.addf %15, %21 : vector<4x128xf32>
    %23 = vector.broadcast %2 : vector<1x128xf32> to vector<4x128xf32>
    %24 = arith.addf %22, %23 : vector<4x128xf32>
    %cst_25 = arith.constant 0.000000e+00 : f32
    %25 = vector.broadcast %cst_25 : f32 to vector<4x128xf32>
    %26 = arith.maximumf %24, %25 : vector<4x128xf32>
    %c0_26 = arith.constant 0 : index
    %c0_27 = arith.constant 0 : index
    %c0_28 = arith.constant 0 : index
    %27 = vector.load %arg2[%c0_26, %c0_27, %c0_28] : memref<3x4x4xf32, #tpu.memory_space<vmem>>, vector<1x4x4xf32>
    %28 = vector.shape_cast %27 : vector<1x4x4xf32> to vector<4x4xf32>
    %cst_29 = arith.constant dense<0.000000e+00> : vector<4x128xf32>
    %29 = tpu.matmul %28, %26, %cst_29 {dimension_numbers = #tpu.dot_dimension_numbers<[1], [0], [0], [1], [0, 0, 1, 1], [], []>} : vector<4x4xf32>, vector<4x128xf32>, vector<4x128xf32> -> vector<4x128xf32>
    %c0_30 = arith.constant 0 : index
    %c0_31 = arith.constant 0 : index
    %c0_32 = arith.constant 0 : index
    %30 = vector.load %arg5[%c0_30, %c0_31, %c0_32] : memref<6x128x64xf32, #tpu.memory_space<vmem>>, vector<1x128x64xf32>
    %31 = vector.shape_cast %30 : vector<1x128x64xf32> to vector<128x64xf32>
    %cst_33 = arith.constant dense<0.000000e+00> : vector<4x64xf32>
    %32 = tpu.matmul %29, %31, %cst_33 {dimension_numbers = #tpu.dot_dimension_numbers<[1], [0], [0], [1], [0, 0, 1, 1], [], []>} : vector<4x128xf32>, vector<128x64xf32>, vector<4x64xf32> -> vector<4x64xf32>
    %c1_34 = arith.constant 1 : index
    %c0_35 = arith.constant 0 : index
    %c0_36 = arith.constant 0 : index
    %33 = vector.load %arg2[%c1_34, %c0_35, %c0_36] : memref<3x4x4xf32, #tpu.memory_space<vmem>>, vector<1x4x4xf32>
    %34 = vector.shape_cast %33 : vector<1x4x4xf32> to vector<4x4xf32>
    %cst_37 = arith.constant dense<0.000000e+00> : vector<4x128xf32>
    %35 = tpu.matmul %34, %26, %cst_37 {dimension_numbers = #tpu.dot_dimension_numbers<[1], [0], [0], [1], [0, 0, 1, 1], [], []>} : vector<4x4xf32>, vector<4x128xf32>, vector<4x128xf32> -> vector<4x128xf32>
    %c1_38 = arith.constant 1 : index
    %c0_39 = arith.constant 0 : index
    %c0_40 = arith.constant 0 : index
    %36 = vector.load %arg5[%c1_38, %c0_39, %c0_40] : memref<6x128x64xf32, #tpu.memory_space<vmem>>, vector<1x128x64xf32>
    %37 = vector.shape_cast %36 : vector<1x128x64xf32> to vector<128x64xf32>
    %cst_41 = arith.constant dense<0.000000e+00> : vector<4x64xf32>
    %38 = tpu.matmul %35, %37, %cst_41 {dimension_numbers = #tpu.dot_dimension_numbers<[1], [0], [0], [1], [0, 0, 1, 1], [], []>} : vector<4x128xf32>, vector<128x64xf32>, vector<4x64xf32> -> vector<4x64xf32>
    %39 = arith.addf %32, %38 : vector<4x64xf32>
    %c2_42 = arith.constant 2 : index
    %c0_43 = arith.constant 0 : index
    %c0_44 = arith.constant 0 : index
    %40 = vector.load %arg2[%c2_42, %c0_43, %c0_44] : memref<3x4x4xf32, #tpu.memory_space<vmem>>, vector<1x4x4xf32>
    %41 = vector.shape_cast %40 : vector<1x4x4xf32> to vector<4x4xf32>
    %cst_45 = arith.constant dense<0.000000e+00> : vector<4x128xf32>
    %42 = tpu.matmul %41, %26, %cst_45 {dimension_numbers = #tpu.dot_dimension_numbers<[1], [0], [0], [1], [0, 0, 1, 1], [], []>} : vector<4x4xf32>, vector<4x128xf32>, vector<4x128xf32> -> vector<4x128xf32>
    %c2_46 = arith.constant 2 : index
    %c0_47 = arith.constant 0 : index
    %c0_48 = arith.constant 0 : index
    %43 = vector.load %arg5[%c2_46, %c0_47, %c0_48] : memref<6x128x64xf32, #tpu.memory_space<vmem>>, vector<1x128x64xf32>
    %44 = vector.shape_cast %43 : vector<1x128x64xf32> to vector<128x64xf32>
    %cst_49 = arith.constant dense<0.000000e+00> : vector<4x64xf32>
    %45 = tpu.matmul %42, %44, %cst_49 {dimension_numbers = #tpu.dot_dimension_numbers<[1], [0], [0], [1], [0, 0, 1, 1], [], []>} : vector<4x128xf32>, vector<128x64xf32>, vector<4x64xf32> -> vector<4x64xf32>
    %46 = arith.addf %39, %45 : vector<4x64xf32>
    %cst_50 = arith.constant 0.000000e+00 : f32
    %47 = vector.broadcast %cst_50 : f32 to vector<4x64xf32>
    %48 = arith.maximumf %46, %47 : vector<4x64xf32>
    %c0_51 = arith.constant 0 : index
    %c0_52 = arith.constant 0 : index
    %c0_53 = arith.constant 0 : index
    %49 = vector.load %arg6[%c0_51, %c0_52, %c0_53] : memref<2x64x128xf32, #tpu.memory_space<vmem>>, vector<1x64x128xf32>
    %50 = vector.shape_cast %49 : vector<1x64x128xf32> to vector<64x128xf32>
    %cst_54 = arith.constant dense<0.000000e+00> : vector<4x128xf32>
    %51 = tpu.matmul %48, %50, %cst_54 {dimension_numbers = #tpu.dot_dimension_numbers<[1], [0], [0], [1], [0, 0, 1, 1], [], []>} : vector<4x64xf32>, vector<64x128xf32>, vector<4x128xf32> -> vector<4x128xf32>
    %52 = arith.addf %24, %51 : vector<4x128xf32>
    %cst_55 = arith.constant 0.000000e+00 : f32
    %53 = vector.broadcast %cst_55 : f32 to vector<4x128xf32>
    %54 = arith.maximumf %52, %53 : vector<4x128xf32>
    %c0_56 = arith.constant 0 : index
    %c0_57 = arith.constant 0 : index
    %c0_58 = arith.constant 0 : index
    %55 = vector.load %arg2[%c0_56, %c0_57, %c0_58] : memref<3x4x4xf32, #tpu.memory_space<vmem>>, vector<1x4x4xf32>
    %56 = vector.shape_cast %55 : vector<1x4x4xf32> to vector<4x4xf32>
    %cst_59 = arith.constant dense<0.000000e+00> : vector<4x128xf32>
    %57 = tpu.matmul %56, %54, %cst_59 {dimension_numbers = #tpu.dot_dimension_numbers<[1], [0], [0], [1], [0, 0, 1, 1], [], []>} : vector<4x4xf32>, vector<4x128xf32>, vector<4x128xf32> -> vector<4x128xf32>
    %c3 = arith.constant 3 : index
    %c0_60 = arith.constant 0 : index
    %c0_61 = arith.constant 0 : index
    %58 = vector.load %arg5[%c3, %c0_60, %c0_61] : memref<6x128x64xf32, #tpu.memory_space<vmem>>, vector<1x128x64xf32>
    %59 = vector.shape_cast %58 : vector<1x128x64xf32> to vector<128x64xf32>
    %cst_62 = arith.constant dense<0.000000e+00> : vector<4x64xf32>
    %60 = tpu.matmul %57, %59, %cst_62 {dimension_numbers = #tpu.dot_dimension_numbers<[1], [0], [0], [1], [0, 0, 1, 1], [], []>} : vector<4x128xf32>, vector<128x64xf32>, vector<4x64xf32> -> vector<4x64xf32>
    %c1_63 = arith.constant 1 : index
    %c0_64 = arith.constant 0 : index
    %c0_65 = arith.constant 0 : index
    %61 = vector.load %arg2[%c1_63, %c0_64, %c0_65] : memref<3x4x4xf32, #tpu.memory_space<vmem>>, vector<1x4x4xf32>
    %62 = vector.shape_cast %61 : vector<1x4x4xf32> to vector<4x4xf32>
    %cst_66 = arith.constant dense<0.000000e+00> : vector<4x128xf32>
    %63 = tpu.matmul %62, %54, %cst_66 {dimension_numbers = #tpu.dot_dimension_numbers<[1], [0], [0], [1], [0, 0, 1, 1], [], []>} : vector<4x4xf32>, vector<4x128xf32>, vector<4x128xf32> -> vector<4x128xf32>
    %c4 = arith.constant 4 : index
    %c0_67 = arith.constant 0 : index
    %c0_68 = arith.constant 0 : index
    %64 = vector.load %arg5[%c4, %c0_67, %c0_68] : memref<6x128x64xf32, #tpu.memory_space<vmem>>, vector<1x128x64xf32>
    %65 = vector.shape_cast %64 : vector<1x128x64xf32> to vector<128x64xf32>
    %cst_69 = arith.constant dense<0.000000e+00> : vector<4x64xf32>
    %66 = tpu.matmul %63, %65, %cst_69 {dimension_numbers = #tpu.dot_dimension_numbers<[1], [0], [0], [1], [0, 0, 1, 1], [], []>} : vector<4x128xf32>, vector<128x64xf32>, vector<4x64xf32> -> vector<4x64xf32>
    %67 = arith.addf %60, %66 : vector<4x64xf32>
    %c2_70 = arith.constant 2 : index
    %c0_71 = arith.constant 0 : index
    %c0_72 = arith.constant 0 : index
    %68 = vector.load %arg2[%c2_70, %c0_71, %c0_72] : memref<3x4x4xf32, #tpu.memory_space<vmem>>, vector<1x4x4xf32>
    %69 = vector.shape_cast %68 : vector<1x4x4xf32> to vector<4x4xf32>
    %cst_73 = arith.constant dense<0.000000e+00> : vector<4x128xf32>
    %70 = tpu.matmul %69, %54, %cst_73 {dimension_numbers = #tpu.dot_dimension_numbers<[1], [0], [0], [1], [0, 0, 1, 1], [], []>} : vector<4x4xf32>, vector<4x128xf32>, vector<4x128xf32> -> vector<4x128xf32>
    %c5 = arith.constant 5 : index
    %c0_74 = arith.constant 0 : index
    %c0_75 = arith.constant 0 : index
    %71 = vector.load %arg5[%c5, %c0_74, %c0_75] : memref<6x128x64xf32, #tpu.memory_space<vmem>>, vector<1x128x64xf32>
    %72 = vector.shape_cast %71 : vector<1x128x64xf32> to vector<128x64xf32>
    %cst_76 = arith.constant dense<0.000000e+00> : vector<4x64xf32>
    %73 = tpu.matmul %70, %72, %cst_76 {dimension_numbers = #tpu.dot_dimension_numbers<[1], [0], [0], [1], [0, 0, 1, 1], [], []>} : vector<4x128xf32>, vector<128x64xf32>, vector<4x64xf32> -> vector<4x64xf32>
    %74 = arith.addf %67, %73 : vector<4x64xf32>
    %cst_77 = arith.constant 0.000000e+00 : f32
    %75 = vector.broadcast %cst_77 : f32 to vector<4x64xf32>
    %76 = arith.maximumf %74, %75 : vector<4x64xf32>
    %c1_78 = arith.constant 1 : index
    %c0_79 = arith.constant 0 : index
    %c0_80 = arith.constant 0 : index
    %77 = vector.load %arg6[%c1_78, %c0_79, %c0_80] : memref<2x64x128xf32, #tpu.memory_space<vmem>>, vector<1x64x128xf32>
    %78 = vector.shape_cast %77 : vector<1x64x128xf32> to vector<64x128xf32>
    %cst_81 = arith.constant dense<0.000000e+00> : vector<4x128xf32>
    %79 = tpu.matmul %76, %78, %cst_81 {dimension_numbers = #tpu.dot_dimension_numbers<[1], [0], [0], [1], [0, 0, 1, 1], [], []>} : vector<4x64xf32>, vector<64x128xf32>, vector<4x128xf32> -> vector<4x128xf32>
    %80 = arith.addf %52, %79 : vector<4x128xf32>
    %cst_82 = arith.constant 0.000000e+00 : f32
    %81 = vector.broadcast %cst_82 : f32 to vector<4x128xf32>
    %82 = arith.maximumf %80, %81 : vector<4x128xf32>
    %c0_83 = arith.constant 0 : index
    %c0_84 = arith.constant 0 : index
    %83 = vector.load %arg9[%c0_83, %c0_84] : memref<1x128xf32, #tpu.memory_space<vmem>>, vector<1x128xf32>
    %c0_85 = arith.constant 0 : index
    %c0_86 = arith.constant 0 : index
    %c0_87 = arith.constant 0 : index
    %84 = vector.load %arg7[%c0_85, %c0_86, %c0_87] : memref<4x8x4xf32, #tpu.memory_space<vmem>>, vector<1x8x4xf32>
    %85 = vector.shape_cast %84 : vector<1x8x4xf32> to vector<8x4xf32>
    %cst_88 = arith.constant dense<0.000000e+00> : vector<8x128xf32>
    %86 = tpu.matmul %85, %82, %cst_88 {dimension_numbers = #tpu.dot_dimension_numbers<[1], [0], [0], [1], [0, 0, 1, 1], [], []>} : vector<8x4xf32>, vector<4x128xf32>, vector<8x128xf32> -> vector<8x128xf32>
    %c0_89 = arith.constant 0 : index
    %c0_90 = arith.constant 0 : index
    %c0_91 = arith.constant 0 : index
    %87 = vector.load %arg8[%c0_89, %c0_90, %c0_91] : memref<4x128x128xf32, #tpu.memory_space<vmem>>, vector<1x128x128xf32>
    %88 = vector.shape_cast %87 : vector<1x128x128xf32> to vector<128x128xf32>
    %cst_92 = arith.constant dense<0.000000e+00> : vector<8x128xf32>
    %89 = tpu.matmul %86, %88, %cst_92 {dimension_numbers = #tpu.dot_dimension_numbers<[1], [0], [0], [1], [0, 0, 1, 1], [], []>} : vector<8x128xf32>, vector<128x128xf32>, vector<8x128xf32> -> vector<8x128xf32>
    %c1_93 = arith.constant 1 : index
    %c0_94 = arith.constant 0 : index
    %c0_95 = arith.constant 0 : index
    %90 = vector.load %arg7[%c1_93, %c0_94, %c0_95] : memref<4x8x4xf32, #tpu.memory_space<vmem>>, vector<1x8x4xf32>
    %91 = vector.shape_cast %90 : vector<1x8x4xf32> to vector<8x4xf32>
    %cst_96 = arith.constant dense<0.000000e+00> : vector<8x128xf32>
    %92 = tpu.matmul %91, %82, %cst_96 {dimension_numbers = #tpu.dot_dimension_numbers<[1], [0], [0], [1], [0, 0, 1, 1], [], []>} : vector<8x4xf32>, vector<4x128xf32>, vector<8x128xf32> -> vector<8x128xf32>
    %c1_97 = arith.constant 1 : index
    %c0_98 = arith.constant 0 : index
    %c0_99 = arith.constant 0 : index
    %93 = vector.load %arg8[%c1_97, %c0_98, %c0_99] : memref<4x128x128xf32, #tpu.memory_space<vmem>>, vector<1x128x128xf32>
    %94 = vector.shape_cast %93 : vector<1x128x128xf32> to vector<128x128xf32>
    %cst_100 = arith.constant dense<0.000000e+00> : vector<8x128xf32>
    %95 = tpu.matmul %92, %94, %cst_100 {dimension_numbers = #tpu.dot_dimension_numbers<[1], [0], [0], [1], [0, 0, 1, 1], [], []>} : vector<8x128xf32>, vector<128x128xf32>, vector<8x128xf32> -> vector<8x128xf32>
    %96 = arith.addf %89, %95 : vector<8x128xf32>
    %c2_101 = arith.constant 2 : index
    %c0_102 = arith.constant 0 : index
    %c0_103 = arith.constant 0 : index
    %97 = vector.load %arg7[%c2_101, %c0_102, %c0_103] : memref<4x8x4xf32, #tpu.memory_space<vmem>>, vector<1x8x4xf32>
    %98 = vector.shape_cast %97 : vector<1x8x4xf32> to vector<8x4xf32>
    %cst_104 = arith.constant dense<0.000000e+00> : vector<8x128xf32>
    %99 = tpu.matmul %98, %82, %cst_104 {dimension_numbers = #tpu.dot_dimension_numbers<[1], [0], [0], [1], [0, 0, 1, 1], [], []>} : vector<8x4xf32>, vector<4x128xf32>, vector<8x128xf32> -> vector<8x128xf32>
    %c2_105 = arith.constant 2 : index
    %c0_106 = arith.constant 0 : index
    %c0_107 = arith.constant 0 : index
    %100 = vector.load %arg8[%c2_105, %c0_106, %c0_107] : memref<4x128x128xf32, #tpu.memory_space<vmem>>, vector<1x128x128xf32>
    %101 = vector.shape_cast %100 : vector<1x128x128xf32> to vector<128x128xf32>
    %cst_108 = arith.constant dense<0.000000e+00> : vector<8x128xf32>
    %102 = tpu.matmul %99, %101, %cst_108 {dimension_numbers = #tpu.dot_dimension_numbers<[1], [0], [0], [1], [0, 0, 1, 1], [], []>} : vector<8x128xf32>, vector<128x128xf32>, vector<8x128xf32> -> vector<8x128xf32>
    %103 = arith.addf %96, %102 : vector<8x128xf32>
    %c3_109 = arith.constant 3 : index
    %c0_110 = arith.constant 0 : index
    %c0_111 = arith.constant 0 : index
    %104 = vector.load %arg7[%c3_109, %c0_110, %c0_111] : memref<4x8x4xf32, #tpu.memory_space<vmem>>, vector<1x8x4xf32>
    %105 = vector.shape_cast %104 : vector<1x8x4xf32> to vector<8x4xf32>
    %cst_112 = arith.constant dense<0.000000e+00> : vector<8x128xf32>
    %106 = tpu.matmul %105, %82, %cst_112 {dimension_numbers = #tpu.dot_dimension_numbers<[1], [0], [0], [1], [0, 0, 1, 1], [], []>} : vector<8x4xf32>, vector<4x128xf32>, vector<8x128xf32> -> vector<8x128xf32>
    %c3_113 = arith.constant 3 : index
    %c0_114 = arith.constant 0 : index
    %c0_115 = arith.constant 0 : index
    %107 = vector.load %arg8[%c3_113, %c0_114, %c0_115] : memref<4x128x128xf32, #tpu.memory_space<vmem>>, vector<1x128x128xf32>
    %108 = vector.shape_cast %107 : vector<1x128x128xf32> to vector<128x128xf32>
    %cst_116 = arith.constant dense<0.000000e+00> : vector<8x128xf32>
    %109 = tpu.matmul %106, %108, %cst_116 {dimension_numbers = #tpu.dot_dimension_numbers<[1], [0], [0], [1], [0, 0, 1, 1], [], []>} : vector<8x128xf32>, vector<128x128xf32>, vector<8x128xf32> -> vector<8x128xf32>
    %110 = arith.addf %103, %109 : vector<8x128xf32>
    %111 = vector.broadcast %83 : vector<1x128xf32> to vector<8x128xf32>
    %112 = arith.addf %110, %111 : vector<8x128xf32>
    %cst_117 = arith.constant 0.000000e+00 : f32
    %113 = vector.broadcast %cst_117 : f32 to vector<8x128xf32>
    %114 = arith.maximumf %112, %113 : vector<8x128xf32>
    %c0_118 = arith.constant 0 : index
    %c0_119 = arith.constant 0 : index
    %115 = vector.load %arg12[%c0_118, %c0_119] : memref<1x16xf32, #tpu.memory_space<vmem>>, vector<1x16xf32>
    %c0_120 = arith.constant 0 : index
    %c0_121 = arith.constant 0 : index
    %c0_122 = arith.constant 0 : index
    %116 = vector.load %arg10[%c0_120, %c0_121, %c0_122] : memref<4x16x8xf32, #tpu.memory_space<vmem>>, vector<1x16x8xf32>
    %117 = vector.shape_cast %116 : vector<1x16x8xf32> to vector<16x8xf32>
    %cst_123 = arith.constant dense<0.000000e+00> : vector<16x128xf32>
    %118 = tpu.matmul %117, %114, %cst_123 {dimension_numbers = #tpu.dot_dimension_numbers<[1], [0], [0], [1], [0, 0, 1, 1], [], []>} : vector<16x8xf32>, vector<8x128xf32>, vector<16x128xf32> -> vector<16x128xf32>
    %c0_124 = arith.constant 0 : index
    %c0_125 = arith.constant 0 : index
    %c0_126 = arith.constant 0 : index
    %119 = vector.load %arg11[%c0_124, %c0_125, %c0_126] : memref<4x128x16xf32, #tpu.memory_space<vmem>>, vector<1x128x16xf32>
    %120 = vector.shape_cast %119 : vector<1x128x16xf32> to vector<128x16xf32>
    %cst_127 = arith.constant dense<0.000000e+00> : vector<16x16xf32>
    %121 = tpu.matmul %118, %120, %cst_127 {dimension_numbers = #tpu.dot_dimension_numbers<[1], [0], [0], [1], [0, 0, 1, 1], [], []>} : vector<16x128xf32>, vector<128x16xf32>, vector<16x16xf32> -> vector<16x16xf32>
    %c1_128 = arith.constant 1 : index
    %c0_129 = arith.constant 0 : index
    %c0_130 = arith.constant 0 : index
    %122 = vector.load %arg10[%c1_128, %c0_129, %c0_130] : memref<4x16x8xf32, #tpu.memory_space<vmem>>, vector<1x16x8xf32>
    %123 = vector.shape_cast %122 : vector<1x16x8xf32> to vector<16x8xf32>
    %cst_131 = arith.constant dense<0.000000e+00> : vector<16x128xf32>
    %124 = tpu.matmul %123, %114, %cst_131 {dimension_numbers = #tpu.dot_dimension_numbers<[1], [0], [0], [1], [0, 0, 1, 1], [], []>} : vector<16x8xf32>, vector<8x128xf32>, vector<16x128xf32> -> vector<16x128xf32>
    %c1_132 = arith.constant 1 : index
    %c0_133 = arith.constant 0 : index
    %c0_134 = arith.constant 0 : index
    %125 = vector.load %arg11[%c1_132, %c0_133, %c0_134] : memref<4x128x16xf32, #tpu.memory_space<vmem>>, vector<1x128x16xf32>
    %126 = vector.shape_cast %125 : vector<1x128x16xf32> to vector<128x16xf32>
    %cst_135 = arith.constant dense<0.000000e+00> : vector<16x16xf32>
    %127 = tpu.matmul %124, %126, %cst_135 {dimension_numbers = #tpu.dot_dimension_numbers<[1], [0], [0], [1], [0, 0, 1, 1], [], []>} : vector<16x128xf32>, vector<128x16xf32>, vector<16x16xf32> -> vector<16x16xf32>
    %128 = arith.addf %121, %127 : vector<16x16xf32>
    %c2_136 = arith.constant 2 : index
    %c0_137 = arith.constant 0 : index
    %c0_138 = arith.constant 0 : index
    %129 = vector.load %arg10[%c2_136, %c0_137, %c0_138] : memref<4x16x8xf32, #tpu.memory_space<vmem>>, vector<1x16x8xf32>
    %130 = vector.shape_cast %129 : vector<1x16x8xf32> to vector<16x8xf32>
    %cst_139 = arith.constant dense<0.000000e+00> : vector<16x128xf32>
    %131 = tpu.matmul %130, %114, %cst_139 {dimension_numbers = #tpu.dot_dimension_numbers<[1], [0], [0], [1], [0, 0, 1, 1], [], []>} : vector<16x8xf32>, vector<8x128xf32>, vector<16x128xf32> -> vector<16x128xf32>
    %c2_140 = arith.constant 2 : index
    %c0_141 = arith.constant 0 : index
    %c0_142 = arith.constant 0 : index
    %132 = vector.load %arg11[%c2_140, %c0_141, %c0_142] : memref<4x128x16xf32, #tpu.memory_space<vmem>>, vector<1x128x16xf32>
    %133 = vector.shape_cast %132 : vector<1x128x16xf32> to vector<128x16xf32>
    %cst_143 = arith.constant dense<0.000000e+00> : vector<16x16xf32>
    %134 = tpu.matmul %131, %133, %cst_143 {dimension_numbers = #tpu.dot_dimension_numbers<[1], [0], [0], [1], [0, 0, 1, 1], [], []>} : vector<16x128xf32>, vector<128x16xf32>, vector<16x16xf32> -> vector<16x16xf32>
    %135 = arith.addf %128, %134 : vector<16x16xf32>
    %c3_144 = arith.constant 3 : index
    %c0_145 = arith.constant 0 : index
    %c0_146 = arith.constant 0 : index
    %136 = vector.load %arg10[%c3_144, %c0_145, %c0_146] : memref<4x16x8xf32, #tpu.memory_space<vmem>>, vector<1x16x8xf32>
    %137 = vector.shape_cast %136 : vector<1x16x8xf32> to vector<16x8xf32>
    %cst_147 = arith.constant dense<0.000000e+00> : vector<16x128xf32>
    %138 = tpu.matmul %137, %114, %cst_147 {dimension_numbers = #tpu.dot_dimension_numbers<[1], [0], [0], [1], [0, 0, 1, 1], [], []>} : vector<16x8xf32>, vector<8x128xf32>, vector<16x128xf32> -> vector<16x128xf32>
    %c3_148 = arith.constant 3 : index
    %c0_149 = arith.constant 0 : index
    %c0_150 = arith.constant 0 : index
    %139 = vector.load %arg11[%c3_148, %c0_149, %c0_150] : memref<4x128x16xf32, #tpu.memory_space<vmem>>, vector<1x128x16xf32>
    %140 = vector.shape_cast %139 : vector<1x128x16xf32> to vector<128x16xf32>
    %cst_151 = arith.constant dense<0.000000e+00> : vector<16x16xf32>
    %141 = tpu.matmul %138, %140, %cst_151 {dimension_numbers = #tpu.dot_dimension_numbers<[1], [0], [0], [1], [0, 0, 1, 1], [], []>} : vector<16x128xf32>, vector<128x16xf32>, vector<16x16xf32> -> vector<16x16xf32>
    %142 = arith.addf %135, %141 : vector<16x16xf32>
    %143 = vector.broadcast %115 : vector<1x16xf32> to vector<16x16xf32>
    %144 = arith.addf %142, %143 : vector<16x16xf32>
    %c0_152 = arith.constant 0 : index
    %c0_153 = arith.constant 0 : index
    %c0_154 = arith.constant 0 : index
    %145 = vector.load %arg13[%c0_152, %c0_153, %c0_154] : memref<1x16x16xf32, #tpu.memory_space<vmem>>, vector<1x16x16xf32>
    %146 = vector.shape_cast %145 : vector<1x16x16xf32> to vector<16x16xf32>
    %147 = vector.shape_cast %144 : vector<16x16xf32> to vector<1x16x16xf32>
    tpu.vector_store %arg13[%c0_152, %c0_153, %c0_154], %147 {strides = array<i32>} : memref<1x16x16xf32, #tpu.memory_space<vmem>>, vector<1x16x16xf32>,
    return
  }
  func.func @transform_0(%arg0: i32) -> (i32, i32, i32) {
    %c0_i32 = arith.constant 0 : i32
    %c0_i32_0 = arith.constant 0 : i32
    %c0_i32_1 = arith.constant 0 : i32
    return %arg0, %c0_i32, %c0_i32_0 : i32, i32, i32
  }
  func.func @transform_1(%arg0: i32) -> (i32, i32, i32) {
    %c0_i32 = arith.constant 0 : i32
    %c0_i32_0 = arith.constant 0 : i32
    %c0_i32_1 = arith.constant 0 : i32
    %c0_i32_2 = arith.constant 0 : i32
    return %c0_i32, %c0_i32_0, %c0_i32_1 : i32, i32, i32
  }
  func.func @transform_2(%arg0: i32) -> (i32, i32, i32) {
    %c0_i32 = arith.constant 0 : i32
    %c0_i32_0 = arith.constant 0 : i32
    %c0_i32_1 = arith.constant 0 : i32
    %c0_i32_2 = arith.constant 0 : i32
    return %c0_i32, %c0_i32_0, %c0_i32_1 : i32, i32, i32
  }
  func.func @transform_3(%arg0: i32) -> (i32, i32) {
    %c0_i32 = arith.constant 0 : i32
    %c0_i32_0 = arith.constant 0 : i32
    %c0_i32_1 = arith.constant 0 : i32
    return %c0_i32, %c0_i32_0 : i32, i32
  }
  func.func @transform_4(%arg0: i32) -> (i32, i32, i32) {
    %c0_i32 = arith.constant 0 : i32
    %c0_i32_0 = arith.constant 0 : i32
    %c0_i32_1 = arith.constant 0 : i32
    %c0_i32_2 = arith.constant 0 : i32
    return %c0_i32, %c0_i32_0, %c0_i32_1 : i32, i32, i32
  }
  func.func @transform_5(%arg0: i32) -> (i32, i32, i32) {
    %c0_i32 = arith.constant 0 : i32
    %c0_i32_0 = arith.constant 0 : i32
    %c0_i32_1 = arith.constant 0 : i32
    %c0_i32_2 = arith.constant 0 : i32
    return %c0_i32, %c0_i32_0, %c0_i32_1 : i32, i32, i32
  }
  func.func @transform_6(%arg0: i32) -> (i32, i32, i32) {
    %c0_i32 = arith.constant 0 : i32
    %c0_i32_0 = arith.constant 0 : i32
    %c0_i32_1 = arith.constant 0 : i32
    %c0_i32_2 = arith.constant 0 : i32
    return %c0_i32, %c0_i32_0, %c0_i32_1 : i32, i32, i32
  }
  func.func @transform_7(%arg0: i32) -> (i32, i32, i32) {
    %c0_i32 = arith.constant 0 : i32
    %c0_i32_0 = arith.constant 0 : i32
    %c0_i32_1 = arith.constant 0 : i32
    %c0_i32_2 = arith.constant 0 : i32
    return %c0_i32, %c0_i32_0, %c0_i32_1 : i32, i32, i32
  }
  func.func @transform_8(%arg0: i32) -> (i32, i32) {
    %c0_i32 = arith.constant 0 : i32
    %c0_i32_0 = arith.constant 0 : i32
    %c0_i32_1 = arith.constant 0 : i32
    return %c0_i32, %c0_i32_0 : i32, i32
  }
  func.func @transform_9(%arg0: i32) -> (i32, i32, i32) {
    %c0_i32 = arith.constant 0 : i32
    %c0_i32_0 = arith.constant 0 : i32
    %c0_i32_1 = arith.constant 0 : i32
    %c0_i32_2 = arith.constant 0 : i32
    return %c0_i32, %c0_i32_0, %c0_i32_1 : i32, i32, i32
  }
  func.func @transform_10(%arg0: i32) -> (i32, i32, i32) {
    %c0_i32 = arith.constant 0 : i32
    %c0_i32_0 = arith.constant 0 : i32
    %c0_i32_1 = arith.constant 0 : i32
    %c0_i32_2 = arith.constant 0 : i32
    return %c0_i32, %c0_i32_0, %c0_i32_1 : i32, i32, i32
  }
  func.func @transform_11(%arg0: i32) -> (i32, i32) {
    %c0_i32 = arith.constant 0 : i32
    %c0_i32_0 = arith.constant 0 : i32
    %c0_i32_1 = arith.constant 0 : i32
    return %c0_i32, %c0_i32_0 : i32, i32
  }
  func.func @transform_12(%arg0: i32) -> (i32, i32, i32) {
    %c0_i32 = arith.constant 0 : i32
    %c0_i32_0 = arith.constant 0 : i32
    %c0_i32_1 = arith.constant 0 : i32
    return %arg0, %c0_i32, %c0_i32_0 : i32, i32, i32
  }
}

</mosaic_0001>

<llo_original>
// kernel: tile.38
$region0: #{tile.38}
  #allocation0 [shape = 's32[1]{0}', space=sflag, size = 0x4, scoped, tag = 'scoped memory for tile.38']
  %s0 = inlined_call_operand.vmem [shape: f32[16], index: 0, kind: input, shape index: {}]
  %s1 = inlined_call_operand.vmem [shape: f32[8,16], index: 1, kind: output, shape index: {}]
  // Predicated region
  $region2: #{tile.38} parent=0 // pred_check
    _
  $region3: #{tile.38} parent=0 // pred_check_branch
    %3 = sbr.rel (0) target = $region5
  $region4: #{tile.38} parent=0 // pred_region
    _
  $region5: #{tile.38} parent=0 // pred_fallthru
    _
  %v4 = vld [vmem:[%s0] ss:$0 sm:$0xff]
  %5 = vst [vmem:[%s1] sm:$0xff] %v4

// kernel: tile.39
$region0: #{tile.39}
  %s0 = inlined_call_operand.vmem [shape: f32[8,16], index: 0, kind: input, shape index: {}]
  %s1 = inlined_call_operand.vmem [shape: f32[1,128], index: 1, kind: output, shape index: {}]
  $region1: #{tile.39} parent=0
    #allocation0 [shape = 'u8[4096]{0}', space=vmem, size = 0x1000, scoped, tag = 'scoped mem for output reshape']
    %v2 = vld [vmem:[%s0] sm:$0x1]
    %vm3 = vcmask 130048
    %4 = vst.msk [vmem:[#allocation0] sm:$0x1] %vm3, %v2
    %s5 = scalar_lea.vmem %s0, 7
    %v6 = vld [vmem:[%s5] sm:$0x1]
    %7 = vrot.lane.b32.xlu0 %v6, 112
    %v8 = vpop.permute.xlu0 %7
    %vm9 = vcmask 1048448
    %10 = vst.msk [vmem:[#allocation0] sm:$0x1] %vm9, %v8
    %s11 = scalar_lea.vmem %s0, 6
    %v12 = vld [vmem:[%s11] sm:$0x1]
    %13 = vrot.lane.b32.xlu0 %v12, 96
    %v14 = vpop.permute.xlu0 %13
    %vm15 = vcmask 917248
    %16 = vst.msk [vmem:[#allocation0] sm:$0x1] %vm15, %v14
    %s17 = scalar_lea.vmem %s0, 5
    %v18 = vld [vmem:[%s17] sm:$0x1]
    %19 = vrot.lane.b32.xlu0 %v18, 80
    %v20 = vpop.permute.xlu0 %19
    %vm21 = vcmask 786048
    %22 = vst.msk [vmem:[#allocation0] sm:$0x1] %vm21, %v20
    %s23 = scalar_lea.vmem %s0, 4
    %v24 = vld [vmem:[%s23] sm:$0x1]
    %25 = vrot.lane.b32.xlu0 %v24, 64
    %v26 = vpop.permute.xlu0 %25
    %vm27 = vcmask 654848
    %28 = vst.msk [vmem:[#allocation0] sm:$0x1] %vm27, %v26
    %s29 = scalar_lea.vmem %s0, 3
    %v30 = vld [vmem:[%s29] sm:$0x1]
    %31 = vrot.lane.b32.xlu0 %v30, 48
    %v32 = vpop.permute.xlu0 %31
    %vm33 = vcmask 523648
    %34 = vst.msk [vmem:[#allocation0] sm:$0x1] %vm33, %v32
    %s35 = scalar_lea.vmem %s0, 2
    %v36 = vld [vmem:[%s35] sm:$0x1]
    %37 = vrot.lane.b32.xlu0 %v36, 32
    %v38 = vpop.permute.xlu0 %37
    %vm39 = vcmask 392448
    %40 = vst.msk [vmem:[#allocation0] sm:$0x1] %vm39, %v38
    %s41 = scalar_lea.vmem %s0, 1
    %v42 = vld [vmem:[%s41] sm:$0x1]
    %43 = vrot.lane.b32.xlu0 %v42, 16
    %v44 = vpop.permute.xlu0 %43
    %vm45 = vcmask 261248
    %46 = vst.msk [vmem:[#allocation0] sm:$0x1] %vm45, %v44
    %s48 = sshllo.u32 0, 1
    %v50 = vld [vmem:[#allocation0] sm:%s48]
    %s51 = sshllo.u32 0, 1
    %52 = vst [vmem:[%s1] sm:%s51] %v50

// kernel: tile.43
$region0: #{tile.43}
  #allocation0 [shape = 's32[1]{0}', space=sflag, size = 0x4, scoped, tag = 'scoped memory for tile.43']
  %s0 = inlined_call_operand.vmem [shape: f32[32], index: 0, kind: input, shape index: {}]
  %s1 = inlined_call_operand.vmem [shape: f32[4,32], index: 1, kind: output, shape index: {}]
  // Predicated region
  $region2: #{tile.43} parent=0 // pred_check
    _
  $region3: #{tile.43} parent=0 // pred_check_branch
    %3 = sbr.rel (0) target = $region5
  $region4: #{tile.43} parent=0 // pred_region
    _
  $region5: #{tile.43} parent=0 // pred_fallthru
    _
  %v4 = vld [vmem:[%s0] ss:$0 sm:$0xff]
  %5 = vst [vmem:[%s1] sm:$0xf] %v4

// kernel: tile.44
$region0: #{tile.44}
  %s0 = inlined_call_operand.vmem [shape: f32[4,32], index: 0, kind: input, shape index: {}]
  %s1 = inlined_call_operand.vmem [shape: f32[1,128], index: 1, kind: output, shape index: {}]
  $region1: #{tile.44} parent=0
    #allocation0 [shape = 'u8[4096]{0}', space=vmem, size = 0x1000, scoped, tag = 'scoped mem for output reshape']
    #allocation1 [shape = 'u8[4096]{0}', space=vmem, size = 0x1000, scoped, tag = 'scoped mem for input reshape']
    %s3 = sshllo.u32 0, 4
    %v4 = vld [vmem:[%s0] sm:%s3]
    %5 = vst [vmem:[#allocation1] sm:%s3] %v4
    %v6 = vld [vmem:[#allocation1] sm:$0x1]
    %vm7 = vcmask 261120
    %8 = vst.msk [vmem:[#allocation0] sm:$0x1] %vm7, %v6
    %s9 = scalar_lea.vmem [#allocation1], 3
    %v10 = vld [vmem:[%s9] sm:$0x1]
    %11 = vrot.lane.b32.xlu0 %v10, 96
    %v12 = vpop.permute.xlu0 %11
    %vm13 = vcmask 1048320
    %14 = vst.msk [vmem:[#allocation0] sm:$0x1] %vm13, %v12
    %s15 = scalar_lea.vmem [#allocation1], 2
    %v16 = vld [vmem:[%s15] sm:$0x1]
    %17 = vrot.lane.b32.xlu0 %v16, 64
    %v18 = vpop.permute.xlu0 %17
    %vm19 = vcmask 785920
    %20 = vst.msk [vmem:[#allocation0] sm:$0x1] %vm19, %v18
    %s21 = scalar_lea.vmem [#allocation1], 1
    %v22 = vld [vmem:[%s21] sm:$0x1]
    %23 = vrot.lane.b32.xlu0 %v22, 32
    %v24 = vpop.permute.xlu0 %23
    %vm25 = vcmask 523520
    %26 = vst.msk [vmem:[#allocation0] sm:$0x1] %vm25, %v24
    %s28 = sshllo.u32 0, 1
    %v30 = vld [vmem:[#allocation0] sm:%s28]
    %s31 = sshllo.u32 0, 1
    %32 = vst [vmem:[%s1] sm:%s31] %v30

// kernel: tile.53
$region0: #{tile.53}
  #allocation0 [shape = 's32[1]{0}', space=sflag, size = 0x4, scoped, tag = 'scoped memory for tile.53']
  %s0 = inlined_call_operand.vmem [shape: f32[16], index: 0, kind: input, shape index: {}]
  %s1 = inlined_call_operand.vmem [shape: f32[4,16], index: 1, kind: output, shape index: {}]
  // Predicated region
  $region2: #{tile.53} parent=0 // pred_check
    _
  $region3: #{tile.53} parent=0 // pred_check_branch
    %3 = sbr.rel (0) target = $region5
  $region4: #{tile.53} parent=0 // pred_region
    _
  $region5: #{tile.53} parent=0 // pred_fallthru
    _
  %v4 = vld [vmem:[%s0] ss:$0 sm:$0xff]
  %5 = vst [vmem:[%s1] sm:$0xf] %v4

// kernel: tile.54
$region0: #{tile.54}
  %s0 = inlined_call_operand.vmem [shape: f32[4,16], index: 0, kind: input, shape index: {}]
  %s1 = inlined_call_operand.vmem [shape: f32[1,64], index: 1, kind: output, shape index: {}]
  $region1: #{tile.54} parent=0
    #allocation0 [shape = 'u8[4096]{0}', space=vmem, size = 0x1000, scoped, tag = 'scoped mem for output reshape']
    #allocation1 [shape = 'u8[4096]{0}', space=vmem, size = 0x1000, scoped, tag = 'scoped mem for input reshape']
    %s3 = sshllo.u32 0, 4
    %v4 = vld [vmem:[%s0] sm:%s3]
    %5 = vst [vmem:[#allocation1] sm:%s3] %v4
    %v6 = vld [vmem:[#allocation1] sm:$0x1]
    %vm7 = vcmask 130048
    %8 = vst.msk [vmem:[#allocation0] sm:$0x1] %vm7, %v6
    %s9 = scalar_lea.vmem [#allocation1], 3
    %v10 = vld [vmem:[%s9] sm:$0x1]
    %11 = vrot.lane.b32.xlu0 %v10, 48
    %v12 = vpop.permute.xlu0 %11
    %vm13 = vcmask 523648
    %14 = vst.msk [vmem:[#allocation0] sm:$0x1] %vm13, %v12
    %s15 = scalar_lea.vmem [#allocation1], 2
    %v16 = vld [vmem:[%s15] sm:$0x1]
    %17 = vrot.lane.b32.xlu0 %v16, 32
    %v18 = vpop.permute.xlu0 %17
    %vm19 = vcmask 392448
    %20 = vst.msk [vmem:[#allocation0] sm:$0x1] %vm19, %v18
    %s21 = scalar_lea.vmem [#allocation1], 1
    %v22 = vld [vmem:[%s21] sm:$0x1]
    %23 = vrot.lane.b32.xlu0 %v22, 16
    %v24 = vpop.permute.xlu0 %23
    %vm25 = vcmask 261248
    %26 = vst.msk [vmem:[#allocation0] sm:$0x1] %vm25, %v24
    %s28 = sshllo.u32 0, 1
    %v30 = vld [vmem:[#allocation0] sm:%s28]
    %s31 = sshllo.u32 0, 1
    %32 = vst [vmem:[%s1] sm:%s31] %v30

// kernel: vqvae_forward.4
$region0: #{vqvae_forward.4}
  #allocation0 [shape = 'u32[]', space=smem, size = 0x4, offset = 0x4, fixed_abs, tag = 'smem constant byte address 0x4 - core index']
  #allocation1 [shape = 'u32[144,128]{1,0:T(1,128)}', space=vmem, size = 0x12000, scoped, tag = 'internal scratch']
  %s0 = inlined_call_operand.vmem [shape: f32[32,16], index: 0, kind: input, shape index: {}]
  %s1 = inlined_call_operand.vmem [shape: f32[32,16], index: 1, kind: input, shape index: {}]
  %s2 = inlined_call_operand.vmem [shape: f32[16,32], index: 2, kind: input, shape index: {}]
  %s3 = inlined_call_operand.vmem [shape: f32[1,32], index: 3, kind: input, shape index: {}]
  %s4 = inlined_call_operand.vmem [shape: f32[16,16], index: 4, kind: input, shape index: {}]
  %s5 = inlined_call_operand.vmem [shape: f32[1,16], index: 5, kind: input, shape index: {}]
  %s6 = inlined_call_operand.vmem [shape: f32[32,16], index: 6, kind: output, shape index: {0}]
  %s7 = inlined_call_operand.hbm [shape: f32[32,32], index: 7, kind: output, shape index: {1}]
  %s8 = inlined_call_operand.hbm [shape: f32[1,1], index: 8, kind: output, shape index: {2}]
  %s9 = inlined_call_operand.hbm [shape: f32[1,1], index: 9, kind: output, shape index: {3}]
  %10 = xla_tuple %s6, %s7, %s8, %s9
  %s11 = sld [smem:[#allocation0]]
  $region58: #{vqvae_forward.4} parent=0
    _
  %s13 = ssub.s32 1, %s11
  %s14 = scalar_select 0, %s13, %s11
  $region1: #{vqvae_forward.4} parent=0
    #allocation2 [shape = 'u8[16384]{0}', space=vmem, size = 0x4000, scoped, tag = 'output window, operand 1, single buffered']
    #allocation3 [shape = 's32[1]{0}', space=sflag, size = 0x4, scoped, tag = 'scoped memory for vqvae_forward.4']
    #allocation4 [shape = 'u8[512]{0}', space=vmem, size = 0x400, scoped, tag = 'output window, operand 2, single buffered']
    #allocation5 [shape = 's32[1]{0}', space=sflag, size = 0x4, scoped, tag = 'scoped memory for vqvae_forward.4']
    #allocation6 [shape = 'u8[512]{0}', space=vmem, size = 0x400, scoped, tag = 'output window, operand 3, single buffered']
    %15 = vsyncpa [#allocation3], 0
    %16 = vsyncpa [#allocation5], 0
    // Predicated region
    $region2: #{vqvae_forward.4} parent=1 // pred_check
      _
    $region3: #{vqvae_forward.4} parent=1 // pred_check_branch
      %18 = sbr.rel (0) target = $region5
    $region4: #{vqvae_forward.4} parent=1 // pred_region
      _
    $region5: #{vqvae_forward.4} parent=1 // pred_fallthru
      _
    // Predicated region
    $region6: #{vqvae_forward.4} parent=1 // pred_check
      _
    $region7: #{vqvae_forward.4} parent=1 // pred_check_branch
      %20 = sbr.rel (0) target = $region9
    $region8: #{vqvae_forward.4} parent=1 // pred_region
      _
    $region9: #{vqvae_forward.4} parent=1 // pred_fallthru
      _
    // Predicated region
    $region10: #{vqvae_forward.4} parent=1 // pred_check
      _
    $region11: #{vqvae_forward.4} parent=1 // pred_check_branch
      %22 = sbr.rel (0) target = $region13
    $region12: #{vqvae_forward.4} parent=1 // pred_region
      _
    $region13: #{vqvae_forward.4} parent=1 // pred_fallthru
      _
    // Predicated region
    $region14: #{vqvae_forward.4} parent=1 // pred_check
      _
    $region15: #{vqvae_forward.4} parent=1 // pred_check_branch
      %24 = sbr.rel (0) target = $region17
    $region16: #{vqvae_forward.4} parent=1 // pred_region
      _
    $region17: #{vqvae_forward.4} parent=1 // pred_fallthru
      _
    // Predicated region
    $region18: #{vqvae_forward.4} parent=1 // pred_check
      _
    $region19: #{vqvae_forward.4} parent=1 // pred_check_branch
      %26 = sbr.rel (0) target = $region21
    $region20: #{vqvae_forward.4} parent=1 // pred_region
      _
    $region21: #{vqvae_forward.4} parent=1 // pred_fallthru
      _
    // Predicated region
    $region22: #{vqvae_forward.4} parent=1 // pred_check
      _
    $region23: #{vqvae_forward.4} parent=1 // pred_check_branch
      %28 = sbr.rel (0) target = $region25
    $region24: #{vqvae_forward.4} parent=1 // pred_region
      _
    $region25: #{vqvae_forward.4} parent=1 // pred_fallthru
      _
    %v29 = vld [vmem:[%s0] sm:$0xff]
    %v30 = vld [vmem:[%s0 + $0x8] sm:$0xff]
    %v31 = vld [vmem:[%s0 + $0x10] sm:$0xff]
    %v32 = vld [vmem:[%s0 + $0x18] sm:$0xff]
    %v33 = vld [vmem:[%s2] sm:$0xff]
    %v34 = vld [vmem:[%s2 + $0x8] sm:$0xff]
    %vm35 = vcmask 130048
    %v37 = vsel %vm35, %v29, 0
    %v40 = vsel %vm35, %v30, 0
    %v43 = vsel %vm35, %v31, 0
    %v46 = vsel %vm35, %v32, 0
    %48 = vmatprep.subr.mxu0 0.0
    %49 = vmatpush1.msra.mxu0 %v33
    %50 = vmatprep.subr.mxu0 0.0
    %51 = vmatpush1.msra.mxu0 %v34
    %52 = vmatprep.subr.mxu0 0.0
    %53 = vmatpush1.msra.mxu0 0.0
    %54 = vmatprep.subr.mxu0 0.0
    %55 = vmatpush1.msra.mxu0 0.0
    %56 = vmatprep.subr.mxu0 0.0
    %57 = vmatpush1.msra.mxu0 0.0
    %58 = vmatprep.subr.mxu0 0.0
    %59 = vmatpush1.msra.mxu0 0.0
    %60 = vmatprep.subr.mxu0 0.0
    %61 = vmatpush1.msra.mxu0 0.0
    %62 = vmatprep.subr.mxu0 0.0
    %63 = vmatpush1.msra.mxu0 0.0
    %64 = vmatprep.subr.mxu0 0.0
    %65 = vmatpush1.msra.mxu0 0.0
    %66 = vmatprep.subr.mxu0 0.0
    %67 = vmatpush1.msra.mxu0 0.0
    %68 = vmatprep.subr.mxu0 0.0
    %69 = vmatpush1.msra.mxu0 0.0
    %70 = vmatprep.subr.mxu0 0.0
    %71 = vmatpush1.msra.mxu0 0.0
    %72 = vmatprep.subr.mxu0 0.0
    %73 = vmatpush1.msra.mxu0 0.0
    %74 = vmatprep.subr.mxu0 0.0
    %75 = vmatpush1.msra.mxu0 0.0
    %76 = vmatprep.subr.mxu0 0.0
    %77 = vmatpush1.msra.mxu0 0.0
    %78 = vmatprep.subr.mxu0 0.0
    %79 = vmatpush1.msra.mxu0 0.0
    %80 = vmatprep.subr.mxu0 0.0
    %81 = vmatpush1.msra.mxu0 0.0
    %82 = vmatprep.subr.mxu0 0.0
    %83 = vmatpush1.msra.mxu0 0.0
    %84 = vmatprep.subr.mxu0 0.0
    %85 = vmatpush1.msra.mxu0 0.0
    %86 = vmatprep.subr.mxu0 0.0
    %87 = vmatpush1.msra.mxu0 0.0
    %88 = vmatprep.subr.mxu0 0.0
    %89 = vmatpush1.msra.mxu0 0.0
    %90 = vmatprep.subr.mxu0 0.0
    %91 = vmatpush1.msra.mxu0 0.0
    %92 = vmatprep.subr.mxu0 0.0
    %93 = vmatpush1.msra.mxu0 0.0
    %94 = vmatprep.subr.mxu0 0.0
    %95 = vmatpush1.msra.mxu0 0.0
    %96 = vmatprep.subr.mxu0 0.0
    %97 = vmatpush1.msra.mxu0 0.0
    %98 = vmatprep.subr.mxu0 0.0
    %99 = vmatpush1.msra.mxu0 0.0
    %100 = vmatprep.subr.mxu0 0.0
    %101 = vmatpush1.msra.mxu0 0.0
    %102 = vmatprep.subr.mxu0 0.0
    %103 = vmatpush1.msra.mxu0 0.0
    %104 = vmatprep.subr.mxu0 0.0
    %105 = vmatpush1.msra.mxu0 0.0
    %106 = vmatprep.subr.mxu0 0.0
    %107 = vmatpush1.msra.mxu0 0.0
    %108 = vmatprep.subr.mxu0 0.0
    %109 = vmatpush1.msra.mxu0 0.0
    %110 = vmatprep.subr.mxu0 0.0
    %111 = vmatpush1.msra.mxu0 0.0
    %112 = vmatprep.mubr.f32.mxu0 0.0
    %113 = vmatmul.mubr.f32.gmra.mrb[0].mxu0 %v37
    %v114 = vpop.f32.mrb[0].mxu0
    %v115 = vadd.f32 0.0, %v114
    %v116 = vpop.f32.mrb[0].mxu0
    %117 = vmatprep.mubr.f32.mxu0 0.0
    %118 = vmatmul.mubr.f32.gmra.mrb[0].mxu0 %v40
    %v119 = vpop.f32.mrb[0].mxu0
    %v120 = vadd.f32 0.0, %v119
    %v121 = vpop.f32.mrb[0].mxu0
    %122 = vmatprep.mubr.f32.mxu0 0.0
    %123 = vmatmul.mubr.f32.gmra.mrb[0].mxu0 %v43
    %v124 = vpop.f32.mrb[0].mxu0
    %v125 = vadd.f32 0.0, %v124
    %v126 = vpop.f32.mrb[0].mxu0
    %127 = vmatprep.mubr.f32.mxu0 0.0
    %128 = vmatmul.mubr.f32.gmra.mrb[0].mxu0 %v46
    %v129 = vpop.f32.mrb[0].mxu0
    %v130 = vadd.f32 0.0, %v129
    %v131 = vpop.f32.mrb[0].mxu0
    %132 = vdwg.mxu0
    %v133 = vld [vmem:[%s3] sm:$0x1]
    %v134 = vmul.f32 %v115, 2.0
    %v135 = vmul.f32 %v120, 2.0
    %v136 = vmul.f32 %v125, 2.0
    %v137 = vmul.f32 %v130, 2.0
    %v139 = vlaneseq
    %v140 = vshrl.u32 %v139, 7
    %v141 = vsub.s32 0, %v140
    %v142 = vrot.slane %v133, %v141
    %v144 = vsub.f32 %v142, %v134
    %v145 = vsub.f32 %v142, %v135
    %v146 = vsub.f32 %v142, %v136
    %v147 = vsub.f32 %v142, %v137
    %v148 = vlaneseq
    %v149 = vand.u32 %v148, 127
    %vm150 = vcmask 261120
    %v151 = vsel %vm150, %v144, inf
    %152 = vmin.xlane.f32.xlu0 %v151
    %v153 = vpop.xlane.xlu0 %152
    %v154 = vsel %vm150, %v145, inf
    %155 = vmin.xlane.f32.xlu0 %v154
    %v156 = vpop.xlane.xlu0 %155
    %v157 = vsel %vm150, %v146, inf
    %158 = vmin.xlane.f32.xlu0 %v157
    %v159 = vpop.xlane.xlu0 %158
    %v160 = vsel %vm150, %v147, inf
    %161 = vmin.xlane.f32.xlu0 %v160
    %v162 = vpop.xlane.xlu0 %161
    %vm163 = vcmp.le.f32.partialorder %v144, %v153
    %vm164 = vcmp.le.f32.partialorder %v145, %v156
    %vm165 = vcmp.le.f32.partialorder %v146, %v159
    %vm166 = vcmp.le.f32.partialorder %v147, %v162
    %v167 = vsel %vm163, %v149, 32
    %v168 = vsel %vm164, %v149, 32
    %v169 = vsel %vm165, %v149, 32
    %v170 = vsel %vm166, %v149, 32
    %v171 = vsel %vm150, %v167, 2147483647
    %v172 = vand.u32 %v171, 65535
    %v173 = vshra.s32 %v171, 16
    %v174 = vcvt.s32.f32 %v172
    %v175 = vcvt.s32.f32 %v173
    %176 = vmin.xlane.f32.xlu0 %v175
    %v177 = vpop.xlane.xlu0 %176
    %vm178 = vcmp.eq.f32.partialorder %v175, %v177
    %v179 = vsel %vm178, %v174, inf
    %180 = vmin.xlane.f32.xlu0 %v179
    %v181 = vpop.xlane.xlu0 %180
    %v182 = vcvt.f32.s32 %v181
    %v183 = vcvt.f32.s32 %v177
    %v184 = vshll.u32 %v183, 16
    %v185 = vadd.s32 %v184, %v182
    %v186 = vsel %vm150, %v168, 2147483647
    %v187 = vand.u32 %v186, 65535
    %v188 = vshra.s32 %v186, 16
    %v189 = vcvt.s32.f32 %v187
    %v190 = vcvt.s32.f32 %v188
    %191 = vmin.xlane.f32.xlu0 %v190
    %v192 = vpop.xlane.xlu0 %191
    %vm193 = vcmp.eq.f32.partialorder %v190, %v192
    %v194 = vsel %vm193, %v189, inf
    %195 = vmin.xlane.f32.xlu0 %v194
    %v196 = vpop.xlane.xlu0 %195
    %v197 = vcvt.f32.s32 %v196
    %v198 = vcvt.f32.s32 %v192
    %v199 = vshll.u32 %v198, 16
    %v200 = vadd.s32 %v199, %v197
    %v201 = vsel %vm150, %v169, 2147483647
    %v202 = vand.u32 %v201, 65535
    %v203 = vshra.s32 %v201, 16
    %v204 = vcvt.s32.f32 %v202
    %v205 = vcvt.s32.f32 %v203
    %206 = vmin.xlane.f32.xlu0 %v205
    %v207 = vpop.xlane.xlu0 %206
    %vm208 = vcmp.eq.f32.partialorder %v205, %v207
    %v209 = vsel %vm208, %v204, inf
    %210 = vmin.xlane.f32.xlu0 %v209
    %v211 = vpop.xlane.xlu0 %210
    %v212 = vcvt.f32.s32 %v211
    %v213 = vcvt.f32.s32 %v207
    %v214 = vshll.u32 %v213, 16
    %v215 = vadd.s32 %v214, %v212
    %v216 = vsel %vm150, %v170, 2147483647
    %v217 = vand.u32 %v216, 65535
    %v218 = vshra.s32 %v216, 16
    %v219 = vcvt.s32.f32 %v217
    %v220 = vcvt.s32.f32 %v218
    %221 = vmin.xlane.f32.xlu0 %v220
    %v222 = vpop.xlane.xlu0 %221
    %vm223 = vcmp.eq.f32.partialorder %v220, %v222
    %v224 = vsel %vm223, %v219, inf
    %225 = vmin.xlane.f32.xlu0 %v224
    %v226 = vpop.xlane.xlu0 %225
    %v227 = vcvt.f32.s32 %v226
    %v228 = vcvt.f32.s32 %v222
    %v229 = vshll.u32 %v228, 16
    %v230 = vadd.s32 %v229, %v227
    %vm231 = vcmp.eq.s32.totalorder %v149, %v185
    %vm232 = vcmp.eq.s32.totalorder %v149, %v200
    %vm233 = vcmp.eq.s32.totalorder %v149, %v215
    %vm234 = vcmp.eq.s32.totalorder %v149, %v230
    %v235 = vsel %vm231, 1, 0
    %v236 = vsel %vm232, 1, 0
    %v237 = vsel %vm233, 1, 0
    %v238 = vsel %vm234, 1, 0
    %v239 = vcvt.s32.f32 %v235
    %v240 = vcvt.s32.f32 %v236
    %v241 = vcvt.s32.f32 %v237
    %v242 = vcvt.s32.f32 %v238
    %v243 = vld [vmem:[%s1] sm:$0xff]
    %v244 = vld [vmem:[%s1 + $0x8] sm:$0xff]
    %v245 = vld [vmem:[%s1 + $0x10] sm:$0xff]
    %v246 = vld [vmem:[%s1 + $0x18] sm:$0xff]
    %v248 = vsel %vm150, %v239, 0
    %v251 = vsel %vm150, %v240, 0
    %v254 = vsel %vm150, %v241, 0
    %v257 = vsel %vm150, %v242, 0
    %259 = vmatprep.subr.mxu0 0.0
    %260 = vmatpush1.msra.mxu0 %v243
    %261 = vmatprep.subr.mxu0 0.0
    %262 = vmatpush1.msra.mxu0 %v244
    %263 = vmatprep.subr.mxu0 0.0
    %264 = vmatpush1.msra.mxu0 %v245
    %265 = vmatprep.subr.mxu0 0.0
    %266 = vmatpush1.msra.mxu0 %v246
    %267 = vmatprep.subr.mxu0 0.0
    %268 = vmatpush1.msra.mxu0 0.0
    %269 = vmatprep.subr.mxu0 0.0
    %270 = vmatpush1.msra.mxu0 0.0
    %271 = vmatprep.subr.mxu0 0.0
    %272 = vmatpush1.msra.mxu0 0.0
    %273 = vmatprep.subr.mxu0 0.0
    %274 = vmatpush1.msra.mxu0 0.0
    %275 = vmatprep.subr.mxu0 0.0
    %276 = vmatpush1.msra.mxu0 0.0
    %277 = vmatprep.subr.mxu0 0.0
    %278 = vmatpush1.msra.mxu0 0.0
    %279 = vmatprep.subr.mxu0 0.0
    %280 = vmatpush1.msra.mxu0 0.0
    %281 = vmatprep.subr.mxu0 0.0
    %282 = vmatpush1.msra.mxu0 0.0
    %283 = vmatprep.subr.mxu0 0.0
    %284 = vmatpush1.msra.mxu0 0.0
    %285 = vmatprep.subr.mxu0 0.0
    %286 = vmatpush1.msra.mxu0 0.0
    %287 = vmatprep.subr.mxu0 0.0
    %288 = vmatpush1.msra.mxu0 0.0
    %289 = vmatprep.subr.mxu0 0.0
    %290 = vmatpush1.msra.mxu0 0.0
    %291 = vmatprep.subr.mxu0 0.0
    %292 = vmatpush1.msra.mxu0 0.0
    %293 = vmatprep.subr.mxu0 0.0
    %294 = vmatpush1.msra.mxu0 0.0
    %295 = vmatprep.subr.mxu0 0.0
    %296 = vmatpush1.msra.mxu0 0.0
    %297 = vmatprep.subr.mxu0 0.0
    %298 = vmatpush1.msra.mxu0 0.0
    %299 = vmatprep.subr.mxu0 0.0
    %300 = vmatpush1.msra.mxu0 0.0
    %301 = vmatprep.subr.mxu0 0.0
    %302 = vmatpush1.msra.mxu0 0.0
    %303 = vmatprep.subr.mxu0 0.0
    %304 = vmatpush1.msra.mxu0 0.0
    %305 = vmatprep.subr.mxu0 0.0
    %306 = vmatpush1.msra.mxu0 0.0
    %307 = vmatprep.subr.mxu0 0.0
    %308 = vmatpush1.msra.mxu0 0.0
    %309 = vmatprep.subr.mxu0 0.0
    %310 = vmatpush1.msra.mxu0 0.0
    %311 = vmatprep.subr.mxu0 0.0
    %312 = vmatpush1.msra.mxu0 0.0
    %313 = vmatprep.subr.mxu0 0.0
    %314 = vmatpush1.msra.mxu0 0.0
    %315 = vmatprep.subr.mxu0 0.0
    %316 = vmatpush1.msra.mxu0 0.0
    %317 = vmatprep.subr.mxu0 0.0
    %318 = vmatpush1.msra.mxu0 0.0
    %319 = vmatprep.subr.mxu0 0.0
    %320 = vmatpush1.msra.mxu0 0.0
    %321 = vmatprep.subr.mxu0 0.0
    %322 = vmatpush1.msra.mxu0 0.0
    %323 = vmatprep.mubr.f32.mxu0 0.0
    %324 = vmatmul.mubr.f32.gmra.mrb[0].mxu0 %v248
    %v325 = vpop.f32.mrb[0].mxu0
    %v326 = vadd.f32 0.0, %v325
    %v327 = vpop.f32.mrb[0].mxu0
    %328 = vmatprep.mubr.f32.mxu0 0.0
    %329 = vmatmul.mubr.f32.gmra.mrb[0].mxu0 %v251
    %v330 = vpop.f32.mrb[0].mxu0
    %v331 = vadd.f32 0.0, %v330
    %v332 = vpop.f32.mrb[0].mxu0
    %333 = vmatprep.mubr.f32.mxu0 0.0
    %334 = vmatmul.mubr.f32.gmra.mrb[0].mxu0 %v254
    %v335 = vpop.f32.mrb[0].mxu0
    %v336 = vadd.f32 0.0, %v335
    %v337 = vpop.f32.mrb[0].mxu0
    %338 = vmatprep.mubr.f32.mxu0 0.0
    %339 = vmatmul.mubr.f32.gmra.mrb[0].mxu0 %v257
    %v340 = vpop.f32.mrb[0].mxu0
    %v341 = vadd.f32 0.0, %v340
    %v342 = vpop.f32.mrb[0].mxu0
    %343 = vdwg.mxu0
    %v344 = vsub.f32 %v326, %v29
    %v345 = vsub.f32 %v331, %v30
    %v346 = vsub.f32 %v336, %v31
    %v347 = vsub.f32 %v341, %v32
    %v348 = vmul.f32 %v344, %v344
    %v349 = vmul.f32 %v345, %v345
    %v350 = vmul.f32 %v346, %v346
    %v351 = vmul.f32 %v347, %v347
    %v352 = vsel %vm35, %v348, 0.0
    %353 = vadd.xlane.f32.xlu0 %v352
    %v354 = vpop.xlane.xlu0 %353
    %v355 = vsel %vm35, %v349, 0.0
    %356 = vadd.xlane.f32.xlu0 %v355
    %v357 = vpop.xlane.xlu0 %356
    %v358 = vsel %vm35, %v350, 0.0
    %359 = vadd.xlane.f32.xlu0 %v358
    %v360 = vpop.xlane.xlu0 %359
    %v361 = vsel %vm35, %v351, 0.0
    %362 = vadd.xlane.f32.xlu0 %v361
    %v363 = vpop.xlane.xlu0 %362
    %v364 = vadd.f32 %v354, %v357
    %v365 = vadd.f32 %v364, %v360
    %v366 = vadd.f32 %v365, %v363
    %v367 = vrot.slane %v366, 4
    %v368 = vadd.f32 %v366, %v367
    %v369 = vrot.slane %v368, 2
    %v370 = vadd.f32 %v368, %v369
    %v371 = vrot.slane %v370, 1
    %v372 = vadd.f32 %v370, %v371
    %v373 = vmul.f32 %v372, 1.25
    %v374 = vrcp.pop 512.0
    %v375 = vmul.f32 %v373, %v374
    %vm376 = vcmask 0
    %377 = vst.msk [vmem:[#allocation4] sm:$0x1] %vm376, %v375
    %v378 = vsel %vm150, %v239, 0.0
    %v379 = vsel %vm150, %v240, 0.0
    %v380 = vadd.f32 %v378, %v379
    %v381 = vsel %vm150, %v241, 0.0
    %v382 = vadd.f32 %v380, %v381
    %v383 = vsel %vm150, %v242, 0.0
    %v384 = vadd.f32 %v382, %v383
    %v385 = vrot.slane %v384, 4
    %v386 = vadd.f32 %v384, %v385
    %v387 = vrot.slane %v386, 2
    %v388 = vadd.f32 %v386, %v387
    %v389 = vrot.slane %v388, 1
    %v390 = vadd.f32 %v388, %v389
    %v391 = vrcp.pop 32.0
    %v392 = vmul.f32 %v390, %v391
    %v393 = vadd.f32 %v392, 1e-10
    %v394 = vlog2.pop %v393
    %v395 = vmul.f32 %v394, 0.6931472
    %v396 = vmul.f32 %v392, %v395
    %v397 = vsel %vm150, %v396, 0.0
    %398 = vadd.xlane.f32.xlu0 %v397
    %v399 = vpop.xlane.xlu0 %398
    %v400 = vsub.f32 0.0, %v399
    %v401 = vmul.f32 %v400, 1.442695
    %v402 = vpow.pop %v401
    %403 = vst.msk [vmem:[#allocation6] sm:$0x1] %vm376, %v402
    %404 = vst.msk [vmem:[#allocation2] sm:$0xff] %vm150, %v239
    %405 = vst.msk [vmem:[#allocation2 + $0x8] sm:$0xff] %vm150, %v240
    %406 = vst.msk [vmem:[#allocation2 + $0x10] sm:$0xff] %vm150, %v241
    %407 = vst.msk [vmem:[#allocation2 + $0x18] sm:$0xff] %vm150, %v242
    %v408 = vld [vmem:[%s4] sm:$0xff]
    %v409 = vld [vmem:[%s4 + $0x8] sm:$0xff]
    %v410 = vld [vmem:[%s5] sm:$0x1]
    %v412 = vlaneseq
    %v413 = vshrl.u32 %v412, 7
    %v414 = vsub.s32 0, %v413
    %v415 = vrot.slane %v410, %v414
    %v418 = vsel %vm35, %v326, 0
    %v421 = vsel %vm35, %v331, 0
    %v424 = vsel %vm35, %v336, 0
    %v427 = vsel %vm35, %v341, 0
    %429 = vmatprep.subr.mxu0 0.0
    %430 = vmatpush1.msra.mxu0 %v408
    %431 = vmatprep.subr.mxu0 0.0
    %432 = vmatpush1.msra.mxu0 %v409
    %433 = vmatprep.subr.mxu0 0.0
    %434 = vmatpush1.msra.mxu0 0.0
    %435 = vmatprep.subr.mxu0 0.0
    %436 = vmatpush1.msra.mxu0 0.0
    %437 = vmatprep.subr.mxu0 0.0
    %438 = vmatpush1.msra.mxu0 0.0
    %439 = vmatprep.subr.mxu0 0.0
    %440 = vmatpush1.msra.mxu0 0.0
    %441 = vmatprep.subr.mxu0 0.0
    %442 = vmatpush1.msra.mxu0 0.0
    %443 = vmatprep.subr.mxu0 0.0
    %444 = vmatpush1.msra.mxu0 0.0
    %445 = vmatprep.subr.mxu0 0.0
    %446 = vmatpush1.msra.mxu0 0.0
    %447 = vmatprep.subr.mxu0 0.0
    %448 = vmatpush1.msra.mxu0 0.0
    %449 = vmatprep.subr.mxu0 0.0
    %450 = vmatpush1.msra.mxu0 0.0
    %451 = vmatprep.subr.mxu0 0.0
    %452 = vmatpush1.msra.mxu0 0.0
    %453 = vmatprep.subr.mxu0 0.0
    %454 = vmatpush1.msra.mxu0 0.0
    %455 = vmatprep.subr.mxu0 0.0
    %456 = vmatpush1.msra.mxu0 0.0
    %457 = vmatprep.subr.mxu0 0.0
    %458 = vmatpush1.msra.mxu0 0.0
    %459 = vmatprep.subr.mxu0 0.0
    %460 = vmatpush1.msra.mxu0 0.0
    %461 = vmatprep.subr.mxu0 0.0
    %462 = vmatpush1.msra.mxu0 0.0
    %463 = vmatprep.subr.mxu0 0.0
    %464 = vmatpush1.msra.mxu0 0.0
    %465 = vmatprep.subr.mxu0 0.0
    %466 = vmatpush1.msra.mxu0 0.0
    %467 = vmatprep.subr.mxu0 0.0
    %468 = vmatpush1.msra.mxu0 0.0
    %469 = vmatprep.subr.mxu0 0.0
    %470 = vmatpush1.msra.mxu0 0.0
    %471 = vmatprep.subr.mxu0 0.0
    %472 = vmatpush1.msra.mxu0 0.0
    %473 = vmatprep.subr.mxu0 0.0
    %474 = vmatpush1.msra.mxu0 0.0
    %475 = vmatprep.subr.mxu0 0.0
    %476 = vmatpush1.msra.mxu0 0.0
    %477 = vmatprep.subr.mxu0 0.0
    %478 = vmatpush1.msra.mxu0 0.0
    %479 = vmatprep.subr.mxu0 0.0
    %480 = vmatpush1.msra.mxu0 0.0
    %481 = vmatprep.subr.mxu0 0.0
    %482 = vmatpush1.msra.mxu0 0.0
    %483 = vmatprep.subr.mxu0 0.0
    %484 = vmatpush1.msra.mxu0 0.0
    %485 = vmatprep.subr.mxu0 0.0
    %486 = vmatpush1.msra.mxu0 0.0
    %487 = vmatprep.subr.mxu0 0.0
    %488 = vmatpush1.msra.mxu0 0.0
    %489 = vmatprep.subr.mxu0 0.0
    %490 = vmatpush1.msra.mxu0 0.0
    %491 = vmatprep.subr.mxu0 0.0
    %492 = vmatpush1.msra.mxu0 0.0
    %493 = vmatprep.mubr.f32.mxu0 0.0
    %494 = vmatmul.mubr.f32.gmra.mrb[0].mxu0 %v418
    %v495 = vpop.f32.mrb[0].mxu0
    %v496 = vadd.f32 %v415, %v495
    %v497 = vpop.f32.mrb[0].mxu0
    %498 = vmatprep.mubr.f32.mxu0 0.0
    %499 = vmatmul.mubr.f32.gmra.mrb[0].mxu0 %v421
    %v500 = vpop.f32.mrb[0].mxu0
    %v501 = vadd.f32 %v415, %v500
    %v502 = vpop.f32.mrb[0].mxu0
    %503 = vmatprep.mubr.f32.mxu0 0.0
    %504 = vmatmul.mubr.f32.gmra.mrb[0].mxu0 %v424
    %v505 = vpop.f32.mrb[0].mxu0
    %v506 = vadd.f32 %v415, %v505
    %v507 = vpop.f32.mrb[0].mxu0
    %508 = vmatprep.mubr.f32.mxu0 0.0
    %509 = vmatmul.mubr.f32.gmra.mrb[0].mxu0 %v427
    %v510 = vpop.f32.mrb[0].mxu0
    %v511 = vadd.f32 %v415, %v510
    %v512 = vpop.f32.mrb[0].mxu0
    %513 = vdwg.mxu0
    %514 = vst.msk [vmem:[%s6] sm:$0xff] %vm35, %v496
    %515 = vst.msk [vmem:[%s6 + $0x8] sm:$0xff] %vm35, %v501
    %516 = vst.msk [vmem:[%s6 + $0x10] sm:$0xff] %vm35, %v506
    %517 = vst.msk [vmem:[%s6 + $0x18] sm:$0xff] %vm35, %v511
    // Predicated region
    $region26: #{vqvae_forward.4} parent=1 // pred_check
      _
    $region27: #{vqvae_forward.4} parent=1 // pred_check_branch
      %519 = sbr.rel (0) target = $region29
    $region28: #{vqvae_forward.4} parent=1 // pred_region
      _
    $region29: #{vqvae_forward.4} parent=1 // pred_fallthru
      _
    // Predicated region
    $region30: #{vqvae_forward.4} parent=1 // pred_check
      _
    $region31: #{vqvae_forward.4} parent=1 // pred_check_branch
      %521 = sbr.rel (0) target = $region33
    $region32: #{vqvae_forward.4} parent=1 // pred_region
      %s523 = ssub.s32 512, 512
      %524 = vsyncadd [#allocation3], %s523
      %s525 = sshll.u32 [#allocation2], 4
      %s526 = int_to_ptr.vmem [resolvable:$true] %s525
      %531 = dma.vmem_to_hbm [thread:$0]  %s526, 512, %s7, [#allocation3], 128, 128, 8
    $region33: #{vqvae_forward.4} parent=1 // pred_fallthru
      _
    // Predicated region
    $region34: #{vqvae_forward.4} parent=1 // pred_check
      _
    $region35: #{vqvae_forward.4} parent=1 // pred_check_branch
      %533 = sbr.rel (0) target = $region37
    $region36: #{vqvae_forward.4} parent=1 // pred_region
      %s535 = ssub.s32 16, 16
      %536 = vsyncadd [#allocation5], %s535
      %s538 = sshll.u32 [#allocation4], 4
      %s539 = int_to_ptr.vmem [resolvable:$true] %s538
      %541 = dma.vmem_to_hbm [thread:$0]  %s539, 16, %s8, [#allocation5]
    $region37: #{vqvae_forward.4} parent=1 // pred_fallthru
      _
    // Predicated region
    $region38: #{vqvae_forward.4} parent=1 // pred_check
      _
    $region39: #{vqvae_forward.4} parent=1 // pred_check_branch
      %543 = sbr.rel (0) target = $region41
    $region40: #{vqvae_forward.4} parent=1 // pred_region
      %s545 = ssub.s32 16, 16
      %546 = vsyncadd [#allocation5], %s545
      %s548 = sshll.u32 [#allocation6], 4
      %s549 = int_to_ptr.vmem [resolvable:$true] %s548
      %551 = dma.vmem_to_hbm [thread:$0]  %s549, 16, %s9, [#allocation5]
    $region41: #{vqvae_forward.4} parent=1 // pred_fallthru
      _
    // Predicated region
    $region42: #{vqvae_forward.4} parent=1 // pred_check
      _
    $region43: #{vqvae_forward.4} parent=1 // pred_check_branch
      %553 = sbr.rel (0) target = $region45
    $region44: #{vqvae_forward.4} parent=1 // pred_region
      _
    $region45: #{vqvae_forward.4} parent=1 // pred_fallthru
      _
    // Predicated region
    $region46: #{vqvae_forward.4} parent=1 // pred_check
      _
    $region47: #{vqvae_forward.4} parent=1 // pred_check_branch
      %555 = sbr.rel (0) target = $region49
    $region48: #{vqvae_forward.4} parent=1 // pred_region
      %556 = dma.done [#allocation3], 512
    $region49: #{vqvae_forward.4} parent=1 // pred_fallthru
      _
    // Predicated region
    $region50: #{vqvae_forward.4} parent=1 // pred_check
      _
    $region51: #{vqvae_forward.4} parent=1 // pred_check_branch
      %558 = sbr.rel (0) target = $region53
    $region52: #{vqvae_forward.4} parent=1 // pred_region
      %559 = dma.done [#allocation5], 16
    $region53: #{vqvae_forward.4} parent=1 // pred_fallthru
      _
    // Predicated region
    $region54: #{vqvae_forward.4} parent=1 // pred_check
      _
    $region55: #{vqvae_forward.4} parent=1 // pred_check_branch
      %561 = sbr.rel (0) target = $region57
    $region56: #{vqvae_forward.4} parent=1 // pred_region
      %562 = dma.done [#allocation5], 16
    $region57: #{vqvae_forward.4} parent=1 // pred_fallthru
      _
    %563 = vsyncpa [#allocation3], 1
    %564 = vsyncpa [#allocation5], 1

// kernel: vqvae_forward.3
$region0: #{vqvae_forward.3}
  #allocation0 [shape = 'u32[]', space=smem, size = 0x4, offset = 0x4, fixed_abs, tag = 'smem constant byte address 0x4 - core index']
  #allocation1 [shape = 'u32[144,128]{1,0:T(1,128)}', space=vmem, size = 0x12000, scoped, tag = 'internal scratch']
  %s0 = inlined_call_operand.vmem [shape: f32[2,16,16], index: 0, kind: input, shape index: {}]
  %s1 = inlined_call_operand.vmem [shape: f32[4,8,16], index: 1, kind: input, shape index: {}]
  %s2 = inlined_call_operand.vmem [shape: f32[4,16,128], index: 2, kind: input, shape index: {}]
  %s3 = inlined_call_operand.vmem [shape: f32[1,128], index: 3, kind: input, shape index: {}]
  %s4 = inlined_call_operand.vmem [shape: f32[4,4,8], index: 4, kind: input, shape index: {}]
  %s5 = inlined_call_operand.vmem [shape: f32[4,128,128], index: 5, kind: input, shape index: {}]
  %s6 = inlined_call_operand.vmem [shape: f32[1,128], index: 6, kind: input, shape index: {}]
  %s7 = inlined_call_operand.vmem [shape: f32[3,4,4], index: 7, kind: input, shape index: {}]
  %s8 = inlined_call_operand.vmem [shape: f32[3,128,128], index: 8, kind: input, shape index: {}]
  %s9 = inlined_call_operand.vmem [shape: f32[1,128], index: 9, kind: input, shape index: {}]
  %s10 = inlined_call_operand.vmem [shape: f32[6,128,64], index: 10, kind: input, shape index: {}]
  %s11 = inlined_call_operand.vmem [shape: f32[2,64,128], index: 11, kind: input, shape index: {}]
  %s12 = inlined_call_operand.vmem [shape: f32[128,64], index: 12, kind: input, shape index: {}]
  %s13 = inlined_call_operand.vmem [shape: f32[1,64], index: 13, kind: input, shape index: {}]
  %s14 = inlined_call_operand.vmem [shape: f32[2,4,64], index: 14, kind: output, shape index: {}]
  %s15 = sld [smem:[#allocation0]]
  $region89: #{vqvae_forward.3} parent=0
    _
  %s17 = ssub.s32 1, %s15
  %s18 = scalar_select 0, %s17, %s15
  loop: start=0, step=1, limit=4
  $region2: #{vqvae_forward.3} parent=0 // loop_pre_header
    _
  $region3: #{vqvae_forward.3} parent=0 // loop_header
    %s20 = sphi 0, %s24
    %p21 = scmp.ge.s32.totalorder %s20, 4
    %s30 = sphi 0, %s32
    %s33 = sphi 0, %s30
    %s34 = sphi 0, %s33
    %s50 = sphi 0, %s34
    %s54 = sphi 0, %s54
    %s56 = sphi 0, %s54
    %s57 = sphi 0, %s56
    %s71 = sphi 0, %s57
    %s75 = sphi 0, %s75
    %s77 = sphi 0, %s75
    %s78 = sphi 0, %s77
    %s92 = sphi 0, %s78
    %s96 = sphi 0, %s96
    %s98 = sphi 0, %s96
    %s99 = sphi 0, %s98
    %s113 = sphi 0, %s99
    %s117 = sphi 0, %s117
    %s119 = sphi 0, %s117
    %s120 = sphi 0, %s119
    %s134 = sphi 0, %s120
    %s138 = sphi 0, %s138
    %s140 = sphi 0, %s138
    %s141 = sphi 0, %s140
    %s155 = sphi 0, %s141
    %s159 = sphi 0, %s159
    %s161 = sphi 0, %s159
    %s162 = sphi 0, %s161
    %s176 = sphi 0, %s162
    %s180 = sphi 0, %s180
    %s182 = sphi 0, %s180
    %s183 = sphi 0, %s182
    %s197 = sphi 0, %s183
    %s201 = sphi 0, %s201
    %s203 = sphi 0, %s201
    %s204 = sphi 0, %s203
    %s218 = sphi 0, %s204
    %s222 = sphi 0, %s222
    %s224 = sphi 0, %s222
    %s225 = sphi 0, %s224
    %s239 = sphi 0, %s225
    %s243 = sphi 0, %s243
    %s245 = sphi 0, %s243
    %s246 = sphi 0, %s245
    %s260 = sphi 0, %s246
    %s264 = sphi 0, %s264
    %s266 = sphi 0, %s264
    %s267 = sphi 0, %s266
    %s281 = sphi 0, %s267
    %s285 = sphi 0, %s285
    %s287 = sphi 0, %s285
    %s288 = sphi 0, %s287
    %s302 = sphi 0, %s288
    %s306 = sphi 0, %s306
    %s308 = sphi 0, %s306
    %s309 = sphi 0, %s308
    %s323 = sphi 0, %s309
    %s329 = sphi 0, %s331
    %s332 = sphi 0, %s329
    %s333 = sphi 0, %s332
    %s349 = sphi 0, %s333
  $region4: #{vqvae_forward.3} parent=0 // loop_header_branch
    %23 = sbr.rel (%p21) target = $region8
  $region5: #{vqvae_forward.3} parent=0 // loop_body
    %s25 = ssub.s32 %s20, 1
    %s26 = ssub.s32 %s20, 2
    %s27 = sadd.s32 %s20, 1
    %s28 = ssub.s32 %s20, %s27
    %p29 = scmp.eq.s32.totalorder %s28, 0
    %s31 = sadd.s32 %s30, 1
    %s32 = scalar_select %p29, %s30, %s31
    %p35 = pneg %p29
    %p36 = scmp.eq.s32.totalorder %s20, 1
    %p37 = por %p35, %p36
    %p38 = scmp.ne.s32.totalorder %s30, %s33
    %p39 = scmp.eq.s32.totalorder %s20, 0
    %p40 = por %p38, %p39
    %p41 = scmp.ne.s32.totalorder %s30, %s33
    %p42 = scmp.eq.s32.totalorder %s25, 1
    %p43 = por %p41, %p42
    %p44 = scmp.ne.s32.totalorder %s33, %s34
    %p45 = scmp.eq.s32.totalorder %s25, 0
    %p46 = por %p44, %p45
    %p47 = scmp.ne.s32.totalorder %s33, %s34
    %p48 = scmp.eq.s32.totalorder %s26, 1
    %p49 = por %p47, %p48
    %p51 = scmp.ne.s32.totalorder %s34, %s50
    %p52 = scmp.eq.s32.totalorder %s26, 0
    %p53 = por %p51, %p52
    %s55 = sadd.s32 %s54, 1
    %p58 = scmp.eq.s32.totalorder %s20, 1
    %p59 = scmp.ne.s32.totalorder %s54, %s56
    %p60 = scmp.eq.s32.totalorder %s20, 0
    %p61 = por %p59, %p60
    %p62 = scmp.ne.s32.totalorder %s54, %s56
    %p63 = scmp.eq.s32.totalorder %s25, 1
    %p64 = por %p62, %p63
    %p65 = scmp.ne.s32.totalorder %s56, %s57
    %p66 = scmp.eq.s32.totalorder %s25, 0
    %p67 = por %p65, %p66
    %p68 = scmp.ne.s32.totalorder %s56, %s57
    %p69 = scmp.eq.s32.totalorder %s26, 1
    %p70 = por %p68, %p69
    %p72 = scmp.ne.s32.totalorder %s57, %s71
    %p73 = scmp.eq.s32.totalorder %s26, 0
    %p74 = por %p72, %p73
    %s76 = sadd.s32 %s75, 1
    %p79 = scmp.eq.s32.totalorder %s20, 1
    %p80 = scmp.ne.s32.totalorder %s75, %s77
    %p81 = scmp.eq.s32.totalorder %s20, 0
    %p82 = por %p80, %p81
    %p83 = scmp.ne.s32.totalorder %s75, %s77
    %p84 = scmp.eq.s32.totalorder %s25, 1
    %p85 = por %p83, %p84
    %p86 = scmp.ne.s32.totalorder %s77, %s78
    %p87 = scmp.eq.s32.totalorder %s25, 0
    %p88 = por %p86, %p87
    %p89 = scmp.ne.s32.totalorder %s77, %s78
    %p90 = scmp.eq.s32.totalorder %s26, 1
    %p91 = por %p89, %p90
    %p93 = scmp.ne.s32.totalorder %s78, %s92
    %p94 = scmp.eq.s32.totalorder %s26, 0
    %p95 = por %p93, %p94
    %s97 = sadd.s32 %s96, 1
    %p100 = scmp.eq.s32.totalorder %s20, 1
    %p101 = scmp.ne.s32.totalorder %s96, %s98
    %p102 = scmp.eq.s32.totalorder %s20, 0
    %p103 = por %p101, %p102
    %p104 = scmp.ne.s32.totalorder %s96, %s98
    %p105 = scmp.eq.s32.totalorder %s25, 1
    %p106 = por %p104, %p105
    %p107 = scmp.ne.s32.totalorder %s98, %s99
    %p108 = scmp.eq.s32.totalorder %s25, 0
    %p109 = por %p107, %p108
    %p110 = scmp.ne.s32.totalorder %s98, %s99
    %p111 = scmp.eq.s32.totalorder %s26, 1
    %p112 = por %p110, %p111
    %p114 = scmp.ne.s32.totalorder %s99, %s113
    %p115 = scmp.eq.s32.totalorder %s26, 0
    %p116 = por %p114, %p115
    %s118 = sadd.s32 %s117, 1
    %p121 = scmp.eq.s32.totalorder %s20, 1
    %p122 = scmp.ne.s32.totalorder %s117, %s119
    %p123 = scmp.eq.s32.totalorder %s20, 0
    %p124 = por %p122, %p123
    %p125 = scmp.ne.s32.totalorder %s117, %s119
    %p126 = scmp.eq.s32.totalorder %s25, 1
    %p127 = por %p125, %p126
    %p128 = scmp.ne.s32.totalorder %s119, %s120
    %p129 = scmp.eq.s32.totalorder %s25, 0
    %p130 = por %p128, %p129
    %p131 = scmp.ne.s32.totalorder %s119, %s120
    %p132 = scmp.eq.s32.totalorder %s26, 1
    %p133 = por %p131, %p132
    %p135 = scmp.ne.s32.totalorder %s120, %s134
    %p136 = scmp.eq.s32.totalorder %s26, 0
    %p137 = por %p135, %p136
    %s139 = sadd.s32 %s138, 1
    %p142 = scmp.eq.s32.totalorder %s20, 1
    %p143 = scmp.ne.s32.totalorder %s138, %s140
    %p144 = scmp.eq.s32.totalorder %s20, 0
    %p145 = por %p143, %p144
    %p146 = scmp.ne.s32.totalorder %s138, %s140
    %p147 = scmp.eq.s32.totalorder %s25, 1
    %p148 = por %p146, %p147
    %p149 = scmp.ne.s32.totalorder %s140, %s141
    %p150 = scmp.eq.s32.totalorder %s25, 0
    %p151 = por %p149, %p150
    %p152 = scmp.ne.s32.totalorder %s140, %s141
    %p153 = scmp.eq.s32.totalorder %s26, 1
    %p154 = por %p152, %p153
    %p156 = scmp.ne.s32.totalorder %s141, %s155
    %p157 = scmp.eq.s32.totalorder %s26, 0
    %p158 = por %p156, %p157
    %s160 = sadd.s32 %s159, 1
    %p163 = scmp.eq.s32.totalorder %s20, 1
    %p164 = scmp.ne.s32.totalorder %s159, %s161
    %p165 = scmp.eq.s32.totalorder %s20, 0
    %p166 = por %p164, %p165
    %p167 = scmp.ne.s32.totalorder %s159, %s161
    %p168 = scmp.eq.s32.totalorder %s25, 1
    %p169 = por %p167, %p168
    %p170 = scmp.ne.s32.totalorder %s161, %s162
    %p171 = scmp.eq.s32.totalorder %s25, 0
    %p172 = por %p170, %p171
    %p173 = scmp.ne.s32.totalorder %s161, %s162
    %p174 = scmp.eq.s32.totalorder %s26, 1
    %p175 = por %p173, %p174
    %p177 = scmp.ne.s32.totalorder %s162, %s176
    %p178 = scmp.eq.s32.totalorder %s26, 0
    %p179 = por %p177, %p178
    %s181 = sadd.s32 %s180, 1
    %p184 = scmp.eq.s32.totalorder %s20, 1
    %p185 = scmp.ne.s32.totalorder %s180, %s182
    %p186 = scmp.eq.s32.totalorder %s20, 0
    %p187 = por %p185, %p186
    %p188 = scmp.ne.s32.totalorder %s180, %s182
    %p189 = scmp.eq.s32.totalorder %s25, 1
    %p190 = por %p188, %p189
    %p191 = scmp.ne.s32.totalorder %s182, %s183
    %p192 = scmp.eq.s32.totalorder %s25, 0
    %p193 = por %p191, %p192
    %p194 = scmp.ne.s32.totalorder %s182, %s183
    %p195 = scmp.eq.s32.totalorder %s26, 1
    %p196 = por %p194, %p195
    %p198 = scmp.ne.s32.totalorder %s183, %s197
    %p199 = scmp.eq.s32.totalorder %s26, 0
    %p200 = por %p198, %p199
    %s202 = sadd.s32 %s201, 1
    %p205 = scmp.eq.s32.totalorder %s20, 1
    %p206 = scmp.ne.s32.totalorder %s201, %s203
    %p207 = scmp.eq.s32.totalorder %s20, 0
    %p208 = por %p206, %p207
    %p209 = scmp.ne.s32.totalorder %s201, %s203
    %p210 = scmp.eq.s32.totalorder %s25, 1
    %p211 = por %p209, %p210
    %p212 = scmp.ne.s32.totalorder %s203, %s204
    %p213 = scmp.eq.s32.totalorder %s25, 0
    %p214 = por %p212, %p213
    %p215 = scmp.ne.s32.totalorder %s203, %s204
    %p216 = scmp.eq.s32.totalorder %s26, 1
    %p217 = por %p215, %p216
    %p219 = scmp.ne.s32.totalorder %s204, %s218
    %p220 = scmp.eq.s32.totalorder %s26, 0
    %p221 = por %p219, %p220
    %s223 = sadd.s32 %s222, 1
    %p226 = scmp.eq.s32.totalorder %s20, 1
    %p227 = scmp.ne.s32.totalorder %s222, %s224
    %p228 = scmp.eq.s32.totalorder %s20, 0
    %p229 = por %p227, %p228
    %p230 = scmp.ne.s32.totalorder %s222, %s224
    %p231 = scmp.eq.s32.totalorder %s25, 1
    %p232 = por %p230, %p231
    %p233 = scmp.ne.s32.totalorder %s224, %s225
    %p234 = scmp.eq.s32.totalorder %s25, 0
    %p235 = por %p233, %p234
    %p236 = scmp.ne.s32.totalorder %s224, %s225
    %p237 = scmp.eq.s32.totalorder %s26, 1
    %p238 = por %p236, %p237
    %p240 = scmp.ne.s32.totalorder %s225, %s239
    %p241 = scmp.eq.s32.totalorder %s26, 0
    %p242 = por %p240, %p241
    %s244 = sadd.s32 %s243, 1
    %p247 = scmp.eq.s32.totalorder %s20, 1
    %p248 = scmp.ne.s32.totalorder %s243, %s245
    %p249 = scmp.eq.s32.totalorder %s20, 0
    %p250 = por %p248, %p249
    %p251 = scmp.ne.s32.totalorder %s243, %s245
    %p252 = scmp.eq.s32.totalorder %s25, 1
    %p253 = por %p251, %p252
    %p254 = scmp.ne.s32.totalorder %s245, %s246
    %p255 = scmp.eq.s32.totalorder %s25, 0
    %p256 = por %p254, %p255
    %p257 = scmp.ne.s32.totalorder %s245, %s246
    %p258 = scmp.eq.s32.totalorder %s26, 1
    %p259 = por %p257, %p258
    %p261 = scmp.ne.s32.totalorder %s246, %s260
    %p262 = scmp.eq.s32.totalorder %s26, 0
    %p263 = por %p261, %p262
    %s265 = sadd.s32 %s264, 1
    %p268 = scmp.eq.s32.totalorder %s20, 1
    %p269 = scmp.ne.s32.totalorder %s264, %s266
    %p270 = scmp.eq.s32.totalorder %s20, 0
    %p271 = por %p269, %p270
    %p272 = scmp.ne.s32.totalorder %s264, %s266
    %p273 = scmp.eq.s32.totalorder %s25, 1
    %p274 = por %p272, %p273
    %p275 = scmp.ne.s32.totalorder %s266, %s267
    %p276 = scmp.eq.s32.totalorder %s25, 0
    %p277 = por %p275, %p276
    %p278 = scmp.ne.s32.totalorder %s266, %s267
    %p279 = scmp.eq.s32.totalorder %s26, 1
    %p280 = por %p278, %p279
    %p282 = scmp.ne.s32.totalorder %s267, %s281
    %p283 = scmp.eq.s32.totalorder %s26, 0
    %p284 = por %p282, %p283
    %s286 = sadd.s32 %s285, 1
    %p289 = scmp.eq.s32.totalorder %s20, 1
    %p290 = scmp.ne.s32.totalorder %s285, %s287
    %p291 = scmp.eq.s32.totalorder %s20, 0
    %p292 = por %p290, %p291
    %p293 = scmp.ne.s32.totalorder %s285, %s287
    %p294 = scmp.eq.s32.totalorder %s25, 1
    %p295 = por %p293, %p294
    %p296 = scmp.ne.s32.totalorder %s287, %s288
    %p297 = scmp.eq.s32.totalorder %s25, 0
    %p298 = por %p296, %p297
    %p299 = scmp.ne.s32.totalorder %s287, %s288
    %p300 = scmp.eq.s32.totalorder %s26, 1
    %p301 = por %p299, %p300
    %p303 = scmp.ne.s32.totalorder %s288, %s302
    %p304 = scmp.eq.s32.totalorder %s26, 0
    %p305 = por %p303, %p304
    %s307 = sadd.s32 %s306, 1
    %p310 = scmp.eq.s32.totalorder %s20, 1
    %p311 = scmp.ne.s32.totalorder %s306, %s308
    %p312 = scmp.eq.s32.totalorder %s20, 0
    %p313 = por %p311, %p312
    %p314 = scmp.ne.s32.totalorder %s306, %s308
    %p315 = scmp.eq.s32.totalorder %s25, 1
    %p316 = por %p314, %p315
    %p317 = scmp.ne.s32.totalorder %s308, %s309
    %p318 = scmp.eq.s32.totalorder %s25, 0
    %p319 = por %p317, %p318
    %p320 = scmp.ne.s32.totalorder %s308, %s309
    %p321 = scmp.eq.s32.totalorder %s26, 1
    %p322 = por %p320, %p321
    %p324 = scmp.ne.s32.totalorder %s309, %s323
    %p325 = scmp.eq.s32.totalorder %s26, 0
    %p326 = por %p324, %p325
    %s327 = ssub.s32 %s20, %s27
    %p328 = scmp.eq.s32.totalorder %s327, 0
    %s330 = sadd.s32 %s329, 1
    %s331 = scalar_select %p328, %s329, %s330
    %p334 = pneg %p328
    %p335 = scmp.eq.s32.totalorder %s20, 1
    %p336 = por %p334, %p335
    %p337 = scmp.ne.s32.totalorder %s329, %s332
    %p338 = scmp.eq.s32.totalorder %s20, 0
    %p339 = por %p337, %p338
    %p340 = scmp.ne.s32.totalorder %s329, %s332
    %p341 = scmp.eq.s32.totalorder %s25, 1
    %p342 = por %p340, %p341
    %p343 = scmp.ne.s32.totalorder %s332, %s333
    %p344 = scmp.eq.s32.totalorder %s25, 0
    %p345 = por %p343, %p344
    %p346 = scmp.ne.s32.totalorder %s332, %s333
    %p347 = scmp.eq.s32.totalorder %s26, 1
    %p348 = por %p346, %p347
    %p350 = scmp.ne.s32.totalorder %s333, %s349
    %p351 = scmp.eq.s32.totalorder %s26, 0
    %p352 = por %p350, %p351
    %p353 = scmp.le.s32.totalorder 1, %s20
    %p354 = scmp.lt.s32.totalorder %s20, 3
    %p355 = pnand %p353, %p354
    %p356 = pneg %p355
    // Predicated region
    $region9: #{vqvae_forward.3} parent=5 // pred_check
      _
    $region10: #{vqvae_forward.3} parent=5 // pred_check_branch
      %358 = sbr.rel (%p355) target = $region12
    $region11: #{vqvae_forward.3} parent=5 // pred_region
      %s359 = ssub.s32 %s20, 1
      // Predicated region
      $region13: #{vqvae_forward.3} parent=11 // pred_check
        %p360 = pneg %p67
      $region14: #{vqvae_forward.3} parent=11 // pred_check_branch
        %362 = sbr.rel (%p360) target = $region16
      $region15: #{vqvae_forward.3} parent=11 // pred_region
        _
      $region16: #{vqvae_forward.3} parent=11 // pred_fallthru
        _
      // Predicated region
      $region17: #{vqvae_forward.3} parent=11 // pred_check
        %p363 = pneg %p88
      $region18: #{vqvae_forward.3} parent=11 // pred_check_branch
        %365 = sbr.rel (%p363) target = $region20
      $region19: #{vqvae_forward.3} parent=11 // pred_region
        _
      $region20: #{vqvae_forward.3} parent=11 // pred_fallthru
        _
      // Predicated region
      $region21: #{vqvae_forward.3} parent=11 // pred_check
        %p366 = pneg %p109
      $region22: #{vqvae_forward.3} parent=11 // pred_check_branch
        %368 = sbr.rel (%p366) target = $region24
      $region23: #{vqvae_forward.3} parent=11 // pred_region
        _
      $region24: #{vqvae_forward.3} parent=11 // pred_fallthru
        _
      // Predicated region
      $region25: #{vqvae_forward.3} parent=11 // pred_check
        %p369 = pneg %p130
      $region26: #{vqvae_forward.3} parent=11 // pred_check_branch
        %371 = sbr.rel (%p369) target = $region28
      $region27: #{vqvae_forward.3} parent=11 // pred_region
        _
      $region28: #{vqvae_forward.3} parent=11 // pred_fallthru
        _
      // Predicated region
      $region29: #{vqvae_forward.3} parent=11 // pred_check
        %p372 = pneg %p151
      $region30: #{vqvae_forward.3} parent=11 // pred_check_branch
        %374 = sbr.rel (%p372) target = $region32
      $region31: #{vqvae_forward.3} parent=11 // pred_region
        _
      $region32: #{vqvae_forward.3} parent=11 // pred_fallthru
        _
      // Predicated region
      $region33: #{vqvae_forward.3} parent=11 // pred_check
        %p375 = pneg %p172
      $region34: #{vqvae_forward.3} parent=11 // pred_check_branch
        %377 = sbr.rel (%p375) target = $region36
      $region35: #{vqvae_forward.3} parent=11 // pred_region
        _
      $region36: #{vqvae_forward.3} parent=11 // pred_fallthru
        _
      // Predicated region
      $region37: #{vqvae_forward.3} parent=11 // pred_check
        %p378 = pneg %p193
      $region38: #{vqvae_forward.3} parent=11 // pred_check_branch
        %380 = sbr.rel (%p378) target = $region40
      $region39: #{vqvae_forward.3} parent=11 // pred_region
        _
      $region40: #{vqvae_forward.3} parent=11 // pred_fallthru
        _
      // Predicated region
      $region41: #{vqvae_forward.3} parent=11 // pred_check
        %p381 = pneg %p214
      $region42: #{vqvae_forward.3} parent=11 // pred_check_branch
        %383 = sbr.rel (%p381) target = $region44
      $region43: #{vqvae_forward.3} parent=11 // pred_region
        _
      $region44: #{vqvae_forward.3} parent=11 // pred_fallthru
        _
      // Predicated region
      $region45: #{vqvae_forward.3} parent=11 // pred_check
        %p384 = pneg %p235
      $region46: #{vqvae_forward.3} parent=11 // pred_check_branch
        %386 = sbr.rel (%p384) target = $region48
      $region47: #{vqvae_forward.3} parent=11 // pred_region
        _
      $region48: #{vqvae_forward.3} parent=11 // pred_fallthru
        _
      // Predicated region
      $region49: #{vqvae_forward.3} parent=11 // pred_check
        %p387 = pneg %p256
      $region50: #{vqvae_forward.3} parent=11 // pred_check_branch
        %389 = sbr.rel (%p387) target = $region52
      $region51: #{vqvae_forward.3} parent=11 // pred_region
        _
      $region52: #{vqvae_forward.3} parent=11 // pred_fallthru
        _
      // Predicated region
      $region53: #{vqvae_forward.3} parent=11 // pred_check
        %p390 = pneg %p277
      $region54: #{vqvae_forward.3} parent=11 // pred_check_branch
        %392 = sbr.rel (%p390) target = $region56
      $region55: #{vqvae_forward.3} parent=11 // pred_region
        _
      $region56: #{vqvae_forward.3} parent=11 // pred_fallthru
        _
      // Predicated region
      $region57: #{vqvae_forward.3} parent=11 // pred_check
        %p393 = pneg %p298
      $region58: #{vqvae_forward.3} parent=11 // pred_check_branch
        %395 = sbr.rel (%p393) target = $region60
      $region59: #{vqvae_forward.3} parent=11 // pred_region
        _
      $region60: #{vqvae_forward.3} parent=11 // pred_fallthru
        _
      // Predicated region
      $region61: #{vqvae_forward.3} parent=11 // pred_check
        %p396 = pneg %p319
      $region62: #{vqvae_forward.3} parent=11 // pred_check_branch
        %398 = sbr.rel (%p396) target = $region64
      $region63: #{vqvae_forward.3} parent=11 // pred_region
        _
      $region64: #{vqvae_forward.3} parent=11 // pred_fallthru
        _
    $region12: #{vqvae_forward.3} parent=5 // pred_fallthru
      _
    %p399 = scmp.lt.s32.totalorder %s20, 2
    // Predicated region
    $region65: #{vqvae_forward.3} parent=5 // pred_check
      %p400 = pneg %p399
    $region66: #{vqvae_forward.3} parent=5 // pred_check_branch
      %402 = sbr.rel (%p400) target = $region68
    $region67: #{vqvae_forward.3} parent=5 // pred_region
      // Predicated region
      $region69: #{vqvae_forward.3} parent=67 // pred_check
        %p403 = pneg %p40
      $region70: #{vqvae_forward.3} parent=67 // pred_check_branch
        %405 = sbr.rel (%p403) target = $region72
      $region71: #{vqvae_forward.3} parent=67 // pred_region
        %p406 = scmp.lt.s32.totalorder %s20, 1
        %s407 = scalar_select %p406, %s20, 1
        %s408 = smul.addr %s407, 2
        %s409 = smul.addr %s408, 8
        %s410 = scalar_lea.vmem %s0, %s409
      $region72: #{vqvae_forward.3} parent=67 // pred_fallthru
        _
    $region68: #{vqvae_forward.3} parent=5 // pred_fallthru
      _
    %p411 = scmp.le.s32.totalorder 1, %s20
    %p412 = scmp.lt.s32.totalorder %s20, 3
    %p413 = pnand %p411, %p412
    %p414 = pneg %p413
    // Predicated region
    $region73: #{vqvae_forward.3} parent=5 // pred_check
      _
    $region74: #{vqvae_forward.3} parent=5 // pred_check_branch
      %416 = sbr.rel (%p413) target = $region76
    $region75: #{vqvae_forward.3} parent=5 // pred_region
      %s417 = ssub.s32 %s20, 1
      %p418 = scmp.lt.s32.totalorder %s25, 1
      %s419 = scalar_select %p418, %s25, 1
      %s420 = smul.addr %s419, 2
      %s421 = smul.addr %s420, 8
      %s422 = scalar_lea.vmem %s0, %s421
      %p423 = pneg %p46
      %p424 = pneg %p43
      %p425 = pneg %p67
      %p426 = pneg %p64
      %p427 = pneg %p88
      %p428 = pneg %p85
      %p429 = pneg %p109
      %p430 = pneg %p106
      %p431 = pneg %p130
      %p432 = pneg %p127
      %p433 = pneg %p151
      %p434 = pneg %p148
      %p435 = pneg %p172
      %p436 = pneg %p169
      %p437 = pneg %p193
      %p438 = pneg %p190
      %p439 = pneg %p214
      %p440 = pneg %p211
      %p441 = pneg %p235
      %p442 = pneg %p232
      %p443 = pneg %p256
      %p444 = pneg %p253
      %p445 = pneg %p277
      %p446 = pneg %p274
      %p447 = pneg %p298
      %p448 = pneg %p295
      %p449 = pneg %p319
      %p450 = pneg %p316
      %p451 = pneg %p345
      %p452 = pneg %p342
      %p453 = scmp.lt.s32.totalorder %s25, 1
      %s454 = scalar_select %p453, %s25, 1
      %s455 = smul.addr %s454, 4
      %s456 = scalar_lea.vmem %s14, %s455
      %p457 = scmp.lt.s32.totalorder %s25, 1
      %s458 = scalar_select %p457, %s25, 1
      %s459 = smul.addr %s458, 2
      %s460 = smul.addr %s459, 8
      %s461 = scalar_lea.vmem %s0, %s460
      %p462 = scmp.lt.s32.totalorder %s25, 1
      %s463 = scalar_select %p462, %s25, 1
      %s464 = smul.addr %s463, 4
      %s465 = scalar_lea.vmem %s14, %s464
      %v466 = vld [vmem:[%s461] sm:$0xff]
      %v467 = vld [vmem:[%s461 + $0x8] sm:$0xff]
      %v468 = vld [vmem:[%s3] sm:$0x1]
      %v469 = vld [vmem:[%s1] sm:$0xff]
      %vm470 = vcmask 130048
      %v472 = vsel %vm470, %v469, 0
      %474 = vmatprep.subr.mxu0 0.0
      %475 = vmatpush1.msra.mxu0 %v466
      %476 = vmatprep.subr.mxu0 0.0
      %477 = vmatpush1.msra.mxu0 %v467
      %478 = vmatprep.subr.mxu0 0.0
      %479 = vmatpush1.msra.mxu0 0.0
      %480 = vmatprep.subr.mxu0 0.0
      %481 = vmatpush1.msra.mxu0 0.0
      %482 = vmatprep.subr.mxu0 0.0
      %483 = vmatpush1.msra.mxu0 0.0
      %484 = vmatprep.subr.mxu0 0.0
      %485 = vmatpush1.msra.mxu0 0.0
      %486 = vmatprep.subr.mxu0 0.0
      %487 = vmatpush1.msra.mxu0 0.0
      %488 = vmatprep.subr.mxu0 0.0
      %489 = vmatpush1.msra.mxu0 0.0
      %490 = vmatprep.subr.mxu0 0.0
      %491 = vmatpush1.msra.mxu0 0.0
      %492 = vmatprep.subr.mxu0 0.0
      %493 = vmatpush1.msra.mxu0 0.0
      %494 = vmatprep.subr.mxu0 0.0
      %495 = vmatpush1.msra.mxu0 0.0
      %496 = vmatprep.subr.mxu0 0.0
      %497 = vmatpush1.msra.mxu0 0.0
      %498 = vmatprep.subr.mxu0 0.0
      %499 = vmatpush1.msra.mxu0 0.0
      %500 = vmatprep.subr.mxu0 0.0
      %501 = vmatpush1.msra.mxu0 0.0
      %502 = vmatprep.subr.mxu0 0.0
      %503 = vmatpush1.msra.mxu0 0.0
      %504 = vmatprep.subr.mxu0 0.0
      %505 = vmatpush1.msra.mxu0 0.0
      %506 = vmatprep.subr.mxu0 0.0
      %507 = vmatpush1.msra.mxu0 0.0
      %508 = vmatprep.subr.mxu0 0.0
      %509 = vmatpush1.msra.mxu0 0.0
      %510 = vmatprep.subr.mxu0 0.0
      %511 = vmatpush1.msra.mxu0 0.0
      %512 = vmatprep.subr.mxu0 0.0
      %513 = vmatpush1.msra.mxu0 0.0
      %514 = vmatprep.subr.mxu0 0.0
      %515 = vmatpush1.msra.mxu0 0.0
      %516 = vmatprep.subr.mxu0 0.0
      %517 = vmatpush1.msra.mxu0 0.0
      %518 = vmatprep.subr.mxu0 0.0
      %519 = vmatpush1.msra.mxu0 0.0
      %520 = vmatprep.subr.mxu0 0.0
      %521 = vmatpush1.msra.mxu0 0.0
      %522 = vmatprep.subr.mxu0 0.0
      %523 = vmatpush1.msra.mxu0 0.0
      %524 = vmatprep.subr.mxu0 0.0
      %525 = vmatpush1.msra.mxu0 0.0
      %526 = vmatprep.subr.mxu0 0.0
      %527 = vmatpush1.msra.mxu0 0.0
      %528 = vmatprep.subr.mxu0 0.0
      %529 = vmatpush1.msra.mxu0 0.0
      %530 = vmatprep.subr.mxu0 0.0
      %531 = vmatpush1.msra.mxu0 0.0
      %532 = vmatprep.subr.mxu0 0.0
      %533 = vmatpush1.msra.mxu0 0.0
      %534 = vmatprep.subr.mxu0 0.0
      %535 = vmatpush1.msra.mxu0 0.0
      %536 = vmatprep.subr.mxu0 0.0
      %537 = vmatpush1.msra.mxu0 0.0
      %538 = vmatprep.mubr.f32.mxu0 0.0
      %539 = vmatmul.mubr.f32.gmra.mrb[0].mxu0 %v472
      %v540 = vpop.f32.mrb[0].mxu0
      %v541 = vadd.f32 0.0, %v540
      %v542 = vpop.f32.mrb[0].mxu0
      %543 = vdwg.mxu0
      %v544 = vld [vmem:[%s2] sm:$0xff]
      %v545 = vld [vmem:[%s2 + $0x8] sm:$0xff]
      %s546 = scalar_lea.vmem %s1, 8
      %v547 = vld [vmem:[%s546] sm:$0xff]
      %v549 = vsel %vm470, %v547, 0
      %551 = vmatprep.subr.mxu0 0.0
      %552 = vmatpush1.msra.mxu0 %v466
      %553 = vmatprep.subr.mxu0 0.0
      %554 = vmatpush1.msra.mxu0 %v467
      %555 = vmatprep.subr.mxu0 0.0
      %556 = vmatpush1.msra.mxu0 0.0
      %557 = vmatprep.subr.mxu0 0.0
      %558 = vmatpush1.msra.mxu0 0.0
      %559 = vmatprep.subr.mxu0 0.0
      %560 = vmatpush1.msra.mxu0 0.0
      %561 = vmatprep.subr.mxu0 0.0
      %562 = vmatpush1.msra.mxu0 0.0
      %563 = vmatprep.subr.mxu0 0.0
      %564 = vmatpush1.msra.mxu0 0.0
      %565 = vmatprep.subr.mxu0 0.0
      %566 = vmatpush1.msra.mxu0 0.0
      %567 = vmatprep.subr.mxu0 0.0
      %568 = vmatpush1.msra.mxu0 0.0
      %569 = vmatprep.subr.mxu0 0.0
      %570 = vmatpush1.msra.mxu0 0.0
      %571 = vmatprep.subr.mxu0 0.0
      %572 = vmatpush1.msra.mxu0 0.0
      %573 = vmatprep.subr.mxu0 0.0
      %574 = vmatpush1.msra.mxu0 0.0
      %575 = vmatprep.subr.mxu0 0.0
      %576 = vmatpush1.msra.mxu0 0.0
      %577 = vmatprep.subr.mxu0 0.0
      %578 = vmatpush1.msra.mxu0 0.0
      %579 = vmatprep.subr.mxu0 0.0
      %580 = vmatpush1.msra.mxu0 0.0
      %581 = vmatprep.subr.mxu0 0.0
      %582 = vmatpush1.msra.mxu0 0.0
      %583 = vmatprep.subr.mxu0 0.0
      %584 = vmatpush1.msra.mxu0 0.0
      %585 = vmatprep.subr.mxu0 0.0
      %586 = vmatpush1.msra.mxu0 0.0
      %587 = vmatprep.subr.mxu0 0.0
      %588 = vmatpush1.msra.mxu0 0.0
      %589 = vmatprep.subr.mxu0 0.0
      %590 = vmatpush1.msra.mxu0 0.0
      %591 = vmatprep.subr.mxu0 0.0
      %592 = vmatpush1.msra.mxu0 0.0
      %593 = vmatprep.subr.mxu0 0.0
      %594 = vmatpush1.msra.mxu0 0.0
      %595 = vmatprep.subr.mxu0 0.0
      %596 = vmatpush1.msra.mxu0 0.0
      %597 = vmatprep.subr.mxu0 0.0
      %598 = vmatpush1.msra.mxu0 0.0
      %599 = vmatprep.subr.mxu0 0.0
      %600 = vmatpush1.msra.mxu0 0.0
      %601 = vmatprep.subr.mxu0 0.0
      %602 = vmatpush1.msra.mxu0 0.0
      %603 = vmatprep.subr.mxu0 0.0
      %604 = vmatpush1.msra.mxu0 0.0
      %605 = vmatprep.subr.mxu0 0.0
      %606 = vmatpush1.msra.mxu0 0.0
      %607 = vmatprep.subr.mxu0 0.0
      %608 = vmatpush1.msra.mxu0 0.0
      %609 = vmatprep.subr.mxu0 0.0
      %610 = vmatpush1.msra.mxu0 0.0
      %611 = vmatprep.subr.mxu0 0.0
      %612 = vmatpush1.msra.mxu0 0.0
      %613 = vmatprep.subr.mxu0 0.0
      %614 = vmatpush1.msra.mxu0 0.0
      %615 = vmatprep.mubr.f32.mxu0 0.0
      %616 = vmatmul.mubr.f32.gmra.mrb[0].mxu0 %v549
      %v617 = vpop.f32.mrb[0].mxu0
      %v618 = vadd.f32 0.0, %v617
      %v619 = vpop.f32.mrb[0].mxu0
      %620 = vdwg.mxu0
      %s621 = scalar_lea.vmem %s2, 16
      %v622 = vld [vmem:[%s621] sm:$0xff]
      %v623 = vld [vmem:[%s621 + $0x8] sm:$0xff]
      %v625 = vsel %vm470, %v618, 0
      %627 = vmatprep.subr.mxu0 0.0
      %628 = vmatpush1.msra.mxu0 %v622
      %629 = vmatprep.subr.mxu0 0.0
      %630 = vmatpush1.msra.mxu0 %v623
      %631 = vmatprep.subr.mxu0 0.0
      %632 = vmatpush1.msra.mxu0 0.0
      %633 = vmatprep.subr.mxu0 0.0
      %634 = vmatpush1.msra.mxu0 0.0
      %635 = vmatprep.subr.mxu0 0.0
      %636 = vmatpush1.msra.mxu0 0.0
      %637 = vmatprep.subr.mxu0 0.0
      %638 = vmatpush1.msra.mxu0 0.0
      %639 = vmatprep.subr.mxu0 0.0
      %640 = vmatpush1.msra.mxu0 0.0
      %641 = vmatprep.subr.mxu0 0.0
      %642 = vmatpush1.msra.mxu0 0.0
      %643 = vmatprep.subr.mxu0 0.0
      %644 = vmatpush1.msra.mxu0 0.0
      %645 = vmatprep.subr.mxu0 0.0
      %646 = vmatpush1.msra.mxu0 0.0
      %647 = vmatprep.subr.mxu0 0.0
      %648 = vmatpush1.msra.mxu0 0.0
      %649 = vmatprep.subr.mxu0 0.0
      %650 = vmatpush1.msra.mxu0 0.0
      %651 = vmatprep.subr.mxu0 0.0
      %652 = vmatpush1.msra.mxu0 0.0
      %653 = vmatprep.subr.mxu0 0.0
      %654 = vmatpush1.msra.mxu0 0.0
      %655 = vmatprep.subr.mxu0 0.0
      %656 = vmatpush1.msra.mxu0 0.0
      %657 = vmatprep.subr.mxu0 0.0
      %658 = vmatpush1.msra.mxu0 0.0
      %659 = vmatprep.subr.mxu0 0.0
      %660 = vmatpush1.msra.mxu0 0.0
      %661 = vmatprep.subr.mxu0 0.0
      %662 = vmatpush1.msra.mxu0 0.0
      %663 = vmatprep.subr.mxu0 0.0
      %664 = vmatpush1.msra.mxu0 0.0
      %665 = vmatprep.subr.mxu0 0.0
      %666 = vmatpush1.msra.mxu0 0.0
      %667 = vmatprep.subr.mxu0 0.0
      %668 = vmatpush1.msra.mxu0 0.0
      %669 = vmatprep.subr.mxu0 0.0
      %670 = vmatpush1.msra.mxu0 0.0
      %671 = vmatprep.subr.mxu0 0.0
      %672 = vmatpush1.msra.mxu0 0.0
      %673 = vmatprep.subr.mxu0 0.0
      %674 = vmatpush1.msra.mxu0 0.0
      %675 = vmatprep.subr.mxu0 0.0
      %676 = vmatpush1.msra.mxu0 0.0
      %677 = vmatprep.subr.mxu0 0.0
      %678 = vmatpush1.msra.mxu0 0.0
      %679 = vmatprep.subr.mxu0 0.0
      %680 = vmatpush1.msra.mxu0 0.0
      %681 = vmatprep.subr.mxu0 0.0
      %682 = vmatpush1.msra.mxu0 0.0
      %683 = vmatprep.subr.mxu0 0.0
      %684 = vmatpush1.msra.mxu0 0.0
      %685 = vmatprep.subr.mxu0 0.0
      %686 = vmatpush1.msra.mxu0 0.0
      %687 = vmatprep.subr.mxu0 0.0
      %688 = vmatpush1.msra.mxu0 0.0
      %689 = vmatprep.subr.mxu0 0.0
      %690 = vmatpush1.msra.mxu0 0.0
      %691 = vmatprep.mubr.f32.mxu0 0.0
      %692 = vmatmul.mubr.f32.gmra.mrb[0].mxu0 %v625
      %v693 = vpop.f32.mrb[0].mxu0
      %v694 = vadd.f32 0.0, %v693
      %v695 = vpop.f32.mrb[0].mxu0
      %696 = vdwg.mxu0
      %v698 = vsel %vm470, %v541, 0
      %700 = vmatprep.subr.mxu0 0.0
      %701 = vmatpush1.msra.mxu0 %v544
      %702 = vmatprep.subr.mxu0 0.0
      %703 = vmatpush1.msra.mxu0 %v545
      %704 = vmatprep.subr.mxu0 0.0
      %705 = vmatpush1.msra.mxu0 0.0
      %706 = vmatprep.subr.mxu0 0.0
      %707 = vmatpush1.msra.mxu0 0.0
      %708 = vmatprep.subr.mxu0 0.0
      %709 = vmatpush1.msra.mxu0 0.0
      %710 = vmatprep.subr.mxu0 0.0
      %711 = vmatpush1.msra.mxu0 0.0
      %712 = vmatprep.subr.mxu0 0.0
      %713 = vmatpush1.msra.mxu0 0.0
      %714 = vmatprep.subr.mxu0 0.0
      %715 = vmatpush1.msra.mxu0 0.0
      %716 = vmatprep.subr.mxu0 0.0
      %717 = vmatpush1.msra.mxu0 0.0
      %718 = vmatprep.subr.mxu0 0.0
      %719 = vmatpush1.msra.mxu0 0.0
      %720 = vmatprep.subr.mxu0 0.0
      %721 = vmatpush1.msra.mxu0 0.0
      %722 = vmatprep.subr.mxu0 0.0
      %723 = vmatpush1.msra.mxu0 0.0
      %724 = vmatprep.subr.mxu0 0.0
      %725 = vmatpush1.msra.mxu0 0.0
      %726 = vmatprep.subr.mxu0 0.0
      %727 = vmatpush1.msra.mxu0 0.0
      %728 = vmatprep.subr.mxu0 0.0
      %729 = vmatpush1.msra.mxu0 0.0
      %730 = vmatprep.subr.mxu0 0.0
      %731 = vmatpush1.msra.mxu0 0.0
      %732 = vmatprep.subr.mxu0 0.0
      %733 = vmatpush1.msra.mxu0 0.0
      %734 = vmatprep.subr.mxu0 0.0
      %735 = vmatpush1.msra.mxu0 0.0
      %736 = vmatprep.subr.mxu0 0.0
      %737 = vmatpush1.msra.mxu0 0.0
      %738 = vmatprep.subr.mxu0 0.0
      %739 = vmatpush1.msra.mxu0 0.0
      %740 = vmatprep.subr.mxu0 0.0
      %741 = vmatpush1.msra.mxu0 0.0
      %742 = vmatprep.subr.mxu0 0.0
      %743 = vmatpush1.msra.mxu0 0.0
      %744 = vmatprep.subr.mxu0 0.0
      %745 = vmatpush1.msra.mxu0 0.0
      %746 = vmatprep.subr.mxu0 0.0
      %747 = vmatpush1.msra.mxu0 0.0
      %748 = vmatprep.subr.mxu0 0.0
      %749 = vmatpush1.msra.mxu0 0.0
      %750 = vmatprep.subr.mxu0 0.0
      %751 = vmatpush1.msra.mxu0 0.0
      %752 = vmatprep.subr.mxu0 0.0
      %753 = vmatpush1.msra.mxu0 0.0
      %754 = vmatprep.subr.mxu0 0.0
      %755 = vmatpush1.msra.mxu0 0.0
      %756 = vmatprep.subr.mxu0 0.0
      %757 = vmatpush1.msra.mxu0 0.0
      %758 = vmatprep.subr.mxu0 0.0
      %759 = vmatpush1.msra.mxu0 0.0
      %760 = vmatprep.subr.mxu0 0.0
      %761 = vmatpush1.msra.mxu0 0.0
      %762 = vmatprep.subr.mxu0 0.0
      %763 = vmatpush1.msra.mxu0 0.0
      %764 = vmatprep.mubr.f32.mxu0 0.0
      %765 = vmatmul.mubr.f32.gmra.mrb[0].mxu0 %v698
      %v766 = vpop.f32.mrb[0].mxu0
      %v767 = vadd.f32 %v694, %v766
      %v768 = vpop.f32.mrb[0].mxu0
      %769 = vdwg.mxu0
      %s770 = scalar_lea.vmem %s1, 16
      %v771 = vld [vmem:[%s770] sm:$0xff]
      %v773 = vsel %vm470, %v771, 0
      %775 = vmatprep.subr.mxu0 0.0
      %776 = vmatpush1.msra.mxu0 %v466
      %777 = vmatprep.subr.mxu0 0.0
      %778 = vmatpush1.msra.mxu0 %v467
      %779 = vmatprep.subr.mxu0 0.0
      %780 = vmatpush1.msra.mxu0 0.0
      %781 = vmatprep.subr.mxu0 0.0
      %782 = vmatpush1.msra.mxu0 0.0
      %783 = vmatprep.subr.mxu0 0.0
      %784 = vmatpush1.msra.mxu0 0.0
      %785 = vmatprep.subr.mxu0 0.0
      %786 = vmatpush1.msra.mxu0 0.0
      %787 = vmatprep.subr.mxu0 0.0
      %788 = vmatpush1.msra.mxu0 0.0
      %789 = vmatprep.subr.mxu0 0.0
      %790 = vmatpush1.msra.mxu0 0.0
      %791 = vmatprep.subr.mxu0 0.0
      %792 = vmatpush1.msra.mxu0 0.0
      %793 = vmatprep.subr.mxu0 0.0
      %794 = vmatpush1.msra.mxu0 0.0
      %795 = vmatprep.subr.mxu0 0.0
      %796 = vmatpush1.msra.mxu0 0.0
      %797 = vmatprep.subr.mxu0 0.0
      %798 = vmatpush1.msra.mxu0 0.0
      %799 = vmatprep.subr.mxu0 0.0
      %800 = vmatpush1.msra.mxu0 0.0
      %801 = vmatprep.subr.mxu0 0.0
      %802 = vmatpush1.msra.mxu0 0.0
      %803 = vmatprep.subr.mxu0 0.0
      %804 = vmatpush1.msra.mxu0 0.0
      %805 = vmatprep.subr.mxu0 0.0
      %806 = vmatpush1.msra.mxu0 0.0
      %807 = vmatprep.subr.mxu0 0.0
      %808 = vmatpush1.msra.mxu0 0.0
      %809 = vmatprep.subr.mxu0 0.0
      %810 = vmatpush1.msra.mxu0 0.0
      %811 = vmatprep.subr.mxu0 0.0
      %812 = vmatpush1.msra.mxu0 0.0
      %813 = vmatprep.subr.mxu0 0.0
      %814 = vmatpush1.msra.mxu0 0.0
      %815 = vmatprep.subr.mxu0 0.0
      %816 = vmatpush1.msra.mxu0 0.0
      %817 = vmatprep.subr.mxu0 0.0
      %818 = vmatpush1.msra.mxu0 0.0
      %819 = vmatprep.subr.mxu0 0.0
      %820 = vmatpush1.msra.mxu0 0.0
      %821 = vmatprep.subr.mxu0 0.0
      %822 = vmatpush1.msra.mxu0 0.0
      %823 = vmatprep.subr.mxu0 0.0
      %824 = vmatpush1.msra.mxu0 0.0
      %825 = vmatprep.subr.mxu0 0.0
      %826 = vmatpush1.msra.mxu0 0.0
      %827 = vmatprep.subr.mxu0 0.0
      %828 = vmatpush1.msra.mxu0 0.0
      %829 = vmatprep.subr.mxu0 0.0
      %830 = vmatpush1.msra.mxu0 0.0
      %831 = vmatprep.subr.mxu0 0.0
      %832 = vmatpush1.msra.mxu0 0.0
      %833 = vmatprep.subr.mxu0 0.0
      %834 = vmatpush1.msra.mxu0 0.0
      %835 = vmatprep.subr.mxu0 0.0
      %836 = vmatpush1.msra.mxu0 0.0
      %837 = vmatprep.subr.mxu0 0.0
      %838 = vmatpush1.msra.mxu0 0.0
      %839 = vmatprep.mubr.f32.mxu0 0.0
      %840 = vmatmul.mubr.f32.gmra.mrb[0].mxu0 %v773
      %v841 = vpop.f32.mrb[0].mxu0
      %v842 = vadd.f32 0.0, %v841
      %v843 = vpop.f32.mrb[0].mxu0
      %844 = vdwg.mxu0
      %s845 = scalar_lea.vmem %s2, 32
      %v846 = vld [vmem:[%s845] sm:$0xff]
      %v847 = vld [vmem:[%s845 + $0x8] sm:$0xff]
      %v849 = vsel %vm470, %v842, 0
      %851 = vmatprep.subr.mxu0 0.0
      %852 = vmatpush1.msra.mxu0 %v846
      %853 = vmatprep.subr.mxu0 0.0
      %854 = vmatpush1.msra.mxu0 %v847
      %855 = vmatprep.subr.mxu0 0.0
      %856 = vmatpush1.msra.mxu0 0.0
      %857 = vmatprep.subr.mxu0 0.0
      %858 = vmatpush1.msra.mxu0 0.0
      %859 = vmatprep.subr.mxu0 0.0
      %860 = vmatpush1.msra.mxu0 0.0
      %861 = vmatprep.subr.mxu0 0.0
      %862 = vmatpush1.msra.mxu0 0.0
      %863 = vmatprep.subr.mxu0 0.0
      %864 = vmatpush1.msra.mxu0 0.0
      %865 = vmatprep.subr.mxu0 0.0
      %866 = vmatpush1.msra.mxu0 0.0
      %867 = vmatprep.subr.mxu0 0.0
      %868 = vmatpush1.msra.mxu0 0.0
      %869 = vmatprep.subr.mxu0 0.0
      %870 = vmatpush1.msra.mxu0 0.0
      %871 = vmatprep.subr.mxu0 0.0
      %872 = vmatpush1.msra.mxu0 0.0
      %873 = vmatprep.subr.mxu0 0.0
      %874 = vmatpush1.msra.mxu0 0.0
      %875 = vmatprep.subr.mxu0 0.0
      %876 = vmatpush1.msra.mxu0 0.0
      %877 = vmatprep.subr.mxu0 0.0
      %878 = vmatpush1.msra.mxu0 0.0
      %879 = vmatprep.subr.mxu0 0.0
      %880 = vmatpush1.msra.mxu0 0.0
      %881 = vmatprep.subr.mxu0 0.0
      %882 = vmatpush1.msra.mxu0 0.0
      %883 = vmatprep.subr.mxu0 0.0
      %884 = vmatpush1.msra.mxu0 0.0
      %885 = vmatprep.subr.mxu0 0.0
      %886 = vmatpush1.msra.mxu0 0.0
      %887 = vmatprep.subr.mxu0 0.0
      %888 = vmatpush1.msra.mxu0 0.0
      %889 = vmatprep.subr.mxu0 0.0
      %890 = vmatpush1.msra.mxu0 0.0
      %891 = vmatprep.subr.mxu0 0.0
      %892 = vmatpush1.msra.mxu0 0.0
      %893 = vmatprep.subr.mxu0 0.0
      %894 = vmatpush1.msra.mxu0 0.0
      %895 = vmatprep.subr.mxu0 0.0
      %896 = vmatpush1.msra.mxu0 0.0
      %897 = vmatprep.subr.mxu0 0.0
      %898 = vmatpush1.msra.mxu0 0.0
      %899 = vmatprep.subr.mxu0 0.0
      %900 = vmatpush1.msra.mxu0 0.0
      %901 = vmatprep.subr.mxu0 0.0
      %902 = vmatpush1.msra.mxu0 0.0
      %903 = vmatprep.subr.mxu0 0.0
      %904 = vmatpush1.msra.mxu0 0.0
      %905 = vmatprep.subr.mxu0 0.0
      %906 = vmatpush1.msra.mxu0 0.0
      %907 = vmatprep.subr.mxu0 0.0
      %908 = vmatpush1.msra.mxu0 0.0
      %909 = vmatprep.subr.mxu0 0.0
      %910 = vmatpush1.msra.mxu0 0.0
      %911 = vmatprep.subr.mxu0 0.0
      %912 = vmatpush1.msra.mxu0 0.0
      %913 = vmatprep.subr.mxu0 0.0
      %914 = vmatpush1.msra.mxu0 0.0
      %915 = vmatprep.mubr.f32.mxu0 0.0
      %916 = vmatmul.mubr.f32.gmra.mrb[0].mxu0 %v849
      %v917 = vpop.f32.mrb[0].mxu0
      %v918 = vadd.f32 0.0, %v917
      %v919 = vpop.f32.mrb[0].mxu0
      %920 = vdwg.mxu0
      %v921 = vadd.f32 %v767, %v918
      %s922 = scalar_lea.vmem %s1, 24
      %v923 = vld [vmem:[%s922] sm:$0xff]
      %v925 = vsel %vm470, %v923, 0
      %927 = vmatprep.subr.mxu0 0.0
      %928 = vmatpush1.msra.mxu0 %v466
      %929 = vmatprep.subr.mxu0 0.0
      %930 = vmatpush1.msra.mxu0 %v467
      %931 = vmatprep.subr.mxu0 0.0
      %932 = vmatpush1.msra.mxu0 0.0
      %933 = vmatprep.subr.mxu0 0.0
      %934 = vmatpush1.msra.mxu0 0.0
      %935 = vmatprep.subr.mxu0 0.0
      %936 = vmatpush1.msra.mxu0 0.0
      %937 = vmatprep.subr.mxu0 0.0
      %938 = vmatpush1.msra.mxu0 0.0
      %939 = vmatprep.subr.mxu0 0.0
      %940 = vmatpush1.msra.mxu0 0.0
      %941 = vmatprep.subr.mxu0 0.0
      %942 = vmatpush1.msra.mxu0 0.0
      %943 = vmatprep.subr.mxu0 0.0
      %944 = vmatpush1.msra.mxu0 0.0
      %945 = vmatprep.subr.mxu0 0.0
      %946 = vmatpush1.msra.mxu0 0.0
      %947 = vmatprep.subr.mxu0 0.0
      %948 = vmatpush1.msra.mxu0 0.0
      %949 = vmatprep.subr.mxu0 0.0
      %950 = vmatpush1.msra.mxu0 0.0
      %951 = vmatprep.subr.mxu0 0.0
      %952 = vmatpush1.msra.mxu0 0.0
      %953 = vmatprep.subr.mxu0 0.0
      %954 = vmatpush1.msra.mxu0 0.0
      %955 = vmatprep.subr.mxu0 0.0
      %956 = vmatpush1.msra.mxu0 0.0
      %957 = vmatprep.subr.mxu0 0.0
      %958 = vmatpush1.msra.mxu0 0.0
      %959 = vmatprep.subr.mxu0 0.0
      %960 = vmatpush1.msra.mxu0 0.0
      %961 = vmatprep.subr.mxu0 0.0
      %962 = vmatpush1.msra.mxu0 0.0
      %963 = vmatprep.subr.mxu0 0.0
      %964 = vmatpush1.msra.mxu0 0.0
      %965 = vmatprep.subr.mxu0 0.0
      %966 = vmatpush1.msra.mxu0 0.0
      %967 = vmatprep.subr.mxu0 0.0
      %968 = vmatpush1.msra.mxu0 0.0
      %969 = vmatprep.subr.mxu0 0.0
      %970 = vmatpush1.msra.mxu0 0.0
      %971 = vmatprep.subr.mxu0 0.0
      %972 = vmatpush1.msra.mxu0 0.0
      %973 = vmatprep.subr.mxu0 0.0
      %974 = vmatpush1.msra.mxu0 0.0
      %975 = vmatprep.subr.mxu0 0.0
      %976 = vmatpush1.msra.mxu0 0.0
      %977 = vmatprep.subr.mxu0 0.0
      %978 = vmatpush1.msra.mxu0 0.0
      %979 = vmatprep.subr.mxu0 0.0
      %980 = vmatpush1.msra.mxu0 0.0
      %981 = vmatprep.subr.mxu0 0.0
      %982 = vmatpush1.msra.mxu0 0.0
      %983 = vmatprep.subr.mxu0 0.0
      %984 = vmatpush1.msra.mxu0 0.0
      %985 = vmatprep.subr.mxu0 0.0
      %986 = vmatpush1.msra.mxu0 0.0
      %987 = vmatprep.subr.mxu0 0.0
      %988 = vmatpush1.msra.mxu0 0.0
      %989 = vmatprep.subr.mxu0 0.0
      %990 = vmatpush1.msra.mxu0 0.0
      %991 = vmatprep.mubr.f32.mxu0 0.0
      %992 = vmatmul.mubr.f32.gmra.mrb[0].mxu0 %v925
      %v993 = vpop.f32.mrb[0].mxu0
      %v994 = vadd.f32 0.0, %v993
      %v995 = vpop.f32.mrb[0].mxu0
      %996 = vdwg.mxu0
      %s997 = scalar_lea.vmem %s2, 48
      %v998 = vld [vmem:[%s997] sm:$0xff]
      %v999 = vld [vmem:[%s997 + $0x8] sm:$0xff]
      %v1001 = vsel %vm470, %v994, 0
      %1003 = vmatprep.subr.mxu0 0.0
      %1004 = vmatpush1.msra.mxu0 %v998
      %1005 = vmatprep.subr.mxu0 0.0
      %1006 = vmatpush1.msra.mxu0 %v999
      %1007 = vmatprep.subr.mxu0 0.0
      %1008 = vmatpush1.msra.mxu0 0.0
      %1009 = vmatprep.subr.mxu0 0.0
      %1010 = vmatpush1.msra.mxu0 0.0
      %1011 = vmatprep.subr.mxu0 0.0
      %1012 = vmatpush1.msra.mxu0 0.0
      %1013 = vmatprep.subr.mxu0 0.0
      %1014 = vmatpush1.msra.mxu0 0.0
      %1015 = vmatprep.subr.mxu0 0.0
      %1016 = vmatpush1.msra.mxu0 0.0
      %1017 = vmatprep.subr.mxu0 0.0
      %1018 = vmatpush1.msra.mxu0 0.0
      %1019 = vmatprep.subr.mxu0 0.0
      %1020 = vmatpush1.msra.mxu0 0.0
      %1021 = vmatprep.subr.mxu0 0.0
      %1022 = vmatpush1.msra.mxu0 0.0
      %1023 = vmatprep.subr.mxu0 0.0
      %1024 = vmatpush1.msra.mxu0 0.0
      %1025 = vmatprep.subr.mxu0 0.0
      %1026 = vmatpush1.msra.mxu0 0.0
      %1027 = vmatprep.subr.mxu0 0.0
      %1028 = vmatpush1.msra.mxu0 0.0
      %1029 = vmatprep.subr.mxu0 0.0
      %1030 = vmatpush1.msra.mxu0 0.0
      %1031 = vmatprep.subr.mxu0 0.0
      %1032 = vmatpush1.msra.mxu0 0.0
      %1033 = vmatprep.subr.mxu0 0.0
      %1034 = vmatpush1.msra.mxu0 0.0
      %1035 = vmatprep.subr.mxu0 0.0
      %1036 = vmatpush1.msra.mxu0 0.0
      %1037 = vmatprep.subr.mxu0 0.0
      %1038 = vmatpush1.msra.mxu0 0.0
      %1039 = vmatprep.subr.mxu0 0.0
      %1040 = vmatpush1.msra.mxu0 0.0
      %1041 = vmatprep.subr.mxu0 0.0
      %1042 = vmatpush1.msra.mxu0 0.0
      %1043 = vmatprep.subr.mxu0 0.0
      %1044 = vmatpush1.msra.mxu0 0.0
      %1045 = vmatprep.subr.mxu0 0.0
      %1046 = vmatpush1.msra.mxu0 0.0
      %1047 = vmatprep.subr.mxu0 0.0
      %1048 = vmatpush1.msra.mxu0 0.0
      %1049 = vmatprep.subr.mxu0 0.0
      %1050 = vmatpush1.msra.mxu0 0.0
      %1051 = vmatprep.subr.mxu0 0.0
      %1052 = vmatpush1.msra.mxu0 0.0
      %1053 = vmatprep.subr.mxu0 0.0
      %1054 = vmatpush1.msra.mxu0 0.0
      %1055 = vmatprep.subr.mxu0 0.0
      %1056 = vmatpush1.msra.mxu0 0.0
      %1057 = vmatprep.subr.mxu0 0.0
      %1058 = vmatpush1.msra.mxu0 0.0
      %1059 = vmatprep.subr.mxu0 0.0
      %1060 = vmatpush1.msra.mxu0 0.0
      %1061 = vmatprep.subr.mxu0 0.0
      %1062 = vmatpush1.msra.mxu0 0.0
      %1063 = vmatprep.subr.mxu0 0.0
      %1064 = vmatpush1.msra.mxu0 0.0
      %1065 = vmatprep.subr.mxu0 0.0
      %1066 = vmatpush1.msra.mxu0 0.0
      %1067 = vmatprep.mubr.f32.mxu0 0.0
      %1068 = vmatmul.mubr.f32.gmra.mrb[0].mxu0 %v1001
      %v1069 = vpop.f32.mrb[0].mxu0
      %v1070 = vadd.f32 0.0, %v1069
      %v1071 = vpop.f32.mrb[0].mxu0
      %1072 = vdwg.mxu0
      %v1073 = vadd.f32 %v921, %v1070
      %v1075 = vlaneseq
      %v1076 = vshrl.u32 %v1075, 7
      %v1077 = vsub.s32 0, %v1076
      %v1078 = vrot.slane %v468, %v1077
      %v1080 = vadd.f32 %v1073, %v1078
      %v1081 = vmax.f32 %v1080, 0.0
      %v1082 = vld [vmem:[%s6] sm:$0x1]
      %v1083 = vld [vmem:[%s4] sm:$0xf]
      %vm1084 = vcmask 64512
      %v1086 = vsel %vm1084, %v1083, 0
      %1088 = vmatprep.subr.mxu0 0.0
      %1089 = vmatpush1.msra.mxu0 %v1081
      %1090 = vmatprep.subr.mxu0 0.0
      %1091 = vmatpush1.msra.mxu0 0.0
      %1092 = vmatprep.subr.mxu0 0.0
      %1093 = vmatpush1.msra.mxu0 0.0
      %1094 = vmatprep.subr.mxu0 0.0
      %1095 = vmatpush1.msra.mxu0 0.0
      %1096 = vmatprep.subr.mxu0 0.0
      %1097 = vmatpush1.msra.mxu0 0.0
      %1098 = vmatprep.subr.mxu0 0.0
      %1099 = vmatpush1.msra.mxu0 0.0
      %1100 = vmatprep.subr.mxu0 0.0
      %1101 = vmatpush1.msra.mxu0 0.0
      %1102 = vmatprep.subr.mxu0 0.0
      %1103 = vmatpush1.msra.mxu0 0.0
      %1104 = vmatprep.subr.mxu0 0.0
      %1105 = vmatpush1.msra.mxu0 0.0
      %1106 = vmatprep.subr.mxu0 0.0
      %1107 = vmatpush1.msra.mxu0 0.0
      %1108 = vmatprep.subr.mxu0 0.0
      %1109 = vmatpush1.msra.mxu0 0.0
      %1110 = vmatprep.subr.mxu0 0.0
      %1111 = vmatpush1.msra.mxu0 0.0
      %1112 = vmatprep.subr.mxu0 0.0
      %1113 = vmatpush1.msra.mxu0 0.0
      %1114 = vmatprep.subr.mxu0 0.0
      %1115 = vmatpush1.msra.mxu0 0.0
      %1116 = vmatprep.subr.mxu0 0.0
      %1117 = vmatpush1.msra.mxu0 0.0
      %1118 = vmatprep.subr.mxu0 0.0
      %1119 = vmatpush1.msra.mxu0 0.0
      %1120 = vmatprep.subr.mxu0 0.0
      %1121 = vmatpush1.msra.mxu0 0.0
      %1122 = vmatprep.subr.mxu0 0.0
      %1123 = vmatpush1.msra.mxu0 0.0
      %1124 = vmatprep.subr.mxu0 0.0
      %1125 = vmatpush1.msra.mxu0 0.0
      %1126 = vmatprep.subr.mxu0 0.0
      %1127 = vmatpush1.msra.mxu0 0.0
      %1128 = vmatprep.subr.mxu0 0.0
      %1129 = vmatpush1.msra.mxu0 0.0
      %1130 = vmatprep.subr.mxu0 0.0
      %1131 = vmatpush1.msra.mxu0 0.0
      %1132 = vmatprep.subr.mxu0 0.0
      %1133 = vmatpush1.msra.mxu0 0.0
      %1134 = vmatprep.subr.mxu0 0.0
      %1135 = vmatpush1.msra.mxu0 0.0
      %1136 = vmatprep.subr.mxu0 0.0
      %1137 = vmatpush1.msra.mxu0 0.0
      %1138 = vmatprep.subr.mxu0 0.0
      %1139 = vmatpush1.msra.mxu0 0.0
      %1140 = vmatprep.subr.mxu0 0.0
      %1141 = vmatpush1.msra.mxu0 0.0
      %1142 = vmatprep.subr.mxu0 0.0
      %1143 = vmatpush1.msra.mxu0 0.0
      %1144 = vmatprep.subr.mxu0 0.0
      %1145 = vmatpush1.msra.mxu0 0.0
      %1146 = vmatprep.subr.mxu0 0.0
      %1147 = vmatpush1.msra.mxu0 0.0
      %1148 = vmatprep.subr.mxu0 0.0
      %1149 = vmatpush1.msra.mxu0 0.0
      %1150 = vmatprep.subr.mxu0 0.0
      %1151 = vmatpush1.msra.mxu0 0.0
      %1152 = vmatprep.mubr.f32.mxu0 0.0
      %1153 = vmatmul.mubr.f32.gmra.mrb[0].mxu0 %v1086
      %v1154 = vpop.f32.mrb[0].mxu0
      %v1155 = vadd.f32 0.0, %v1154
      %v1156 = vpop.f32.mrb[0].mxu0
      %1157 = vdwg.mxu0
      %v1158 = vld [vmem:[%s5] sm:$0xff]
      %v1159 = vld [vmem:[%s5 + $0x8] sm:$0xff]
      %v1160 = vld [vmem:[%s5 + $0x10] sm:$0xff]
      %v1161 = vld [vmem:[%s5 + $0x18] sm:$0xff]
      %v1162 = vld [vmem:[%s5 + $0x20] sm:$0xff]
      %v1163 = vld [vmem:[%s5 + $0x28] sm:$0xff]
      %v1164 = vld [vmem:[%s5 + $0x30] sm:$0xff]
      %v1165 = vld [vmem:[%s5 + $0x38] sm:$0xff]
      %v1166 = vld [vmem:[%s5 + $0x40] sm:$0xff]
      %v1167 = vld [vmem:[%s5 + $0x48] sm:$0xff]
      %v1168 = vld [vmem:[%s5 + $0x50] sm:$0xff]
      %v1169 = vld [vmem:[%s5 + $0x58] sm:$0xff]
      %v1170 = vld [vmem:[%s5 + $0x60] sm:$0xff]
      %v1171 = vld [vmem:[%s5 + $0x68] sm:$0xff]
      %v1172 = vld [vmem:[%s5 + $0x70] sm:$0xff]
      %v1173 = vld [vmem:[%s5 + $0x78] sm:$0xff]
      %s1174 = scalar_lea.vmem %s4, 4
      %v1175 = vld [vmem:[%s1174] sm:$0xf]
      %v1177 = vsel %vm1084, %v1175, 0
      %1179 = vmatprep.subr.mxu0 0.0
      %1180 = vmatpush1.msra.mxu0 %v1081
      %1181 = vmatprep.subr.mxu0 0.0
      %1182 = vmatpush1.msra.mxu0 0.0
      %1183 = vmatprep.subr.mxu0 0.0
      %1184 = vmatpush1.msra.mxu0 0.0
      %1185 = vmatprep.subr.mxu0 0.0
      %1186 = vmatpush1.msra.mxu0 0.0
      %1187 = vmatprep.subr.mxu0 0.0
      %1188 = vmatpush1.msra.mxu0 0.0
      %1189 = vmatprep.subr.mxu0 0.0
      %1190 = vmatpush1.msra.mxu0 0.0
      %1191 = vmatprep.subr.mxu0 0.0
      %1192 = vmatpush1.msra.mxu0 0.0
      %1193 = vmatprep.subr.mxu0 0.0
      %1194 = vmatpush1.msra.mxu0 0.0
      %1195 = vmatprep.subr.mxu0 0.0
      %1196 = vmatpush1.msra.mxu0 0.0
      %1197 = vmatprep.subr.mxu0 0.0
      %1198 = vmatpush1.msra.mxu0 0.0
      %1199 = vmatprep.subr.mxu0 0.0
      %1200 = vmatpush1.msra.mxu0 0.0
      %1201 = vmatprep.subr.mxu0 0.0
      %1202 = vmatpush1.msra.mxu0 0.0
      %1203 = vmatprep.subr.mxu0 0.0
      %1204 = vmatpush1.msra.mxu0 0.0
      %1205 = vmatprep.subr.mxu0 0.0
      %1206 = vmatpush1.msra.mxu0 0.0
      %1207 = vmatprep.subr.mxu0 0.0
      %1208 = vmatpush1.msra.mxu0 0.0
      %1209 = vmatprep.subr.mxu0 0.0
      %1210 = vmatpush1.msra.mxu0 0.0
      %1211 = vmatprep.subr.mxu0 0.0
      %1212 = vmatpush1.msra.mxu0 0.0
      %1213 = vmatprep.subr.mxu0 0.0
      %1214 = vmatpush1.msra.mxu0 0.0
      %1215 = vmatprep.subr.mxu0 0.0
      %1216 = vmatpush1.msra.mxu0 0.0
      %1217 = vmatprep.subr.mxu0 0.0
      %1218 = vmatpush1.msra.mxu0 0.0
      %1219 = vmatprep.subr.mxu0 0.0
      %1220 = vmatpush1.msra.mxu0 0.0
      %1221 = vmatprep.subr.mxu0 0.0
      %1222 = vmatpush1.msra.mxu0 0.0
      %1223 = vmatprep.subr.mxu0 0.0
      %1224 = vmatpush1.msra.mxu0 0.0
      %1225 = vmatprep.subr.mxu0 0.0
      %1226 = vmatpush1.msra.mxu0 0.0
      %1227 = vmatprep.subr.mxu0 0.0
      %1228 = vmatpush1.msra.mxu0 0.0
      %1229 = vmatprep.subr.mxu0 0.0
      %1230 = vmatpush1.msra.mxu0 0.0
      %1231 = vmatprep.subr.mxu0 0.0
      %1232 = vmatpush1.msra.mxu0 0.0
      %1233 = vmatprep.subr.mxu0 0.0
      %1234 = vmatpush1.msra.mxu0 0.0
      %1235 = vmatprep.subr.mxu0 0.0
      %1236 = vmatpush1.msra.mxu0 0.0
      %1237 = vmatprep.subr.mxu0 0.0
      %1238 = vmatpush1.msra.mxu0 0.0
      %1239 = vmatprep.subr.mxu0 0.0
      %1240 = vmatpush1.msra.mxu0 0.0
      %1241 = vmatprep.subr.mxu0 0.0
      %1242 = vmatpush1.msra.mxu0 0.0
      %1243 = vmatprep.mubr.f32.mxu0 0.0
      %1244 = vmatmul.mubr.f32.gmra.mrb[0].mxu0 %v1177
      %v1245 = vpop.f32.mrb[0].mxu0
      %v1246 = vadd.f32 0.0, %v1245
      %v1247 = vpop.f32.mrb[0].mxu0
      %1248 = vdwg.mxu0
      %s1249 = scalar_lea.vmem %s5, 128
      %v1250 = vld [vmem:[%s1249] sm:$0xff]
      %v1251 = vld [vmem:[%s1249 + $0x8] sm:$0xff]
      %v1252 = vld [vmem:[%s1249 + $0x10] sm:$0xff]
      %v1253 = vld [vmem:[%s1249 + $0x18] sm:$0xff]
      %v1254 = vld [vmem:[%s1249 + $0x20] sm:$0xff]
      %v1255 = vld [vmem:[%s1249 + $0x28] sm:$0xff]
      %v1256 = vld [vmem:[%s1249 + $0x30] sm:$0xff]
      %v1257 = vld [vmem:[%s1249 + $0x38] sm:$0xff]
      %v1258 = vld [vmem:[%s1249 + $0x40] sm:$0xff]
      %v1259 = vld [vmem:[%s1249 + $0x48] sm:$0xff]
      %v1260 = vld [vmem:[%s1249 + $0x50] sm:$0xff]
      %v1261 = vld [vmem:[%s1249 + $0x58] sm:$0xff]
      %v1262 = vld [vmem:[%s1249 + $0x60] sm:$0xff]
      %v1263 = vld [vmem:[%s1249 + $0x68] sm:$0xff]
      %v1264 = vld [vmem:[%s1249 + $0x70] sm:$0xff]
      %v1265 = vld [vmem:[%s1249 + $0x78] sm:$0xff]
      %1266 = vmatprep.subr.mxu0 0.0
      %1267 = vmatpush1.msra.mxu0 %v1250
      %1268 = vmatprep.subr.mxu0 0.0
      %1269 = vmatpush1.msra.mxu0 %v1251
      %1270 = vmatprep.subr.mxu0 0.0
      %1271 = vmatpush1.msra.mxu0 %v1252
      %1272 = vmatprep.subr.mxu0 0.0
      %1273 = vmatpush1.msra.mxu0 %v1253
      %1274 = vmatprep.subr.mxu0 0.0
      %1275 = vmatpush1.msra.mxu0 %v1254
      %1276 = vmatprep.subr.mxu0 0.0
      %1277 = vmatpush1.msra.mxu0 %v1255
      %1278 = vmatprep.subr.mxu0 0.0
      %1279 = vmatpush1.msra.mxu0 %v1256
      %1280 = vmatprep.subr.mxu0 0.0
      %1281 = vmatpush1.msra.mxu0 %v1257
      %1282 = vmatprep.subr.mxu0 0.0
      %1283 = vmatpush1.msra.mxu0 %v1258
      %1284 = vmatprep.subr.mxu0 0.0
      %1285 = vmatpush1.msra.mxu0 %v1259
      %1286 = vmatprep.subr.mxu0 0.0
      %1287 = vmatpush1.msra.mxu0 %v1260
      %1288 = vmatprep.subr.mxu0 0.0
      %1289 = vmatpush1.msra.mxu0 %v1261
      %1290 = vmatprep.subr.mxu0 0.0
      %1291 = vmatpush1.msra.mxu0 %v1262
      %1292 = vmatprep.subr.mxu0 0.0
      %1293 = vmatpush1.msra.mxu0 %v1263
      %1294 = vmatprep.subr.mxu0 0.0
      %1295 = vmatpush1.msra.mxu0 %v1264
      %1296 = vmatprep.subr.mxu0 0.0
      %1297 = vmatpush1.msra.mxu0 %v1265
      %1298 = vmatprep.subr.mxu0 0.0
      %1299 = vmatpush1.msra.mxu0 0.0
      %1300 = vmatprep.subr.mxu0 0.0
      %1301 = vmatpush1.msra.mxu0 0.0
      %1302 = vmatprep.subr.mxu0 0.0
      %1303 = vmatpush1.msra.mxu0 0.0
      %1304 = vmatprep.subr.mxu0 0.0
      %1305 = vmatpush1.msra.mxu0 0.0
      %1306 = vmatprep.subr.mxu0 0.0
      %1307 = vmatpush1.msra.mxu0 0.0
      %1308 = vmatprep.subr.mxu0 0.0
      %1309 = vmatpush1.msra.mxu0 0.0
      %1310 = vmatprep.subr.mxu0 0.0
      %1311 = vmatpush1.msra.mxu0 0.0
      %1312 = vmatprep.subr.mxu0 0.0
      %1313 = vmatpush1.msra.mxu0 0.0
      %1314 = vmatprep.subr.mxu0 0.0
      %1315 = vmatpush1.msra.mxu0 0.0
      %1316 = vmatprep.subr.mxu0 0.0
      %1317 = vmatpush1.msra.mxu0 0.0
      %1318 = vmatprep.subr.mxu0 0.0
      %1319 = vmatpush1.msra.mxu0 0.0
      %1320 = vmatprep.subr.mxu0 0.0
      %1321 = vmatpush1.msra.mxu0 0.0
      %1322 = vmatprep.subr.mxu0 0.0
      %1323 = vmatpush1.msra.mxu0 0.0
      %1324 = vmatprep.subr.mxu0 0.0
      %1325 = vmatpush1.msra.mxu0 0.0
      %1326 = vmatprep.subr.mxu0 0.0
      %1327 = vmatpush1.msra.mxu0 0.0
      %1328 = vmatprep.subr.mxu0 0.0
      %1329 = vmatpush1.msra.mxu0 0.0
      %1330 = vmatprep.mubr.f32.mxu0 0.0
      %1331 = vmatmul.mubr.f32.gmra.mrb[0].mxu0 %v1246
      %v1332 = vpop.f32.mrb[0].mxu0
      %v1333 = vadd.f32 0.0, %v1332
      %v1334 = vpop.f32.mrb[0].mxu0
      %1335 = vdwg.mxu0
      %1336 = vmatprep.subr.mxu0 0.0
      %1337 = vmatpush1.msra.mxu0 %v1158
      %1338 = vmatprep.subr.mxu0 0.0
      %1339 = vmatpush1.msra.mxu0 %v1159
      %1340 = vmatprep.subr.mxu0 0.0
      %1341 = vmatpush1.msra.mxu0 %v1160
      %1342 = vmatprep.subr.mxu0 0.0
      %1343 = vmatpush1.msra.mxu0 %v1161
      %1344 = vmatprep.subr.mxu0 0.0
      %1345 = vmatpush1.msra.mxu0 %v1162
      %1346 = vmatprep.subr.mxu0 0.0
      %1347 = vmatpush1.msra.mxu0 %v1163
      %1348 = vmatprep.subr.mxu0 0.0
      %1349 = vmatpush1.msra.mxu0 %v1164
      %1350 = vmatprep.subr.mxu0 0.0
      %1351 = vmatpush1.msra.mxu0 %v1165
      %1352 = vmatprep.subr.mxu0 0.0
      %1353 = vmatpush1.msra.mxu0 %v1166
      %1354 = vmatprep.subr.mxu0 0.0
      %1355 = vmatpush1.msra.mxu0 %v1167
      %1356 = vmatprep.subr.mxu0 0.0
      %1357 = vmatpush1.msra.mxu0 %v1168
      %1358 = vmatprep.subr.mxu0 0.0
      %1359 = vmatpush1.msra.mxu0 %v1169
      %1360 = vmatprep.subr.mxu0 0.0
      %1361 = vmatpush1.msra.mxu0 %v1170
      %1362 = vmatprep.subr.mxu0 0.0
      %1363 = vmatpush1.msra.mxu0 %v1171
      %1364 = vmatprep.subr.mxu0 0.0
      %1365 = vmatpush1.msra.mxu0 %v1172
      %1366 = vmatprep.subr.mxu0 0.0
      %1367 = vmatpush1.msra.mxu0 %v1173
      %1368 = vmatprep.subr.mxu0 0.0
      %1369 = vmatpush1.msra.mxu0 0.0
      %1370 = vmatprep.subr.mxu0 0.0
      %1371 = vmatpush1.msra.mxu0 0.0
      %1372 = vmatprep.subr.mxu0 0.0
      %1373 = vmatpush1.msra.mxu0 0.0
      %1374 = vmatprep.subr.mxu0 0.0
      %1375 = vmatpush1.msra.mxu0 0.0
      %1376 = vmatprep.subr.mxu0 0.0
      %1377 = vmatpush1.msra.mxu0 0.0
      %1378 = vmatprep.subr.mxu0 0.0
      %1379 = vmatpush1.msra.mxu0 0.0
      %1380 = vmatprep.subr.mxu0 0.0
      %1381 = vmatpush1.msra.mxu0 0.0
      %1382 = vmatprep.subr.mxu0 0.0
      %1383 = vmatpush1.msra.mxu0 0.0
      %1384 = vmatprep.subr.mxu0 0.0
      %1385 = vmatpush1.msra.mxu0 0.0
      %1386 = vmatprep.subr.mxu0 0.0
      %1387 = vmatpush1.msra.mxu0 0.0
      %1388 = vmatprep.subr.mxu0 0.0
      %1389 = vmatpush1.msra.mxu0 0.0
      %1390 = vmatprep.subr.mxu0 0.0
      %1391 = vmatpush1.msra.mxu0 0.0
      %1392 = vmatprep.subr.mxu0 0.0
      %1393 = vmatpush1.msra.mxu0 0.0
      %1394 = vmatprep.subr.mxu0 0.0
      %1395 = vmatpush1.msra.mxu0 0.0
      %1396 = vmatprep.subr.mxu0 0.0
      %1397 = vmatpush1.msra.mxu0 0.0
      %1398 = vmatprep.subr.mxu0 0.0
      %1399 = vmatpush1.msra.mxu0 0.0
      %1400 = vmatprep.mubr.f32.mxu0 0.0
      %1401 = vmatmul.mubr.f32.gmra.mrb[0].mxu0 %v1155
      %v1402 = vpop.f32.mrb[0].mxu0
      %v1403 = vadd.f32 %v1333, %v1402
      %v1404 = vpop.f32.mrb[0].mxu0
      %1405 = vdwg.mxu0
      %s1406 = scalar_lea.vmem %s4, 8
      %v1407 = vld [vmem:[%s1406] sm:$0xf]
      %v1409 = vsel %vm1084, %v1407, 0
      %1411 = vmatprep.subr.mxu0 0.0
      %1412 = vmatpush1.msra.mxu0 %v1081
      %1413 = vmatprep.subr.mxu0 0.0
      %1414 = vmatpush1.msra.mxu0 0.0
      %1415 = vmatprep.subr.mxu0 0.0
      %1416 = vmatpush1.msra.mxu0 0.0
      %1417 = vmatprep.subr.mxu0 0.0
      %1418 = vmatpush1.msra.mxu0 0.0
      %1419 = vmatprep.subr.mxu0 0.0
      %1420 = vmatpush1.msra.mxu0 0.0
      %1421 = vmatprep.subr.mxu0 0.0
      %1422 = vmatpush1.msra.mxu0 0.0
      %1423 = vmatprep.subr.mxu0 0.0
      %1424 = vmatpush1.msra.mxu0 0.0
      %1425 = vmatprep.subr.mxu0 0.0
      %1426 = vmatpush1.msra.mxu0 0.0
      %1427 = vmatprep.subr.mxu0 0.0
      %1428 = vmatpush1.msra.mxu0 0.0
      %1429 = vmatprep.subr.mxu0 0.0
      %1430 = vmatpush1.msra.mxu0 0.0
      %1431 = vmatprep.subr.mxu0 0.0
      %1432 = vmatpush1.msra.mxu0 0.0
      %1433 = vmatprep.subr.mxu0 0.0
      %1434 = vmatpush1.msra.mxu0 0.0
      %1435 = vmatprep.subr.mxu0 0.0
      %1436 = vmatpush1.msra.mxu0 0.0
      %1437 = vmatprep.subr.mxu0 0.0
      %1438 = vmatpush1.msra.mxu0 0.0
      %1439 = vmatprep.subr.mxu0 0.0
      %1440 = vmatpush1.msra.mxu0 0.0
      %1441 = vmatprep.subr.mxu0 0.0
      %1442 = vmatpush1.msra.mxu0 0.0
      %1443 = vmatprep.subr.mxu0 0.0
      %1444 = vmatpush1.msra.mxu0 0.0
      %1445 = vmatprep.subr.mxu0 0.0
      %1446 = vmatpush1.msra.mxu0 0.0
      %1447 = vmatprep.subr.mxu0 0.0
      %1448 = vmatpush1.msra.mxu0 0.0
      %1449 = vmatprep.subr.mxu0 0.0
      %1450 = vmatpush1.msra.mxu0 0.0
      %1451 = vmatprep.subr.mxu0 0.0
      %1452 = vmatpush1.msra.mxu0 0.0
      %1453 = vmatprep.subr.mxu0 0.0
      %1454 = vmatpush1.msra.mxu0 0.0
      %1455 = vmatprep.subr.mxu0 0.0
      %1456 = vmatpush1.msra.mxu0 0.0
      %1457 = vmatprep.subr.mxu0 0.0
      %1458 = vmatpush1.msra.mxu0 0.0
      %1459 = vmatprep.subr.mxu0 0.0
      %1460 = vmatpush1.msra.mxu0 0.0
      %1461 = vmatprep.subr.mxu0 0.0
      %1462 = vmatpush1.msra.mxu0 0.0
      %1463 = vmatprep.subr.mxu0 0.0
      %1464 = vmatpush1.msra.mxu0 0.0
      %1465 = vmatprep.subr.mxu0 0.0
      %1466 = vmatpush1.msra.mxu0 0.0
      %1467 = vmatprep.subr.mxu0 0.0
      %1468 = vmatpush1.msra.mxu0 0.0
      %1469 = vmatprep.subr.mxu0 0.0
      %1470 = vmatpush1.msra.mxu0 0.0
      %1471 = vmatprep.subr.mxu0 0.0
      %1472 = vmatpush1.msra.mxu0 0.0
      %1473 = vmatprep.subr.mxu0 0.0
      %1474 = vmatpush1.msra.mxu0 0.0
      %1475 = vmatprep.mubr.f32.mxu0 0.0
      %1476 = vmatmul.mubr.f32.gmra.mrb[0].mxu0 %v1409
      %v1477 = vpop.f32.mrb[0].mxu0
      %v1478 = vadd.f32 0.0, %v1477
      %v1479 = vpop.f32.mrb[0].mxu0
      %1480 = vdwg.mxu0
      %s1481 = scalar_lea.vmem %s5, 256
      %v1482 = vld [vmem:[%s1481] sm:$0xff]
      %v1483 = vld [vmem:[%s1481 + $0x8] sm:$0xff]
      %v1484 = vld [vmem:[%s1481 + $0x10] sm:$0xff]
      %v1485 = vld [vmem:[%s1481 + $0x18] sm:$0xff]
      %v1486 = vld [vmem:[%s1481 + $0x20] sm:$0xff]
      %v1487 = vld [vmem:[%s1481 + $0x28] sm:$0xff]
      %v1488 = vld [vmem:[%s1481 + $0x30] sm:$0xff]
      %v1489 = vld [vmem:[%s1481 + $0x38] sm:$0xff]
      %v1490 = vld [vmem:[%s1481 + $0x40] sm:$0xff]
      %v1491 = vld [vmem:[%s1481 + $0x48] sm:$0xff]
      %v1492 = vld [vmem:[%s1481 + $0x50] sm:$0xff]
      %v1493 = vld [vmem:[%s1481 + $0x58] sm:$0xff]
      %v1494 = vld [vmem:[%s1481 + $0x60] sm:$0xff]
      %v1495 = vld [vmem:[%s1481 + $0x68] sm:$0xff]
      %v1496 = vld [vmem:[%s1481 + $0x70] sm:$0xff]
      %v1497 = vld [vmem:[%s1481 + $0x78] sm:$0xff]
      %1498 = vmatprep.subr.mxu0 0.0
      %1499 = vmatpush1.msra.mxu0 %v1482
      %1500 = vmatprep.subr.mxu0 0.0
      %1501 = vmatpush1.msra.mxu0 %v1483
      %1502 = vmatprep.subr.mxu0 0.0
      %1503 = vmatpush1.msra.mxu0 %v1484
      %1504 = vmatprep.subr.mxu0 0.0
      %1505 = vmatpush1.msra.mxu0 %v1485
      %1506 = vmatprep.subr.mxu0 0.0
      %1507 = vmatpush1.msra.mxu0 %v1486
      %1508 = vmatprep.subr.mxu0 0.0
      %1509 = vmatpush1.msra.mxu0 %v1487
      %1510 = vmatprep.subr.mxu0 0.0
      %1511 = vmatpush1.msra.mxu0 %v1488
      %1512 = vmatprep.subr.mxu0 0.0
      %1513 = vmatpush1.msra.mxu0 %v1489
      %1514 = vmatprep.subr.mxu0 0.0
      %1515 = vmatpush1.msra.mxu0 %v1490
      %1516 = vmatprep.subr.mxu0 0.0
      %1517 = vmatpush1.msra.mxu0 %v1491
      %1518 = vmatprep.subr.mxu0 0.0
      %1519 = vmatpush1.msra.mxu0 %v1492
      %1520 = vmatprep.subr.mxu0 0.0
      %1521 = vmatpush1.msra.mxu0 %v1493
      %1522 = vmatprep.subr.mxu0 0.0
      %1523 = vmatpush1.msra.mxu0 %v1494
      %1524 = vmatprep.subr.mxu0 0.0
      %1525 = vmatpush1.msra.mxu0 %v1495
      %1526 = vmatprep.subr.mxu0 0.0
      %1527 = vmatpush1.msra.mxu0 %v1496
      %1528 = vmatprep.subr.mxu0 0.0
      %1529 = vmatpush1.msra.mxu0 %v1497
      %1530 = vmatprep.subr.mxu0 0.0
      %1531 = vmatpush1.msra.mxu0 0.0
      %1532 = vmatprep.subr.mxu0 0.0
      %1533 = vmatpush1.msra.mxu0 0.0
      %1534 = vmatprep.subr.mxu0 0.0
      %1535 = vmatpush1.msra.mxu0 0.0
      %1536 = vmatprep.subr.mxu0 0.0
      %1537 = vmatpush1.msra.mxu0 0.0
      %1538 = vmatprep.subr.mxu0 0.0
      %1539 = vmatpush1.msra.mxu0 0.0
      %1540 = vmatprep.subr.mxu0 0.0
      %1541 = vmatpush1.msra.mxu0 0.0
      %1542 = vmatprep.subr.mxu0 0.0
      %1543 = vmatpush1.msra.mxu0 0.0
      %1544 = vmatprep.subr.mxu0 0.0
      %1545 = vmatpush1.msra.mxu0 0.0
      %1546 = vmatprep.subr.mxu0 0.0
      %1547 = vmatpush1.msra.mxu0 0.0
      %1548 = vmatprep.subr.mxu0 0.0
      %1549 = vmatpush1.msra.mxu0 0.0
      %1550 = vmatprep.subr.mxu0 0.0
      %1551 = vmatpush1.msra.mxu0 0.0
      %1552 = vmatprep.subr.mxu0 0.0
      %1553 = vmatpush1.msra.mxu0 0.0
      %1554 = vmatprep.subr.mxu0 0.0
      %1555 = vmatpush1.msra.mxu0 0.0
      %1556 = vmatprep.subr.mxu0 0.0
      %1557 = vmatpush1.msra.mxu0 0.0
      %1558 = vmatprep.subr.mxu0 0.0
      %1559 = vmatpush1.msra.mxu0 0.0
      %1560 = vmatprep.subr.mxu0 0.0
      %1561 = vmatpush1.msra.mxu0 0.0
      %1562 = vmatprep.mubr.f32.mxu0 0.0
      %1563 = vmatmul.mubr.f32.gmra.mrb[0].mxu0 %v1478
      %v1564 = vpop.f32.mrb[0].mxu0
      %v1565 = vadd.f32 0.0, %v1564
      %v1566 = vpop.f32.mrb[0].mxu0
      %1567 = vdwg.mxu0
      %v1568 = vadd.f32 %v1403, %v1565
      %s1569 = scalar_lea.vmem %s4, 12
      %v1570 = vld [vmem:[%s1569] sm:$0xf]
      %v1572 = vsel %vm1084, %v1570, 0
      %1574 = vmatprep.subr.mxu0 0.0
      %1575 = vmatpush1.msra.mxu0 %v1081
      %1576 = vmatprep.subr.mxu0 0.0
      %1577 = vmatpush1.msra.mxu0 0.0
      %1578 = vmatprep.subr.mxu0 0.0
      %1579 = vmatpush1.msra.mxu0 0.0
      %1580 = vmatprep.subr.mxu0 0.0
      %1581 = vmatpush1.msra.mxu0 0.0
      %1582 = vmatprep.subr.mxu0 0.0
      %1583 = vmatpush1.msra.mxu0 0.0
      %1584 = vmatprep.subr.mxu0 0.0
      %1585 = vmatpush1.msra.mxu0 0.0
      %1586 = vmatprep.subr.mxu0 0.0
      %1587 = vmatpush1.msra.mxu0 0.0
      %1588 = vmatprep.subr.mxu0 0.0
      %1589 = vmatpush1.msra.mxu0 0.0
      %1590 = vmatprep.subr.mxu0 0.0
      %1591 = vmatpush1.msra.mxu0 0.0
      %1592 = vmatprep.subr.mxu0 0.0
      %1593 = vmatpush1.msra.mxu0 0.0
      %1594 = vmatprep.subr.mxu0 0.0
      %1595 = vmatpush1.msra.mxu0 0.0
      %1596 = vmatprep.subr.mxu0 0.0
      %1597 = vmatpush1.msra.mxu0 0.0
      %1598 = vmatprep.subr.mxu0 0.0
      %1599 = vmatpush1.msra.mxu0 0.0
      %1600 = vmatprep.subr.mxu0 0.0
      %1601 = vmatpush1.msra.mxu0 0.0
      %1602 = vmatprep.subr.mxu0 0.0
      %1603 = vmatpush1.msra.mxu0 0.0
      %1604 = vmatprep.subr.mxu0 0.0
      %1605 = vmatpush1.msra.mxu0 0.0
      %1606 = vmatprep.subr.mxu0 0.0
      %1607 = vmatpush1.msra.mxu0 0.0
      %1608 = vmatprep.subr.mxu0 0.0
      %1609 = vmatpush1.msra.mxu0 0.0
      %1610 = vmatprep.subr.mxu0 0.0
      %1611 = vmatpush1.msra.mxu0 0.0
      %1612 = vmatprep.subr.mxu0 0.0
      %1613 = vmatpush1.msra.mxu0 0.0
      %1614 = vmatprep.subr.mxu0 0.0
      %1615 = vmatpush1.msra.mxu0 0.0
      %1616 = vmatprep.subr.mxu0 0.0
      %1617 = vmatpush1.msra.mxu0 0.0
      %1618 = vmatprep.subr.mxu0 0.0
      %1619 = vmatpush1.msra.mxu0 0.0
      %1620 = vmatprep.subr.mxu0 0.0
      %1621 = vmatpush1.msra.mxu0 0.0
      %1622 = vmatprep.subr.mxu0 0.0
      %1623 = vmatpush1.msra.mxu0 0.0
      %1624 = vmatprep.subr.mxu0 0.0
      %1625 = vmatpush1.msra.mxu0 0.0
      %1626 = vmatprep.subr.mxu0 0.0
      %1627 = vmatpush1.msra.mxu0 0.0
      %1628 = vmatprep.subr.mxu0 0.0
      %1629 = vmatpush1.msra.mxu0 0.0
      %1630 = vmatprep.subr.mxu0 0.0
      %1631 = vmatpush1.msra.mxu0 0.0
      %1632 = vmatprep.subr.mxu0 0.0
      %1633 = vmatpush1.msra.mxu0 0.0
      %1634 = vmatprep.subr.mxu0 0.0
      %1635 = vmatpush1.msra.mxu0 0.0
      %1636 = vmatprep.subr.mxu0 0.0
      %1637 = vmatpush1.msra.mxu0 0.0
      %1638 = vmatprep.mubr.f32.mxu0 0.0
      %1639 = vmatmul.mubr.f32.gmra.mrb[0].mxu0 %v1572
      %v1640 = vpop.f32.mrb[0].mxu0
      %v1641 = vadd.f32 0.0, %v1640
      %v1642 = vpop.f32.mrb[0].mxu0
      %1643 = vdwg.mxu0
      %s1644 = scalar_lea.vmem %s5, 384
      %v1645 = vld [vmem:[%s1644] sm:$0xff]
      %v1646 = vld [vmem:[%s1644 + $0x8] sm:$0xff]
      %v1647 = vld [vmem:[%s1644 + $0x10] sm:$0xff]
      %v1648 = vld [vmem:[%s1644 + $0x18] sm:$0xff]
      %v1649 = vld [vmem:[%s1644 + $0x20] sm:$0xff]
      %v1650 = vld [vmem:[%s1644 + $0x28] sm:$0xff]
      %v1651 = vld [vmem:[%s1644 + $0x30] sm:$0xff]
      %v1652 = vld [vmem:[%s1644 + $0x38] sm:$0xff]
      %v1653 = vld [vmem:[%s1644 + $0x40] sm:$0xff]
      %v1654 = vld [vmem:[%s1644 + $0x48] sm:$0xff]
      %v1655 = vld [vmem:[%s1644 + $0x50] sm:$0xff]
      %v1656 = vld [vmem:[%s1644 + $0x58] sm:$0xff]
      %v1657 = vld [vmem:[%s1644 + $0x60] sm:$0xff]
      %v1658 = vld [vmem:[%s1644 + $0x68] sm:$0xff]
      %v1659 = vld [vmem:[%s1644 + $0x70] sm:$0xff]
      %v1660 = vld [vmem:[%s1644 + $0x78] sm:$0xff]
      %1661 = vmatprep.subr.mxu0 0.0
      %1662 = vmatpush1.msra.mxu0 %v1645
      %1663 = vmatprep.subr.mxu0 0.0
      %1664 = vmatpush1.msra.mxu0 %v1646
      %1665 = vmatprep.subr.mxu0 0.0
      %1666 = vmatpush1.msra.mxu0 %v1647
      %1667 = vmatprep.subr.mxu0 0.0
      %1668 = vmatpush1.msra.mxu0 %v1648
      %1669 = vmatprep.subr.mxu0 0.0
      %1670 = vmatpush1.msra.mxu0 %v1649
      %1671 = vmatprep.subr.mxu0 0.0
      %1672 = vmatpush1.msra.mxu0 %v1650
      %1673 = vmatprep.subr.mxu0 0.0
      %1674 = vmatpush1.msra.mxu0 %v1651
      %1675 = vmatprep.subr.mxu0 0.0
      %1676 = vmatpush1.msra.mxu0 %v1652
      %1677 = vmatprep.subr.mxu0 0.0
      %1678 = vmatpush1.msra.mxu0 %v1653
      %1679 = vmatprep.subr.mxu0 0.0
      %1680 = vmatpush1.msra.mxu0 %v1654
      %1681 = vmatprep.subr.mxu0 0.0
      %1682 = vmatpush1.msra.mxu0 %v1655
      %1683 = vmatprep.subr.mxu0 0.0
      %1684 = vmatpush1.msra.mxu0 %v1656
      %1685 = vmatprep.subr.mxu0 0.0
      %1686 = vmatpush1.msra.mxu0 %v1657
      %1687 = vmatprep.subr.mxu0 0.0
      %1688 = vmatpush1.msra.mxu0 %v1658
      %1689 = vmatprep.subr.mxu0 0.0
      %1690 = vmatpush1.msra.mxu0 %v1659
      %1691 = vmatprep.subr.mxu0 0.0
      %1692 = vmatpush1.msra.mxu0 %v1660
      %1693 = vmatprep.subr.mxu0 0.0
      %1694 = vmatpush1.msra.mxu0 0.0
      %1695 = vmatprep.subr.mxu0 0.0
      %1696 = vmatpush1.msra.mxu0 0.0
      %1697 = vmatprep.subr.mxu0 0.0
      %1698 = vmatpush1.msra.mxu0 0.0
      %1699 = vmatprep.subr.mxu0 0.0
      %1700 = vmatpush1.msra.mxu0 0.0
      %1701 = vmatprep.subr.mxu0 0.0
      %1702 = vmatpush1.msra.mxu0 0.0
      %1703 = vmatprep.subr.mxu0 0.0
      %1704 = vmatpush1.msra.mxu0 0.0
      %1705 = vmatprep.subr.mxu0 0.0
      %1706 = vmatpush1.msra.mxu0 0.0
      %1707 = vmatprep.subr.mxu0 0.0
      %1708 = vmatpush1.msra.mxu0 0.0
      %1709 = vmatprep.subr.mxu0 0.0
      %1710 = vmatpush1.msra.mxu0 0.0
      %1711 = vmatprep.subr.mxu0 0.0
      %1712 = vmatpush1.msra.mxu0 0.0
      %1713 = vmatprep.subr.mxu0 0.0
      %1714 = vmatpush1.msra.mxu0 0.0
      %1715 = vmatprep.subr.mxu0 0.0
      %1716 = vmatpush1.msra.mxu0 0.0
      %1717 = vmatprep.subr.mxu0 0.0
      %1718 = vmatpush1.msra.mxu0 0.0
      %1719 = vmatprep.subr.mxu0 0.0
      %1720 = vmatpush1.msra.mxu0 0.0
      %1721 = vmatprep.subr.mxu0 0.0
      %1722 = vmatpush1.msra.mxu0 0.0
      %1723 = vmatprep.subr.mxu0 0.0
      %1724 = vmatpush1.msra.mxu0 0.0
      %1725 = vmatprep.mubr.f32.mxu0 0.0
      %1726 = vmatmul.mubr.f32.gmra.mrb[0].mxu0 %v1641
      %v1727 = vpop.f32.mrb[0].mxu0
      %v1728 = vadd.f32 0.0, %v1727
      %v1729 = vpop.f32.mrb[0].mxu0
      %1730 = vdwg.mxu0
      %v1731 = vadd.f32 %v1568, %v1728
      %v1733 = vlaneseq
      %v1734 = vshrl.u32 %v1733, 7
      %v1735 = vsub.s32 0, %v1734
      %v1736 = vrot.slane %v1082, %v1735
      %v1738 = vadd.f32 %v1731, %v1736
      %v1739 = vmax.f32 %v1738, 0.0
      %v1740 = vld [vmem:[%s9] sm:$0x1]
      %v1741 = vld [vmem:[%s7] sm:$0xf]
      %vm1742 = vcmask 31744
      %v1744 = vsel %vm1742, %v1741, 0
      %vm1746 = vcmask 1043456
      %v1748 = vsel %vm1746, %v1739, 0
      %1750 = vmatprep.subr.mxu0 0.0
      %1751 = vmatpush1.msra.mxu0 %v1748
      %1752 = vmatprep.subr.mxu0 0.0
      %1753 = vmatpush1.msra.mxu0 0.0
      %1754 = vmatprep.subr.mxu0 0.0
      %1755 = vmatpush1.msra.mxu0 0.0
      %1756 = vmatprep.subr.mxu0 0.0
      %1757 = vmatpush1.msra.mxu0 0.0
      %1758 = vmatprep.subr.mxu0 0.0
      %1759 = vmatpush1.msra.mxu0 0.0
      %1760 = vmatprep.subr.mxu0 0.0
      %1761 = vmatpush1.msra.mxu0 0.0
      %1762 = vmatprep.subr.mxu0 0.0
      %1763 = vmatpush1.msra.mxu0 0.0
      %1764 = vmatprep.subr.mxu0 0.0
      %1765 = vmatpush1.msra.mxu0 0.0
      %1766 = vmatprep.subr.mxu0 0.0
      %1767 = vmatpush1.msra.mxu0 0.0
      %1768 = vmatprep.subr.mxu0 0.0
      %1769 = vmatpush1.msra.mxu0 0.0
      %1770 = vmatprep.subr.mxu0 0.0
      %1771 = vmatpush1.msra.mxu0 0.0
      %1772 = vmatprep.subr.mxu0 0.0
      %1773 = vmatpush1.msra.mxu0 0.0
      %1774 = vmatprep.subr.mxu0 0.0
      %1775 = vmatpush1.msra.mxu0 0.0
      %1776 = vmatprep.subr.mxu0 0.0
      %1777 = vmatpush1.msra.mxu0 0.0
      %1778 = vmatprep.subr.mxu0 0.0
      %1779 = vmatpush1.msra.mxu0 0.0
      %1780 = vmatprep.subr.mxu0 0.0
      %1781 = vmatpush1.msra.mxu0 0.0
      %1782 = vmatprep.subr.mxu0 0.0
      %1783 = vmatpush1.msra.mxu0 0.0
      %1784 = vmatprep.subr.mxu0 0.0
      %1785 = vmatpush1.msra.mxu0 0.0
      %1786 = vmatprep.subr.mxu0 0.0
      %1787 = vmatpush1.msra.mxu0 0.0
      %1788 = vmatprep.subr.mxu0 0.0
      %1789 = vmatpush1.msra.mxu0 0.0
      %1790 = vmatprep.subr.mxu0 0.0
      %1791 = vmatpush1.msra.mxu0 0.0
      %1792 = vmatprep.subr.mxu0 0.0
      %1793 = vmatpush1.msra.mxu0 0.0
      %1794 = vmatprep.subr.mxu0 0.0
      %1795 = vmatpush1.msra.mxu0 0.0
      %1796 = vmatprep.subr.mxu0 0.0
      %1797 = vmatpush1.msra.mxu0 0.0
      %1798 = vmatprep.subr.mxu0 0.0
      %1799 = vmatpush1.msra.mxu0 0.0
      %1800 = vmatprep.subr.mxu0 0.0
      %1801 = vmatpush1.msra.mxu0 0.0
      %1802 = vmatprep.subr.mxu0 0.0
      %1803 = vmatpush1.msra.mxu0 0.0
      %1804 = vmatprep.subr.mxu0 0.0
      %1805 = vmatpush1.msra.mxu0 0.0
      %1806 = vmatprep.subr.mxu0 0.0
      %1807 = vmatpush1.msra.mxu0 0.0
      %1808 = vmatprep.subr.mxu0 0.0
      %1809 = vmatpush1.msra.mxu0 0.0
      %1810 = vmatprep.subr.mxu0 0.0
      %1811 = vmatpush1.msra.mxu0 0.0
      %1812 = vmatprep.subr.mxu0 0.0
      %1813 = vmatpush1.msra.mxu0 0.0
      %1814 = vmatprep.mubr.f32.mxu0 0.0
      %1815 = vmatmul.mubr.f32.gmra.mrb[0].mxu0 %v1744
      %v1816 = vpop.f32.mrb[0].mxu0
      %v1817 = vadd.f32 0.0, %v1816
      %v1818 = vpop.f32.mrb[0].mxu0
      %1819 = vdwg.mxu0
      %v1820 = vld [vmem:[%s8] sm:$0xff]
      %v1821 = vld [vmem:[%s8 + $0x8] sm:$0xff]
      %v1822 = vld [vmem:[%s8 + $0x10] sm:$0xff]
      %v1823 = vld [vmem:[%s8 + $0x18] sm:$0xff]
      %v1824 = vld [vmem:[%s8 + $0x20] sm:$0xff]
      %v1825 = vld [vmem:[%s8 + $0x28] sm:$0xff]
      %v1826 = vld [vmem:[%s8 + $0x30] sm:$0xff]
      %v1827 = vld [vmem:[%s8 + $0x38] sm:$0xff]
      %v1828 = vld [vmem:[%s8 + $0x40] sm:$0xff]
      %v1829 = vld [vmem:[%s8 + $0x48] sm:$0xff]
      %v1830 = vld [vmem:[%s8 + $0x50] sm:$0xff]
      %v1831 = vld [vmem:[%s8 + $0x58] sm:$0xff]
      %v1832 = vld [vmem:[%s8 + $0x60] sm:$0xff]
      %v1833 = vld [vmem:[%s8 + $0x68] sm:$0xff]
      %v1834 = vld [vmem:[%s8 + $0x70] sm:$0xff]
      %v1835 = vld [vmem:[%s8 + $0x78] sm:$0xff]
      %s1836 = scalar_lea.vmem %s7, 4
      %v1837 = vld [vmem:[%s1836] sm:$0xf]
      %v1839 = vsel %vm1742, %v1837, 0
      %1841 = vmatprep.subr.mxu0 0.0
      %1842 = vmatpush1.msra.mxu0 %v1748
      %1843 = vmatprep.subr.mxu0 0.0
      %1844 = vmatpush1.msra.mxu0 0.0
      %1845 = vmatprep.subr.mxu0 0.0
      %1846 = vmatpush1.msra.mxu0 0.0
      %1847 = vmatprep.subr.mxu0 0.0
      %1848 = vmatpush1.msra.mxu0 0.0
      %1849 = vmatprep.subr.mxu0 0.0
      %1850 = vmatpush1.msra.mxu0 0.0
      %1851 = vmatprep.subr.mxu0 0.0
      %1852 = vmatpush1.msra.mxu0 0.0
      %1853 = vmatprep.subr.mxu0 0.0
      %1854 = vmatpush1.msra.mxu0 0.0
      %1855 = vmatprep.subr.mxu0 0.0
      %1856 = vmatpush1.msra.mxu0 0.0
      %1857 = vmatprep.subr.mxu0 0.0
      %1858 = vmatpush1.msra.mxu0 0.0
      %1859 = vmatprep.subr.mxu0 0.0
      %1860 = vmatpush1.msra.mxu0 0.0
      %1861 = vmatprep.subr.mxu0 0.0
      %1862 = vmatpush1.msra.mxu0 0.0
      %1863 = vmatprep.subr.mxu0 0.0
      %1864 = vmatpush1.msra.mxu0 0.0
      %1865 = vmatprep.subr.mxu0 0.0
      %1866 = vmatpush1.msra.mxu0 0.0
      %1867 = vmatprep.subr.mxu0 0.0
      %1868 = vmatpush1.msra.mxu0 0.0
      %1869 = vmatprep.subr.mxu0 0.0
      %1870 = vmatpush1.msra.mxu0 0.0
      %1871 = vmatprep.subr.mxu0 0.0
      %1872 = vmatpush1.msra.mxu0 0.0
      %1873 = vmatprep.subr.mxu0 0.0
      %1874 = vmatpush1.msra.mxu0 0.0
      %1875 = vmatprep.subr.mxu0 0.0
      %1876 = vmatpush1.msra.mxu0 0.0
      %1877 = vmatprep.subr.mxu0 0.0
      %1878 = vmatpush1.msra.mxu0 0.0
      %1879 = vmatprep.subr.mxu0 0.0
      %1880 = vmatpush1.msra.mxu0 0.0
      %1881 = vmatprep.subr.mxu0 0.0
      %1882 = vmatpush1.msra.mxu0 0.0
      %1883 = vmatprep.subr.mxu0 0.0
      %1884 = vmatpush1.msra.mxu0 0.0
      %1885 = vmatprep.subr.mxu0 0.0
      %1886 = vmatpush1.msra.mxu0 0.0
      %1887 = vmatprep.subr.mxu0 0.0
      %1888 = vmatpush1.msra.mxu0 0.0
      %1889 = vmatprep.subr.mxu0 0.0
      %1890 = vmatpush1.msra.mxu0 0.0
      %1891 = vmatprep.subr.mxu0 0.0
      %1892 = vmatpush1.msra.mxu0 0.0
      %1893 = vmatprep.subr.mxu0 0.0
      %1894 = vmatpush1.msra.mxu0 0.0
      %1895 = vmatprep.subr.mxu0 0.0
      %1896 = vmatpush1.msra.mxu0 0.0
      %1897 = vmatprep.subr.mxu0 0.0
      %1898 = vmatpush1.msra.mxu0 0.0
      %1899 = vmatprep.subr.mxu0 0.0
      %1900 = vmatpush1.msra.mxu0 0.0
      %1901 = vmatprep.subr.mxu0 0.0
      %1902 = vmatpush1.msra.mxu0 0.0
      %1903 = vmatprep.subr.mxu0 0.0
      %1904 = vmatpush1.msra.mxu0 0.0
      %1905 = vmatprep.mubr.f32.mxu0 0.0
      %1906 = vmatmul.mubr.f32.gmra.mrb[0].mxu0 %v1839
      %v1907 = vpop.f32.mrb[0].mxu0
      %v1908 = vadd.f32 0.0, %v1907
      %v1909 = vpop.f32.mrb[0].mxu0
      %1910 = vdwg.mxu0
      %s1911 = scalar_lea.vmem %s8, 128
      %v1912 = vld [vmem:[%s1911] sm:$0xff]
      %v1913 = vld [vmem:[%s1911 + $0x8] sm:$0xff]
      %v1914 = vld [vmem:[%s1911 + $0x10] sm:$0xff]
      %v1915 = vld [vmem:[%s1911 + $0x18] sm:$0xff]
      %v1916 = vld [vmem:[%s1911 + $0x20] sm:$0xff]
      %v1917 = vld [vmem:[%s1911 + $0x28] sm:$0xff]
      %v1918 = vld [vmem:[%s1911 + $0x30] sm:$0xff]
      %v1919 = vld [vmem:[%s1911 + $0x38] sm:$0xff]
      %v1920 = vld [vmem:[%s1911 + $0x40] sm:$0xff]
      %v1921 = vld [vmem:[%s1911 + $0x48] sm:$0xff]
      %v1922 = vld [vmem:[%s1911 + $0x50] sm:$0xff]
      %v1923 = vld [vmem:[%s1911 + $0x58] sm:$0xff]
      %v1924 = vld [vmem:[%s1911 + $0x60] sm:$0xff]
      %v1925 = vld [vmem:[%s1911 + $0x68] sm:$0xff]
      %v1926 = vld [vmem:[%s1911 + $0x70] sm:$0xff]
      %v1927 = vld [vmem:[%s1911 + $0x78] sm:$0xff]
      %1928 = vmatprep.subr.mxu0 0.0
      %1929 = vmatpush1.msra.mxu0 %v1912
      %1930 = vmatprep.subr.mxu0 0.0
      %1931 = vmatpush1.msra.mxu0 %v1913
      %1932 = vmatprep.subr.mxu0 0.0
      %1933 = vmatpush1.msra.mxu0 %v1914
      %1934 = vmatprep.subr.mxu0 0.0
      %1935 = vmatpush1.msra.mxu0 %v1915
      %1936 = vmatprep.subr.mxu0 0.0
      %1937 = vmatpush1.msra.mxu0 %v1916
      %1938 = vmatprep.subr.mxu0 0.0
      %1939 = vmatpush1.msra.mxu0 %v1917
      %1940 = vmatprep.subr.mxu0 0.0
      %1941 = vmatpush1.msra.mxu0 %v1918
      %1942 = vmatprep.subr.mxu0 0.0
      %1943 = vmatpush1.msra.mxu0 %v1919
      %1944 = vmatprep.subr.mxu0 0.0
      %1945 = vmatpush1.msra.mxu0 %v1920
      %1946 = vmatprep.subr.mxu0 0.0
      %1947 = vmatpush1.msra.mxu0 %v1921
      %1948 = vmatprep.subr.mxu0 0.0
      %1949 = vmatpush1.msra.mxu0 %v1922
      %1950 = vmatprep.subr.mxu0 0.0
      %1951 = vmatpush1.msra.mxu0 %v1923
      %1952 = vmatprep.subr.mxu0 0.0
      %1953 = vmatpush1.msra.mxu0 %v1924
      %1954 = vmatprep.subr.mxu0 0.0
      %1955 = vmatpush1.msra.mxu0 %v1925
      %1956 = vmatprep.subr.mxu0 0.0
      %1957 = vmatpush1.msra.mxu0 %v1926
      %1958 = vmatprep.subr.mxu0 0.0
      %1959 = vmatpush1.msra.mxu0 %v1927
      %1960 = vmatprep.subr.mxu0 0.0
      %1961 = vmatpush1.msra.mxu0 0.0
      %1962 = vmatprep.subr.mxu0 0.0
      %1963 = vmatpush1.msra.mxu0 0.0
      %1964 = vmatprep.subr.mxu0 0.0
      %1965 = vmatpush1.msra.mxu0 0.0
      %1966 = vmatprep.subr.mxu0 0.0
      %1967 = vmatpush1.msra.mxu0 0.0
      %1968 = vmatprep.subr.mxu0 0.0
      %1969 = vmatpush1.msra.mxu0 0.0
      %1970 = vmatprep.subr.mxu0 0.0
      %1971 = vmatpush1.msra.mxu0 0.0
      %1972 = vmatprep.subr.mxu0 0.0
      %1973 = vmatpush1.msra.mxu0 0.0
      %1974 = vmatprep.subr.mxu0 0.0
      %1975 = vmatpush1.msra.mxu0 0.0
      %1976 = vmatprep.subr.mxu0 0.0
      %1977 = vmatpush1.msra.mxu0 0.0
      %1978 = vmatprep.subr.mxu0 0.0
      %1979 = vmatpush1.msra.mxu0 0.0
      %1980 = vmatprep.subr.mxu0 0.0
      %1981 = vmatpush1.msra.mxu0 0.0
      %1982 = vmatprep.subr.mxu0 0.0
      %1983 = vmatpush1.msra.mxu0 0.0
      %1984 = vmatprep.subr.mxu0 0.0
      %1985 = vmatpush1.msra.mxu0 0.0
      %1986 = vmatprep.subr.mxu0 0.0
      %1987 = vmatpush1.msra.mxu0 0.0
      %1988 = vmatprep.subr.mxu0 0.0
      %1989 = vmatpush1.msra.mxu0 0.0
      %1990 = vmatprep.subr.mxu0 0.0
      %1991 = vmatpush1.msra.mxu0 0.0
      %1992 = vmatprep.mubr.f32.mxu0 0.0
      %1993 = vmatmul.mubr.f32.gmra.mrb[0].mxu0 %v1908
      %v1994 = vpop.f32.mrb[0].mxu0
      %v1995 = vadd.f32 0.0, %v1994
      %v1996 = vpop.f32.mrb[0].mxu0
      %1997 = vdwg.mxu0
      %1998 = vmatprep.subr.mxu0 0.0
      %1999 = vmatpush1.msra.mxu0 %v1820
      %2000 = vmatprep.subr.mxu0 0.0
      %2001 = vmatpush1.msra.mxu0 %v1821
      %2002 = vmatprep.subr.mxu0 0.0
      %2003 = vmatpush1.msra.mxu0 %v1822
      %2004 = vmatprep.subr.mxu0 0.0
      %2005 = vmatpush1.msra.mxu0 %v1823
      %2006 = vmatprep.subr.mxu0 0.0
      %2007 = vmatpush1.msra.mxu0 %v1824
      %2008 = vmatprep.subr.mxu0 0.0
      %2009 = vmatpush1.msra.mxu0 %v1825
      %2010 = vmatprep.subr.mxu0 0.0
      %2011 = vmatpush1.msra.mxu0 %v1826
      %2012 = vmatprep.subr.mxu0 0.0
      %2013 = vmatpush1.msra.mxu0 %v1827
      %2014 = vmatprep.subr.mxu0 0.0
      %2015 = vmatpush1.msra.mxu0 %v1828
      %2016 = vmatprep.subr.mxu0 0.0
      %2017 = vmatpush1.msra.mxu0 %v1829
      %2018 = vmatprep.subr.mxu0 0.0
      %2019 = vmatpush1.msra.mxu0 %v1830
      %2020 = vmatprep.subr.mxu0 0.0
      %2021 = vmatpush1.msra.mxu0 %v1831
      %2022 = vmatprep.subr.mxu0 0.0
      %2023 = vmatpush1.msra.mxu0 %v1832
      %2024 = vmatprep.subr.mxu0 0.0
      %2025 = vmatpush1.msra.mxu0 %v1833
      %2026 = vmatprep.subr.mxu0 0.0
      %2027 = vmatpush1.msra.mxu0 %v1834
      %2028 = vmatprep.subr.mxu0 0.0
      %2029 = vmatpush1.msra.mxu0 %v1835
      %2030 = vmatprep.subr.mxu0 0.0
      %2031 = vmatpush1.msra.mxu0 0.0
      %2032 = vmatprep.subr.mxu0 0.0
      %2033 = vmatpush1.msra.mxu0 0.0
      %2034 = vmatprep.subr.mxu0 0.0
      %2035 = vmatpush1.msra.mxu0 0.0
      %2036 = vmatprep.subr.mxu0 0.0
      %2037 = vmatpush1.msra.mxu0 0.0
      %2038 = vmatprep.subr.mxu0 0.0
      %2039 = vmatpush1.msra.mxu0 0.0
      %2040 = vmatprep.subr.mxu0 0.0
      %2041 = vmatpush1.msra.mxu0 0.0
      %2042 = vmatprep.subr.mxu0 0.0
      %2043 = vmatpush1.msra.mxu0 0.0
      %2044 = vmatprep.subr.mxu0 0.0
      %2045 = vmatpush1.msra.mxu0 0.0
      %2046 = vmatprep.subr.mxu0 0.0
      %2047 = vmatpush1.msra.mxu0 0.0
      %2048 = vmatprep.subr.mxu0 0.0
      %2049 = vmatpush1.msra.mxu0 0.0
      %2050 = vmatprep.subr.mxu0 0.0
      %2051 = vmatpush1.msra.mxu0 0.0
      %2052 = vmatprep.subr.mxu0 0.0
      %2053 = vmatpush1.msra.mxu0 0.0
      %2054 = vmatprep.subr.mxu0 0.0
      %2055 = vmatpush1.msra.mxu0 0.0
      %2056 = vmatprep.subr.mxu0 0.0
      %2057 = vmatpush1.msra.mxu0 0.0
      %2058 = vmatprep.subr.mxu0 0.0
      %2059 = vmatpush1.msra.mxu0 0.0
      %2060 = vmatprep.subr.mxu0 0.0
      %2061 = vmatpush1.msra.mxu0 0.0
      %2062 = vmatprep.mubr.f32.mxu0 0.0
      %2063 = vmatmul.mubr.f32.gmra.mrb[0].mxu0 %v1817
      %v2064 = vpop.f32.mrb[0].mxu0
      %v2065 = vadd.f32 %v1995, %v2064
      %v2066 = vpop.f32.mrb[0].mxu0
      %2067 = vdwg.mxu0
      %s2068 = scalar_lea.vmem %s7, 8
      %v2069 = vld [vmem:[%s2068] sm:$0xf]
      %v2071 = vsel %vm1742, %v2069, 0
      %2073 = vmatprep.subr.mxu0 0.0
      %2074 = vmatpush1.msra.mxu0 %v1748
      %2075 = vmatprep.subr.mxu0 0.0
      %2076 = vmatpush1.msra.mxu0 0.0
      %2077 = vmatprep.subr.mxu0 0.0
      %2078 = vmatpush1.msra.mxu0 0.0
      %2079 = vmatprep.subr.mxu0 0.0
      %2080 = vmatpush1.msra.mxu0 0.0
      %2081 = vmatprep.subr.mxu0 0.0
      %2082 = vmatpush1.msra.mxu0 0.0
      %2083 = vmatprep.subr.mxu0 0.0
      %2084 = vmatpush1.msra.mxu0 0.0
      %2085 = vmatprep.subr.mxu0 0.0
      %2086 = vmatpush1.msra.mxu0 0.0
      %2087 = vmatprep.subr.mxu0 0.0
      %2088 = vmatpush1.msra.mxu0 0.0
      %2089 = vmatprep.subr.mxu0 0.0
      %2090 = vmatpush1.msra.mxu0 0.0
      %2091 = vmatprep.subr.mxu0 0.0
      %2092 = vmatpush1.msra.mxu0 0.0
      %2093 = vmatprep.subr.mxu0 0.0
      %2094 = vmatpush1.msra.mxu0 0.0
      %2095 = vmatprep.subr.mxu0 0.0
      %2096 = vmatpush1.msra.mxu0 0.0
      %2097 = vmatprep.subr.mxu0 0.0
      %2098 = vmatpush1.msra.mxu0 0.0
      %2099 = vmatprep.subr.mxu0 0.0
      %2100 = vmatpush1.msra.mxu0 0.0
      %2101 = vmatprep.subr.mxu0 0.0
      %2102 = vmatpush1.msra.mxu0 0.0
      %2103 = vmatprep.subr.mxu0 0.0
      %2104 = vmatpush1.msra.mxu0 0.0
      %2105 = vmatprep.subr.mxu0 0.0
      %2106 = vmatpush1.msra.mxu0 0.0
      %2107 = vmatprep.subr.mxu0 0.0
      %2108 = vmatpush1.msra.mxu0 0.0
      %2109 = vmatprep.subr.mxu0 0.0
      %2110 = vmatpush1.msra.mxu0 0.0
      %2111 = vmatprep.subr.mxu0 0.0
      %2112 = vmatpush1.msra.mxu0 0.0
      %2113 = vmatprep.subr.mxu0 0.0
      %2114 = vmatpush1.msra.mxu0 0.0
      %2115 = vmatprep.subr.mxu0 0.0
      %2116 = vmatpush1.msra.mxu0 0.0
      %2117 = vmatprep.subr.mxu0 0.0
      %2118 = vmatpush1.msra.mxu0 0.0
      %2119 = vmatprep.subr.mxu0 0.0
      %2120 = vmatpush1.msra.mxu0 0.0
      %2121 = vmatprep.subr.mxu0 0.0
      %2122 = vmatpush1.msra.mxu0 0.0
      %2123 = vmatprep.subr.mxu0 0.0
      %2124 = vmatpush1.msra.mxu0 0.0
      %2125 = vmatprep.subr.mxu0 0.0
      %2126 = vmatpush1.msra.mxu0 0.0
      %2127 = vmatprep.subr.mxu0 0.0
      %2128 = vmatpush1.msra.mxu0 0.0
      %2129 = vmatprep.subr.mxu0 0.0
      %2130 = vmatpush1.msra.mxu0 0.0
      %2131 = vmatprep.subr.mxu0 0.0
      %2132 = vmatpush1.msra.mxu0 0.0
      %2133 = vmatprep.subr.mxu0 0.0
      %2134 = vmatpush1.msra.mxu0 0.0
      %2135 = vmatprep.subr.mxu0 0.0
      %2136 = vmatpush1.msra.mxu0 0.0
      %2137 = vmatprep.mubr.f32.mxu0 0.0
      %2138 = vmatmul.mubr.f32.gmra.mrb[0].mxu0 %v2071
      %v2139 = vpop.f32.mrb[0].mxu0
      %v2140 = vadd.f32 0.0, %v2139
      %v2141 = vpop.f32.mrb[0].mxu0
      %2142 = vdwg.mxu0
      %s2143 = scalar_lea.vmem %s8, 256
      %v2144 = vld [vmem:[%s2143] sm:$0xff]
      %v2145 = vld [vmem:[%s2143 + $0x8] sm:$0xff]
      %v2146 = vld [vmem:[%s2143 + $0x10] sm:$0xff]
      %v2147 = vld [vmem:[%s2143 + $0x18] sm:$0xff]
      %v2148 = vld [vmem:[%s2143 + $0x20] sm:$0xff]
      %v2149 = vld [vmem:[%s2143 + $0x28] sm:$0xff]
      %v2150 = vld [vmem:[%s2143 + $0x30] sm:$0xff]
      %v2151 = vld [vmem:[%s2143 + $0x38] sm:$0xff]
      %v2152 = vld [vmem:[%s2143 + $0x40] sm:$0xff]
      %v2153 = vld [vmem:[%s2143 + $0x48] sm:$0xff]
      %v2154 = vld [vmem:[%s2143 + $0x50] sm:$0xff]
      %v2155 = vld [vmem:[%s2143 + $0x58] sm:$0xff]
      %v2156 = vld [vmem:[%s2143 + $0x60] sm:$0xff]
      %v2157 = vld [vmem:[%s2143 + $0x68] sm:$0xff]
      %v2158 = vld [vmem:[%s2143 + $0x70] sm:$0xff]
      %v2159 = vld [vmem:[%s2143 + $0x78] sm:$0xff]
      %2160 = vmatprep.subr.mxu0 0.0
      %2161 = vmatpush1.msra.mxu0 %v2144
      %2162 = vmatprep.subr.mxu0 0.0
      %2163 = vmatpush1.msra.mxu0 %v2145
      %2164 = vmatprep.subr.mxu0 0.0
      %2165 = vmatpush1.msra.mxu0 %v2146
      %2166 = vmatprep.subr.mxu0 0.0
      %2167 = vmatpush1.msra.mxu0 %v2147
      %2168 = vmatprep.subr.mxu0 0.0
      %2169 = vmatpush1.msra.mxu0 %v2148
      %2170 = vmatprep.subr.mxu0 0.0
      %2171 = vmatpush1.msra.mxu0 %v2149
      %2172 = vmatprep.subr.mxu0 0.0
      %2173 = vmatpush1.msra.mxu0 %v2150
      %2174 = vmatprep.subr.mxu0 0.0
      %2175 = vmatpush1.msra.mxu0 %v2151
      %2176 = vmatprep.subr.mxu0 0.0
      %2177 = vmatpush1.msra.mxu0 %v2152
      %2178 = vmatprep.subr.mxu0 0.0
      %2179 = vmatpush1.msra.mxu0 %v2153
      %2180 = vmatprep.subr.mxu0 0.0
      %2181 = vmatpush1.msra.mxu0 %v2154
      %2182 = vmatprep.subr.mxu0 0.0
      %2183 = vmatpush1.msra.mxu0 %v2155
      %2184 = vmatprep.subr.mxu0 0.0
      %2185 = vmatpush1.msra.mxu0 %v2156
      %2186 = vmatprep.subr.mxu0 0.0
      %2187 = vmatpush1.msra.mxu0 %v2157
      %2188 = vmatprep.subr.mxu0 0.0
      %2189 = vmatpush1.msra.mxu0 %v2158
      %2190 = vmatprep.subr.mxu0 0.0
      %2191 = vmatpush1.msra.mxu0 %v2159
      %2192 = vmatprep.subr.mxu0 0.0
      %2193 = vmatpush1.msra.mxu0 0.0
      %2194 = vmatprep.subr.mxu0 0.0
      %2195 = vmatpush1.msra.mxu0 0.0
      %2196 = vmatprep.subr.mxu0 0.0
      %2197 = vmatpush1.msra.mxu0 0.0
      %2198 = vmatprep.subr.mxu0 0.0
      %2199 = vmatpush1.msra.mxu0 0.0
      %2200 = vmatprep.subr.mxu0 0.0
      %2201 = vmatpush1.msra.mxu0 0.0
      %2202 = vmatprep.subr.mxu0 0.0
      %2203 = vmatpush1.msra.mxu0 0.0
      %2204 = vmatprep.subr.mxu0 0.0
      %2205 = vmatpush1.msra.mxu0 0.0
      %2206 = vmatprep.subr.mxu0 0.0
      %2207 = vmatpush1.msra.mxu0 0.0
      %2208 = vmatprep.subr.mxu0 0.0
      %2209 = vmatpush1.msra.mxu0 0.0
      %2210 = vmatprep.subr.mxu0 0.0
      %2211 = vmatpush1.msra.mxu0 0.0
      %2212 = vmatprep.subr.mxu0 0.0
      %2213 = vmatpush1.msra.mxu0 0.0
      %2214 = vmatprep.subr.mxu0 0.0
      %2215 = vmatpush1.msra.mxu0 0.0
      %2216 = vmatprep.subr.mxu0 0.0
      %2217 = vmatpush1.msra.mxu0 0.0
      %2218 = vmatprep.subr.mxu0 0.0
      %2219 = vmatpush1.msra.mxu0 0.0
      %2220 = vmatprep.subr.mxu0 0.0
      %2221 = vmatpush1.msra.mxu0 0.0
      %2222 = vmatprep.subr.mxu0 0.0
      %2223 = vmatpush1.msra.mxu0 0.0
      %2224 = vmatprep.mubr.f32.mxu0 0.0
      %2225 = vmatmul.mubr.f32.gmra.mrb[0].mxu0 %v2140
      %v2226 = vpop.f32.mrb[0].mxu0
      %v2227 = vadd.f32 0.0, %v2226
      %v2228 = vpop.f32.mrb[0].mxu0
      %2229 = vdwg.mxu0
      %v2230 = vadd.f32 %v2065, %v2227
      %v2232 = vlaneseq
      %v2233 = vshrl.u32 %v2232, 7
      %v2234 = vsub.s32 0, %v2233
      %v2235 = vrot.slane %v1740, %v2234
      %v2237 = vadd.f32 %v2230, %v2235
      %v2238 = vmax.f32 %v2237, 0.0
      %v2240 = vsel %vm1746, %v2238, 0
      %2242 = vmatprep.subr.mxu0 0.0
      %2243 = vmatpush1.msra.mxu0 %v2240
      %2244 = vmatprep.subr.mxu0 0.0
      %2245 = vmatpush1.msra.mxu0 0.0
      %2246 = vmatprep.subr.mxu0 0.0
      %2247 = vmatpush1.msra.mxu0 0.0
      %2248 = vmatprep.subr.mxu0 0.0
      %2249 = vmatpush1.msra.mxu0 0.0
      %2250 = vmatprep.subr.mxu0 0.0
      %2251 = vmatpush1.msra.mxu0 0.0
      %2252 = vmatprep.subr.mxu0 0.0
      %2253 = vmatpush1.msra.mxu0 0.0
      %2254 = vmatprep.subr.mxu0 0.0
      %2255 = vmatpush1.msra.mxu0 0.0
      %2256 = vmatprep.subr.mxu0 0.0
      %2257 = vmatpush1.msra.mxu0 0.0
      %2258 = vmatprep.subr.mxu0 0.0
      %2259 = vmatpush1.msra.mxu0 0.0
      %2260 = vmatprep.subr.mxu0 0.0
      %2261 = vmatpush1.msra.mxu0 0.0
      %2262 = vmatprep.subr.mxu0 0.0
      %2263 = vmatpush1.msra.mxu0 0.0
      %2264 = vmatprep.subr.mxu0 0.0
      %2265 = vmatpush1.msra.mxu0 0.0
      %2266 = vmatprep.subr.mxu0 0.0
      %2267 = vmatpush1.msra.mxu0 0.0
      %2268 = vmatprep.subr.mxu0 0.0
      %2269 = vmatpush1.msra.mxu0 0.0
      %2270 = vmatprep.subr.mxu0 0.0
      %2271 = vmatpush1.msra.mxu0 0.0
      %2272 = vmatprep.subr.mxu0 0.0
      %2273 = vmatpush1.msra.mxu0 0.0
      %2274 = vmatprep.subr.mxu0 0.0
      %2275 = vmatpush1.msra.mxu0 0.0
      %2276 = vmatprep.subr.mxu0 0.0
      %2277 = vmatpush1.msra.mxu0 0.0
      %2278 = vmatprep.subr.mxu0 0.0
      %2279 = vmatpush1.msra.mxu0 0.0
      %2280 = vmatprep.subr.mxu0 0.0
      %2281 = vmatpush1.msra.mxu0 0.0
      %2282 = vmatprep.subr.mxu0 0.0
      %2283 = vmatpush1.msra.mxu0 0.0
      %2284 = vmatprep.subr.mxu0 0.0
      %2285 = vmatpush1.msra.mxu0 0.0
      %2286 = vmatprep.subr.mxu0 0.0
      %2287 = vmatpush1.msra.mxu0 0.0
      %2288 = vmatprep.subr.mxu0 0.0
      %2289 = vmatpush1.msra.mxu0 0.0
      %2290 = vmatprep.subr.mxu0 0.0
      %2291 = vmatpush1.msra.mxu0 0.0
      %2292 = vmatprep.subr.mxu0 0.0
      %2293 = vmatpush1.msra.mxu0 0.0
      %2294 = vmatprep.subr.mxu0 0.0
      %2295 = vmatpush1.msra.mxu0 0.0
      %2296 = vmatprep.subr.mxu0 0.0
      %2297 = vmatpush1.msra.mxu0 0.0
      %2298 = vmatprep.subr.mxu0 0.0
      %2299 = vmatpush1.msra.mxu0 0.0
      %2300 = vmatprep.subr.mxu0 0.0
      %2301 = vmatpush1.msra.mxu0 0.0
      %2302 = vmatprep.subr.mxu0 0.0
      %2303 = vmatpush1.msra.mxu0 0.0
      %2304 = vmatprep.subr.mxu0 0.0
      %2305 = vmatpush1.msra.mxu0 0.0
      %2306 = vmatprep.mubr.f32.mxu0 0.0
      %2307 = vmatmul.mubr.f32.gmra.mrb[0].mxu0 %v1744
      %v2308 = vpop.f32.mrb[0].mxu0
      %v2309 = vadd.f32 0.0, %v2308
      %v2310 = vpop.f32.mrb[0].mxu0
      %2311 = vdwg.mxu0
      %v2312 = vld [vmem:[%s10] sm:$0xff]
      %v2313 = vld [vmem:[%s10 + $0x8] sm:$0xff]
      %v2314 = vld [vmem:[%s10 + $0x10] sm:$0xff]
      %v2315 = vld [vmem:[%s10 + $0x18] sm:$0xff]
      %v2316 = vld [vmem:[%s10 + $0x20] sm:$0xff]
      %v2317 = vld [vmem:[%s10 + $0x28] sm:$0xff]
      %v2318 = vld [vmem:[%s10 + $0x30] sm:$0xff]
      %v2319 = vld [vmem:[%s10 + $0x38] sm:$0xff]
      %v2320 = vld [vmem:[%s10 + $0x40] sm:$0xff]
      %v2321 = vld [vmem:[%s10 + $0x48] sm:$0xff]
      %v2322 = vld [vmem:[%s10 + $0x50] sm:$0xff]
      %v2323 = vld [vmem:[%s10 + $0x58] sm:$0xff]
      %v2324 = vld [vmem:[%s10 + $0x60] sm:$0xff]
      %v2325 = vld [vmem:[%s10 + $0x68] sm:$0xff]
      %v2326 = vld [vmem:[%s10 + $0x70] sm:$0xff]
      %v2327 = vld [vmem:[%s10 + $0x78] sm:$0xff]
      %2328 = vmatprep.subr.mxu0 0.0
      %2329 = vmatpush1.msra.mxu0 %v2240
      %2330 = vmatprep.subr.mxu0 0.0
      %2331 = vmatpush1.msra.mxu0 0.0
      %2332 = vmatprep.subr.mxu0 0.0
      %2333 = vmatpush1.msra.mxu0 0.0
      %2334 = vmatprep.subr.mxu0 0.0
      %2335 = vmatpush1.msra.mxu0 0.0
      %2336 = vmatprep.subr.mxu0 0.0
      %2337 = vmatpush1.msra.mxu0 0.0
      %2338 = vmatprep.subr.mxu0 0.0
      %2339 = vmatpush1.msra.mxu0 0.0
      %2340 = vmatprep.subr.mxu0 0.0
      %2341 = vmatpush1.msra.mxu0 0.0
      %2342 = vmatprep.subr.mxu0 0.0
      %2343 = vmatpush1.msra.mxu0 0.0
      %2344 = vmatprep.subr.mxu0 0.0
      %2345 = vmatpush1.msra.mxu0 0.0
      %2346 = vmatprep.subr.mxu0 0.0
      %2347 = vmatpush1.msra.mxu0 0.0
      %2348 = vmatprep.subr.mxu0 0.0
      %2349 = vmatpush1.msra.mxu0 0.0
      %2350 = vmatprep.subr.mxu0 0.0
      %2351 = vmatpush1.msra.mxu0 0.0
      %2352 = vmatprep.subr.mxu0 0.0
      %2353 = vmatpush1.msra.mxu0 0.0
      %2354 = vmatprep.subr.mxu0 0.0
      %2355 = vmatpush1.msra.mxu0 0.0
      %2356 = vmatprep.subr.mxu0 0.0
      %2357 = vmatpush1.msra.mxu0 0.0
      %2358 = vmatprep.subr.mxu0 0.0
      %2359 = vmatpush1.msra.mxu0 0.0
      %2360 = vmatprep.subr.mxu0 0.0
      %2361 = vmatpush1.msra.mxu0 0.0
      %2362 = vmatprep.subr.mxu0 0.0
      %2363 = vmatpush1.msra.mxu0 0.0
      %2364 = vmatprep.subr.mxu0 0.0
      %2365 = vmatpush1.msra.mxu0 0.0
      %2366 = vmatprep.subr.mxu0 0.0
      %2367 = vmatpush1.msra.mxu0 0.0
      %2368 = vmatprep.subr.mxu0 0.0
      %2369 = vmatpush1.msra.mxu0 0.0
      %2370 = vmatprep.subr.mxu0 0.0
      %2371 = vmatpush1.msra.mxu0 0.0
      %2372 = vmatprep.subr.mxu0 0.0
      %2373 = vmatpush1.msra.mxu0 0.0
      %2374 = vmatprep.subr.mxu0 0.0
      %2375 = vmatpush1.msra.mxu0 0.0
      %2376 = vmatprep.subr.mxu0 0.0
      %2377 = vmatpush1.msra.mxu0 0.0
      %2378 = vmatprep.subr.mxu0 0.0
      %2379 = vmatpush1.msra.mxu0 0.0
      %2380 = vmatprep.subr.mxu0 0.0
      %2381 = vmatpush1.msra.mxu0 0.0
      %2382 = vmatprep.subr.mxu0 0.0
      %2383 = vmatpush1.msra.mxu0 0.0
      %2384 = vmatprep.subr.mxu0 0.0
      %2385 = vmatpush1.msra.mxu0 0.0
      %2386 = vmatprep.subr.mxu0 0.0
      %2387 = vmatpush1.msra.mxu0 0.0
      %2388 = vmatprep.subr.mxu0 0.0
      %2389 = vmatpush1.msra.mxu0 0.0
      %2390 = vmatprep.subr.mxu0 0.0
      %2391 = vmatpush1.msra.mxu0 0.0
      %2392 = vmatprep.mubr.f32.mxu0 0.0
      %2393 = vmatmul.mubr.f32.gmra.mrb[0].mxu0 %v1839
      %v2394 = vpop.f32.mrb[0].mxu0
      %v2395 = vadd.f32 0.0, %v2394
      %v2396 = vpop.f32.mrb[0].mxu0
      %2397 = vdwg.mxu0
      %s2398 = scalar_lea.vmem %s10, 128
      %v2399 = vld [vmem:[%s2398] sm:$0xff]
      %v2400 = vld [vmem:[%s2398 + $0x8] sm:$0xff]
      %v2401 = vld [vmem:[%s2398 + $0x10] sm:$0xff]
      %v2402 = vld [vmem:[%s2398 + $0x18] sm:$0xff]
      %v2403 = vld [vmem:[%s2398 + $0x20] sm:$0xff]
      %v2404 = vld [vmem:[%s2398 + $0x28] sm:$0xff]
      %v2405 = vld [vmem:[%s2398 + $0x30] sm:$0xff]
      %v2406 = vld [vmem:[%s2398 + $0x38] sm:$0xff]
      %v2407 = vld [vmem:[%s2398 + $0x40] sm:$0xff]
      %v2408 = vld [vmem:[%s2398 + $0x48] sm:$0xff]
      %v2409 = vld [vmem:[%s2398 + $0x50] sm:$0xff]
      %v2410 = vld [vmem:[%s2398 + $0x58] sm:$0xff]
      %v2411 = vld [vmem:[%s2398 + $0x60] sm:$0xff]
      %v2412 = vld [vmem:[%s2398 + $0x68] sm:$0xff]
      %v2413 = vld [vmem:[%s2398 + $0x70] sm:$0xff]
      %v2414 = vld [vmem:[%s2398 + $0x78] sm:$0xff]
      %2415 = vmatprep.subr.mxu0 0.0
      %2416 = vmatpush1.msra.mxu0 %v2399
      %2417 = vmatprep.subr.mxu0 0.0
      %2418 = vmatpush1.msra.mxu0 %v2400
      %2419 = vmatprep.subr.mxu0 0.0
      %2420 = vmatpush1.msra.mxu0 %v2401
      %2421 = vmatprep.subr.mxu0 0.0
      %2422 = vmatpush1.msra.mxu0 %v2402
      %2423 = vmatprep.subr.mxu0 0.0
      %2424 = vmatpush1.msra.mxu0 %v2403
      %2425 = vmatprep.subr.mxu0 0.0
      %2426 = vmatpush1.msra.mxu0 %v2404
      %2427 = vmatprep.subr.mxu0 0.0
      %2428 = vmatpush1.msra.mxu0 %v2405
      %2429 = vmatprep.subr.mxu0 0.0
      %2430 = vmatpush1.msra.mxu0 %v2406
      %2431 = vmatprep.subr.mxu0 0.0
      %2432 = vmatpush1.msra.mxu0 %v2407
      %2433 = vmatprep.subr.mxu0 0.0
      %2434 = vmatpush1.msra.mxu0 %v2408
      %2435 = vmatprep.subr.mxu0 0.0
      %2436 = vmatpush1.msra.mxu0 %v2409
      %2437 = vmatprep.subr.mxu0 0.0
      %2438 = vmatpush1.msra.mxu0 %v2410
      %2439 = vmatprep.subr.mxu0 0.0
      %2440 = vmatpush1.msra.mxu0 %v2411
      %2441 = vmatprep.subr.mxu0 0.0
      %2442 = vmatpush1.msra.mxu0 %v2412
      %2443 = vmatprep.subr.mxu0 0.0
      %2444 = vmatpush1.msra.mxu0 %v2413
      %2445 = vmatprep.subr.mxu0 0.0
      %2446 = vmatpush1.msra.mxu0 %v2414
      %2447 = vmatprep.subr.mxu0 0.0
      %2448 = vmatpush1.msra.mxu0 0.0
      %2449 = vmatprep.subr.mxu0 0.0
      %2450 = vmatpush1.msra.mxu0 0.0
      %2451 = vmatprep.subr.mxu0 0.0
      %2452 = vmatpush1.msra.mxu0 0.0
      %2453 = vmatprep.subr.mxu0 0.0
      %2454 = vmatpush1.msra.mxu0 0.0
      %2455 = vmatprep.subr.mxu0 0.0
      %2456 = vmatpush1.msra.mxu0 0.0
      %2457 = vmatprep.subr.mxu0 0.0
      %2458 = vmatpush1.msra.mxu0 0.0
      %2459 = vmatprep.subr.mxu0 0.0
      %2460 = vmatpush1.msra.mxu0 0.0
      %2461 = vmatprep.subr.mxu0 0.0
      %2462 = vmatpush1.msra.mxu0 0.0
      %2463 = vmatprep.subr.mxu0 0.0
      %2464 = vmatpush1.msra.mxu0 0.0
      %2465 = vmatprep.subr.mxu0 0.0
      %2466 = vmatpush1.msra.mxu0 0.0
      %2467 = vmatprep.subr.mxu0 0.0
      %2468 = vmatpush1.msra.mxu0 0.0
      %2469 = vmatprep.subr.mxu0 0.0
      %2470 = vmatpush1.msra.mxu0 0.0
      %2471 = vmatprep.subr.mxu0 0.0
      %2472 = vmatpush1.msra.mxu0 0.0
      %2473 = vmatprep.subr.mxu0 0.0
      %2474 = vmatpush1.msra.mxu0 0.0
      %2475 = vmatprep.subr.mxu0 0.0
      %2476 = vmatpush1.msra.mxu0 0.0
      %2477 = vmatprep.subr.mxu0 0.0
      %2478 = vmatpush1.msra.mxu0 0.0
      %2479 = vmatprep.mubr.f32.mxu0 0.0
      %2480 = vmatmul.mubr.f32.gmra.mrb[0].mxu0 %v2395
      %v2481 = vpop.f32.mrb[0].mxu0
      %v2482 = vadd.f32 0.0, %v2481
      %v2483 = vpop.f32.mrb[0].mxu0
      %2484 = vdwg.mxu0
      %2485 = vmatprep.subr.mxu0 0.0
      %2486 = vmatpush1.msra.mxu0 %v2312
      %2487 = vmatprep.subr.mxu0 0.0
      %2488 = vmatpush1.msra.mxu0 %v2313
      %2489 = vmatprep.subr.mxu0 0.0
      %2490 = vmatpush1.msra.mxu0 %v2314
      %2491 = vmatprep.subr.mxu0 0.0
      %2492 = vmatpush1.msra.mxu0 %v2315
      %2493 = vmatprep.subr.mxu0 0.0
      %2494 = vmatpush1.msra.mxu0 %v2316
      %2495 = vmatprep.subr.mxu0 0.0
      %2496 = vmatpush1.msra.mxu0 %v2317
      %2497 = vmatprep.subr.mxu0 0.0
      %2498 = vmatpush1.msra.mxu0 %v2318
      %2499 = vmatprep.subr.mxu0 0.0
      %2500 = vmatpush1.msra.mxu0 %v2319
      %2501 = vmatprep.subr.mxu0 0.0
      %2502 = vmatpush1.msra.mxu0 %v2320
      %2503 = vmatprep.subr.mxu0 0.0
      %2504 = vmatpush1.msra.mxu0 %v2321
      %2505 = vmatprep.subr.mxu0 0.0
      %2506 = vmatpush1.msra.mxu0 %v2322
      %2507 = vmatprep.subr.mxu0 0.0
      %2508 = vmatpush1.msra.mxu0 %v2323
      %2509 = vmatprep.subr.mxu0 0.0
      %2510 = vmatpush1.msra.mxu0 %v2324
      %2511 = vmatprep.subr.mxu0 0.0
      %2512 = vmatpush1.msra.mxu0 %v2325
      %2513 = vmatprep.subr.mxu0 0.0
      %2514 = vmatpush1.msra.mxu0 %v2326
      %2515 = vmatprep.subr.mxu0 0.0
      %2516 = vmatpush1.msra.mxu0 %v2327
      %2517 = vmatprep.subr.mxu0 0.0
      %2518 = vmatpush1.msra.mxu0 0.0
      %2519 = vmatprep.subr.mxu0 0.0
      %2520 = vmatpush1.msra.mxu0 0.0
      %2521 = vmatprep.subr.mxu0 0.0
      %2522 = vmatpush1.msra.mxu0 0.0
      %2523 = vmatprep.subr.mxu0 0.0
      %2524 = vmatpush1.msra.mxu0 0.0
      %2525 = vmatprep.subr.mxu0 0.0
      %2526 = vmatpush1.msra.mxu0 0.0
      %2527 = vmatprep.subr.mxu0 0.0
      %2528 = vmatpush1.msra.mxu0 0.0
      %2529 = vmatprep.subr.mxu0 0.0
      %2530 = vmatpush1.msra.mxu0 0.0
      %2531 = vmatprep.subr.mxu0 0.0
      %2532 = vmatpush1.msra.mxu0 0.0
      %2533 = vmatprep.subr.mxu0 0.0
      %2534 = vmatpush1.msra.mxu0 0.0
      %2535 = vmatprep.subr.mxu0 0.0
      %2536 = vmatpush1.msra.mxu0 0.0
      %2537 = vmatprep.subr.mxu0 0.0
      %2538 = vmatpush1.msra.mxu0 0.0
      %2539 = vmatprep.subr.mxu0 0.0
      %2540 = vmatpush1.msra.mxu0 0.0
      %2541 = vmatprep.subr.mxu0 0.0
      %2542 = vmatpush1.msra.mxu0 0.0
      %2543 = vmatprep.subr.mxu0 0.0
      %2544 = vmatpush1.msra.mxu0 0.0
      %2545 = vmatprep.subr.mxu0 0.0
      %2546 = vmatpush1.msra.mxu0 0.0
      %2547 = vmatprep.subr.mxu0 0.0
      %2548 = vmatpush1.msra.mxu0 0.0
      %2549 = vmatprep.mubr.f32.mxu0 0.0
      %2550 = vmatmul.mubr.f32.gmra.mrb[0].mxu0 %v2309
      %v2551 = vpop.f32.mrb[0].mxu0
      %v2552 = vadd.f32 %v2482, %v2551
      %v2553 = vpop.f32.mrb[0].mxu0
      %2554 = vdwg.mxu0
      %2555 = vmatprep.subr.mxu0 0.0
      %2556 = vmatpush1.msra.mxu0 %v2240
      %2557 = vmatprep.subr.mxu0 0.0
      %2558 = vmatpush1.msra.mxu0 0.0
      %2559 = vmatprep.subr.mxu0 0.0
      %2560 = vmatpush1.msra.mxu0 0.0
      %2561 = vmatprep.subr.mxu0 0.0
      %2562 = vmatpush1.msra.mxu0 0.0
      %2563 = vmatprep.subr.mxu0 0.0
      %2564 = vmatpush1.msra.mxu0 0.0
      %2565 = vmatprep.subr.mxu0 0.0
      %2566 = vmatpush1.msra.mxu0 0.0
      %2567 = vmatprep.subr.mxu0 0.0
      %2568 = vmatpush1.msra.mxu0 0.0
      %2569 = vmatprep.subr.mxu0 0.0
      %2570 = vmatpush1.msra.mxu0 0.0
      %2571 = vmatprep.subr.mxu0 0.0
      %2572 = vmatpush1.msra.mxu0 0.0
      %2573 = vmatprep.subr.mxu0 0.0
      %2574 = vmatpush1.msra.mxu0 0.0
      %2575 = vmatprep.subr.mxu0 0.0
      %2576 = vmatpush1.msra.mxu0 0.0
      %2577 = vmatprep.subr.mxu0 0.0
      %2578 = vmatpush1.msra.mxu0 0.0
      %2579 = vmatprep.subr.mxu0 0.0
      %2580 = vmatpush1.msra.mxu0 0.0
      %2581 = vmatprep.subr.mxu0 0.0
      %2582 = vmatpush1.msra.mxu0 0.0
      %2583 = vmatprep.subr.mxu0 0.0
      %2584 = vmatpush1.msra.mxu0 0.0
      %2585 = vmatprep.subr.mxu0 0.0
      %2586 = vmatpush1.msra.mxu0 0.0
      %2587 = vmatprep.subr.mxu0 0.0
      %2588 = vmatpush1.msra.mxu0 0.0
      %2589 = vmatprep.subr.mxu0 0.0
      %2590 = vmatpush1.msra.mxu0 0.0
      %2591 = vmatprep.subr.mxu0 0.0
      %2592 = vmatpush1.msra.mxu0 0.0
      %2593 = vmatprep.subr.mxu0 0.0
      %2594 = vmatpush1.msra.mxu0 0.0
      %2595 = vmatprep.subr.mxu0 0.0
      %2596 = vmatpush1.msra.mxu0 0.0
      %2597 = vmatprep.subr.mxu0 0.0
      %2598 = vmatpush1.msra.mxu0 0.0
      %2599 = vmatprep.subr.mxu0 0.0
      %2600 = vmatpush1.msra.mxu0 0.0
      %2601 = vmatprep.subr.mxu0 0.0
      %2602 = vmatpush1.msra.mxu0 0.0
      %2603 = vmatprep.subr.mxu0 0.0
      %2604 = vmatpush1.msra.mxu0 0.0
      %2605 = vmatprep.subr.mxu0 0.0
      %2606 = vmatpush1.msra.mxu0 0.0
      %2607 = vmatprep.subr.mxu0 0.0
      %2608 = vmatpush1.msra.mxu0 0.0
      %2609 = vmatprep.subr.mxu0 0.0
      %2610 = vmatpush1.msra.mxu0 0.0
      %2611 = vmatprep.subr.mxu0 0.0
      %2612 = vmatpush1.msra.mxu0 0.0
      %2613 = vmatprep.subr.mxu0 0.0
      %2614 = vmatpush1.msra.mxu0 0.0
      %2615 = vmatprep.subr.mxu0 0.0
      %2616 = vmatpush1.msra.mxu0 0.0
      %2617 = vmatprep.subr.mxu0 0.0
      %2618 = vmatpush1.msra.mxu0 0.0
      %2619 = vmatprep.mubr.f32.mxu0 0.0
      %2620 = vmatmul.mubr.f32.gmra.mrb[0].mxu0 %v2071
      %v2621 = vpop.f32.mrb[0].mxu0
      %v2622 = vadd.f32 0.0, %v2621
      %v2623 = vpop.f32.mrb[0].mxu0
      %2624 = vdwg.mxu0
      %s2625 = scalar_lea.vmem %s10, 256
      %v2626 = vld [vmem:[%s2625] sm:$0xff]
      %v2627 = vld [vmem:[%s2625 + $0x8] sm:$0xff]
      %v2628 = vld [vmem:[%s2625 + $0x10] sm:$0xff]
      %v2629 = vld [vmem:[%s2625 + $0x18] sm:$0xff]
      %v2630 = vld [vmem:[%s2625 + $0x20] sm:$0xff]
      %v2631 = vld [vmem:[%s2625 + $0x28] sm:$0xff]
      %v2632 = vld [vmem:[%s2625 + $0x30] sm:$0xff]
      %v2633 = vld [vmem:[%s2625 + $0x38] sm:$0xff]
      %v2634 = vld [vmem:[%s2625 + $0x40] sm:$0xff]
      %v2635 = vld [vmem:[%s2625 + $0x48] sm:$0xff]
      %v2636 = vld [vmem:[%s2625 + $0x50] sm:$0xff]
      %v2637 = vld [vmem:[%s2625 + $0x58] sm:$0xff]
      %v2638 = vld [vmem:[%s2625 + $0x60] sm:$0xff]
      %v2639 = vld [vmem:[%s2625 + $0x68] sm:$0xff]
      %v2640 = vld [vmem:[%s2625 + $0x70] sm:$0xff]
      %v2641 = vld [vmem:[%s2625 + $0x78] sm:$0xff]
      %2642 = vmatprep.subr.mxu0 0.0
      %2643 = vmatpush1.msra.mxu0 %v2626
      %2644 = vmatprep.subr.mxu0 0.0
      %2645 = vmatpush1.msra.mxu0 %v2627
      %2646 = vmatprep.subr.mxu0 0.0
      %2647 = vmatpush1.msra.mxu0 %v2628
      %2648 = vmatprep.subr.mxu0 0.0
      %2649 = vmatpush1.msra.mxu0 %v2629
      %2650 = vmatprep.subr.mxu0 0.0
      %2651 = vmatpush1.msra.mxu0 %v2630
      %2652 = vmatprep.subr.mxu0 0.0
      %2653 = vmatpush1.msra.mxu0 %v2631
      %2654 = vmatprep.subr.mxu0 0.0
      %2655 = vmatpush1.msra.mxu0 %v2632
      %2656 = vmatprep.subr.mxu0 0.0
      %2657 = vmatpush1.msra.mxu0 %v2633
      %2658 = vmatprep.subr.mxu0 0.0
      %2659 = vmatpush1.msra.mxu0 %v2634
      %2660 = vmatprep.subr.mxu0 0.0
      %2661 = vmatpush1.msra.mxu0 %v2635
      %2662 = vmatprep.subr.mxu0 0.0
      %2663 = vmatpush1.msra.mxu0 %v2636
      %2664 = vmatprep.subr.mxu0 0.0
      %2665 = vmatpush1.msra.mxu0 %v2637
      %2666 = vmatprep.subr.mxu0 0.0
      %2667 = vmatpush1.msra.mxu0 %v2638
      %2668 = vmatprep.subr.mxu0 0.0
      %2669 = vmatpush1.msra.mxu0 %v2639
      %2670 = vmatprep.subr.mxu0 0.0
      %2671 = vmatpush1.msra.mxu0 %v2640
      %2672 = vmatprep.subr.mxu0 0.0
      %2673 = vmatpush1.msra.mxu0 %v2641
      %2674 = vmatprep.subr.mxu0 0.0
      %2675 = vmatpush1.msra.mxu0 0.0
      %2676 = vmatprep.subr.mxu0 0.0
      %2677 = vmatpush1.msra.mxu0 0.0
      %2678 = vmatprep.subr.mxu0 0.0
      %2679 = vmatpush1.msra.mxu0 0.0
      %2680 = vmatprep.subr.mxu0 0.0
      %2681 = vmatpush1.msra.mxu0 0.0
      %2682 = vmatprep.subr.mxu0 0.0
      %2683 = vmatpush1.msra.mxu0 0.0
      %2684 = vmatprep.subr.mxu0 0.0
      %2685 = vmatpush1.msra.mxu0 0.0
      %2686 = vmatprep.subr.mxu0 0.0
      %2687 = vmatpush1.msra.mxu0 0.0
      %2688 = vmatprep.subr.mxu0 0.0
      %2689 = vmatpush1.msra.mxu0 0.0
      %2690 = vmatprep.subr.mxu0 0.0
      %2691 = vmatpush1.msra.mxu0 0.0
      %2692 = vmatprep.subr.mxu0 0.0
      %2693 = vmatpush1.msra.mxu0 0.0
      %2694 = vmatprep.subr.mxu0 0.0
      %2695 = vmatpush1.msra.mxu0 0.0
      %2696 = vmatprep.subr.mxu0 0.0
      %2697 = vmatpush1.msra.mxu0 0.0
      %2698 = vmatprep.subr.mxu0 0.0
      %2699 = vmatpush1.msra.mxu0 0.0
      %2700 = vmatprep.subr.mxu0 0.0
      %2701 = vmatpush1.msra.mxu0 0.0
      %2702 = vmatprep.subr.mxu0 0.0
      %2703 = vmatpush1.msra.mxu0 0.0
      %2704 = vmatprep.subr.mxu0 0.0
      %2705 = vmatpush1.msra.mxu0 0.0
      %2706 = vmatprep.mubr.f32.mxu0 0.0
      %2707 = vmatmul.mubr.f32.gmra.mrb[0].mxu0 %v2622
      %v2708 = vpop.f32.mrb[0].mxu0
      %v2709 = vadd.f32 0.0, %v2708
      %v2710 = vpop.f32.mrb[0].mxu0
      %2711 = vdwg.mxu0
      %v2712 = vadd.f32 %v2552, %v2709
      %v2713 = vmax.f32 %v2712, 0.0
      %v2714 = vld [vmem:[%s11] sm:$0xff]
      %v2715 = vld [vmem:[%s11 + $0x8] sm:$0xff]
      %v2716 = vld [vmem:[%s11 + $0x10] sm:$0xff]
      %v2717 = vld [vmem:[%s11 + $0x18] sm:$0xff]
      %v2718 = vld [vmem:[%s11 + $0x20] sm:$0xff]
      %v2719 = vld [vmem:[%s11 + $0x28] sm:$0xff]
      %v2720 = vld [vmem:[%s11 + $0x30] sm:$0xff]
      %v2721 = vld [vmem:[%s11 + $0x38] sm:$0xff]
      %vm2722 = vcmask 523264
      %v2724 = vsel %vm2722, %v2713, 0
      %2726 = vmatprep.subr.mxu0 0.0
      %2727 = vmatpush1.msra.mxu0 %v2714
      %2728 = vmatprep.subr.mxu0 0.0
      %2729 = vmatpush1.msra.mxu0 %v2715
      %2730 = vmatprep.subr.mxu0 0.0
      %2731 = vmatpush1.msra.mxu0 %v2716
      %2732 = vmatprep.subr.mxu0 0.0
      %2733 = vmatpush1.msra.mxu0 %v2717
      %2734 = vmatprep.subr.mxu0 0.0
      %2735 = vmatpush1.msra.mxu0 %v2718
      %2736 = vmatprep.subr.mxu0 0.0
      %2737 = vmatpush1.msra.mxu0 %v2719
      %2738 = vmatprep.subr.mxu0 0.0
      %2739 = vmatpush1.msra.mxu0 %v2720
      %2740 = vmatprep.subr.mxu0 0.0
      %2741 = vmatpush1.msra.mxu0 %v2721
      %2742 = vmatprep.subr.mxu0 0.0
      %2743 = vmatpush1.msra.mxu0 0.0
      %2744 = vmatprep.subr.mxu0 0.0
      %2745 = vmatpush1.msra.mxu0 0.0
      %2746 = vmatprep.subr.mxu0 0.0
      %2747 = vmatpush1.msra.mxu0 0.0
      %2748 = vmatprep.subr.mxu0 0.0
      %2749 = vmatpush1.msra.mxu0 0.0
      %2750 = vmatprep.subr.mxu0 0.0
      %2751 = vmatpush1.msra.mxu0 0.0
      %2752 = vmatprep.subr.mxu0 0.0
      %2753 = vmatpush1.msra.mxu0 0.0
      %2754 = vmatprep.subr.mxu0 0.0
      %2755 = vmatpush1.msra.mxu0 0.0
      %2756 = vmatprep.subr.mxu0 0.0
      %2757 = vmatpush1.msra.mxu0 0.0
      %2758 = vmatprep.subr.mxu0 0.0
      %2759 = vmatpush1.msra.mxu0 0.0
      %2760 = vmatprep.subr.mxu0 0.0
      %2761 = vmatpush1.msra.mxu0 0.0
      %2762 = vmatprep.subr.mxu0 0.0
      %2763 = vmatpush1.msra.mxu0 0.0
      %2764 = vmatprep.subr.mxu0 0.0
      %2765 = vmatpush1.msra.mxu0 0.0
      %2766 = vmatprep.subr.mxu0 0.0
      %2767 = vmatpush1.msra.mxu0 0.0
      %2768 = vmatprep.subr.mxu0 0.0
      %2769 = vmatpush1.msra.mxu0 0.0
      %2770 = vmatprep.subr.mxu0 0.0
      %2771 = vmatpush1.msra.mxu0 0.0
      %2772 = vmatprep.subr.mxu0 0.0
      %2773 = vmatpush1.msra.mxu0 0.0
      %2774 = vmatprep.subr.mxu0 0.0
      %2775 = vmatpush1.msra.mxu0 0.0
      %2776 = vmatprep.subr.mxu0 0.0
      %2777 = vmatpush1.msra.mxu0 0.0
      %2778 = vmatprep.subr.mxu0 0.0
      %2779 = vmatpush1.msra.mxu0 0.0
      %2780 = vmatprep.subr.mxu0 0.0
      %2781 = vmatpush1.msra.mxu0 0.0
      %2782 = vmatprep.subr.mxu0 0.0
      %2783 = vmatpush1.msra.mxu0 0.0
      %2784 = vmatprep.subr.mxu0 0.0
      %2785 = vmatpush1.msra.mxu0 0.0
      %2786 = vmatprep.subr.mxu0 0.0
      %2787 = vmatpush1.msra.mxu0 0.0
      %2788 = vmatprep.subr.mxu0 0.0
      %2789 = vmatpush1.msra.mxu0 0.0
      %2790 = vmatprep.mubr.f32.mxu0 0.0
      %2791 = vmatmul.mubr.f32.gmra.mrb[0].mxu0 %v2724
      %v2792 = vpop.f32.mrb[0].mxu0
      %v2793 = vadd.f32 0.0, %v2792
      %v2794 = vpop.f32.mrb[0].mxu0
      %2795 = vdwg.mxu0
      %v2796 = vadd.f32 %v2237, %v2793
      %v2797 = vmax.f32 %v2796, 0.0
      %v2799 = vsel %vm1746, %v2797, 0
      %2801 = vmatprep.subr.mxu0 0.0
      %2802 = vmatpush1.msra.mxu0 %v2799
      %2803 = vmatprep.subr.mxu0 0.0
      %2804 = vmatpush1.msra.mxu0 0.0
      %2805 = vmatprep.subr.mxu0 0.0
      %2806 = vmatpush1.msra.mxu0 0.0
      %2807 = vmatprep.subr.mxu0 0.0
      %2808 = vmatpush1.msra.mxu0 0.0
      %2809 = vmatprep.subr.mxu0 0.0
      %2810 = vmatpush1.msra.mxu0 0.0
      %2811 = vmatprep.subr.mxu0 0.0
      %2812 = vmatpush1.msra.mxu0 0.0
      %2813 = vmatprep.subr.mxu0 0.0
      %2814 = vmatpush1.msra.mxu0 0.0
      %2815 = vmatprep.subr.mxu0 0.0
      %2816 = vmatpush1.msra.mxu0 0.0
      %2817 = vmatprep.subr.mxu0 0.0
      %2818 = vmatpush1.msra.mxu0 0.0
      %2819 = vmatprep.subr.mxu0 0.0
      %2820 = vmatpush1.msra.mxu0 0.0
      %2821 = vmatprep.subr.mxu0 0.0
      %2822 = vmatpush1.msra.mxu0 0.0
      %2823 = vmatprep.subr.mxu0 0.0
      %2824 = vmatpush1.msra.mxu0 0.0
      %2825 = vmatprep.subr.mxu0 0.0
      %2826 = vmatpush1.msra.mxu0 0.0
      %2827 = vmatprep.subr.mxu0 0.0
      %2828 = vmatpush1.msra.mxu0 0.0
      %2829 = vmatprep.subr.mxu0 0.0
      %2830 = vmatpush1.msra.mxu0 0.0
      %2831 = vmatprep.subr.mxu0 0.0
      %2832 = vmatpush1.msra.mxu0 0.0
      %2833 = vmatprep.subr.mxu0 0.0
      %2834 = vmatpush1.msra.mxu0 0.0
      %2835 = vmatprep.subr.mxu0 0.0
      %2836 = vmatpush1.msra.mxu0 0.0
      %2837 = vmatprep.subr.mxu0 0.0
      %2838 = vmatpush1.msra.mxu0 0.0
      %2839 = vmatprep.subr.mxu0 0.0
      %2840 = vmatpush1.msra.mxu0 0.0
      %2841 = vmatprep.subr.mxu0 0.0
      %2842 = vmatpush1.msra.mxu0 0.0
      %2843 = vmatprep.subr.mxu0 0.0
      %2844 = vmatpush1.msra.mxu0 0.0
      %2845 = vmatprep.subr.mxu0 0.0
      %2846 = vmatpush1.msra.mxu0 0.0
      %2847 = vmatprep.subr.mxu0 0.0
      %2848 = vmatpush1.msra.mxu0 0.0
      %2849 = vmatprep.subr.mxu0 0.0
      %2850 = vmatpush1.msra.mxu0 0.0
      %2851 = vmatprep.subr.mxu0 0.0
      %2852 = vmatpush1.msra.mxu0 0.0
      %2853 = vmatprep.subr.mxu0 0.0
      %2854 = vmatpush1.msra.mxu0 0.0
      %2855 = vmatprep.subr.mxu0 0.0
      %2856 = vmatpush1.msra.mxu0 0.0
      %2857 = vmatprep.subr.mxu0 0.0
      %2858 = vmatpush1.msra.mxu0 0.0
      %2859 = vmatprep.subr.mxu0 0.0
      %2860 = vmatpush1.msra.mxu0 0.0
      %2861 = vmatprep.subr.mxu0 0.0
      %2862 = vmatpush1.msra.mxu0 0.0
      %2863 = vmatprep.subr.mxu0 0.0
      %2864 = vmatpush1.msra.mxu0 0.0
      %2865 = vmatprep.mubr.f32.mxu0 0.0
      %2866 = vmatmul.mubr.f32.gmra.mrb[0].mxu0 %v1744
      %v2867 = vpop.f32.mrb[0].mxu0
      %v2868 = vadd.f32 0.0, %v2867
      %v2869 = vpop.f32.mrb[0].mxu0
      %2870 = vdwg.mxu0
      %s2871 = scalar_lea.vmem %s10, 384
      %v2872 = vld [vmem:[%s2871] sm:$0xff]
      %v2873 = vld [vmem:[%s2871 + $0x8] sm:$0xff]
      %v2874 = vld [vmem:[%s2871 + $0x10] sm:$0xff]
      %v2875 = vld [vmem:[%s2871 + $0x18] sm:$0xff]
      %v2876 = vld [vmem:[%s2871 + $0x20] sm:$0xff]
      %v2877 = vld [vmem:[%s2871 + $0x28] sm:$0xff]
      %v2878 = vld [vmem:[%s2871 + $0x30] sm:$0xff]
      %v2879 = vld [vmem:[%s2871 + $0x38] sm:$0xff]
      %v2880 = vld [vmem:[%s2871 + $0x40] sm:$0xff]
      %v2881 = vld [vmem:[%s2871 + $0x48] sm:$0xff]
      %v2882 = vld [vmem:[%s2871 + $0x50] sm:$0xff]
      %v2883 = vld [vmem:[%s2871 + $0x58] sm:$0xff]
      %v2884 = vld [vmem:[%s2871 + $0x60] sm:$0xff]
      %v2885 = vld [vmem:[%s2871 + $0x68] sm:$0xff]
      %v2886 = vld [vmem:[%s2871 + $0x70] sm:$0xff]
      %v2887 = vld [vmem:[%s2871 + $0x78] sm:$0xff]
      %2888 = vmatprep.subr.mxu0 0.0
      %2889 = vmatpush1.msra.mxu0 %v2799
      %2890 = vmatprep.subr.mxu0 0.0
      %2891 = vmatpush1.msra.mxu0 0.0
      %2892 = vmatprep.subr.mxu0 0.0
      %2893 = vmatpush1.msra.mxu0 0.0
      %2894 = vmatprep.subr.mxu0 0.0
      %2895 = vmatpush1.msra.mxu0 0.0
      %2896 = vmatprep.subr.mxu0 0.0
      %2897 = vmatpush1.msra.mxu0 0.0
      %2898 = vmatprep.subr.mxu0 0.0
      %2899 = vmatpush1.msra.mxu0 0.0
      %2900 = vmatprep.subr.mxu0 0.0
      %2901 = vmatpush1.msra.mxu0 0.0
      %2902 = vmatprep.subr.mxu0 0.0
      %2903 = vmatpush1.msra.mxu0 0.0
      %2904 = vmatprep.subr.mxu0 0.0
      %2905 = vmatpush1.msra.mxu0 0.0
      %2906 = vmatprep.subr.mxu0 0.0
      %2907 = vmatpush1.msra.mxu0 0.0
      %2908 = vmatprep.subr.mxu0 0.0
      %2909 = vmatpush1.msra.mxu0 0.0
      %2910 = vmatprep.subr.mxu0 0.0
      %2911 = vmatpush1.msra.mxu0 0.0
      %2912 = vmatprep.subr.mxu0 0.0
      %2913 = vmatpush1.msra.mxu0 0.0
      %2914 = vmatprep.subr.mxu0 0.0
      %2915 = vmatpush1.msra.mxu0 0.0
      %2916 = vmatprep.subr.mxu0 0.0
      %2917 = vmatpush1.msra.mxu0 0.0
      %2918 = vmatprep.subr.mxu0 0.0
      %2919 = vmatpush1.msra.mxu0 0.0
      %2920 = vmatprep.subr.mxu0 0.0
      %2921 = vmatpush1.msra.mxu0 0.0
      %2922 = vmatprep.subr.mxu0 0.0
      %2923 = vmatpush1.msra.mxu0 0.0
      %2924 = vmatprep.subr.mxu0 0.0
      %2925 = vmatpush1.msra.mxu0 0.0
      %2926 = vmatprep.subr.mxu0 0.0
      %2927 = vmatpush1.msra.mxu0 0.0
      %2928 = vmatprep.subr.mxu0 0.0
      %2929 = vmatpush1.msra.mxu0 0.0
      %2930 = vmatprep.subr.mxu0 0.0
      %2931 = vmatpush1.msra.mxu0 0.0
      %2932 = vmatprep.subr.mxu0 0.0
      %2933 = vmatpush1.msra.mxu0 0.0
      %2934 = vmatprep.subr.mxu0 0.0
      %2935 = vmatpush1.msra.mxu0 0.0
      %2936 = vmatprep.subr.mxu0 0.0
      %2937 = vmatpush1.msra.mxu0 0.0
      %2938 = vmatprep.subr.mxu0 0.0
      %2939 = vmatpush1.msra.mxu0 0.0
      %2940 = vmatprep.subr.mxu0 0.0
      %2941 = vmatpush1.msra.mxu0 0.0
      %2942 = vmatprep.subr.mxu0 0.0
      %2943 = vmatpush1.msra.mxu0 0.0
      %2944 = vmatprep.subr.mxu0 0.0
      %2945 = vmatpush1.msra.mxu0 0.0
      %2946 = vmatprep.subr.mxu0 0.0
      %2947 = vmatpush1.msra.mxu0 0.0
      %2948 = vmatprep.subr.mxu0 0.0
      %2949 = vmatpush1.msra.mxu0 0.0
      %2950 = vmatprep.subr.mxu0 0.0
      %2951 = vmatpush1.msra.mxu0 0.0
      %2952 = vmatprep.mubr.f32.mxu0 0.0
      %2953 = vmatmul.mubr.f32.gmra.mrb[0].mxu0 %v1839
      %v2954 = vpop.f32.mrb[0].mxu0
      %v2955 = vadd.f32 0.0, %v2954
      %v2956 = vpop.f32.mrb[0].mxu0
      %2957 = vdwg.mxu0
      %s2958 = scalar_lea.vmem %s10, 512
      %v2959 = vld [vmem:[%s2958] sm:$0xff]
      %v2960 = vld [vmem:[%s2958 + $0x8] sm:$0xff]
      %v2961 = vld [vmem:[%s2958 + $0x10] sm:$0xff]
      %v2962 = vld [vmem:[%s2958 + $0x18] sm:$0xff]
      %v2963 = vld [vmem:[%s2958 + $0x20] sm:$0xff]
      %v2964 = vld [vmem:[%s2958 + $0x28] sm:$0xff]
      %v2965 = vld [vmem:[%s2958 + $0x30] sm:$0xff]
      %v2966 = vld [vmem:[%s2958 + $0x38] sm:$0xff]
      %v2967 = vld [vmem:[%s2958 + $0x40] sm:$0xff]
      %v2968 = vld [vmem:[%s2958 + $0x48] sm:$0xff]
      %v2969 = vld [vmem:[%s2958 + $0x50] sm:$0xff]
      %v2970 = vld [vmem:[%s2958 + $0x58] sm:$0xff]
      %v2971 = vld [vmem:[%s2958 + $0x60] sm:$0xff]
      %v2972 = vld [vmem:[%s2958 + $0x68] sm:$0xff]
      %v2973 = vld [vmem:[%s2958 + $0x70] sm:$0xff]
      %v2974 = vld [vmem:[%s2958 + $0x78] sm:$0xff]
      %2975 = vmatprep.subr.mxu0 0.0
      %2976 = vmatpush1.msra.mxu0 %v2959
      %2977 = vmatprep.subr.mxu0 0.0
      %2978 = vmatpush1.msra.mxu0 %v2960
      %2979 = vmatprep.subr.mxu0 0.0
      %2980 = vmatpush1.msra.mxu0 %v2961
      %2981 = vmatprep.subr.mxu0 0.0
      %2982 = vmatpush1.msra.mxu0 %v2962
      %2983 = vmatprep.subr.mxu0 0.0
      %2984 = vmatpush1.msra.mxu0 %v2963
      %2985 = vmatprep.subr.mxu0 0.0
      %2986 = vmatpush1.msra.mxu0 %v2964
      %2987 = vmatprep.subr.mxu0 0.0
      %2988 = vmatpush1.msra.mxu0 %v2965
      %2989 = vmatprep.subr.mxu0 0.0
      %2990 = vmatpush1.msra.mxu0 %v2966
      %2991 = vmatprep.subr.mxu0 0.0
      %2992 = vmatpush1.msra.mxu0 %v2967
      %2993 = vmatprep.subr.mxu0 0.0
      %2994 = vmatpush1.msra.mxu0 %v2968
      %2995 = vmatprep.subr.mxu0 0.0
      %2996 = vmatpush1.msra.mxu0 %v2969
      %2997 = vmatprep.subr.mxu0 0.0
      %2998 = vmatpush1.msra.mxu0 %v2970
      %2999 = vmatprep.subr.mxu0 0.0
      %3000 = vmatpush1.msra.mxu0 %v2971
      %3001 = vmatprep.subr.mxu0 0.0
      %3002 = vmatpush1.msra.mxu0 %v2972
      %3003 = vmatprep.subr.mxu0 0.0
      %3004 = vmatpush1.msra.mxu0 %v2973
      %3005 = vmatprep.subr.mxu0 0.0
      %3006 = vmatpush1.msra.mxu0 %v2974
      %3007 = vmatprep.subr.mxu0 0.0
      %3008 = vmatpush1.msra.mxu0 0.0
      %3009 = vmatprep.subr.mxu0 0.0
      %3010 = vmatpush1.msra.mxu0 0.0
      %3011 = vmatprep.subr.mxu0 0.0
      %3012 = vmatpush1.msra.mxu0 0.0
      %3013 = vmatprep.subr.mxu0 0.0
      %3014 = vmatpush1.msra.mxu0 0.0
      %3015 = vmatprep.subr.mxu0 0.0
      %3016 = vmatpush1.msra.mxu0 0.0
      %3017 = vmatprep.subr.mxu0 0.0
      %3018 = vmatpush1.msra.mxu0 0.0
      %3019 = vmatprep.subr.mxu0 0.0
      %3020 = vmatpush1.msra.mxu0 0.0
      %3021 = vmatprep.subr.mxu0 0.0
      %3022 = vmatpush1.msra.mxu0 0.0
      %3023 = vmatprep.subr.mxu0 0.0
      %3024 = vmatpush1.msra.mxu0 0.0
      %3025 = vmatprep.subr.mxu0 0.0
      %3026 = vmatpush1.msra.mxu0 0.0
      %3027 = vmatprep.subr.mxu0 0.0
      %3028 = vmatpush1.msra.mxu0 0.0
      %3029 = vmatprep.subr.mxu0 0.0
      %3030 = vmatpush1.msra.mxu0 0.0
      %3031 = vmatprep.subr.mxu0 0.0
      %3032 = vmatpush1.msra.mxu0 0.0
      %3033 = vmatprep.subr.mxu0 0.0
      %3034 = vmatpush1.msra.mxu0 0.0
      %3035 = vmatprep.subr.mxu0 0.0
      %3036 = vmatpush1.msra.mxu0 0.0
      %3037 = vmatprep.subr.mxu0 0.0
      %3038 = vmatpush1.msra.mxu0 0.0
      %3039 = vmatprep.mubr.f32.mxu0 0.0
      %3040 = vmatmul.mubr.f32.gmra.mrb[0].mxu0 %v2955
      %v3041 = vpop.f32.mrb[0].mxu0
      %v3042 = vadd.f32 0.0, %v3041
      %v3043 = vpop.f32.mrb[0].mxu0
      %3044 = vdwg.mxu0
      %3045 = vmatprep.subr.mxu0 0.0
      %3046 = vmatpush1.msra.mxu0 %v2872
      %3047 = vmatprep.subr.mxu0 0.0
      %3048 = vmatpush1.msra.mxu0 %v2873
      %3049 = vmatprep.subr.mxu0 0.0
      %3050 = vmatpush1.msra.mxu0 %v2874
      %3051 = vmatprep.subr.mxu0 0.0
      %3052 = vmatpush1.msra.mxu0 %v2875
      %3053 = vmatprep.subr.mxu0 0.0
      %3054 = vmatpush1.msra.mxu0 %v2876
      %3055 = vmatprep.subr.mxu0 0.0
      %3056 = vmatpush1.msra.mxu0 %v2877
      %3057 = vmatprep.subr.mxu0 0.0
      %3058 = vmatpush1.msra.mxu0 %v2878
      %3059 = vmatprep.subr.mxu0 0.0
      %3060 = vmatpush1.msra.mxu0 %v2879
      %3061 = vmatprep.subr.mxu0 0.0
      %3062 = vmatpush1.msra.mxu0 %v2880
      %3063 = vmatprep.subr.mxu0 0.0
      %3064 = vmatpush1.msra.mxu0 %v2881
      %3065 = vmatprep.subr.mxu0 0.0
      %3066 = vmatpush1.msra.mxu0 %v2882
      %3067 = vmatprep.subr.mxu0 0.0
      %3068 = vmatpush1.msra.mxu0 %v2883
      %3069 = vmatprep.subr.mxu0 0.0
      %3070 = vmatpush1.msra.mxu0 %v2884
      %3071 = vmatprep.subr.mxu0 0.0
      %3072 = vmatpush1.msra.mxu0 %v2885
      %3073 = vmatprep.subr.mxu0 0.0
      %3074 = vmatpush1.msra.mxu0 %v2886
      %3075 = vmatprep.subr.mxu0 0.0
      %3076 = vmatpush1.msra.mxu0 %v2887
      %3077 = vmatprep.subr.mxu0 0.0
      %3078 = vmatpush1.msra.mxu0 0.0
      %3079 = vmatprep.subr.mxu0 0.0
      %3080 = vmatpush1.msra.mxu0 0.0
      %3081 = vmatprep.subr.mxu0 0.0
      %3082 = vmatpush1.msra.mxu0 0.0
      %3083 = vmatprep.subr.mxu0 0.0
      %3084 = vmatpush1.msra.mxu0 0.0
      %3085 = vmatprep.subr.mxu0 0.0
      %3086 = vmatpush1.msra.mxu0 0.0
      %3087 = vmatprep.subr.mxu0 0.0
      %3088 = vmatpush1.msra.mxu0 0.0
      %3089 = vmatprep.subr.mxu0 0.0
      %3090 = vmatpush1.msra.mxu0 0.0
      %3091 = vmatprep.subr.mxu0 0.0
      %3092 = vmatpush1.msra.mxu0 0.0
      %3093 = vmatprep.subr.mxu0 0.0
      %3094 = vmatpush1.msra.mxu0 0.0
      %3095 = vmatprep.subr.mxu0 0.0
      %3096 = vmatpush1.msra.mxu0 0.0
      %3097 = vmatprep.subr.mxu0 0.0
      %3098 = vmatpush1.msra.mxu0 0.0
      %3099 = vmatprep.subr.mxu0 0.0
      %3100 = vmatpush1.msra.mxu0 0.0
      %3101 = vmatprep.subr.mxu0 0.0
      %3102 = vmatpush1.msra.mxu0 0.0
      %3103 = vmatprep.subr.mxu0 0.0
      %3104 = vmatpush1.msra.mxu0 0.0
      %3105 = vmatprep.subr.mxu0 0.0
      %3106 = vmatpush1.msra.mxu0 0.0
      %3107 = vmatprep.subr.mxu0 0.0
      %3108 = vmatpush1.msra.mxu0 0.0
      %3109 = vmatprep.mubr.f32.mxu0 0.0
      %3110 = vmatmul.mubr.f32.gmra.mrb[0].mxu0 %v2868
      %v3111 = vpop.f32.mrb[0].mxu0
      %v3112 = vadd.f32 %v3042, %v3111
      %v3113 = vpop.f32.mrb[0].mxu0
      %3114 = vdwg.mxu0
      %3115 = vmatprep.subr.mxu0 0.0
      %3116 = vmatpush1.msra.mxu0 %v2799
      %3117 = vmatprep.subr.mxu0 0.0
      %3118 = vmatpush1.msra.mxu0 0.0
      %3119 = vmatprep.subr.mxu0 0.0
      %3120 = vmatpush1.msra.mxu0 0.0
      %3121 = vmatprep.subr.mxu0 0.0
      %3122 = vmatpush1.msra.mxu0 0.0
      %3123 = vmatprep.subr.mxu0 0.0
      %3124 = vmatpush1.msra.mxu0 0.0
      %3125 = vmatprep.subr.mxu0 0.0
      %3126 = vmatpush1.msra.mxu0 0.0
      %3127 = vmatprep.subr.mxu0 0.0
      %3128 = vmatpush1.msra.mxu0 0.0
      %3129 = vmatprep.subr.mxu0 0.0
      %3130 = vmatpush1.msra.mxu0 0.0
      %3131 = vmatprep.subr.mxu0 0.0
      %3132 = vmatpush1.msra.mxu0 0.0
      %3133 = vmatprep.subr.mxu0 0.0
      %3134 = vmatpush1.msra.mxu0 0.0
      %3135 = vmatprep.subr.mxu0 0.0
      %3136 = vmatpush1.msra.mxu0 0.0
      %3137 = vmatprep.subr.mxu0 0.0
      %3138 = vmatpush1.msra.mxu0 0.0
      %3139 = vmatprep.subr.mxu0 0.0
      %3140 = vmatpush1.msra.mxu0 0.0
      %3141 = vmatprep.subr.mxu0 0.0
      %3142 = vmatpush1.msra.mxu0 0.0
      %3143 = vmatprep.subr.mxu0 0.0
      %3144 = vmatpush1.msra.mxu0 0.0
      %3145 = vmatprep.subr.mxu0 0.0
      %3146 = vmatpush1.msra.mxu0 0.0
      %3147 = vmatprep.subr.mxu0 0.0
      %3148 = vmatpush1.msra.mxu0 0.0
      %3149 = vmatprep.subr.mxu0 0.0
      %3150 = vmatpush1.msra.mxu0 0.0
      %3151 = vmatprep.subr.mxu0 0.0
      %3152 = vmatpush1.msra.mxu0 0.0
      %3153 = vmatprep.subr.mxu0 0.0
      %3154 = vmatpush1.msra.mxu0 0.0
      %3155 = vmatprep.subr.mxu0 0.0
      %3156 = vmatpush1.msra.mxu0 0.0
      %3157 = vmatprep.subr.mxu0 0.0
      %3158 = vmatpush1.msra.mxu0 0.0
      %3159 = vmatprep.subr.mxu0 0.0
      %3160 = vmatpush1.msra.mxu0 0.0
      %3161 = vmatprep.subr.mxu0 0.0
      %3162 = vmatpush1.msra.mxu0 0.0
      %3163 = vmatprep.subr.mxu0 0.0
      %3164 = vmatpush1.msra.mxu0 0.0
      %3165 = vmatprep.subr.mxu0 0.0
      %3166 = vmatpush1.msra.mxu0 0.0
      %3167 = vmatprep.subr.mxu0 0.0
      %3168 = vmatpush1.msra.mxu0 0.0
      %3169 = vmatprep.subr.mxu0 0.0
      %3170 = vmatpush1.msra.mxu0 0.0
      %3171 = vmatprep.subr.mxu0 0.0
      %3172 = vmatpush1.msra.mxu0 0.0
      %3173 = vmatprep.subr.mxu0 0.0
      %3174 = vmatpush1.msra.mxu0 0.0
      %3175 = vmatprep.subr.mxu0 0.0
      %3176 = vmatpush1.msra.mxu0 0.0
      %3177 = vmatprep.subr.mxu0 0.0
      %3178 = vmatpush1.msra.mxu0 0.0
      %3179 = vmatprep.mubr.f32.mxu0 0.0
      %3180 = vmatmul.mubr.f32.gmra.mrb[0].mxu0 %v2071
      %v3181 = vpop.f32.mrb[0].mxu0
      %v3182 = vadd.f32 0.0, %v3181
      %v3183 = vpop.f32.mrb[0].mxu0
      %3184 = vdwg.mxu0
      %s3185 = scalar_lea.vmem %s10, 640
      %v3186 = vld [vmem:[%s3185] sm:$0xff]
      %v3187 = vld [vmem:[%s3185 + $0x8] sm:$0xff]
      %v3188 = vld [vmem:[%s3185 + $0x10] sm:$0xff]
      %v3189 = vld [vmem:[%s3185 + $0x18] sm:$0xff]
      %v3190 = vld [vmem:[%s3185 + $0x20] sm:$0xff]
      %v3191 = vld [vmem:[%s3185 + $0x28] sm:$0xff]
      %v3192 = vld [vmem:[%s3185 + $0x30] sm:$0xff]
      %v3193 = vld [vmem:[%s3185 + $0x38] sm:$0xff]
      %v3194 = vld [vmem:[%s3185 + $0x40] sm:$0xff]
      %v3195 = vld [vmem:[%s3185 + $0x48] sm:$0xff]
      %v3196 = vld [vmem:[%s3185 + $0x50] sm:$0xff]
      %v3197 = vld [vmem:[%s3185 + $0x58] sm:$0xff]
      %v3198 = vld [vmem:[%s3185 + $0x60] sm:$0xff]
      %v3199 = vld [vmem:[%s3185 + $0x68] sm:$0xff]
      %v3200 = vld [vmem:[%s3185 + $0x70] sm:$0xff]
      %v3201 = vld [vmem:[%s3185 + $0x78] sm:$0xff]
      %3202 = vmatprep.subr.mxu0 0.0
      %3203 = vmatpush1.msra.mxu0 %v3186
      %3204 = vmatprep.subr.mxu0 0.0
      %3205 = vmatpush1.msra.mxu0 %v3187
      %3206 = vmatprep.subr.mxu0 0.0
      %3207 = vmatpush1.msra.mxu0 %v3188
      %3208 = vmatprep.subr.mxu0 0.0
      %3209 = vmatpush1.msra.mxu0 %v3189
      %3210 = vmatprep.subr.mxu0 0.0
      %3211 = vmatpush1.msra.mxu0 %v3190
      %3212 = vmatprep.subr.mxu0 0.0
      %3213 = vmatpush1.msra.mxu0 %v3191
      %3214 = vmatprep.subr.mxu0 0.0
      %3215 = vmatpush1.msra.mxu0 %v3192
      %3216 = vmatprep.subr.mxu0 0.0
      %3217 = vmatpush1.msra.mxu0 %v3193
      %3218 = vmatprep.subr.mxu0 0.0
      %3219 = vmatpush1.msra.mxu0 %v3194
      %3220 = vmatprep.subr.mxu0 0.0
      %3221 = vmatpush1.msra.mxu0 %v3195
      %3222 = vmatprep.subr.mxu0 0.0
      %3223 = vmatpush1.msra.mxu0 %v3196
      %3224 = vmatprep.subr.mxu0 0.0
      %3225 = vmatpush1.msra.mxu0 %v3197
      %3226 = vmatprep.subr.mxu0 0.0
      %3227 = vmatpush1.msra.mxu0 %v3198
      %3228 = vmatprep.subr.mxu0 0.0
      %3229 = vmatpush1.msra.mxu0 %v3199
      %3230 = vmatprep.subr.mxu0 0.0
      %3231 = vmatpush1.msra.mxu0 %v3200
      %3232 = vmatprep.subr.mxu0 0.0
      %3233 = vmatpush1.msra.mxu0 %v3201
      %3234 = vmatprep.subr.mxu0 0.0
      %3235 = vmatpush1.msra.mxu0 0.0
      %3236 = vmatprep.subr.mxu0 0.0
      %3237 = vmatpush1.msra.mxu0 0.0
      %3238 = vmatprep.subr.mxu0 0.0
      %3239 = vmatpush1.msra.mxu0 0.0
      %3240 = vmatprep.subr.mxu0 0.0
      %3241 = vmatpush1.msra.mxu0 0.0
      %3242 = vmatprep.subr.mxu0 0.0
      %3243 = vmatpush1.msra.mxu0 0.0
      %3244 = vmatprep.subr.mxu0 0.0
      %3245 = vmatpush1.msra.mxu0 0.0
      %3246 = vmatprep.subr.mxu0 0.0
      %3247 = vmatpush1.msra.mxu0 0.0
      %3248 = vmatprep.subr.mxu0 0.0
      %3249 = vmatpush1.msra.mxu0 0.0
      %3250 = vmatprep.subr.mxu0 0.0
      %3251 = vmatpush1.msra.mxu0 0.0
      %3252 = vmatprep.subr.mxu0 0.0
      %3253 = vmatpush1.msra.mxu0 0.0
      %3254 = vmatprep.subr.mxu0 0.0
      %3255 = vmatpush1.msra.mxu0 0.0
      %3256 = vmatprep.subr.mxu0 0.0
      %3257 = vmatpush1.msra.mxu0 0.0
      %3258 = vmatprep.subr.mxu0 0.0
      %3259 = vmatpush1.msra.mxu0 0.0
      %3260 = vmatprep.subr.mxu0 0.0
      %3261 = vmatpush1.msra.mxu0 0.0
      %3262 = vmatprep.subr.mxu0 0.0
      %3263 = vmatpush1.msra.mxu0 0.0
      %3264 = vmatprep.subr.mxu0 0.0
      %3265 = vmatpush1.msra.mxu0 0.0
      %3266 = vmatprep.mubr.f32.mxu0 0.0
      %3267 = vmatmul.mubr.f32.gmra.mrb[0].mxu0 %v3182
      %v3268 = vpop.f32.mrb[0].mxu0
      %v3269 = vadd.f32 0.0, %v3268
      %v3270 = vpop.f32.mrb[0].mxu0
      %3271 = vdwg.mxu0
      %v3272 = vadd.f32 %v3112, %v3269
      %v3273 = vmax.f32 %v3272, 0.0
      %s3274 = scalar_lea.vmem %s11, 64
      %v3275 = vld [vmem:[%s3274] sm:$0xff]
      %v3276 = vld [vmem:[%s3274 + $0x8] sm:$0xff]
      %v3277 = vld [vmem:[%s3274 + $0x10] sm:$0xff]
      %v3278 = vld [vmem:[%s3274 + $0x18] sm:$0xff]
      %v3279 = vld [vmem:[%s3274 + $0x20] sm:$0xff]
      %v3280 = vld [vmem:[%s3274 + $0x28] sm:$0xff]
      %v3281 = vld [vmem:[%s3274 + $0x30] sm:$0xff]
      %v3282 = vld [vmem:[%s3274 + $0x38] sm:$0xff]
      %v3284 = vsel %vm2722, %v3273, 0
      %3286 = vmatprep.subr.mxu0 0.0
      %3287 = vmatpush1.msra.mxu0 %v3275
      %3288 = vmatprep.subr.mxu0 0.0
      %3289 = vmatpush1.msra.mxu0 %v3276
      %3290 = vmatprep.subr.mxu0 0.0
      %3291 = vmatpush1.msra.mxu0 %v3277
      %3292 = vmatprep.subr.mxu0 0.0
      %3293 = vmatpush1.msra.mxu0 %v3278
      %3294 = vmatprep.subr.mxu0 0.0
      %3295 = vmatpush1.msra.mxu0 %v3279
      %3296 = vmatprep.subr.mxu0 0.0
      %3297 = vmatpush1.msra.mxu0 %v3280
      %3298 = vmatprep.subr.mxu0 0.0
      %3299 = vmatpush1.msra.mxu0 %v3281
      %3300 = vmatprep.subr.mxu0 0.0
      %3301 = vmatpush1.msra.mxu0 %v3282
      %3302 = vmatprep.subr.mxu0 0.0
      %3303 = vmatpush1.msra.mxu0 0.0
      %3304 = vmatprep.subr.mxu0 0.0
      %3305 = vmatpush1.msra.mxu0 0.0
      %3306 = vmatprep.subr.mxu0 0.0
      %3307 = vmatpush1.msra.mxu0 0.0
      %3308 = vmatprep.subr.mxu0 0.0
      %3309 = vmatpush1.msra.mxu0 0.0
      %3310 = vmatprep.subr.mxu0 0.0
      %3311 = vmatpush1.msra.mxu0 0.0
      %3312 = vmatprep.subr.mxu0 0.0
      %3313 = vmatpush1.msra.mxu0 0.0
      %3314 = vmatprep.subr.mxu0 0.0
      %3315 = vmatpush1.msra.mxu0 0.0
      %3316 = vmatprep.subr.mxu0 0.0
      %3317 = vmatpush1.msra.mxu0 0.0
      %3318 = vmatprep.subr.mxu0 0.0
      %3319 = vmatpush1.msra.mxu0 0.0
      %3320 = vmatprep.subr.mxu0 0.0
      %3321 = vmatpush1.msra.mxu0 0.0
      %3322 = vmatprep.subr.mxu0 0.0
      %3323 = vmatpush1.msra.mxu0 0.0
      %3324 = vmatprep.subr.mxu0 0.0
      %3325 = vmatpush1.msra.mxu0 0.0
      %3326 = vmatprep.subr.mxu0 0.0
      %3327 = vmatpush1.msra.mxu0 0.0
      %3328 = vmatprep.subr.mxu0 0.0
      %3329 = vmatpush1.msra.mxu0 0.0
      %3330 = vmatprep.subr.mxu0 0.0
      %3331 = vmatpush1.msra.mxu0 0.0
      %3332 = vmatprep.subr.mxu0 0.0
      %3333 = vmatpush1.msra.mxu0 0.0
      %3334 = vmatprep.subr.mxu0 0.0
      %3335 = vmatpush1.msra.mxu0 0.0
      %3336 = vmatprep.subr.mxu0 0.0
      %3337 = vmatpush1.msra.mxu0 0.0
      %3338 = vmatprep.subr.mxu0 0.0
      %3339 = vmatpush1.msra.mxu0 0.0
      %3340 = vmatprep.subr.mxu0 0.0
      %3341 = vmatpush1.msra.mxu0 0.0
      %3342 = vmatprep.subr.mxu0 0.0
      %3343 = vmatpush1.msra.mxu0 0.0
      %3344 = vmatprep.subr.mxu0 0.0
      %3345 = vmatpush1.msra.mxu0 0.0
      %3346 = vmatprep.subr.mxu0 0.0
      %3347 = vmatpush1.msra.mxu0 0.0
      %3348 = vmatprep.subr.mxu0 0.0
      %3349 = vmatpush1.msra.mxu0 0.0
      %3350 = vmatprep.mubr.f32.mxu0 0.0
      %3351 = vmatmul.mubr.f32.gmra.mrb[0].mxu0 %v3284
      %v3352 = vpop.f32.mrb[0].mxu0
      %v3353 = vadd.f32 0.0, %v3352
      %v3354 = vpop.f32.mrb[0].mxu0
      %3355 = vdwg.mxu0
      %v3356 = vadd.f32 %v2796, %v3353
      %v3357 = vmax.f32 %v3356, 0.0
      %v3358 = vld [vmem:[%s12] sm:$0xff]
      %v3359 = vld [vmem:[%s12 + $0x8] sm:$0xff]
      %v3360 = vld [vmem:[%s12 + $0x10] sm:$0xff]
      %v3361 = vld [vmem:[%s12 + $0x18] sm:$0xff]
      %v3362 = vld [vmem:[%s12 + $0x20] sm:$0xff]
      %v3363 = vld [vmem:[%s12 + $0x28] sm:$0xff]
      %v3364 = vld [vmem:[%s12 + $0x30] sm:$0xff]
      %v3365 = vld [vmem:[%s12 + $0x38] sm:$0xff]
      %v3366 = vld [vmem:[%s12 + $0x40] sm:$0xff]
      %v3367 = vld [vmem:[%s12 + $0x48] sm:$0xff]
      %v3368 = vld [vmem:[%s12 + $0x50] sm:$0xff]
      %v3369 = vld [vmem:[%s12 + $0x58] sm:$0xff]
      %v3370 = vld [vmem:[%s12 + $0x60] sm:$0xff]
      %v3371 = vld [vmem:[%s12 + $0x68] sm:$0xff]
      %v3372 = vld [vmem:[%s12 + $0x70] sm:$0xff]
      %v3373 = vld [vmem:[%s12 + $0x78] sm:$0xff]
      %v3374 = vld [vmem:[%s13] sm:$0x1]
      %v3376 = vlaneseq
      %v3377 = vshrl.u32 %v3376, 7
      %v3378 = vsub.s32 0, %v3377
      %v3379 = vrot.slane %v3374, %v3378
      %3381 = vmatprep.subr.mxu0 0.0
      %3382 = vmatpush1.msra.mxu0 %v3358
      %3383 = vmatprep.subr.mxu0 0.0
      %3384 = vmatpush1.msra.mxu0 %v3359
      %3385 = vmatprep.subr.mxu0 0.0
      %3386 = vmatpush1.msra.mxu0 %v3360
      %3387 = vmatprep.subr.mxu0 0.0
      %3388 = vmatpush1.msra.mxu0 %v3361
      %3389 = vmatprep.subr.mxu0 0.0
      %3390 = vmatpush1.msra.mxu0 %v3362
      %3391 = vmatprep.subr.mxu0 0.0
      %3392 = vmatpush1.msra.mxu0 %v3363
      %3393 = vmatprep.subr.mxu0 0.0
      %3394 = vmatpush1.msra.mxu0 %v3364
      %3395 = vmatprep.subr.mxu0 0.0
      %3396 = vmatpush1.msra.mxu0 %v3365
      %3397 = vmatprep.subr.mxu0 0.0
      %3398 = vmatpush1.msra.mxu0 %v3366
      %3399 = vmatprep.subr.mxu0 0.0
      %3400 = vmatpush1.msra.mxu0 %v3367
      %3401 = vmatprep.subr.mxu0 0.0
      %3402 = vmatpush1.msra.mxu0 %v3368
      %3403 = vmatprep.subr.mxu0 0.0
      %3404 = vmatpush1.msra.mxu0 %v3369
      %3405 = vmatprep.subr.mxu0 0.0
      %3406 = vmatpush1.msra.mxu0 %v3370
      %3407 = vmatprep.subr.mxu0 0.0
      %3408 = vmatpush1.msra.mxu0 %v3371
      %3409 = vmatprep.subr.mxu0 0.0
      %3410 = vmatpush1.msra.mxu0 %v3372
      %3411 = vmatprep.subr.mxu0 0.0
      %3412 = vmatpush1.msra.mxu0 %v3373
      %3413 = vmatprep.subr.mxu0 0.0
      %3414 = vmatpush1.msra.mxu0 0.0
      %3415 = vmatprep.subr.mxu0 0.0
      %3416 = vmatpush1.msra.mxu0 0.0
      %3417 = vmatprep.subr.mxu0 0.0
      %3418 = vmatpush1.msra.mxu0 0.0
      %3419 = vmatprep.subr.mxu0 0.0
      %3420 = vmatpush1.msra.mxu0 0.0
      %3421 = vmatprep.subr.mxu0 0.0
      %3422 = vmatpush1.msra.mxu0 0.0
      %3423 = vmatprep.subr.mxu0 0.0
      %3424 = vmatpush1.msra.mxu0 0.0
      %3425 = vmatprep.subr.mxu0 0.0
      %3426 = vmatpush1.msra.mxu0 0.0
      %3427 = vmatprep.subr.mxu0 0.0
      %3428 = vmatpush1.msra.mxu0 0.0
      %3429 = vmatprep.subr.mxu0 0.0
      %3430 = vmatpush1.msra.mxu0 0.0
      %3431 = vmatprep.subr.mxu0 0.0
      %3432 = vmatpush1.msra.mxu0 0.0
      %3433 = vmatprep.subr.mxu0 0.0
      %3434 = vmatpush1.msra.mxu0 0.0
      %3435 = vmatprep.subr.mxu0 0.0
      %3436 = vmatpush1.msra.mxu0 0.0
      %3437 = vmatprep.subr.mxu0 0.0
      %3438 = vmatpush1.msra.mxu0 0.0
      %3439 = vmatprep.subr.mxu0 0.0
      %3440 = vmatpush1.msra.mxu0 0.0
      %3441 = vmatprep.subr.mxu0 0.0
      %3442 = vmatpush1.msra.mxu0 0.0
      %3443 = vmatprep.subr.mxu0 0.0
      %3444 = vmatpush1.msra.mxu0 0.0
      %3445 = vmatprep.mubr.f32.mxu0 0.0
      %3446 = vmatmul.mubr.f32.gmra.mrb[0].mxu0 %v3357
      %v3447 = vpop.f32.mrb[0].mxu0
      %v3448 = vadd.f32 %v3379, %v3447
      %v3449 = vpop.f32.mrb[0].mxu0
      %3450 = vdwg.mxu0
      %vm3451 = vcmask 519168
      %3452 = vst.msk [vmem:[%s465] sm:$0xf] %vm3451, %v3448
      %p3453 = scmp.lt.s32.totalorder %s25, 1
      %s3454 = scalar_select %p3453, %s25, 1
      %s3455 = smul.addr %s3454, 4
      %s3456 = scalar_lea.vmem %s14, %s3455
      // Predicated region
      $region77: #{vqvae_forward.3} parent=75 // pred_check
        %p3457 = pneg %p342
      $region78: #{vqvae_forward.3} parent=75 // pred_check_branch
        %3459 = sbr.rel (%p3457) target = $region80
      $region79: #{vqvae_forward.3} parent=75 // pred_region
        _
      $region80: #{vqvae_forward.3} parent=75 // pred_fallthru
        _
    $region76: #{vqvae_forward.3} parent=5 // pred_fallthru
      _
    %p3460 = scmp.le.s32.totalorder 2, %s20
    // Predicated region
    $region81: #{vqvae_forward.3} parent=5 // pred_check
      %p3461 = pneg %p3460
    $region82: #{vqvae_forward.3} parent=5 // pred_check_branch
      %3463 = sbr.rel (%p3461) target = $region84
    $region83: #{vqvae_forward.3} parent=5 // pred_region
      %s3464 = ssub.s32 %s20, 2
      // Predicated region
      $region85: #{vqvae_forward.3} parent=83 // pred_check
        %p3465 = pneg %p348
      $region86: #{vqvae_forward.3} parent=83 // pred_check_branch
        %3467 = sbr.rel (%p3465) target = $region88
      $region87: #{vqvae_forward.3} parent=83 // pred_region
        %p3468 = scmp.lt.s32.totalorder %s26, 1
        %s3469 = scalar_select %p3468, %s26, 1
        %s3470 = smul.addr %s3469, 4
        %s3471 = scalar_lea.vmem %s14, %s3470
      $region88: #{vqvae_forward.3} parent=83 // pred_fallthru
        _
    $region84: #{vqvae_forward.3} parent=5 // pred_fallthru
      _
  $region6: #{vqvae_forward.3} parent=0 // loop_footer
    %s24 = sadd.s32 1, %s20
  $region7: #{vqvae_forward.3} parent=0 // loop_footer_branch
    %19 = sbr.rel target = $region3
  $region8: #{vqvae_forward.3} parent=0 // loop_exit
    _

// kernel: vqvae_forward.5
$region0: #{vqvae_forward.5}
  #allocation0 [shape = 'u32[]', space=smem, size = 0x4, offset = 0x4, fixed_abs, tag = 'smem constant byte address 0x4 - core index']
  #allocation1 [shape = 'u32[144,128]{1,0:T(1,128)}', space=vmem, size = 0x12000, scoped, tag = 'internal scratch']
  %s0 = inlined_call_operand.vmem [shape: f32[2,4,64], index: 0, kind: input, shape index: {}]
  %s1 = inlined_call_operand.vmem [shape: f32[3,4,4], index: 1, kind: input, shape index: {}]
  %s2 = inlined_call_operand.vmem [shape: f32[3,64,128], index: 2, kind: input, shape index: {}]
  %s3 = inlined_call_operand.vmem [shape: f32[1,128], index: 3, kind: input, shape index: {}]
  %s4 = inlined_call_operand.vmem [shape: f32[6,128,64], index: 4, kind: input, shape index: {}]
  %s5 = inlined_call_operand.vmem [shape: f32[2,64,128], index: 5, kind: input, shape index: {}]
  %s6 = inlined_call_operand.vmem [shape: f32[4,8,4], index: 6, kind: input, shape index: {}]
  %s7 = inlined_call_operand.vmem [shape: f32[4,128,128], index: 7, kind: input, shape index: {}]
  %s8 = inlined_call_operand.vmem [shape: f32[1,128], index: 8, kind: input, shape index: {}]
  %s9 = inlined_call_operand.vmem [shape: f32[4,16,8], index: 9, kind: input, shape index: {}]
  %s10 = inlined_call_operand.vmem [shape: f32[4,128,16], index: 10, kind: input, shape index: {}]
  %s11 = inlined_call_operand.vmem [shape: f32[1,16], index: 11, kind: input, shape index: {}]
  %s12 = inlined_call_operand.hbm [shape: f32[2,16,16], index: 12, kind: output, shape index: {}]
  %s13 = sld [smem:[#allocation0]]
  $region81: #{vqvae_forward.5} parent=0
    _
  %s15 = ssub.s32 1, %s13
  %s16 = scalar_select 0, %s15, %s13
  $region1: #{vqvae_forward.5} parent=0
    #allocation2 [shape = 'u8[16384]{0}', space=vmem, size = 0x4000, scoped, tag = 'output window, operand 0']
    #allocation3 [shape = 's32[2]{0}', space=sflag, size = 0x8, scoped, tag = 'scoped memory for vqvae_forward.5']
    %17 = vsyncpa [#allocation3], 0
    %s18 = scalar_lea.sflag [#allocation3], 1
    %19 = vsyncpa %s18, 0
    loop: start=0, step=1, limit=4
    $region2: #{vqvae_forward.5} parent=1 // loop_pre_header
      _
    $region3: #{vqvae_forward.5} parent=1 // loop_header
      %s21 = sphi 0, %s25
      %p22 = scmp.ge.s32.totalorder %s21, 4
      %s31 = sphi 0, %s33
      %s34 = sphi 0, %s31
      %s35 = sphi 0, %s34
      %s51 = sphi 0, %s35
      %s55 = sphi 0, %s55
      %s57 = sphi 0, %s55
      %s58 = sphi 0, %s57
      %s72 = sphi 0, %s58
      %s76 = sphi 0, %s76
      %s78 = sphi 0, %s76
      %s79 = sphi 0, %s78
      %s93 = sphi 0, %s79
      %s97 = sphi 0, %s97
      %s99 = sphi 0, %s97
      %s100 = sphi 0, %s99
      %s114 = sphi 0, %s100
      %s118 = sphi 0, %s118
      %s120 = sphi 0, %s118
      %s121 = sphi 0, %s120
      %s135 = sphi 0, %s121
      %s139 = sphi 0, %s139
      %s141 = sphi 0, %s139
      %s142 = sphi 0, %s141
      %s156 = sphi 0, %s142
      %s160 = sphi 0, %s160
      %s162 = sphi 0, %s160
      %s163 = sphi 0, %s162
      %s177 = sphi 0, %s163
      %s181 = sphi 0, %s181
      %s183 = sphi 0, %s181
      %s184 = sphi 0, %s183
      %s198 = sphi 0, %s184
      %s202 = sphi 0, %s202
      %s204 = sphi 0, %s202
      %s205 = sphi 0, %s204
      %s219 = sphi 0, %s205
      %s223 = sphi 0, %s223
      %s225 = sphi 0, %s223
      %s226 = sphi 0, %s225
      %s240 = sphi 0, %s226
      %s244 = sphi 0, %s244
      %s246 = sphi 0, %s244
      %s247 = sphi 0, %s246
      %s261 = sphi 0, %s247
      %s265 = sphi 0, %s265
      %s267 = sphi 0, %s265
      %s268 = sphi 0, %s267
      %s282 = sphi 0, %s268
      %s288 = sphi 0, %s290
      %s291 = sphi 0, %s288
      %s292 = sphi 0, %s291
      %s308 = sphi 0, %s292
    $region4: #{vqvae_forward.5} parent=1 // loop_header_branch
      %24 = sbr.rel (%p22) target = $region8
    $region5: #{vqvae_forward.5} parent=1 // loop_body
      %s26 = ssub.s32 %s21, 1
      %s27 = ssub.s32 %s21, 2
      %s28 = sadd.s32 %s21, 1
      %s29 = ssub.s32 %s21, %s28
      %p30 = scmp.eq.s32.totalorder %s29, 0
      %s32 = sadd.s32 %s31, 1
      %s33 = scalar_select %p30, %s31, %s32
      %p36 = pneg %p30
      %p37 = scmp.eq.s32.totalorder %s21, 1
      %p38 = por %p36, %p37
      %p39 = scmp.ne.s32.totalorder %s31, %s34
      %p40 = scmp.eq.s32.totalorder %s21, 0
      %p41 = por %p39, %p40
      %p42 = scmp.ne.s32.totalorder %s31, %s34
      %p43 = scmp.eq.s32.totalorder %s26, 1
      %p44 = por %p42, %p43
      %p45 = scmp.ne.s32.totalorder %s34, %s35
      %p46 = scmp.eq.s32.totalorder %s26, 0
      %p47 = por %p45, %p46
      %p48 = scmp.ne.s32.totalorder %s34, %s35
      %p49 = scmp.eq.s32.totalorder %s27, 1
      %p50 = por %p48, %p49
      %p52 = scmp.ne.s32.totalorder %s35, %s51
      %p53 = scmp.eq.s32.totalorder %s27, 0
      %p54 = por %p52, %p53
      %s56 = sadd.s32 %s55, 1
      %p59 = scmp.eq.s32.totalorder %s21, 1
      %p60 = scmp.ne.s32.totalorder %s55, %s57
      %p61 = scmp.eq.s32.totalorder %s21, 0
      %p62 = por %p60, %p61
      %p63 = scmp.ne.s32.totalorder %s55, %s57
      %p64 = scmp.eq.s32.totalorder %s26, 1
      %p65 = por %p63, %p64
      %p66 = scmp.ne.s32.totalorder %s57, %s58
      %p67 = scmp.eq.s32.totalorder %s26, 0
      %p68 = por %p66, %p67
      %p69 = scmp.ne.s32.totalorder %s57, %s58
      %p70 = scmp.eq.s32.totalorder %s27, 1
      %p71 = por %p69, %p70
      %p73 = scmp.ne.s32.totalorder %s58, %s72
      %p74 = scmp.eq.s32.totalorder %s27, 0
      %p75 = por %p73, %p74
      %s77 = sadd.s32 %s76, 1
      %p80 = scmp.eq.s32.totalorder %s21, 1
      %p81 = scmp.ne.s32.totalorder %s76, %s78
      %p82 = scmp.eq.s32.totalorder %s21, 0
      %p83 = por %p81, %p82
      %p84 = scmp.ne.s32.totalorder %s76, %s78
      %p85 = scmp.eq.s32.totalorder %s26, 1
      %p86 = por %p84, %p85
      %p87 = scmp.ne.s32.totalorder %s78, %s79
      %p88 = scmp.eq.s32.totalorder %s26, 0
      %p89 = por %p87, %p88
      %p90 = scmp.ne.s32.totalorder %s78, %s79
      %p91 = scmp.eq.s32.totalorder %s27, 1
      %p92 = por %p90, %p91
      %p94 = scmp.ne.s32.totalorder %s79, %s93
      %p95 = scmp.eq.s32.totalorder %s27, 0
      %p96 = por %p94, %p95
      %s98 = sadd.s32 %s97, 1
      %p101 = scmp.eq.s32.totalorder %s21, 1
      %p102 = scmp.ne.s32.totalorder %s97, %s99
      %p103 = scmp.eq.s32.totalorder %s21, 0
      %p104 = por %p102, %p103
      %p105 = scmp.ne.s32.totalorder %s97, %s99
      %p106 = scmp.eq.s32.totalorder %s26, 1
      %p107 = por %p105, %p106
      %p108 = scmp.ne.s32.totalorder %s99, %s100
      %p109 = scmp.eq.s32.totalorder %s26, 0
      %p110 = por %p108, %p109
      %p111 = scmp.ne.s32.totalorder %s99, %s100
      %p112 = scmp.eq.s32.totalorder %s27, 1
      %p113 = por %p111, %p112
      %p115 = scmp.ne.s32.totalorder %s100, %s114
      %p116 = scmp.eq.s32.totalorder %s27, 0
      %p117 = por %p115, %p116
      %s119 = sadd.s32 %s118, 1
      %p122 = scmp.eq.s32.totalorder %s21, 1
      %p123 = scmp.ne.s32.totalorder %s118, %s120
      %p124 = scmp.eq.s32.totalorder %s21, 0
      %p125 = por %p123, %p124
      %p126 = scmp.ne.s32.totalorder %s118, %s120
      %p127 = scmp.eq.s32.totalorder %s26, 1
      %p128 = por %p126, %p127
      %p129 = scmp.ne.s32.totalorder %s120, %s121
      %p130 = scmp.eq.s32.totalorder %s26, 0
      %p131 = por %p129, %p130
      %p132 = scmp.ne.s32.totalorder %s120, %s121
      %p133 = scmp.eq.s32.totalorder %s27, 1
      %p134 = por %p132, %p133
      %p136 = scmp.ne.s32.totalorder %s121, %s135
      %p137 = scmp.eq.s32.totalorder %s27, 0
      %p138 = por %p136, %p137
      %s140 = sadd.s32 %s139, 1
      %p143 = scmp.eq.s32.totalorder %s21, 1
      %p144 = scmp.ne.s32.totalorder %s139, %s141
      %p145 = scmp.eq.s32.totalorder %s21, 0
      %p146 = por %p144, %p145
      %p147 = scmp.ne.s32.totalorder %s139, %s141
      %p148 = scmp.eq.s32.totalorder %s26, 1
      %p149 = por %p147, %p148
      %p150 = scmp.ne.s32.totalorder %s141, %s142
      %p151 = scmp.eq.s32.totalorder %s26, 0
      %p152 = por %p150, %p151
      %p153 = scmp.ne.s32.totalorder %s141, %s142
      %p154 = scmp.eq.s32.totalorder %s27, 1
      %p155 = por %p153, %p154
      %p157 = scmp.ne.s32.totalorder %s142, %s156
      %p158 = scmp.eq.s32.totalorder %s27, 0
      %p159 = por %p157, %p158
      %s161 = sadd.s32 %s160, 1
      %p164 = scmp.eq.s32.totalorder %s21, 1
      %p165 = scmp.ne.s32.totalorder %s160, %s162
      %p166 = scmp.eq.s32.totalorder %s21, 0
      %p167 = por %p165, %p166
      %p168 = scmp.ne.s32.totalorder %s160, %s162
      %p169 = scmp.eq.s32.totalorder %s26, 1
      %p170 = por %p168, %p169
      %p171 = scmp.ne.s32.totalorder %s162, %s163
      %p172 = scmp.eq.s32.totalorder %s26, 0
      %p173 = por %p171, %p172
      %p174 = scmp.ne.s32.totalorder %s162, %s163
      %p175 = scmp.eq.s32.totalorder %s27, 1
      %p176 = por %p174, %p175
      %p178 = scmp.ne.s32.totalorder %s163, %s177
      %p179 = scmp.eq.s32.totalorder %s27, 0
      %p180 = por %p178, %p179
      %s182 = sadd.s32 %s181, 1
      %p185 = scmp.eq.s32.totalorder %s21, 1
      %p186 = scmp.ne.s32.totalorder %s181, %s183
      %p187 = scmp.eq.s32.totalorder %s21, 0
      %p188 = por %p186, %p187
      %p189 = scmp.ne.s32.totalorder %s181, %s183
      %p190 = scmp.eq.s32.totalorder %s26, 1
      %p191 = por %p189, %p190
      %p192 = scmp.ne.s32.totalorder %s183, %s184
      %p193 = scmp.eq.s32.totalorder %s26, 0
      %p194 = por %p192, %p193
      %p195 = scmp.ne.s32.totalorder %s183, %s184
      %p196 = scmp.eq.s32.totalorder %s27, 1
      %p197 = por %p195, %p196
      %p199 = scmp.ne.s32.totalorder %s184, %s198
      %p200 = scmp.eq.s32.totalorder %s27, 0
      %p201 = por %p199, %p200
      %s203 = sadd.s32 %s202, 1
      %p206 = scmp.eq.s32.totalorder %s21, 1
      %p207 = scmp.ne.s32.totalorder %s202, %s204
      %p208 = scmp.eq.s32.totalorder %s21, 0
      %p209 = por %p207, %p208
      %p210 = scmp.ne.s32.totalorder %s202, %s204
      %p211 = scmp.eq.s32.totalorder %s26, 1
      %p212 = por %p210, %p211
      %p213 = scmp.ne.s32.totalorder %s204, %s205
      %p214 = scmp.eq.s32.totalorder %s26, 0
      %p215 = por %p213, %p214
      %p216 = scmp.ne.s32.totalorder %s204, %s205
      %p217 = scmp.eq.s32.totalorder %s27, 1
      %p218 = por %p216, %p217
      %p220 = scmp.ne.s32.totalorder %s205, %s219
      %p221 = scmp.eq.s32.totalorder %s27, 0
      %p222 = por %p220, %p221
      %s224 = sadd.s32 %s223, 1
      %p227 = scmp.eq.s32.totalorder %s21, 1
      %p228 = scmp.ne.s32.totalorder %s223, %s225
      %p229 = scmp.eq.s32.totalorder %s21, 0
      %p230 = por %p228, %p229
      %p231 = scmp.ne.s32.totalorder %s223, %s225
      %p232 = scmp.eq.s32.totalorder %s26, 1
      %p233 = por %p231, %p232
      %p234 = scmp.ne.s32.totalorder %s225, %s226
      %p235 = scmp.eq.s32.totalorder %s26, 0
      %p236 = por %p234, %p235
      %p237 = scmp.ne.s32.totalorder %s225, %s226
      %p238 = scmp.eq.s32.totalorder %s27, 1
      %p239 = por %p237, %p238
      %p241 = scmp.ne.s32.totalorder %s226, %s240
      %p242 = scmp.eq.s32.totalorder %s27, 0
      %p243 = por %p241, %p242
      %s245 = sadd.s32 %s244, 1
      %p248 = scmp.eq.s32.totalorder %s21, 1
      %p249 = scmp.ne.s32.totalorder %s244, %s246
      %p250 = scmp.eq.s32.totalorder %s21, 0
      %p251 = por %p249, %p250
      %p252 = scmp.ne.s32.totalorder %s244, %s246
      %p253 = scmp.eq.s32.totalorder %s26, 1
      %p254 = por %p252, %p253
      %p255 = scmp.ne.s32.totalorder %s246, %s247
      %p256 = scmp.eq.s32.totalorder %s26, 0
      %p257 = por %p255, %p256
      %p258 = scmp.ne.s32.totalorder %s246, %s247
      %p259 = scmp.eq.s32.totalorder %s27, 1
      %p260 = por %p258, %p259
      %p262 = scmp.ne.s32.totalorder %s247, %s261
      %p263 = scmp.eq.s32.totalorder %s27, 0
      %p264 = por %p262, %p263
      %s266 = sadd.s32 %s265, 1
      %p269 = scmp.eq.s32.totalorder %s21, 1
      %p270 = scmp.ne.s32.totalorder %s265, %s267
      %p271 = scmp.eq.s32.totalorder %s21, 0
      %p272 = por %p270, %p271
      %p273 = scmp.ne.s32.totalorder %s265, %s267
      %p274 = scmp.eq.s32.totalorder %s26, 1
      %p275 = por %p273, %p274
      %p276 = scmp.ne.s32.totalorder %s267, %s268
      %p277 = scmp.eq.s32.totalorder %s26, 0
      %p278 = por %p276, %p277
      %p279 = scmp.ne.s32.totalorder %s267, %s268
      %p280 = scmp.eq.s32.totalorder %s27, 1
      %p281 = por %p279, %p280
      %p283 = scmp.ne.s32.totalorder %s268, %s282
      %p284 = scmp.eq.s32.totalorder %s27, 0
      %p285 = por %p283, %p284
      %s286 = ssub.s32 %s21, %s28
      %p287 = scmp.eq.s32.totalorder %s286, 0
      %s289 = sadd.s32 %s288, 1
      %s290 = scalar_select %p287, %s288, %s289
      %p293 = pneg %p287
      %p294 = scmp.eq.s32.totalorder %s21, 1
      %p295 = por %p293, %p294
      %p296 = scmp.ne.s32.totalorder %s288, %s291
      %p297 = scmp.eq.s32.totalorder %s21, 0
      %p298 = por %p296, %p297
      %p299 = scmp.ne.s32.totalorder %s288, %s291
      %p300 = scmp.eq.s32.totalorder %s26, 1
      %p301 = por %p299, %p300
      %p302 = scmp.ne.s32.totalorder %s291, %s292
      %p303 = scmp.eq.s32.totalorder %s26, 0
      %p304 = por %p302, %p303
      %p305 = scmp.ne.s32.totalorder %s291, %s292
      %p306 = scmp.eq.s32.totalorder %s27, 1
      %p307 = por %p305, %p306
      %p309 = scmp.ne.s32.totalorder %s292, %s308
      %p310 = scmp.eq.s32.totalorder %s27, 0
      %p311 = por %p309, %p310
      %p312 = scmp.le.s32.totalorder 1, %s21
      %p313 = scmp.lt.s32.totalorder %s21, 3
      %p314 = pnand %p312, %p313
      %p315 = pneg %p314
      // Predicated region
      $region9: #{vqvae_forward.5} parent=5 // pred_check
        _
      $region10: #{vqvae_forward.5} parent=5 // pred_check_branch
        %317 = sbr.rel (%p314) target = $region12
      $region11: #{vqvae_forward.5} parent=5 // pred_region
        %s318 = ssub.s32 %s21, 1
        // Predicated region
        $region13: #{vqvae_forward.5} parent=11 // pred_check
          %p319 = pneg %p68
        $region14: #{vqvae_forward.5} parent=11 // pred_check_branch
          %321 = sbr.rel (%p319) target = $region16
        $region15: #{vqvae_forward.5} parent=11 // pred_region
          _
        $region16: #{vqvae_forward.5} parent=11 // pred_fallthru
          _
        // Predicated region
        $region17: #{vqvae_forward.5} parent=11 // pred_check
          %p322 = pneg %p89
        $region18: #{vqvae_forward.5} parent=11 // pred_check_branch
          %324 = sbr.rel (%p322) target = $region20
        $region19: #{vqvae_forward.5} parent=11 // pred_region
          _
        $region20: #{vqvae_forward.5} parent=11 // pred_fallthru
          _
        // Predicated region
        $region21: #{vqvae_forward.5} parent=11 // pred_check
          %p325 = pneg %p110
        $region22: #{vqvae_forward.5} parent=11 // pred_check_branch
          %327 = sbr.rel (%p325) target = $region24
        $region23: #{vqvae_forward.5} parent=11 // pred_region
          _
        $region24: #{vqvae_forward.5} parent=11 // pred_fallthru
          _
        // Predicated region
        $region25: #{vqvae_forward.5} parent=11 // pred_check
          %p328 = pneg %p131
        $region26: #{vqvae_forward.5} parent=11 // pred_check_branch
          %330 = sbr.rel (%p328) target = $region28
        $region27: #{vqvae_forward.5} parent=11 // pred_region
          _
        $region28: #{vqvae_forward.5} parent=11 // pred_fallthru
          _
        // Predicated region
        $region29: #{vqvae_forward.5} parent=11 // pred_check
          %p331 = pneg %p152
        $region30: #{vqvae_forward.5} parent=11 // pred_check_branch
          %333 = sbr.rel (%p331) target = $region32
        $region31: #{vqvae_forward.5} parent=11 // pred_region
          _
        $region32: #{vqvae_forward.5} parent=11 // pred_fallthru
          _
        // Predicated region
        $region33: #{vqvae_forward.5} parent=11 // pred_check
          %p334 = pneg %p173
        $region34: #{vqvae_forward.5} parent=11 // pred_check_branch
          %336 = sbr.rel (%p334) target = $region36
        $region35: #{vqvae_forward.5} parent=11 // pred_region
          _
        $region36: #{vqvae_forward.5} parent=11 // pred_fallthru
          _
        // Predicated region
        $region37: #{vqvae_forward.5} parent=11 // pred_check
          %p337 = pneg %p194
        $region38: #{vqvae_forward.5} parent=11 // pred_check_branch
          %339 = sbr.rel (%p337) target = $region40
        $region39: #{vqvae_forward.5} parent=11 // pred_region
          _
        $region40: #{vqvae_forward.5} parent=11 // pred_fallthru
          _
        // Predicated region
        $region41: #{vqvae_forward.5} parent=11 // pred_check
          %p340 = pneg %p215
        $region42: #{vqvae_forward.5} parent=11 // pred_check_branch
          %342 = sbr.rel (%p340) target = $region44
        $region43: #{vqvae_forward.5} parent=11 // pred_region
          _
        $region44: #{vqvae_forward.5} parent=11 // pred_fallthru
          _
        // Predicated region
        $region45: #{vqvae_forward.5} parent=11 // pred_check
          %p343 = pneg %p236
        $region46: #{vqvae_forward.5} parent=11 // pred_check_branch
          %345 = sbr.rel (%p343) target = $region48
        $region47: #{vqvae_forward.5} parent=11 // pred_region
          _
        $region48: #{vqvae_forward.5} parent=11 // pred_fallthru
          _
        // Predicated region
        $region49: #{vqvae_forward.5} parent=11 // pred_check
          %p346 = pneg %p257
        $region50: #{vqvae_forward.5} parent=11 // pred_check_branch
          %348 = sbr.rel (%p346) target = $region52
        $region51: #{vqvae_forward.5} parent=11 // pred_region
          _
        $region52: #{vqvae_forward.5} parent=11 // pred_fallthru
          _
        // Predicated region
        $region53: #{vqvae_forward.5} parent=11 // pred_check
          %p349 = pneg %p278
        $region54: #{vqvae_forward.5} parent=11 // pred_check_branch
          %351 = sbr.rel (%p349) target = $region56
        $region55: #{vqvae_forward.5} parent=11 // pred_region
          _
        $region56: #{vqvae_forward.5} parent=11 // pred_fallthru
          _
      $region12: #{vqvae_forward.5} parent=5 // pred_fallthru
        _
      %p352 = scmp.lt.s32.totalorder %s21, 2
      // Predicated region
      $region57: #{vqvae_forward.5} parent=5 // pred_check
        %p353 = pneg %p352
      $region58: #{vqvae_forward.5} parent=5 // pred_check_branch
        %355 = sbr.rel (%p353) target = $region60
      $region59: #{vqvae_forward.5} parent=5 // pred_region
        // Predicated region
        $region61: #{vqvae_forward.5} parent=59 // pred_check
          %p356 = pneg %p41
        $region62: #{vqvae_forward.5} parent=59 // pred_check_branch
          %358 = sbr.rel (%p356) target = $region64
        $region63: #{vqvae_forward.5} parent=59 // pred_region
          %p359 = scmp.lt.s32.totalorder %s21, 1
          %s360 = scalar_select %p359, %s21, 1
          %s361 = smul.addr %s360, 4
          %s362 = scalar_lea.vmem %s0, %s361
        $region64: #{vqvae_forward.5} parent=59 // pred_fallthru
          _
      $region60: #{vqvae_forward.5} parent=5 // pred_fallthru
        _
      %p363 = scmp.le.s32.totalorder 1, %s21
      %p364 = scmp.lt.s32.totalorder %s21, 3
      %p365 = pnand %p363, %p364
      %p366 = pneg %p365
      // Predicated region
      $region65: #{vqvae_forward.5} parent=5 // pred_check
        _
      $region66: #{vqvae_forward.5} parent=5 // pred_check_branch
        %368 = sbr.rel (%p365) target = $region68
      $region67: #{vqvae_forward.5} parent=5 // pred_region
        %s369 = ssub.s32 %s21, 1
        %p370 = scmp.lt.s32.totalorder %s26, 1
        %s371 = scalar_select %p370, %s26, 1
        %s372 = smul.addr %s371, 4
        %s373 = scalar_lea.vmem %s0, %s372
        %p374 = pneg %p47
        %p375 = pneg %p44
        %p376 = pneg %p68
        %p377 = pneg %p65
        %p378 = pneg %p89
        %p379 = pneg %p86
        %p380 = pneg %p110
        %p381 = pneg %p107
        %p382 = pneg %p131
        %p383 = pneg %p128
        %p384 = pneg %p152
        %p385 = pneg %p149
        %p386 = pneg %p173
        %p387 = pneg %p170
        %p388 = pneg %p194
        %p389 = pneg %p191
        %p390 = pneg %p215
        %p391 = pneg %p212
        %p392 = pneg %p236
        %p393 = pneg %p233
        %p394 = pneg %p257
        %p395 = pneg %p254
        %p396 = pneg %p278
        %p397 = pneg %p275
        %p398 = pneg %p304
        %p399 = pneg %p301
        %s400 = sand.u32 %s291, 1
        %s401 = scalar_lea.sflag [#allocation3], %s400
        %s402 = sand.u32 %s291, 1
        %s403 = smul.addr %s402, 16
        %s404 = scalar_lea.vmem [#allocation2], %s403
        %p405 = scmp.lt.s32.totalorder %s26, 1
        %s406 = scalar_select %p405, %s26, 1
        %s407 = smul.addr %s406, 4
        %s408 = scalar_lea.vmem %s0, %s407
        %v409 = vld [vmem:[%s408] sm:$0xf]
        %v410 = vld [vmem:[%s3] sm:$0x1]
        %v411 = vld [vmem:[%s1] sm:$0xf]
        %vm412 = vcmask 31744
        %v414 = vsel %vm412, %v411, 0
        %vm416 = vcmask 1043456
        %v418 = vsel %vm416, %v409, 0
        %420 = vmatprep.subr.mxu0 0.0
        %421 = vmatpush1.msra.mxu0 %v418
        %422 = vmatprep.subr.mxu0 0.0
        %423 = vmatpush1.msra.mxu0 0.0
        %424 = vmatprep.subr.mxu0 0.0
        %425 = vmatpush1.msra.mxu0 0.0
        %426 = vmatprep.subr.mxu0 0.0
        %427 = vmatpush1.msra.mxu0 0.0
        %428 = vmatprep.subr.mxu0 0.0
        %429 = vmatpush1.msra.mxu0 0.0
        %430 = vmatprep.subr.mxu0 0.0
        %431 = vmatpush1.msra.mxu0 0.0
        %432 = vmatprep.subr.mxu0 0.0
        %433 = vmatpush1.msra.mxu0 0.0
        %434 = vmatprep.subr.mxu0 0.0
        %435 = vmatpush1.msra.mxu0 0.0
        %436 = vmatprep.subr.mxu0 0.0
        %437 = vmatpush1.msra.mxu0 0.0
        %438 = vmatprep.subr.mxu0 0.0
        %439 = vmatpush1.msra.mxu0 0.0
        %440 = vmatprep.subr.mxu0 0.0
        %441 = vmatpush1.msra.mxu0 0.0
        %442 = vmatprep.subr.mxu0 0.0
        %443 = vmatpush1.msra.mxu0 0.0
        %444 = vmatprep.subr.mxu0 0.0
        %445 = vmatpush1.msra.mxu0 0.0
        %446 = vmatprep.subr.mxu0 0.0
        %447 = vmatpush1.msra.mxu0 0.0
        %448 = vmatprep.subr.mxu0 0.0
        %449 = vmatpush1.msra.mxu0 0.0
        %450 = vmatprep.subr.mxu0 0.0
        %451 = vmatpush1.msra.mxu0 0.0
        %452 = vmatprep.subr.mxu0 0.0
        %453 = vmatpush1.msra.mxu0 0.0
        %454 = vmatprep.subr.mxu0 0.0
        %455 = vmatpush1.msra.mxu0 0.0
        %456 = vmatprep.subr.mxu0 0.0
        %457 = vmatpush1.msra.mxu0 0.0
        %458 = vmatprep.subr.mxu0 0.0
        %459 = vmatpush1.msra.mxu0 0.0
        %460 = vmatprep.subr.mxu0 0.0
        %461 = vmatpush1.msra.mxu0 0.0
        %462 = vmatprep.subr.mxu0 0.0
        %463 = vmatpush1.msra.mxu0 0.0
        %464 = vmatprep.subr.mxu0 0.0
        %465 = vmatpush1.msra.mxu0 0.0
        %466 = vmatprep.subr.mxu0 0.0
        %467 = vmatpush1.msra.mxu0 0.0
        %468 = vmatprep.subr.mxu0 0.0
        %469 = vmatpush1.msra.mxu0 0.0
        %470 = vmatprep.subr.mxu0 0.0
        %471 = vmatpush1.msra.mxu0 0.0
        %472 = vmatprep.subr.mxu0 0.0
        %473 = vmatpush1.msra.mxu0 0.0
        %474 = vmatprep.subr.mxu0 0.0
        %475 = vmatpush1.msra.mxu0 0.0
        %476 = vmatprep.subr.mxu0 0.0
        %477 = vmatpush1.msra.mxu0 0.0
        %478 = vmatprep.subr.mxu0 0.0
        %479 = vmatpush1.msra.mxu0 0.0
        %480 = vmatprep.subr.mxu0 0.0
        %481 = vmatpush1.msra.mxu0 0.0
        %482 = vmatprep.subr.mxu0 0.0
        %483 = vmatpush1.msra.mxu0 0.0
        %484 = vmatprep.mubr.f32.mxu0 0.0
        %485 = vmatmul.mubr.f32.gmra.mrb[0].mxu0 %v414
        %v486 = vpop.f32.mrb[0].mxu0
        %v487 = vadd.f32 0.0, %v486
        %v488 = vpop.f32.mrb[0].mxu0
        %489 = vdwg.mxu0
        %v490 = vld [vmem:[%s2] sm:$0xff]
        %v491 = vld [vmem:[%s2 + $0x8] sm:$0xff]
        %v492 = vld [vmem:[%s2 + $0x10] sm:$0xff]
        %v493 = vld [vmem:[%s2 + $0x18] sm:$0xff]
        %v494 = vld [vmem:[%s2 + $0x20] sm:$0xff]
        %v495 = vld [vmem:[%s2 + $0x28] sm:$0xff]
        %v496 = vld [vmem:[%s2 + $0x30] sm:$0xff]
        %v497 = vld [vmem:[%s2 + $0x38] sm:$0xff]
        %s498 = scalar_lea.vmem %s1, 4
        %v499 = vld [vmem:[%s498] sm:$0xf]
        %v501 = vsel %vm412, %v499, 0
        %503 = vmatprep.subr.mxu0 0.0
        %504 = vmatpush1.msra.mxu0 %v418
        %505 = vmatprep.subr.mxu0 0.0
        %506 = vmatpush1.msra.mxu0 0.0
        %507 = vmatprep.subr.mxu0 0.0
        %508 = vmatpush1.msra.mxu0 0.0
        %509 = vmatprep.subr.mxu0 0.0
        %510 = vmatpush1.msra.mxu0 0.0
        %511 = vmatprep.subr.mxu0 0.0
        %512 = vmatpush1.msra.mxu0 0.0
        %513 = vmatprep.subr.mxu0 0.0
        %514 = vmatpush1.msra.mxu0 0.0
        %515 = vmatprep.subr.mxu0 0.0
        %516 = vmatpush1.msra.mxu0 0.0
        %517 = vmatprep.subr.mxu0 0.0
        %518 = vmatpush1.msra.mxu0 0.0
        %519 = vmatprep.subr.mxu0 0.0
        %520 = vmatpush1.msra.mxu0 0.0
        %521 = vmatprep.subr.mxu0 0.0
        %522 = vmatpush1.msra.mxu0 0.0
        %523 = vmatprep.subr.mxu0 0.0
        %524 = vmatpush1.msra.mxu0 0.0
        %525 = vmatprep.subr.mxu0 0.0
        %526 = vmatpush1.msra.mxu0 0.0
        %527 = vmatprep.subr.mxu0 0.0
        %528 = vmatpush1.msra.mxu0 0.0
        %529 = vmatprep.subr.mxu0 0.0
        %530 = vmatpush1.msra.mxu0 0.0
        %531 = vmatprep.subr.mxu0 0.0
        %532 = vmatpush1.msra.mxu0 0.0
        %533 = vmatprep.subr.mxu0 0.0
        %534 = vmatpush1.msra.mxu0 0.0
        %535 = vmatprep.subr.mxu0 0.0
        %536 = vmatpush1.msra.mxu0 0.0
        %537 = vmatprep.subr.mxu0 0.0
        %538 = vmatpush1.msra.mxu0 0.0
        %539 = vmatprep.subr.mxu0 0.0
        %540 = vmatpush1.msra.mxu0 0.0
        %541 = vmatprep.subr.mxu0 0.0
        %542 = vmatpush1.msra.mxu0 0.0
        %543 = vmatprep.subr.mxu0 0.0
        %544 = vmatpush1.msra.mxu0 0.0
        %545 = vmatprep.subr.mxu0 0.0
        %546 = vmatpush1.msra.mxu0 0.0
        %547 = vmatprep.subr.mxu0 0.0
        %548 = vmatpush1.msra.mxu0 0.0
        %549 = vmatprep.subr.mxu0 0.0
        %550 = vmatpush1.msra.mxu0 0.0
        %551 = vmatprep.subr.mxu0 0.0
        %552 = vmatpush1.msra.mxu0 0.0
        %553 = vmatprep.subr.mxu0 0.0
        %554 = vmatpush1.msra.mxu0 0.0
        %555 = vmatprep.subr.mxu0 0.0
        %556 = vmatpush1.msra.mxu0 0.0
        %557 = vmatprep.subr.mxu0 0.0
        %558 = vmatpush1.msra.mxu0 0.0
        %559 = vmatprep.subr.mxu0 0.0
        %560 = vmatpush1.msra.mxu0 0.0
        %561 = vmatprep.subr.mxu0 0.0
        %562 = vmatpush1.msra.mxu0 0.0
        %563 = vmatprep.subr.mxu0 0.0
        %564 = vmatpush1.msra.mxu0 0.0
        %565 = vmatprep.subr.mxu0 0.0
        %566 = vmatpush1.msra.mxu0 0.0
        %567 = vmatprep.mubr.f32.mxu0 0.0
        %568 = vmatmul.mubr.f32.gmra.mrb[0].mxu0 %v501
        %v569 = vpop.f32.mrb[0].mxu0
        %v570 = vadd.f32 0.0, %v569
        %v571 = vpop.f32.mrb[0].mxu0
        %572 = vdwg.mxu0
        %s573 = scalar_lea.vmem %s2, 64
        %v574 = vld [vmem:[%s573] sm:$0xff]
        %v575 = vld [vmem:[%s573 + $0x8] sm:$0xff]
        %v576 = vld [vmem:[%s573 + $0x10] sm:$0xff]
        %v577 = vld [vmem:[%s573 + $0x18] sm:$0xff]
        %v578 = vld [vmem:[%s573 + $0x20] sm:$0xff]
        %v579 = vld [vmem:[%s573 + $0x28] sm:$0xff]
        %v580 = vld [vmem:[%s573 + $0x30] sm:$0xff]
        %v581 = vld [vmem:[%s573 + $0x38] sm:$0xff]
        %vm582 = vcmask 523264
        %v584 = vsel %vm582, %v570, 0
        %586 = vmatprep.subr.mxu0 0.0
        %587 = vmatpush1.msra.mxu0 %v574
        %588 = vmatprep.subr.mxu0 0.0
        %589 = vmatpush1.msra.mxu0 %v575
        %590 = vmatprep.subr.mxu0 0.0
        %591 = vmatpush1.msra.mxu0 %v576
        %592 = vmatprep.subr.mxu0 0.0
        %593 = vmatpush1.msra.mxu0 %v577
        %594 = vmatprep.subr.mxu0 0.0
        %595 = vmatpush1.msra.mxu0 %v578
        %596 = vmatprep.subr.mxu0 0.0
        %597 = vmatpush1.msra.mxu0 %v579
        %598 = vmatprep.subr.mxu0 0.0
        %599 = vmatpush1.msra.mxu0 %v580
        %600 = vmatprep.subr.mxu0 0.0
        %601 = vmatpush1.msra.mxu0 %v581
        %602 = vmatprep.subr.mxu0 0.0
        %603 = vmatpush1.msra.mxu0 0.0
        %604 = vmatprep.subr.mxu0 0.0
        %605 = vmatpush1.msra.mxu0 0.0
        %606 = vmatprep.subr.mxu0 0.0
        %607 = vmatpush1.msra.mxu0 0.0
        %608 = vmatprep.subr.mxu0 0.0
        %609 = vmatpush1.msra.mxu0 0.0
        %610 = vmatprep.subr.mxu0 0.0
        %611 = vmatpush1.msra.mxu0 0.0
        %612 = vmatprep.subr.mxu0 0.0
        %613 = vmatpush1.msra.mxu0 0.0
        %614 = vmatprep.subr.mxu0 0.0
        %615 = vmatpush1.msra.mxu0 0.0
        %616 = vmatprep.subr.mxu0 0.0
        %617 = vmatpush1.msra.mxu0 0.0
        %618 = vmatprep.subr.mxu0 0.0
        %619 = vmatpush1.msra.mxu0 0.0
        %620 = vmatprep.subr.mxu0 0.0
        %621 = vmatpush1.msra.mxu0 0.0
        %622 = vmatprep.subr.mxu0 0.0
        %623 = vmatpush1.msra.mxu0 0.0
        %624 = vmatprep.subr.mxu0 0.0
        %625 = vmatpush1.msra.mxu0 0.0
        %626 = vmatprep.subr.mxu0 0.0
        %627 = vmatpush1.msra.mxu0 0.0
        %628 = vmatprep.subr.mxu0 0.0
        %629 = vmatpush1.msra.mxu0 0.0
        %630 = vmatprep.subr.mxu0 0.0
        %631 = vmatpush1.msra.mxu0 0.0
        %632 = vmatprep.subr.mxu0 0.0
        %633 = vmatpush1.msra.mxu0 0.0
        %634 = vmatprep.subr.mxu0 0.0
        %635 = vmatpush1.msra.mxu0 0.0
        %636 = vmatprep.subr.mxu0 0.0
        %637 = vmatpush1.msra.mxu0 0.0
        %638 = vmatprep.subr.mxu0 0.0
        %639 = vmatpush1.msra.mxu0 0.0
        %640 = vmatprep.subr.mxu0 0.0
        %641 = vmatpush1.msra.mxu0 0.0
        %642 = vmatprep.subr.mxu0 0.0
        %643 = vmatpush1.msra.mxu0 0.0
        %644 = vmatprep.subr.mxu0 0.0
        %645 = vmatpush1.msra.mxu0 0.0
        %646 = vmatprep.subr.mxu0 0.0
        %647 = vmatpush1.msra.mxu0 0.0
        %648 = vmatprep.subr.mxu0 0.0
        %649 = vmatpush1.msra.mxu0 0.0
        %650 = vmatprep.mubr.f32.mxu0 0.0
        %651 = vmatmul.mubr.f32.gmra.mrb[0].mxu0 %v584
        %v652 = vpop.f32.mrb[0].mxu0
        %v653 = vadd.f32 0.0, %v652
        %v654 = vpop.f32.mrb[0].mxu0
        %655 = vdwg.mxu0
        %v657 = vsel %vm582, %v487, 0
        %659 = vmatprep.subr.mxu0 0.0
        %660 = vmatpush1.msra.mxu0 %v490
        %661 = vmatprep.subr.mxu0 0.0
        %662 = vmatpush1.msra.mxu0 %v491
        %663 = vmatprep.subr.mxu0 0.0
        %664 = vmatpush1.msra.mxu0 %v492
        %665 = vmatprep.subr.mxu0 0.0
        %666 = vmatpush1.msra.mxu0 %v493
        %667 = vmatprep.subr.mxu0 0.0
        %668 = vmatpush1.msra.mxu0 %v494
        %669 = vmatprep.subr.mxu0 0.0
        %670 = vmatpush1.msra.mxu0 %v495
        %671 = vmatprep.subr.mxu0 0.0
        %672 = vmatpush1.msra.mxu0 %v496
        %673 = vmatprep.subr.mxu0 0.0
        %674 = vmatpush1.msra.mxu0 %v497
        %675 = vmatprep.subr.mxu0 0.0
        %676 = vmatpush1.msra.mxu0 0.0
        %677 = vmatprep.subr.mxu0 0.0
        %678 = vmatpush1.msra.mxu0 0.0
        %679 = vmatprep.subr.mxu0 0.0
        %680 = vmatpush1.msra.mxu0 0.0
        %681 = vmatprep.subr.mxu0 0.0
        %682 = vmatpush1.msra.mxu0 0.0
        %683 = vmatprep.subr.mxu0 0.0
        %684 = vmatpush1.msra.mxu0 0.0
        %685 = vmatprep.subr.mxu0 0.0
        %686 = vmatpush1.msra.mxu0 0.0
        %687 = vmatprep.subr.mxu0 0.0
        %688 = vmatpush1.msra.mxu0 0.0
        %689 = vmatprep.subr.mxu0 0.0
        %690 = vmatpush1.msra.mxu0 0.0
        %691 = vmatprep.subr.mxu0 0.0
        %692 = vmatpush1.msra.mxu0 0.0
        %693 = vmatprep.subr.mxu0 0.0
        %694 = vmatpush1.msra.mxu0 0.0
        %695 = vmatprep.subr.mxu0 0.0
        %696 = vmatpush1.msra.mxu0 0.0
        %697 = vmatprep.subr.mxu0 0.0
        %698 = vmatpush1.msra.mxu0 0.0
        %699 = vmatprep.subr.mxu0 0.0
        %700 = vmatpush1.msra.mxu0 0.0
        %701 = vmatprep.subr.mxu0 0.0
        %702 = vmatpush1.msra.mxu0 0.0
        %703 = vmatprep.subr.mxu0 0.0
        %704 = vmatpush1.msra.mxu0 0.0
        %705 = vmatprep.subr.mxu0 0.0
        %706 = vmatpush1.msra.mxu0 0.0
        %707 = vmatprep.subr.mxu0 0.0
        %708 = vmatpush1.msra.mxu0 0.0
        %709 = vmatprep.subr.mxu0 0.0
        %710 = vmatpush1.msra.mxu0 0.0
        %711 = vmatprep.subr.mxu0 0.0
        %712 = vmatpush1.msra.mxu0 0.0
        %713 = vmatprep.subr.mxu0 0.0
        %714 = vmatpush1.msra.mxu0 0.0
        %715 = vmatprep.subr.mxu0 0.0
        %716 = vmatpush1.msra.mxu0 0.0
        %717 = vmatprep.subr.mxu0 0.0
        %718 = vmatpush1.msra.mxu0 0.0
        %719 = vmatprep.subr.mxu0 0.0
        %720 = vmatpush1.msra.mxu0 0.0
        %721 = vmatprep.subr.mxu0 0.0
        %722 = vmatpush1.msra.mxu0 0.0
        %723 = vmatprep.mubr.f32.mxu0 0.0
        %724 = vmatmul.mubr.f32.gmra.mrb[0].mxu0 %v657
        %v725 = vpop.f32.mrb[0].mxu0
        %v726 = vadd.f32 %v653, %v725
        %v727 = vpop.f32.mrb[0].mxu0
        %728 = vdwg.mxu0
        %s729 = scalar_lea.vmem %s1, 8
        %v730 = vld [vmem:[%s729] sm:$0xf]
        %v732 = vsel %vm412, %v730, 0
        %734 = vmatprep.subr.mxu0 0.0
        %735 = vmatpush1.msra.mxu0 %v418
        %736 = vmatprep.subr.mxu0 0.0
        %737 = vmatpush1.msra.mxu0 0.0
        %738 = vmatprep.subr.mxu0 0.0
        %739 = vmatpush1.msra.mxu0 0.0
        %740 = vmatprep.subr.mxu0 0.0
        %741 = vmatpush1.msra.mxu0 0.0
        %742 = vmatprep.subr.mxu0 0.0
        %743 = vmatpush1.msra.mxu0 0.0
        %744 = vmatprep.subr.mxu0 0.0
        %745 = vmatpush1.msra.mxu0 0.0
        %746 = vmatprep.subr.mxu0 0.0
        %747 = vmatpush1.msra.mxu0 0.0
        %748 = vmatprep.subr.mxu0 0.0
        %749 = vmatpush1.msra.mxu0 0.0
        %750 = vmatprep.subr.mxu0 0.0
        %751 = vmatpush1.msra.mxu0 0.0
        %752 = vmatprep.subr.mxu0 0.0
        %753 = vmatpush1.msra.mxu0 0.0
        %754 = vmatprep.subr.mxu0 0.0
        %755 = vmatpush1.msra.mxu0 0.0
        %756 = vmatprep.subr.mxu0 0.0
        %757 = vmatpush1.msra.mxu0 0.0
        %758 = vmatprep.subr.mxu0 0.0
        %759 = vmatpush1.msra.mxu0 0.0
        %760 = vmatprep.subr.mxu0 0.0
        %761 = vmatpush1.msra.mxu0 0.0
        %762 = vmatprep.subr.mxu0 0.0
        %763 = vmatpush1.msra.mxu0 0.0
        %764 = vmatprep.subr.mxu0 0.0
        %765 = vmatpush1.msra.mxu0 0.0
        %766 = vmatprep.subr.mxu0 0.0
        %767 = vmatpush1.msra.mxu0 0.0
        %768 = vmatprep.subr.mxu0 0.0
        %769 = vmatpush1.msra.mxu0 0.0
        %770 = vmatprep.subr.mxu0 0.0
        %771 = vmatpush1.msra.mxu0 0.0
        %772 = vmatprep.subr.mxu0 0.0
        %773 = vmatpush1.msra.mxu0 0.0
        %774 = vmatprep.subr.mxu0 0.0
        %775 = vmatpush1.msra.mxu0 0.0
        %776 = vmatprep.subr.mxu0 0.0
        %777 = vmatpush1.msra.mxu0 0.0
        %778 = vmatprep.subr.mxu0 0.0
        %779 = vmatpush1.msra.mxu0 0.0
        %780 = vmatprep.subr.mxu0 0.0
        %781 = vmatpush1.msra.mxu0 0.0
        %782 = vmatprep.subr.mxu0 0.0
        %783 = vmatpush1.msra.mxu0 0.0
        %784 = vmatprep.subr.mxu0 0.0
        %785 = vmatpush1.msra.mxu0 0.0
        %786 = vmatprep.subr.mxu0 0.0
        %787 = vmatpush1.msra.mxu0 0.0
        %788 = vmatprep.subr.mxu0 0.0
        %789 = vmatpush1.msra.mxu0 0.0
        %790 = vmatprep.subr.mxu0 0.0
        %791 = vmatpush1.msra.mxu0 0.0
        %792 = vmatprep.subr.mxu0 0.0
        %793 = vmatpush1.msra.mxu0 0.0
        %794 = vmatprep.subr.mxu0 0.0
        %795 = vmatpush1.msra.mxu0 0.0
        %796 = vmatprep.subr.mxu0 0.0
        %797 = vmatpush1.msra.mxu0 0.0
        %798 = vmatprep.mubr.f32.mxu0 0.0
        %799 = vmatmul.mubr.f32.gmra.mrb[0].mxu0 %v732
        %v800 = vpop.f32.mrb[0].mxu0
        %v801 = vadd.f32 0.0, %v800
        %v802 = vpop.f32.mrb[0].mxu0
        %803 = vdwg.mxu0
        %s804 = scalar_lea.vmem %s2, 128
        %v805 = vld [vmem:[%s804] sm:$0xff]
        %v806 = vld [vmem:[%s804 + $0x8] sm:$0xff]
        %v807 = vld [vmem:[%s804 + $0x10] sm:$0xff]
        %v808 = vld [vmem:[%s804 + $0x18] sm:$0xff]
        %v809 = vld [vmem:[%s804 + $0x20] sm:$0xff]
        %v810 = vld [vmem:[%s804 + $0x28] sm:$0xff]
        %v811 = vld [vmem:[%s804 + $0x30] sm:$0xff]
        %v812 = vld [vmem:[%s804 + $0x38] sm:$0xff]
        %v814 = vsel %vm582, %v801, 0
        %816 = vmatprep.subr.mxu0 0.0
        %817 = vmatpush1.msra.mxu0 %v805
        %818 = vmatprep.subr.mxu0 0.0
        %819 = vmatpush1.msra.mxu0 %v806
        %820 = vmatprep.subr.mxu0 0.0
        %821 = vmatpush1.msra.mxu0 %v807
        %822 = vmatprep.subr.mxu0 0.0
        %823 = vmatpush1.msra.mxu0 %v808
        %824 = vmatprep.subr.mxu0 0.0
        %825 = vmatpush1.msra.mxu0 %v809
        %826 = vmatprep.subr.mxu0 0.0
        %827 = vmatpush1.msra.mxu0 %v810
        %828 = vmatprep.subr.mxu0 0.0
        %829 = vmatpush1.msra.mxu0 %v811
        %830 = vmatprep.subr.mxu0 0.0
        %831 = vmatpush1.msra.mxu0 %v812
        %832 = vmatprep.subr.mxu0 0.0
        %833 = vmatpush1.msra.mxu0 0.0
        %834 = vmatprep.subr.mxu0 0.0
        %835 = vmatpush1.msra.mxu0 0.0
        %836 = vmatprep.subr.mxu0 0.0
        %837 = vmatpush1.msra.mxu0 0.0
        %838 = vmatprep.subr.mxu0 0.0
        %839 = vmatpush1.msra.mxu0 0.0
        %840 = vmatprep.subr.mxu0 0.0
        %841 = vmatpush1.msra.mxu0 0.0
        %842 = vmatprep.subr.mxu0 0.0
        %843 = vmatpush1.msra.mxu0 0.0
        %844 = vmatprep.subr.mxu0 0.0
        %845 = vmatpush1.msra.mxu0 0.0
        %846 = vmatprep.subr.mxu0 0.0
        %847 = vmatpush1.msra.mxu0 0.0
        %848 = vmatprep.subr.mxu0 0.0
        %849 = vmatpush1.msra.mxu0 0.0
        %850 = vmatprep.subr.mxu0 0.0
        %851 = vmatpush1.msra.mxu0 0.0
        %852 = vmatprep.subr.mxu0 0.0
        %853 = vmatpush1.msra.mxu0 0.0
        %854 = vmatprep.subr.mxu0 0.0
        %855 = vmatpush1.msra.mxu0 0.0
        %856 = vmatprep.subr.mxu0 0.0
        %857 = vmatpush1.msra.mxu0 0.0
        %858 = vmatprep.subr.mxu0 0.0
        %859 = vmatpush1.msra.mxu0 0.0
        %860 = vmatprep.subr.mxu0 0.0
        %861 = vmatpush1.msra.mxu0 0.0
        %862 = vmatprep.subr.mxu0 0.0
        %863 = vmatpush1.msra.mxu0 0.0
        %864 = vmatprep.subr.mxu0 0.0
        %865 = vmatpush1.msra.mxu0 0.0
        %866 = vmatprep.subr.mxu0 0.0
        %867 = vmatpush1.msra.mxu0 0.0
        %868 = vmatprep.subr.mxu0 0.0
        %869 = vmatpush1.msra.mxu0 0.0
        %870 = vmatprep.subr.mxu0 0.0
        %871 = vmatpush1.msra.mxu0 0.0
        %872 = vmatprep.subr.mxu0 0.0
        %873 = vmatpush1.msra.mxu0 0.0
        %874 = vmatprep.subr.mxu0 0.0
        %875 = vmatpush1.msra.mxu0 0.0
        %876 = vmatprep.subr.mxu0 0.0
        %877 = vmatpush1.msra.mxu0 0.0
        %878 = vmatprep.subr.mxu0 0.0
        %879 = vmatpush1.msra.mxu0 0.0
        %880 = vmatprep.mubr.f32.mxu0 0.0
        %881 = vmatmul.mubr.f32.gmra.mrb[0].mxu0 %v814
        %v882 = vpop.f32.mrb[0].mxu0
        %v883 = vadd.f32 0.0, %v882
        %v884 = vpop.f32.mrb[0].mxu0
        %885 = vdwg.mxu0
        %v886 = vadd.f32 %v726, %v883
        %v888 = vlaneseq
        %v889 = vshrl.u32 %v888, 7
        %v890 = vsub.s32 0, %v889
        %v891 = vrot.slane %v410, %v890
        %v893 = vadd.f32 %v886, %v891
        %v894 = vmax.f32 %v893, 0.0
        %v896 = vsel %vm416, %v894, 0
        %898 = vmatprep.subr.mxu0 0.0
        %899 = vmatpush1.msra.mxu0 %v896
        %900 = vmatprep.subr.mxu0 0.0
        %901 = vmatpush1.msra.mxu0 0.0
        %902 = vmatprep.subr.mxu0 0.0
        %903 = vmatpush1.msra.mxu0 0.0
        %904 = vmatprep.subr.mxu0 0.0
        %905 = vmatpush1.msra.mxu0 0.0
        %906 = vmatprep.subr.mxu0 0.0
        %907 = vmatpush1.msra.mxu0 0.0
        %908 = vmatprep.subr.mxu0 0.0
        %909 = vmatpush1.msra.mxu0 0.0
        %910 = vmatprep.subr.mxu0 0.0
        %911 = vmatpush1.msra.mxu0 0.0
        %912 = vmatprep.subr.mxu0 0.0
        %913 = vmatpush1.msra.mxu0 0.0
        %914 = vmatprep.subr.mxu0 0.0
        %915 = vmatpush1.msra.mxu0 0.0
        %916 = vmatprep.subr.mxu0 0.0
        %917 = vmatpush1.msra.mxu0 0.0
        %918 = vmatprep.subr.mxu0 0.0
        %919 = vmatpush1.msra.mxu0 0.0
        %920 = vmatprep.subr.mxu0 0.0
        %921 = vmatpush1.msra.mxu0 0.0
        %922 = vmatprep.subr.mxu0 0.0
        %923 = vmatpush1.msra.mxu0 0.0
        %924 = vmatprep.subr.mxu0 0.0
        %925 = vmatpush1.msra.mxu0 0.0
        %926 = vmatprep.subr.mxu0 0.0
        %927 = vmatpush1.msra.mxu0 0.0
        %928 = vmatprep.subr.mxu0 0.0
        %929 = vmatpush1.msra.mxu0 0.0
        %930 = vmatprep.subr.mxu0 0.0
        %931 = vmatpush1.msra.mxu0 0.0
        %932 = vmatprep.subr.mxu0 0.0
        %933 = vmatpush1.msra.mxu0 0.0
        %934 = vmatprep.subr.mxu0 0.0
        %935 = vmatpush1.msra.mxu0 0.0
        %936 = vmatprep.subr.mxu0 0.0
        %937 = vmatpush1.msra.mxu0 0.0
        %938 = vmatprep.subr.mxu0 0.0
        %939 = vmatpush1.msra.mxu0 0.0
        %940 = vmatprep.subr.mxu0 0.0
        %941 = vmatpush1.msra.mxu0 0.0
        %942 = vmatprep.subr.mxu0 0.0
        %943 = vmatpush1.msra.mxu0 0.0
        %944 = vmatprep.subr.mxu0 0.0
        %945 = vmatpush1.msra.mxu0 0.0
        %946 = vmatprep.subr.mxu0 0.0
        %947 = vmatpush1.msra.mxu0 0.0
        %948 = vmatprep.subr.mxu0 0.0
        %949 = vmatpush1.msra.mxu0 0.0
        %950 = vmatprep.subr.mxu0 0.0
        %951 = vmatpush1.msra.mxu0 0.0
        %952 = vmatprep.subr.mxu0 0.0
        %953 = vmatpush1.msra.mxu0 0.0
        %954 = vmatprep.subr.mxu0 0.0
        %955 = vmatpush1.msra.mxu0 0.0
        %956 = vmatprep.subr.mxu0 0.0
        %957 = vmatpush1.msra.mxu0 0.0
        %958 = vmatprep.subr.mxu0 0.0
        %959 = vmatpush1.msra.mxu0 0.0
        %960 = vmatprep.subr.mxu0 0.0
        %961 = vmatpush1.msra.mxu0 0.0
        %962 = vmatprep.mubr.f32.mxu0 0.0
        %963 = vmatmul.mubr.f32.gmra.mrb[0].mxu0 %v414
        %v964 = vpop.f32.mrb[0].mxu0
        %v965 = vadd.f32 0.0, %v964
        %v966 = vpop.f32.mrb[0].mxu0
        %967 = vdwg.mxu0
        %v968 = vld [vmem:[%s4] sm:$0xff]
        %v969 = vld [vmem:[%s4 + $0x8] sm:$0xff]
        %v970 = vld [vmem:[%s4 + $0x10] sm:$0xff]
        %v971 = vld [vmem:[%s4 + $0x18] sm:$0xff]
        %v972 = vld [vmem:[%s4 + $0x20] sm:$0xff]
        %v973 = vld [vmem:[%s4 + $0x28] sm:$0xff]
        %v974 = vld [vmem:[%s4 + $0x30] sm:$0xff]
        %v975 = vld [vmem:[%s4 + $0x38] sm:$0xff]
        %v976 = vld [vmem:[%s4 + $0x40] sm:$0xff]
        %v977 = vld [vmem:[%s4 + $0x48] sm:$0xff]
        %v978 = vld [vmem:[%s4 + $0x50] sm:$0xff]
        %v979 = vld [vmem:[%s4 + $0x58] sm:$0xff]
        %v980 = vld [vmem:[%s4 + $0x60] sm:$0xff]
        %v981 = vld [vmem:[%s4 + $0x68] sm:$0xff]
        %v982 = vld [vmem:[%s4 + $0x70] sm:$0xff]
        %v983 = vld [vmem:[%s4 + $0x78] sm:$0xff]
        %984 = vmatprep.subr.mxu0 0.0
        %985 = vmatpush1.msra.mxu0 %v896
        %986 = vmatprep.subr.mxu0 0.0
        %987 = vmatpush1.msra.mxu0 0.0
        %988 = vmatprep.subr.mxu0 0.0
        %989 = vmatpush1.msra.mxu0 0.0
        %990 = vmatprep.subr.mxu0 0.0
        %991 = vmatpush1.msra.mxu0 0.0
        %992 = vmatprep.subr.mxu0 0.0
        %993 = vmatpush1.msra.mxu0 0.0
        %994 = vmatprep.subr.mxu0 0.0
        %995 = vmatpush1.msra.mxu0 0.0
        %996 = vmatprep.subr.mxu0 0.0
        %997 = vmatpush1.msra.mxu0 0.0
        %998 = vmatprep.subr.mxu0 0.0
        %999 = vmatpush1.msra.mxu0 0.0
        %1000 = vmatprep.subr.mxu0 0.0
        %1001 = vmatpush1.msra.mxu0 0.0
        %1002 = vmatprep.subr.mxu0 0.0
        %1003 = vmatpush1.msra.mxu0 0.0
        %1004 = vmatprep.subr.mxu0 0.0
        %1005 = vmatpush1.msra.mxu0 0.0
        %1006 = vmatprep.subr.mxu0 0.0
        %1007 = vmatpush1.msra.mxu0 0.0
        %1008 = vmatprep.subr.mxu0 0.0
        %1009 = vmatpush1.msra.mxu0 0.0
        %1010 = vmatprep.subr.mxu0 0.0
        %1011 = vmatpush1.msra.mxu0 0.0
        %1012 = vmatprep.subr.mxu0 0.0
        %1013 = vmatpush1.msra.mxu0 0.0
        %1014 = vmatprep.subr.mxu0 0.0
        %1015 = vmatpush1.msra.mxu0 0.0
        %1016 = vmatprep.subr.mxu0 0.0
        %1017 = vmatpush1.msra.mxu0 0.0
        %1018 = vmatprep.subr.mxu0 0.0
        %1019 = vmatpush1.msra.mxu0 0.0
        %1020 = vmatprep.subr.mxu0 0.0
        %1021 = vmatpush1.msra.mxu0 0.0
        %1022 = vmatprep.subr.mxu0 0.0
        %1023 = vmatpush1.msra.mxu0 0.0
        %1024 = vmatprep.subr.mxu0 0.0
        %1025 = vmatpush1.msra.mxu0 0.0
        %1026 = vmatprep.subr.mxu0 0.0
        %1027 = vmatpush1.msra.mxu0 0.0
        %1028 = vmatprep.subr.mxu0 0.0
        %1029 = vmatpush1.msra.mxu0 0.0
        %1030 = vmatprep.subr.mxu0 0.0
        %1031 = vmatpush1.msra.mxu0 0.0
        %1032 = vmatprep.subr.mxu0 0.0
        %1033 = vmatpush1.msra.mxu0 0.0
        %1034 = vmatprep.subr.mxu0 0.0
        %1035 = vmatpush1.msra.mxu0 0.0
        %1036 = vmatprep.subr.mxu0 0.0
        %1037 = vmatpush1.msra.mxu0 0.0
        %1038 = vmatprep.subr.mxu0 0.0
        %1039 = vmatpush1.msra.mxu0 0.0
        %1040 = vmatprep.subr.mxu0 0.0
        %1041 = vmatpush1.msra.mxu0 0.0
        %1042 = vmatprep.subr.mxu0 0.0
        %1043 = vmatpush1.msra.mxu0 0.0
        %1044 = vmatprep.subr.mxu0 0.0
        %1045 = vmatpush1.msra.mxu0 0.0
        %1046 = vmatprep.subr.mxu0 0.0
        %1047 = vmatpush1.msra.mxu0 0.0
        %1048 = vmatprep.mubr.f32.mxu0 0.0
        %1049 = vmatmul.mubr.f32.gmra.mrb[0].mxu0 %v501
        %v1050 = vpop.f32.mrb[0].mxu0
        %v1051 = vadd.f32 0.0, %v1050
        %v1052 = vpop.f32.mrb[0].mxu0
        %1053 = vdwg.mxu0
        %s1054 = scalar_lea.vmem %s4, 128
        %v1055 = vld [vmem:[%s1054] sm:$0xff]
        %v1056 = vld [vmem:[%s1054 + $0x8] sm:$0xff]
        %v1057 = vld [vmem:[%s1054 + $0x10] sm:$0xff]
        %v1058 = vld [vmem:[%s1054 + $0x18] sm:$0xff]
        %v1059 = vld [vmem:[%s1054 + $0x20] sm:$0xff]
        %v1060 = vld [vmem:[%s1054 + $0x28] sm:$0xff]
        %v1061 = vld [vmem:[%s1054 + $0x30] sm:$0xff]
        %v1062 = vld [vmem:[%s1054 + $0x38] sm:$0xff]
        %v1063 = vld [vmem:[%s1054 + $0x40] sm:$0xff]
        %v1064 = vld [vmem:[%s1054 + $0x48] sm:$0xff]
        %v1065 = vld [vmem:[%s1054 + $0x50] sm:$0xff]
        %v1066 = vld [vmem:[%s1054 + $0x58] sm:$0xff]
        %v1067 = vld [vmem:[%s1054 + $0x60] sm:$0xff]
        %v1068 = vld [vmem:[%s1054 + $0x68] sm:$0xff]
        %v1069 = vld [vmem:[%s1054 + $0x70] sm:$0xff]
        %v1070 = vld [vmem:[%s1054 + $0x78] sm:$0xff]
        %1071 = vmatprep.subr.mxu0 0.0
        %1072 = vmatpush1.msra.mxu0 %v1055
        %1073 = vmatprep.subr.mxu0 0.0
        %1074 = vmatpush1.msra.mxu0 %v1056
        %1075 = vmatprep.subr.mxu0 0.0
        %1076 = vmatpush1.msra.mxu0 %v1057
        %1077 = vmatprep.subr.mxu0 0.0
        %1078 = vmatpush1.msra.mxu0 %v1058
        %1079 = vmatprep.subr.mxu0 0.0
        %1080 = vmatpush1.msra.mxu0 %v1059
        %1081 = vmatprep.subr.mxu0 0.0
        %1082 = vmatpush1.msra.mxu0 %v1060
        %1083 = vmatprep.subr.mxu0 0.0
        %1084 = vmatpush1.msra.mxu0 %v1061
        %1085 = vmatprep.subr.mxu0 0.0
        %1086 = vmatpush1.msra.mxu0 %v1062
        %1087 = vmatprep.subr.mxu0 0.0
        %1088 = vmatpush1.msra.mxu0 %v1063
        %1089 = vmatprep.subr.mxu0 0.0
        %1090 = vmatpush1.msra.mxu0 %v1064
        %1091 = vmatprep.subr.mxu0 0.0
        %1092 = vmatpush1.msra.mxu0 %v1065
        %1093 = vmatprep.subr.mxu0 0.0
        %1094 = vmatpush1.msra.mxu0 %v1066
        %1095 = vmatprep.subr.mxu0 0.0
        %1096 = vmatpush1.msra.mxu0 %v1067
        %1097 = vmatprep.subr.mxu0 0.0
        %1098 = vmatpush1.msra.mxu0 %v1068
        %1099 = vmatprep.subr.mxu0 0.0
        %1100 = vmatpush1.msra.mxu0 %v1069
        %1101 = vmatprep.subr.mxu0 0.0
        %1102 = vmatpush1.msra.mxu0 %v1070
        %1103 = vmatprep.subr.mxu0 0.0
        %1104 = vmatpush1.msra.mxu0 0.0
        %1105 = vmatprep.subr.mxu0 0.0
        %1106 = vmatpush1.msra.mxu0 0.0
        %1107 = vmatprep.subr.mxu0 0.0
        %1108 = vmatpush1.msra.mxu0 0.0
        %1109 = vmatprep.subr.mxu0 0.0
        %1110 = vmatpush1.msra.mxu0 0.0
        %1111 = vmatprep.subr.mxu0 0.0
        %1112 = vmatpush1.msra.mxu0 0.0
        %1113 = vmatprep.subr.mxu0 0.0
        %1114 = vmatpush1.msra.mxu0 0.0
        %1115 = vmatprep.subr.mxu0 0.0
        %1116 = vmatpush1.msra.mxu0 0.0
        %1117 = vmatprep.subr.mxu0 0.0
        %1118 = vmatpush1.msra.mxu0 0.0
        %1119 = vmatprep.subr.mxu0 0.0
        %1120 = vmatpush1.msra.mxu0 0.0
        %1121 = vmatprep.subr.mxu0 0.0
        %1122 = vmatpush1.msra.mxu0 0.0
        %1123 = vmatprep.subr.mxu0 0.0
        %1124 = vmatpush1.msra.mxu0 0.0
        %1125 = vmatprep.subr.mxu0 0.0
        %1126 = vmatpush1.msra.mxu0 0.0
        %1127 = vmatprep.subr.mxu0 0.0
        %1128 = vmatpush1.msra.mxu0 0.0
        %1129 = vmatprep.subr.mxu0 0.0
        %1130 = vmatpush1.msra.mxu0 0.0
        %1131 = vmatprep.subr.mxu0 0.0
        %1132 = vmatpush1.msra.mxu0 0.0
        %1133 = vmatprep.subr.mxu0 0.0
        %1134 = vmatpush1.msra.mxu0 0.0
        %1135 = vmatprep.mubr.f32.mxu0 0.0
        %1136 = vmatmul.mubr.f32.gmra.mrb[0].mxu0 %v1051
        %v1137 = vpop.f32.mrb[0].mxu0
        %v1138 = vadd.f32 0.0, %v1137
        %v1139 = vpop.f32.mrb[0].mxu0
        %1140 = vdwg.mxu0
        %1141 = vmatprep.subr.mxu0 0.0
        %1142 = vmatpush1.msra.mxu0 %v968
        %1143 = vmatprep.subr.mxu0 0.0
        %1144 = vmatpush1.msra.mxu0 %v969
        %1145 = vmatprep.subr.mxu0 0.0
        %1146 = vmatpush1.msra.mxu0 %v970
        %1147 = vmatprep.subr.mxu0 0.0
        %1148 = vmatpush1.msra.mxu0 %v971
        %1149 = vmatprep.subr.mxu0 0.0
        %1150 = vmatpush1.msra.mxu0 %v972
        %1151 = vmatprep.subr.mxu0 0.0
        %1152 = vmatpush1.msra.mxu0 %v973
        %1153 = vmatprep.subr.mxu0 0.0
        %1154 = vmatpush1.msra.mxu0 %v974
        %1155 = vmatprep.subr.mxu0 0.0
        %1156 = vmatpush1.msra.mxu0 %v975
        %1157 = vmatprep.subr.mxu0 0.0
        %1158 = vmatpush1.msra.mxu0 %v976
        %1159 = vmatprep.subr.mxu0 0.0
        %1160 = vmatpush1.msra.mxu0 %v977
        %1161 = vmatprep.subr.mxu0 0.0
        %1162 = vmatpush1.msra.mxu0 %v978
        %1163 = vmatprep.subr.mxu0 0.0
        %1164 = vmatpush1.msra.mxu0 %v979
        %1165 = vmatprep.subr.mxu0 0.0
        %1166 = vmatpush1.msra.mxu0 %v980
        %1167 = vmatprep.subr.mxu0 0.0
        %1168 = vmatpush1.msra.mxu0 %v981
        %1169 = vmatprep.subr.mxu0 0.0
        %1170 = vmatpush1.msra.mxu0 %v982
        %1171 = vmatprep.subr.mxu0 0.0
        %1172 = vmatpush1.msra.mxu0 %v983
        %1173 = vmatprep.subr.mxu0 0.0
        %1174 = vmatpush1.msra.mxu0 0.0
        %1175 = vmatprep.subr.mxu0 0.0
        %1176 = vmatpush1.msra.mxu0 0.0
        %1177 = vmatprep.subr.mxu0 0.0
        %1178 = vmatpush1.msra.mxu0 0.0
        %1179 = vmatprep.subr.mxu0 0.0
        %1180 = vmatpush1.msra.mxu0 0.0
        %1181 = vmatprep.subr.mxu0 0.0
        %1182 = vmatpush1.msra.mxu0 0.0
        %1183 = vmatprep.subr.mxu0 0.0
        %1184 = vmatpush1.msra.mxu0 0.0
        %1185 = vmatprep.subr.mxu0 0.0
        %1186 = vmatpush1.msra.mxu0 0.0
        %1187 = vmatprep.subr.mxu0 0.0
        %1188 = vmatpush1.msra.mxu0 0.0
        %1189 = vmatprep.subr.mxu0 0.0
        %1190 = vmatpush1.msra.mxu0 0.0
        %1191 = vmatprep.subr.mxu0 0.0
        %1192 = vmatpush1.msra.mxu0 0.0
        %1193 = vmatprep.subr.mxu0 0.0
        %1194 = vmatpush1.msra.mxu0 0.0
        %1195 = vmatprep.subr.mxu0 0.0
        %1196 = vmatpush1.msra.mxu0 0.0
        %1197 = vmatprep.subr.mxu0 0.0
        %1198 = vmatpush1.msra.mxu0 0.0
        %1199 = vmatprep.subr.mxu0 0.0
        %1200 = vmatpush1.msra.mxu0 0.0
        %1201 = vmatprep.subr.mxu0 0.0
        %1202 = vmatpush1.msra.mxu0 0.0
        %1203 = vmatprep.subr.mxu0 0.0
        %1204 = vmatpush1.msra.mxu0 0.0
        %1205 = vmatprep.mubr.f32.mxu0 0.0
        %1206 = vmatmul.mubr.f32.gmra.mrb[0].mxu0 %v965
        %v1207 = vpop.f32.mrb[0].mxu0
        %v1208 = vadd.f32 %v1138, %v1207
        %v1209 = vpop.f32.mrb[0].mxu0
        %1210 = vdwg.mxu0
        %1211 = vmatprep.subr.mxu0 0.0
        %1212 = vmatpush1.msra.mxu0 %v896
        %1213 = vmatprep.subr.mxu0 0.0
        %1214 = vmatpush1.msra.mxu0 0.0
        %1215 = vmatprep.subr.mxu0 0.0
        %1216 = vmatpush1.msra.mxu0 0.0
        %1217 = vmatprep.subr.mxu0 0.0
        %1218 = vmatpush1.msra.mxu0 0.0
        %1219 = vmatprep.subr.mxu0 0.0
        %1220 = vmatpush1.msra.mxu0 0.0
        %1221 = vmatprep.subr.mxu0 0.0
        %1222 = vmatpush1.msra.mxu0 0.0
        %1223 = vmatprep.subr.mxu0 0.0
        %1224 = vmatpush1.msra.mxu0 0.0
        %1225 = vmatprep.subr.mxu0 0.0
        %1226 = vmatpush1.msra.mxu0 0.0
        %1227 = vmatprep.subr.mxu0 0.0
        %1228 = vmatpush1.msra.mxu0 0.0
        %1229 = vmatprep.subr.mxu0 0.0
        %1230 = vmatpush1.msra.mxu0 0.0
        %1231 = vmatprep.subr.mxu0 0.0
        %1232 = vmatpush1.msra.mxu0 0.0
        %1233 = vmatprep.subr.mxu0 0.0
        %1234 = vmatpush1.msra.mxu0 0.0
        %1235 = vmatprep.subr.mxu0 0.0
        %1236 = vmatpush1.msra.mxu0 0.0
        %1237 = vmatprep.subr.mxu0 0.0
        %1238 = vmatpush1.msra.mxu0 0.0
        %1239 = vmatprep.subr.mxu0 0.0
        %1240 = vmatpush1.msra.mxu0 0.0
        %1241 = vmatprep.subr.mxu0 0.0
        %1242 = vmatpush1.msra.mxu0 0.0
        %1243 = vmatprep.subr.mxu0 0.0
        %1244 = vmatpush1.msra.mxu0 0.0
        %1245 = vmatprep.subr.mxu0 0.0
        %1246 = vmatpush1.msra.mxu0 0.0
        %1247 = vmatprep.subr.mxu0 0.0
        %1248 = vmatpush1.msra.mxu0 0.0
        %1249 = vmatprep.subr.mxu0 0.0
        %1250 = vmatpush1.msra.mxu0 0.0
        %1251 = vmatprep.subr.mxu0 0.0
        %1252 = vmatpush1.msra.mxu0 0.0
        %1253 = vmatprep.subr.mxu0 0.0
        %1254 = vmatpush1.msra.mxu0 0.0
        %1255 = vmatprep.subr.mxu0 0.0
        %1256 = vmatpush1.msra.mxu0 0.0
        %1257 = vmatprep.subr.mxu0 0.0
        %1258 = vmatpush1.msra.mxu0 0.0
        %1259 = vmatprep.subr.mxu0 0.0
        %1260 = vmatpush1.msra.mxu0 0.0
        %1261 = vmatprep.subr.mxu0 0.0
        %1262 = vmatpush1.msra.mxu0 0.0
        %1263 = vmatprep.subr.mxu0 0.0
        %1264 = vmatpush1.msra.mxu0 0.0
        %1265 = vmatprep.subr.mxu0 0.0
        %1266 = vmatpush1.msra.mxu0 0.0
        %1267 = vmatprep.subr.mxu0 0.0
        %1268 = vmatpush1.msra.mxu0 0.0
        %1269 = vmatprep.subr.mxu0 0.0
        %1270 = vmatpush1.msra.mxu0 0.0
        %1271 = vmatprep.subr.mxu0 0.0
        %1272 = vmatpush1.msra.mxu0 0.0
        %1273 = vmatprep.subr.mxu0 0.0
        %1274 = vmatpush1.msra.mxu0 0.0
        %1275 = vmatprep.mubr.f32.mxu0 0.0
        %1276 = vmatmul.mubr.f32.gmra.mrb[0].mxu0 %v732
        %v1277 = vpop.f32.mrb[0].mxu0
        %v1278 = vadd.f32 0.0, %v1277
        %v1279 = vpop.f32.mrb[0].mxu0
        %1280 = vdwg.mxu0
        %s1281 = scalar_lea.vmem %s4, 256
        %v1282 = vld [vmem:[%s1281] sm:$0xff]
        %v1283 = vld [vmem:[%s1281 + $0x8] sm:$0xff]
        %v1284 = vld [vmem:[%s1281 + $0x10] sm:$0xff]
        %v1285 = vld [vmem:[%s1281 + $0x18] sm:$0xff]
        %v1286 = vld [vmem:[%s1281 + $0x20] sm:$0xff]
        %v1287 = vld [vmem:[%s1281 + $0x28] sm:$0xff]
        %v1288 = vld [vmem:[%s1281 + $0x30] sm:$0xff]
        %v1289 = vld [vmem:[%s1281 + $0x38] sm:$0xff]
        %v1290 = vld [vmem:[%s1281 + $0x40] sm:$0xff]
        %v1291 = vld [vmem:[%s1281 + $0x48] sm:$0xff]
        %v1292 = vld [vmem:[%s1281 + $0x50] sm:$0xff]
        %v1293 = vld [vmem:[%s1281 + $0x58] sm:$0xff]
        %v1294 = vld [vmem:[%s1281 + $0x60] sm:$0xff]
        %v1295 = vld [vmem:[%s1281 + $0x68] sm:$0xff]
        %v1296 = vld [vmem:[%s1281 + $0x70] sm:$0xff]
        %v1297 = vld [vmem:[%s1281 + $0x78] sm:$0xff]
        %1298 = vmatprep.subr.mxu0 0.0
        %1299 = vmatpush1.msra.mxu0 %v1282
        %1300 = vmatprep.subr.mxu0 0.0
        %1301 = vmatpush1.msra.mxu0 %v1283
        %1302 = vmatprep.subr.mxu0 0.0
        %1303 = vmatpush1.msra.mxu0 %v1284
        %1304 = vmatprep.subr.mxu0 0.0
        %1305 = vmatpush1.msra.mxu0 %v1285
        %1306 = vmatprep.subr.mxu0 0.0
        %1307 = vmatpush1.msra.mxu0 %v1286
        %1308 = vmatprep.subr.mxu0 0.0
        %1309 = vmatpush1.msra.mxu0 %v1287
        %1310 = vmatprep.subr.mxu0 0.0
        %1311 = vmatpush1.msra.mxu0 %v1288
        %1312 = vmatprep.subr.mxu0 0.0
        %1313 = vmatpush1.msra.mxu0 %v1289
        %1314 = vmatprep.subr.mxu0 0.0
        %1315 = vmatpush1.msra.mxu0 %v1290
        %1316 = vmatprep.subr.mxu0 0.0
        %1317 = vmatpush1.msra.mxu0 %v1291
        %1318 = vmatprep.subr.mxu0 0.0
        %1319 = vmatpush1.msra.mxu0 %v1292
        %1320 = vmatprep.subr.mxu0 0.0
        %1321 = vmatpush1.msra.mxu0 %v1293
        %1322 = vmatprep.subr.mxu0 0.0
        %1323 = vmatpush1.msra.mxu0 %v1294
        %1324 = vmatprep.subr.mxu0 0.0
        %1325 = vmatpush1.msra.mxu0 %v1295
        %1326 = vmatprep.subr.mxu0 0.0
        %1327 = vmatpush1.msra.mxu0 %v1296
        %1328 = vmatprep.subr.mxu0 0.0
        %1329 = vmatpush1.msra.mxu0 %v1297
        %1330 = vmatprep.subr.mxu0 0.0
        %1331 = vmatpush1.msra.mxu0 0.0
        %1332 = vmatprep.subr.mxu0 0.0
        %1333 = vmatpush1.msra.mxu0 0.0
        %1334 = vmatprep.subr.mxu0 0.0
        %1335 = vmatpush1.msra.mxu0 0.0
        %1336 = vmatprep.subr.mxu0 0.0
        %1337 = vmatpush1.msra.mxu0 0.0
        %1338 = vmatprep.subr.mxu0 0.0
        %1339 = vmatpush1.msra.mxu0 0.0
        %1340 = vmatprep.subr.mxu0 0.0
        %1341 = vmatpush1.msra.mxu0 0.0
        %1342 = vmatprep.subr.mxu0 0.0
        %1343 = vmatpush1.msra.mxu0 0.0
        %1344 = vmatprep.subr.mxu0 0.0
        %1345 = vmatpush1.msra.mxu0 0.0
        %1346 = vmatprep.subr.mxu0 0.0
        %1347 = vmatpush1.msra.mxu0 0.0
        %1348 = vmatprep.subr.mxu0 0.0
        %1349 = vmatpush1.msra.mxu0 0.0
        %1350 = vmatprep.subr.mxu0 0.0
        %1351 = vmatpush1.msra.mxu0 0.0
        %1352 = vmatprep.subr.mxu0 0.0
        %1353 = vmatpush1.msra.mxu0 0.0
        %1354 = vmatprep.subr.mxu0 0.0
        %1355 = vmatpush1.msra.mxu0 0.0
        %1356 = vmatprep.subr.mxu0 0.0
        %1357 = vmatpush1.msra.mxu0 0.0
        %1358 = vmatprep.subr.mxu0 0.0
        %1359 = vmatpush1.msra.mxu0 0.0
        %1360 = vmatprep.subr.mxu0 0.0
        %1361 = vmatpush1.msra.mxu0 0.0
        %1362 = vmatprep.mubr.f32.mxu0 0.0
        %1363 = vmatmul.mubr.f32.gmra.mrb[0].mxu0 %v1278
        %v1364 = vpop.f32.mrb[0].mxu0
        %v1365 = vadd.f32 0.0, %v1364
        %v1366 = vpop.f32.mrb[0].mxu0
        %1367 = vdwg.mxu0
        %v1368 = vadd.f32 %v1208, %v1365
        %v1369 = vmax.f32 %v1368, 0.0
        %v1370 = vld [vmem:[%s5] sm:$0xff]
        %v1371 = vld [vmem:[%s5 + $0x8] sm:$0xff]
        %v1372 = vld [vmem:[%s5 + $0x10] sm:$0xff]
        %v1373 = vld [vmem:[%s5 + $0x18] sm:$0xff]
        %v1374 = vld [vmem:[%s5 + $0x20] sm:$0xff]
        %v1375 = vld [vmem:[%s5 + $0x28] sm:$0xff]
        %v1376 = vld [vmem:[%s5 + $0x30] sm:$0xff]
        %v1377 = vld [vmem:[%s5 + $0x38] sm:$0xff]
        %v1379 = vsel %vm582, %v1369, 0
        %1381 = vmatprep.subr.mxu0 0.0
        %1382 = vmatpush1.msra.mxu0 %v1370
        %1383 = vmatprep.subr.mxu0 0.0
        %1384 = vmatpush1.msra.mxu0 %v1371
        %1385 = vmatprep.subr.mxu0 0.0
        %1386 = vmatpush1.msra.mxu0 %v1372
        %1387 = vmatprep.subr.mxu0 0.0
        %1388 = vmatpush1.msra.mxu0 %v1373
        %1389 = vmatprep.subr.mxu0 0.0
        %1390 = vmatpush1.msra.mxu0 %v1374
        %1391 = vmatprep.subr.mxu0 0.0
        %1392 = vmatpush1.msra.mxu0 %v1375
        %1393 = vmatprep.subr.mxu0 0.0
        %1394 = vmatpush1.msra.mxu0 %v1376
        %1395 = vmatprep.subr.mxu0 0.0
        %1396 = vmatpush1.msra.mxu0 %v1377
        %1397 = vmatprep.subr.mxu0 0.0
        %1398 = vmatpush1.msra.mxu0 0.0
        %1399 = vmatprep.subr.mxu0 0.0
        %1400 = vmatpush1.msra.mxu0 0.0
        %1401 = vmatprep.subr.mxu0 0.0
        %1402 = vmatpush1.msra.mxu0 0.0
        %1403 = vmatprep.subr.mxu0 0.0
        %1404 = vmatpush1.msra.mxu0 0.0
        %1405 = vmatprep.subr.mxu0 0.0
        %1406 = vmatpush1.msra.mxu0 0.0
        %1407 = vmatprep.subr.mxu0 0.0
        %1408 = vmatpush1.msra.mxu0 0.0
        %1409 = vmatprep.subr.mxu0 0.0
        %1410 = vmatpush1.msra.mxu0 0.0
        %1411 = vmatprep.subr.mxu0 0.0
        %1412 = vmatpush1.msra.mxu0 0.0
        %1413 = vmatprep.subr.mxu0 0.0
        %1414 = vmatpush1.msra.mxu0 0.0
        %1415 = vmatprep.subr.mxu0 0.0
        %1416 = vmatpush1.msra.mxu0 0.0
        %1417 = vmatprep.subr.mxu0 0.0
        %1418 = vmatpush1.msra.mxu0 0.0
        %1419 = vmatprep.subr.mxu0 0.0
        %1420 = vmatpush1.msra.mxu0 0.0
        %1421 = vmatprep.subr.mxu0 0.0
        %1422 = vmatpush1.msra.mxu0 0.0
        %1423 = vmatprep.subr.mxu0 0.0
        %1424 = vmatpush1.msra.mxu0 0.0
        %1425 = vmatprep.subr.mxu0 0.0
        %1426 = vmatpush1.msra.mxu0 0.0
        %1427 = vmatprep.subr.mxu0 0.0
        %1428 = vmatpush1.msra.mxu0 0.0
        %1429 = vmatprep.subr.mxu0 0.0
        %1430 = vmatpush1.msra.mxu0 0.0
        %1431 = vmatprep.subr.mxu0 0.0
        %1432 = vmatpush1.msra.mxu0 0.0
        %1433 = vmatprep.subr.mxu0 0.0
        %1434 = vmatpush1.msra.mxu0 0.0
        %1435 = vmatprep.subr.mxu0 0.0
        %1436 = vmatpush1.msra.mxu0 0.0
        %1437 = vmatprep.subr.mxu0 0.0
        %1438 = vmatpush1.msra.mxu0 0.0
        %1439 = vmatprep.subr.mxu0 0.0
        %1440 = vmatpush1.msra.mxu0 0.0
        %1441 = vmatprep.subr.mxu0 0.0
        %1442 = vmatpush1.msra.mxu0 0.0
        %1443 = vmatprep.subr.mxu0 0.0
        %1444 = vmatpush1.msra.mxu0 0.0
        %1445 = vmatprep.mubr.f32.mxu0 0.0
        %1446 = vmatmul.mubr.f32.gmra.mrb[0].mxu0 %v1379
        %v1447 = vpop.f32.mrb[0].mxu0
        %v1448 = vadd.f32 0.0, %v1447
        %v1449 = vpop.f32.mrb[0].mxu0
        %1450 = vdwg.mxu0
        %v1451 = vadd.f32 %v893, %v1448
        %v1452 = vmax.f32 %v1451, 0.0
        %v1454 = vsel %vm416, %v1452, 0
        %1456 = vmatprep.subr.mxu0 0.0
        %1457 = vmatpush1.msra.mxu0 %v1454
        %1458 = vmatprep.subr.mxu0 0.0
        %1459 = vmatpush1.msra.mxu0 0.0
        %1460 = vmatprep.subr.mxu0 0.0
        %1461 = vmatpush1.msra.mxu0 0.0
        %1462 = vmatprep.subr.mxu0 0.0
        %1463 = vmatpush1.msra.mxu0 0.0
        %1464 = vmatprep.subr.mxu0 0.0
        %1465 = vmatpush1.msra.mxu0 0.0
        %1466 = vmatprep.subr.mxu0 0.0
        %1467 = vmatpush1.msra.mxu0 0.0
        %1468 = vmatprep.subr.mxu0 0.0
        %1469 = vmatpush1.msra.mxu0 0.0
        %1470 = vmatprep.subr.mxu0 0.0
        %1471 = vmatpush1.msra.mxu0 0.0
        %1472 = vmatprep.subr.mxu0 0.0
        %1473 = vmatpush1.msra.mxu0 0.0
        %1474 = vmatprep.subr.mxu0 0.0
        %1475 = vmatpush1.msra.mxu0 0.0
        %1476 = vmatprep.subr.mxu0 0.0
        %1477 = vmatpush1.msra.mxu0 0.0
        %1478 = vmatprep.subr.mxu0 0.0
        %1479 = vmatpush1.msra.mxu0 0.0
        %1480 = vmatprep.subr.mxu0 0.0
        %1481 = vmatpush1.msra.mxu0 0.0
        %1482 = vmatprep.subr.mxu0 0.0
        %1483 = vmatpush1.msra.mxu0 0.0
        %1484 = vmatprep.subr.mxu0 0.0
        %1485 = vmatpush1.msra.mxu0 0.0
        %1486 = vmatprep.subr.mxu0 0.0
        %1487 = vmatpush1.msra.mxu0 0.0
        %1488 = vmatprep.subr.mxu0 0.0
        %1489 = vmatpush1.msra.mxu0 0.0
        %1490 = vmatprep.subr.mxu0 0.0
        %1491 = vmatpush1.msra.mxu0 0.0
        %1492 = vmatprep.subr.mxu0 0.0
        %1493 = vmatpush1.msra.mxu0 0.0
        %1494 = vmatprep.subr.mxu0 0.0
        %1495 = vmatpush1.msra.mxu0 0.0
        %1496 = vmatprep.subr.mxu0 0.0
        %1497 = vmatpush1.msra.mxu0 0.0
        %1498 = vmatprep.subr.mxu0 0.0
        %1499 = vmatpush1.msra.mxu0 0.0
        %1500 = vmatprep.subr.mxu0 0.0
        %1501 = vmatpush1.msra.mxu0 0.0
        %1502 = vmatprep.subr.mxu0 0.0
        %1503 = vmatpush1.msra.mxu0 0.0
        %1504 = vmatprep.subr.mxu0 0.0
        %1505 = vmatpush1.msra.mxu0 0.0
        %1506 = vmatprep.subr.mxu0 0.0
        %1507 = vmatpush1.msra.mxu0 0.0
        %1508 = vmatprep.subr.mxu0 0.0
        %1509 = vmatpush1.msra.mxu0 0.0
        %1510 = vmatprep.subr.mxu0 0.0
        %1511 = vmatpush1.msra.mxu0 0.0
        %1512 = vmatprep.subr.mxu0 0.0
        %1513 = vmatpush1.msra.mxu0 0.0
        %1514 = vmatprep.subr.mxu0 0.0
        %1515 = vmatpush1.msra.mxu0 0.0
        %1516 = vmatprep.subr.mxu0 0.0
        %1517 = vmatpush1.msra.mxu0 0.0
        %1518 = vmatprep.subr.mxu0 0.0
        %1519 = vmatpush1.msra.mxu0 0.0
        %1520 = vmatprep.mubr.f32.mxu0 0.0
        %1521 = vmatmul.mubr.f32.gmra.mrb[0].mxu0 %v414
        %v1522 = vpop.f32.mrb[0].mxu0
        %v1523 = vadd.f32 0.0, %v1522
        %v1524 = vpop.f32.mrb[0].mxu0
        %1525 = vdwg.mxu0
        %s1526 = scalar_lea.vmem %s4, 384
        %v1527 = vld [vmem:[%s1526] sm:$0xff]
        %v1528 = vld [vmem:[%s1526 + $0x8] sm:$0xff]
        %v1529 = vld [vmem:[%s1526 + $0x10] sm:$0xff]
        %v1530 = vld [vmem:[%s1526 + $0x18] sm:$0xff]
        %v1531 = vld [vmem:[%s1526 + $0x20] sm:$0xff]
        %v1532 = vld [vmem:[%s1526 + $0x28] sm:$0xff]
        %v1533 = vld [vmem:[%s1526 + $0x30] sm:$0xff]
        %v1534 = vld [vmem:[%s1526 + $0x38] sm:$0xff]
        %v1535 = vld [vmem:[%s1526 + $0x40] sm:$0xff]
        %v1536 = vld [vmem:[%s1526 + $0x48] sm:$0xff]
        %v1537 = vld [vmem:[%s1526 + $0x50] sm:$0xff]
        %v1538 = vld [vmem:[%s1526 + $0x58] sm:$0xff]
        %v1539 = vld [vmem:[%s1526 + $0x60] sm:$0xff]
        %v1540 = vld [vmem:[%s1526 + $0x68] sm:$0xff]
        %v1541 = vld [vmem:[%s1526 + $0x70] sm:$0xff]
        %v1542 = vld [vmem:[%s1526 + $0x78] sm:$0xff]
        %1543 = vmatprep.subr.mxu0 0.0
        %1544 = vmatpush1.msra.mxu0 %v1454
        %1545 = vmatprep.subr.mxu0 0.0
        %1546 = vmatpush1.msra.mxu0 0.0
        %1547 = vmatprep.subr.mxu0 0.0
        %1548 = vmatpush1.msra.mxu0 0.0
        %1549 = vmatprep.subr.mxu0 0.0
        %1550 = vmatpush1.msra.mxu0 0.0
        %1551 = vmatprep.subr.mxu0 0.0
        %1552 = vmatpush1.msra.mxu0 0.0
        %1553 = vmatprep.subr.mxu0 0.0
        %1554 = vmatpush1.msra.mxu0 0.0
        %1555 = vmatprep.subr.mxu0 0.0
        %1556 = vmatpush1.msra.mxu0 0.0
        %1557 = vmatprep.subr.mxu0 0.0
        %1558 = vmatpush1.msra.mxu0 0.0
        %1559 = vmatprep.subr.mxu0 0.0
        %1560 = vmatpush1.msra.mxu0 0.0
        %1561 = vmatprep.subr.mxu0 0.0
        %1562 = vmatpush1.msra.mxu0 0.0
        %1563 = vmatprep.subr.mxu0 0.0
        %1564 = vmatpush1.msra.mxu0 0.0
        %1565 = vmatprep.subr.mxu0 0.0
        %1566 = vmatpush1.msra.mxu0 0.0
        %1567 = vmatprep.subr.mxu0 0.0
        %1568 = vmatpush1.msra.mxu0 0.0
        %1569 = vmatprep.subr.mxu0 0.0
        %1570 = vmatpush1.msra.mxu0 0.0
        %1571 = vmatprep.subr.mxu0 0.0
        %1572 = vmatpush1.msra.mxu0 0.0
        %1573 = vmatprep.subr.mxu0 0.0
        %1574 = vmatpush1.msra.mxu0 0.0
        %1575 = vmatprep.subr.mxu0 0.0
        %1576 = vmatpush1.msra.mxu0 0.0
        %1577 = vmatprep.subr.mxu0 0.0
        %1578 = vmatpush1.msra.mxu0 0.0
        %1579 = vmatprep.subr.mxu0 0.0
        %1580 = vmatpush1.msra.mxu0 0.0
        %1581 = vmatprep.subr.mxu0 0.0
        %1582 = vmatpush1.msra.mxu0 0.0
        %1583 = vmatprep.subr.mxu0 0.0
        %1584 = vmatpush1.msra.mxu0 0.0
        %1585 = vmatprep.subr.mxu0 0.0
        %1586 = vmatpush1.msra.mxu0 0.0
        %1587 = vmatprep.subr.mxu0 0.0
        %1588 = vmatpush1.msra.mxu0 0.0
        %1589 = vmatprep.subr.mxu0 0.0
        %1590 = vmatpush1.msra.mxu0 0.0
        %1591 = vmatprep.subr.mxu0 0.0
        %1592 = vmatpush1.msra.mxu0 0.0
        %1593 = vmatprep.subr.mxu0 0.0
        %1594 = vmatpush1.msra.mxu0 0.0
        %1595 = vmatprep.subr.mxu0 0.0
        %1596 = vmatpush1.msra.mxu0 0.0
        %1597 = vmatprep.subr.mxu0 0.0
        %1598 = vmatpush1.msra.mxu0 0.0
        %1599 = vmatprep.subr.mxu0 0.0
        %1600 = vmatpush1.msra.mxu0 0.0
        %1601 = vmatprep.subr.mxu0 0.0
        %1602 = vmatpush1.msra.mxu0 0.0
        %1603 = vmatprep.subr.mxu0 0.0
        %1604 = vmatpush1.msra.mxu0 0.0
        %1605 = vmatprep.subr.mxu0 0.0
        %1606 = vmatpush1.msra.mxu0 0.0
        %1607 = vmatprep.mubr.f32.mxu0 0.0
        %1608 = vmatmul.mubr.f32.gmra.mrb[0].mxu0 %v501
        %v1609 = vpop.f32.mrb[0].mxu0
        %v1610 = vadd.f32 0.0, %v1609
        %v1611 = vpop.f32.mrb[0].mxu0
        %1612 = vdwg.mxu0
        %s1613 = scalar_lea.vmem %s4, 512
        %v1614 = vld [vmem:[%s1613] sm:$0xff]
        %v1615 = vld [vmem:[%s1613 + $0x8] sm:$0xff]
        %v1616 = vld [vmem:[%s1613 + $0x10] sm:$0xff]
        %v1617 = vld [vmem:[%s1613 + $0x18] sm:$0xff]
        %v1618 = vld [vmem:[%s1613 + $0x20] sm:$0xff]
        %v1619 = vld [vmem:[%s1613 + $0x28] sm:$0xff]
        %v1620 = vld [vmem:[%s1613 + $0x30] sm:$0xff]
        %v1621 = vld [vmem:[%s1613 + $0x38] sm:$0xff]
        %v1622 = vld [vmem:[%s1613 + $0x40] sm:$0xff]
        %v1623 = vld [vmem:[%s1613 + $0x48] sm:$0xff]
        %v1624 = vld [vmem:[%s1613 + $0x50] sm:$0xff]
        %v1625 = vld [vmem:[%s1613 + $0x58] sm:$0xff]
        %v1626 = vld [vmem:[%s1613 + $0x60] sm:$0xff]
        %v1627 = vld [vmem:[%s1613 + $0x68] sm:$0xff]
        %v1628 = vld [vmem:[%s1613 + $0x70] sm:$0xff]
        %v1629 = vld [vmem:[%s1613 + $0x78] sm:$0xff]
        %1630 = vmatprep.subr.mxu0 0.0
        %1631 = vmatpush1.msra.mxu0 %v1614
        %1632 = vmatprep.subr.mxu0 0.0
        %1633 = vmatpush1.msra.mxu0 %v1615
        %1634 = vmatprep.subr.mxu0 0.0
        %1635 = vmatpush1.msra.mxu0 %v1616
        %1636 = vmatprep.subr.mxu0 0.0
        %1637 = vmatpush1.msra.mxu0 %v1617
        %1638 = vmatprep.subr.mxu0 0.0
        %1639 = vmatpush1.msra.mxu0 %v1618
        %1640 = vmatprep.subr.mxu0 0.0
        %1641 = vmatpush1.msra.mxu0 %v1619
        %1642 = vmatprep.subr.mxu0 0.0
        %1643 = vmatpush1.msra.mxu0 %v1620
        %1644 = vmatprep.subr.mxu0 0.0
        %1645 = vmatpush1.msra.mxu0 %v1621
        %1646 = vmatprep.subr.mxu0 0.0
        %1647 = vmatpush1.msra.mxu0 %v1622
        %1648 = vmatprep.subr.mxu0 0.0
        %1649 = vmatpush1.msra.mxu0 %v1623
        %1650 = vmatprep.subr.mxu0 0.0
        %1651 = vmatpush1.msra.mxu0 %v1624
        %1652 = vmatprep.subr.mxu0 0.0
        %1653 = vmatpush1.msra.mxu0 %v1625
        %1654 = vmatprep.subr.mxu0 0.0
        %1655 = vmatpush1.msra.mxu0 %v1626
        %1656 = vmatprep.subr.mxu0 0.0
        %1657 = vmatpush1.msra.mxu0 %v1627
        %1658 = vmatprep.subr.mxu0 0.0
        %1659 = vmatpush1.msra.mxu0 %v1628
        %1660 = vmatprep.subr.mxu0 0.0
        %1661 = vmatpush1.msra.mxu0 %v1629
        %1662 = vmatprep.subr.mxu0 0.0
        %1663 = vmatpush1.msra.mxu0 0.0
        %1664 = vmatprep.subr.mxu0 0.0
        %1665 = vmatpush1.msra.mxu0 0.0
        %1666 = vmatprep.subr.mxu0 0.0
        %1667 = vmatpush1.msra.mxu0 0.0
        %1668 = vmatprep.subr.mxu0 0.0
        %1669 = vmatpush1.msra.mxu0 0.0
        %1670 = vmatprep.subr.mxu0 0.0
        %1671 = vmatpush1.msra.mxu0 0.0
        %1672 = vmatprep.subr.mxu0 0.0
        %1673 = vmatpush1.msra.mxu0 0.0
        %1674 = vmatprep.subr.mxu0 0.0
        %1675 = vmatpush1.msra.mxu0 0.0
        %1676 = vmatprep.subr.mxu0 0.0
        %1677 = vmatpush1.msra.mxu0 0.0
        %1678 = vmatprep.subr.mxu0 0.0
        %1679 = vmatpush1.msra.mxu0 0.0
        %1680 = vmatprep.subr.mxu0 0.0
        %1681 = vmatpush1.msra.mxu0 0.0
        %1682 = vmatprep.subr.mxu0 0.0
        %1683 = vmatpush1.msra.mxu0 0.0
        %1684 = vmatprep.subr.mxu0 0.0
        %1685 = vmatpush1.msra.mxu0 0.0
        %1686 = vmatprep.subr.mxu0 0.0
        %1687 = vmatpush1.msra.mxu0 0.0
        %1688 = vmatprep.subr.mxu0 0.0
        %1689 = vmatpush1.msra.mxu0 0.0
        %1690 = vmatprep.subr.mxu0 0.0
        %1691 = vmatpush1.msra.mxu0 0.0
        %1692 = vmatprep.subr.mxu0 0.0
        %1693 = vmatpush1.msra.mxu0 0.0
        %1694 = vmatprep.mubr.f32.mxu0 0.0
        %1695 = vmatmul.mubr.f32.gmra.mrb[0].mxu0 %v1610
        %v1696 = vpop.f32.mrb[0].mxu0
        %v1697 = vadd.f32 0.0, %v1696
        %v1698 = vpop.f32.mrb[0].mxu0
        %1699 = vdwg.mxu0
        %1700 = vmatprep.subr.mxu0 0.0
        %1701 = vmatpush1.msra.mxu0 %v1527
        %1702 = vmatprep.subr.mxu0 0.0
        %1703 = vmatpush1.msra.mxu0 %v1528
        %1704 = vmatprep.subr.mxu0 0.0
        %1705 = vmatpush1.msra.mxu0 %v1529
        %1706 = vmatprep.subr.mxu0 0.0
        %1707 = vmatpush1.msra.mxu0 %v1530
        %1708 = vmatprep.subr.mxu0 0.0
        %1709 = vmatpush1.msra.mxu0 %v1531
        %1710 = vmatprep.subr.mxu0 0.0
        %1711 = vmatpush1.msra.mxu0 %v1532
        %1712 = vmatprep.subr.mxu0 0.0
        %1713 = vmatpush1.msra.mxu0 %v1533
        %1714 = vmatprep.subr.mxu0 0.0
        %1715 = vmatpush1.msra.mxu0 %v1534
        %1716 = vmatprep.subr.mxu0 0.0
        %1717 = vmatpush1.msra.mxu0 %v1535
        %1718 = vmatprep.subr.mxu0 0.0
        %1719 = vmatpush1.msra.mxu0 %v1536
        %1720 = vmatprep.subr.mxu0 0.0
        %1721 = vmatpush1.msra.mxu0 %v1537
        %1722 = vmatprep.subr.mxu0 0.0
        %1723 = vmatpush1.msra.mxu0 %v1538
        %1724 = vmatprep.subr.mxu0 0.0
        %1725 = vmatpush1.msra.mxu0 %v1539
        %1726 = vmatprep.subr.mxu0 0.0
        %1727 = vmatpush1.msra.mxu0 %v1540
        %1728 = vmatprep.subr.mxu0 0.0
        %1729 = vmatpush1.msra.mxu0 %v1541
        %1730 = vmatprep.subr.mxu0 0.0
        %1731 = vmatpush1.msra.mxu0 %v1542
        %1732 = vmatprep.subr.mxu0 0.0
        %1733 = vmatpush1.msra.mxu0 0.0
        %1734 = vmatprep.subr.mxu0 0.0
        %1735 = vmatpush1.msra.mxu0 0.0
        %1736 = vmatprep.subr.mxu0 0.0
        %1737 = vmatpush1.msra.mxu0 0.0
        %1738 = vmatprep.subr.mxu0 0.0
        %1739 = vmatpush1.msra.mxu0 0.0
        %1740 = vmatprep.subr.mxu0 0.0
        %1741 = vmatpush1.msra.mxu0 0.0
        %1742 = vmatprep.subr.mxu0 0.0
        %1743 = vmatpush1.msra.mxu0 0.0
        %1744 = vmatprep.subr.mxu0 0.0
        %1745 = vmatpush1.msra.mxu0 0.0
        %1746 = vmatprep.subr.mxu0 0.0
        %1747 = vmatpush1.msra.mxu0 0.0
        %1748 = vmatprep.subr.mxu0 0.0
        %1749 = vmatpush1.msra.mxu0 0.0
        %1750 = vmatprep.subr.mxu0 0.0
        %1751 = vmatpush1.msra.mxu0 0.0
        %1752 = vmatprep.subr.mxu0 0.0
        %1753 = vmatpush1.msra.mxu0 0.0
        %1754 = vmatprep.subr.mxu0 0.0
        %1755 = vmatpush1.msra.mxu0 0.0
        %1756 = vmatprep.subr.mxu0 0.0
        %1757 = vmatpush1.msra.mxu0 0.0
        %1758 = vmatprep.subr.mxu0 0.0
        %1759 = vmatpush1.msra.mxu0 0.0
        %1760 = vmatprep.subr.mxu0 0.0
        %1761 = vmatpush1.msra.mxu0 0.0
        %1762 = vmatprep.subr.mxu0 0.0
        %1763 = vmatpush1.msra.mxu0 0.0
        %1764 = vmatprep.mubr.f32.mxu0 0.0
        %1765 = vmatmul.mubr.f32.gmra.mrb[0].mxu0 %v1523
        %v1766 = vpop.f32.mrb[0].mxu0
        %v1767 = vadd.f32 %v1697, %v1766
        %v1768 = vpop.f32.mrb[0].mxu0
        %1769 = vdwg.mxu0
        %1770 = vmatprep.subr.mxu0 0.0
        %1771 = vmatpush1.msra.mxu0 %v1454
        %1772 = vmatprep.subr.mxu0 0.0
        %1773 = vmatpush1.msra.mxu0 0.0
        %1774 = vmatprep.subr.mxu0 0.0
        %1775 = vmatpush1.msra.mxu0 0.0
        %1776 = vmatprep.subr.mxu0 0.0
        %1777 = vmatpush1.msra.mxu0 0.0
        %1778 = vmatprep.subr.mxu0 0.0
        %1779 = vmatpush1.msra.mxu0 0.0
        %1780 = vmatprep.subr.mxu0 0.0
        %1781 = vmatpush1.msra.mxu0 0.0
        %1782 = vmatprep.subr.mxu0 0.0
        %1783 = vmatpush1.msra.mxu0 0.0
        %1784 = vmatprep.subr.mxu0 0.0
        %1785 = vmatpush1.msra.mxu0 0.0
        %1786 = vmatprep.subr.mxu0 0.0
        %1787 = vmatpush1.msra.mxu0 0.0
        %1788 = vmatprep.subr.mxu0 0.0
        %1789 = vmatpush1.msra.mxu0 0.0
        %1790 = vmatprep.subr.mxu0 0.0
        %1791 = vmatpush1.msra.mxu0 0.0
        %1792 = vmatprep.subr.mxu0 0.0
        %1793 = vmatpush1.msra.mxu0 0.0
        %1794 = vmatprep.subr.mxu0 0.0
        %1795 = vmatpush1.msra.mxu0 0.0
        %1796 = vmatprep.subr.mxu0 0.0
        %1797 = vmatpush1.msra.mxu0 0.0
        %1798 = vmatprep.subr.mxu0 0.0
        %1799 = vmatpush1.msra.mxu0 0.0
        %1800 = vmatprep.subr.mxu0 0.0
        %1801 = vmatpush1.msra.mxu0 0.0
        %1802 = vmatprep.subr.mxu0 0.0
        %1803 = vmatpush1.msra.mxu0 0.0
        %1804 = vmatprep.subr.mxu0 0.0
        %1805 = vmatpush1.msra.mxu0 0.0
        %1806 = vmatprep.subr.mxu0 0.0
        %1807 = vmatpush1.msra.mxu0 0.0
        %1808 = vmatprep.subr.mxu0 0.0
        %1809 = vmatpush1.msra.mxu0 0.0
        %1810 = vmatprep.subr.mxu0 0.0
        %1811 = vmatpush1.msra.mxu0 0.0
        %1812 = vmatprep.subr.mxu0 0.0
        %1813 = vmatpush1.msra.mxu0 0.0
        %1814 = vmatprep.subr.mxu0 0.0
        %1815 = vmatpush1.msra.mxu0 0.0
        %1816 = vmatprep.subr.mxu0 0.0
        %1817 = vmatpush1.msra.mxu0 0.0
        %1818 = vmatprep.subr.mxu0 0.0
        %1819 = vmatpush1.msra.mxu0 0.0
        %1820 = vmatprep.subr.mxu0 0.0
        %1821 = vmatpush1.msra.mxu0 0.0
        %1822 = vmatprep.subr.mxu0 0.0
        %1823 = vmatpush1.msra.mxu0 0.0
        %1824 = vmatprep.subr.mxu0 0.0
        %1825 = vmatpush1.msra.mxu0 0.0
        %1826 = vmatprep.subr.mxu0 0.0
        %1827 = vmatpush1.msra.mxu0 0.0
        %1828 = vmatprep.subr.mxu0 0.0
        %1829 = vmatpush1.msra.mxu0 0.0
        %1830 = vmatprep.subr.mxu0 0.0
        %1831 = vmatpush1.msra.mxu0 0.0
        %1832 = vmatprep.subr.mxu0 0.0
        %1833 = vmatpush1.msra.mxu0 0.0
        %1834 = vmatprep.mubr.f32.mxu0 0.0
        %1835 = vmatmul.mubr.f32.gmra.mrb[0].mxu0 %v732
        %v1836 = vpop.f32.mrb[0].mxu0
        %v1837 = vadd.f32 0.0, %v1836
        %v1838 = vpop.f32.mrb[0].mxu0
        %1839 = vdwg.mxu0
        %s1840 = scalar_lea.vmem %s4, 640
        %v1841 = vld [vmem:[%s1840] sm:$0xff]
        %v1842 = vld [vmem:[%s1840 + $0x8] sm:$0xff]
        %v1843 = vld [vmem:[%s1840 + $0x10] sm:$0xff]
        %v1844 = vld [vmem:[%s1840 + $0x18] sm:$0xff]
        %v1845 = vld [vmem:[%s1840 + $0x20] sm:$0xff]
        %v1846 = vld [vmem:[%s1840 + $0x28] sm:$0xff]
        %v1847 = vld [vmem:[%s1840 + $0x30] sm:$0xff]
        %v1848 = vld [vmem:[%s1840 + $0x38] sm:$0xff]
        %v1849 = vld [vmem:[%s1840 + $0x40] sm:$0xff]
        %v1850 = vld [vmem:[%s1840 + $0x48] sm:$0xff]
        %v1851 = vld [vmem:[%s1840 + $0x50] sm:$0xff]
        %v1852 = vld [vmem:[%s1840 + $0x58] sm:$0xff]
        %v1853 = vld [vmem:[%s1840 + $0x60] sm:$0xff]
        %v1854 = vld [vmem:[%s1840 + $0x68] sm:$0xff]
        %v1855 = vld [vmem:[%s1840 + $0x70] sm:$0xff]
        %v1856 = vld [vmem:[%s1840 + $0x78] sm:$0xff]
        %1857 = vmatprep.subr.mxu0 0.0
        %1858 = vmatpush1.msra.mxu0 %v1841
        %1859 = vmatprep.subr.mxu0 0.0
        %1860 = vmatpush1.msra.mxu0 %v1842
        %1861 = vmatprep.subr.mxu0 0.0
        %1862 = vmatpush1.msra.mxu0 %v1843
        %1863 = vmatprep.subr.mxu0 0.0
        %1864 = vmatpush1.msra.mxu0 %v1844
        %1865 = vmatprep.subr.mxu0 0.0
        %1866 = vmatpush1.msra.mxu0 %v1845
        %1867 = vmatprep.subr.mxu0 0.0
        %1868 = vmatpush1.msra.mxu0 %v1846
        %1869 = vmatprep.subr.mxu0 0.0
        %1870 = vmatpush1.msra.mxu0 %v1847
        %1871 = vmatprep.subr.mxu0 0.0
        %1872 = vmatpush1.msra.mxu0 %v1848
        %1873 = vmatprep.subr.mxu0 0.0
        %1874 = vmatpush1.msra.mxu0 %v1849
        %1875 = vmatprep.subr.mxu0 0.0
        %1876 = vmatpush1.msra.mxu0 %v1850
        %1877 = vmatprep.subr.mxu0 0.0
        %1878 = vmatpush1.msra.mxu0 %v1851
        %1879 = vmatprep.subr.mxu0 0.0
        %1880 = vmatpush1.msra.mxu0 %v1852
        %1881 = vmatprep.subr.mxu0 0.0
        %1882 = vmatpush1.msra.mxu0 %v1853
        %1883 = vmatprep.subr.mxu0 0.0
        %1884 = vmatpush1.msra.mxu0 %v1854
        %1885 = vmatprep.subr.mxu0 0.0
        %1886 = vmatpush1.msra.mxu0 %v1855
        %1887 = vmatprep.subr.mxu0 0.0
        %1888 = vmatpush1.msra.mxu0 %v1856
        %1889 = vmatprep.subr.mxu0 0.0
        %1890 = vmatpush1.msra.mxu0 0.0
        %1891 = vmatprep.subr.mxu0 0.0
        %1892 = vmatpush1.msra.mxu0 0.0
        %1893 = vmatprep.subr.mxu0 0.0
        %1894 = vmatpush1.msra.mxu0 0.0
        %1895 = vmatprep.subr.mxu0 0.0
        %1896 = vmatpush1.msra.mxu0 0.0
        %1897 = vmatprep.subr.mxu0 0.0
        %1898 = vmatpush1.msra.mxu0 0.0
        %1899 = vmatprep.subr.mxu0 0.0
        %1900 = vmatpush1.msra.mxu0 0.0
        %1901 = vmatprep.subr.mxu0 0.0
        %1902 = vmatpush1.msra.mxu0 0.0
        %1903 = vmatprep.subr.mxu0 0.0
        %1904 = vmatpush1.msra.mxu0 0.0
        %1905 = vmatprep.subr.mxu0 0.0
        %1906 = vmatpush1.msra.mxu0 0.0
        %1907 = vmatprep.subr.mxu0 0.0
        %1908 = vmatpush1.msra.mxu0 0.0
        %1909 = vmatprep.subr.mxu0 0.0
        %1910 = vmatpush1.msra.mxu0 0.0
        %1911 = vmatprep.subr.mxu0 0.0
        %1912 = vmatpush1.msra.mxu0 0.0
        %1913 = vmatprep.subr.mxu0 0.0
        %1914 = vmatpush1.msra.mxu0 0.0
        %1915 = vmatprep.subr.mxu0 0.0
        %1916 = vmatpush1.msra.mxu0 0.0
        %1917 = vmatprep.subr.mxu0 0.0
        %1918 = vmatpush1.msra.mxu0 0.0
        %1919 = vmatprep.subr.mxu0 0.0
        %1920 = vmatpush1.msra.mxu0 0.0
        %1921 = vmatprep.mubr.f32.mxu0 0.0
        %1922 = vmatmul.mubr.f32.gmra.mrb[0].mxu0 %v1837
        %v1923 = vpop.f32.mrb[0].mxu0
        %v1924 = vadd.f32 0.0, %v1923
        %v1925 = vpop.f32.mrb[0].mxu0
        %1926 = vdwg.mxu0
        %v1927 = vadd.f32 %v1767, %v1924
        %v1928 = vmax.f32 %v1927, 0.0
        %s1929 = scalar_lea.vmem %s5, 64
        %v1930 = vld [vmem:[%s1929] sm:$0xff]
        %v1931 = vld [vmem:[%s1929 + $0x8] sm:$0xff]
        %v1932 = vld [vmem:[%s1929 + $0x10] sm:$0xff]
        %v1933 = vld [vmem:[%s1929 + $0x18] sm:$0xff]
        %v1934 = vld [vmem:[%s1929 + $0x20] sm:$0xff]
        %v1935 = vld [vmem:[%s1929 + $0x28] sm:$0xff]
        %v1936 = vld [vmem:[%s1929 + $0x30] sm:$0xff]
        %v1937 = vld [vmem:[%s1929 + $0x38] sm:$0xff]
        %v1939 = vsel %vm582, %v1928, 0
        %1941 = vmatprep.subr.mxu0 0.0
        %1942 = vmatpush1.msra.mxu0 %v1930
        %1943 = vmatprep.subr.mxu0 0.0
        %1944 = vmatpush1.msra.mxu0 %v1931
        %1945 = vmatprep.subr.mxu0 0.0
        %1946 = vmatpush1.msra.mxu0 %v1932
        %1947 = vmatprep.subr.mxu0 0.0
        %1948 = vmatpush1.msra.mxu0 %v1933
        %1949 = vmatprep.subr.mxu0 0.0
        %1950 = vmatpush1.msra.mxu0 %v1934
        %1951 = vmatprep.subr.mxu0 0.0
        %1952 = vmatpush1.msra.mxu0 %v1935
        %1953 = vmatprep.subr.mxu0 0.0
        %1954 = vmatpush1.msra.mxu0 %v1936
        %1955 = vmatprep.subr.mxu0 0.0
        %1956 = vmatpush1.msra.mxu0 %v1937
        %1957 = vmatprep.subr.mxu0 0.0
        %1958 = vmatpush1.msra.mxu0 0.0
        %1959 = vmatprep.subr.mxu0 0.0
        %1960 = vmatpush1.msra.mxu0 0.0
        %1961 = vmatprep.subr.mxu0 0.0
        %1962 = vmatpush1.msra.mxu0 0.0
        %1963 = vmatprep.subr.mxu0 0.0
        %1964 = vmatpush1.msra.mxu0 0.0
        %1965 = vmatprep.subr.mxu0 0.0
        %1966 = vmatpush1.msra.mxu0 0.0
        %1967 = vmatprep.subr.mxu0 0.0
        %1968 = vmatpush1.msra.mxu0 0.0
        %1969 = vmatprep.subr.mxu0 0.0
        %1970 = vmatpush1.msra.mxu0 0.0
        %1971 = vmatprep.subr.mxu0 0.0
        %1972 = vmatpush1.msra.mxu0 0.0
        %1973 = vmatprep.subr.mxu0 0.0
        %1974 = vmatpush1.msra.mxu0 0.0
        %1975 = vmatprep.subr.mxu0 0.0
        %1976 = vmatpush1.msra.mxu0 0.0
        %1977 = vmatprep.subr.mxu0 0.0
        %1978 = vmatpush1.msra.mxu0 0.0
        %1979 = vmatprep.subr.mxu0 0.0
        %1980 = vmatpush1.msra.mxu0 0.0
        %1981 = vmatprep.subr.mxu0 0.0
        %1982 = vmatpush1.msra.mxu0 0.0
        %1983 = vmatprep.subr.mxu0 0.0
        %1984 = vmatpush1.msra.mxu0 0.0
        %1985 = vmatprep.subr.mxu0 0.0
        %1986 = vmatpush1.msra.mxu0 0.0
        %1987 = vmatprep.subr.mxu0 0.0
        %1988 = vmatpush1.msra.mxu0 0.0
        %1989 = vmatprep.subr.mxu0 0.0
        %1990 = vmatpush1.msra.mxu0 0.0
        %1991 = vmatprep.subr.mxu0 0.0
        %1992 = vmatpush1.msra.mxu0 0.0
        %1993 = vmatprep.subr.mxu0 0.0
        %1994 = vmatpush1.msra.mxu0 0.0
        %1995 = vmatprep.subr.mxu0 0.0
        %1996 = vmatpush1.msra.mxu0 0.0
        %1997 = vmatprep.subr.mxu0 0.0
        %1998 = vmatpush1.msra.mxu0 0.0
        %1999 = vmatprep.subr.mxu0 0.0
        %2000 = vmatpush1.msra.mxu0 0.0
        %2001 = vmatprep.subr.mxu0 0.0
        %2002 = vmatpush1.msra.mxu0 0.0
        %2003 = vmatprep.subr.mxu0 0.0
        %2004 = vmatpush1.msra.mxu0 0.0
        %2005 = vmatprep.mubr.f32.mxu0 0.0
        %2006 = vmatmul.mubr.f32.gmra.mrb[0].mxu0 %v1939
        %v2007 = vpop.f32.mrb[0].mxu0
        %v2008 = vadd.f32 0.0, %v2007
        %v2009 = vpop.f32.mrb[0].mxu0
        %2010 = vdwg.mxu0
        %v2011 = vadd.f32 %v1451, %v2008
        %v2012 = vmax.f32 %v2011, 0.0
        %v2013 = vld [vmem:[%s8] sm:$0x1]
        %v2014 = vld [vmem:[%s6] sm:$0xff]
        %v2016 = vsel %vm412, %v2014, 0
        %v2019 = vsel %vm416, %v2012, 0
        %2021 = vmatprep.subr.mxu0 0.0
        %2022 = vmatpush1.msra.mxu0 %v2019
        %2023 = vmatprep.subr.mxu0 0.0
        %2024 = vmatpush1.msra.mxu0 0.0
        %2025 = vmatprep.subr.mxu0 0.0
        %2026 = vmatpush1.msra.mxu0 0.0
        %2027 = vmatprep.subr.mxu0 0.0
        %2028 = vmatpush1.msra.mxu0 0.0
        %2029 = vmatprep.subr.mxu0 0.0
        %2030 = vmatpush1.msra.mxu0 0.0
        %2031 = vmatprep.subr.mxu0 0.0
        %2032 = vmatpush1.msra.mxu0 0.0
        %2033 = vmatprep.subr.mxu0 0.0
        %2034 = vmatpush1.msra.mxu0 0.0
        %2035 = vmatprep.subr.mxu0 0.0
        %2036 = vmatpush1.msra.mxu0 0.0
        %2037 = vmatprep.subr.mxu0 0.0
        %2038 = vmatpush1.msra.mxu0 0.0
        %2039 = vmatprep.subr.mxu0 0.0
        %2040 = vmatpush1.msra.mxu0 0.0
        %2041 = vmatprep.subr.mxu0 0.0
        %2042 = vmatpush1.msra.mxu0 0.0
        %2043 = vmatprep.subr.mxu0 0.0
        %2044 = vmatpush1.msra.mxu0 0.0
        %2045 = vmatprep.subr.mxu0 0.0
        %2046 = vmatpush1.msra.mxu0 0.0
        %2047 = vmatprep.subr.mxu0 0.0
        %2048 = vmatpush1.msra.mxu0 0.0
        %2049 = vmatprep.subr.mxu0 0.0
        %2050 = vmatpush1.msra.mxu0 0.0
        %2051 = vmatprep.subr.mxu0 0.0
        %2052 = vmatpush1.msra.mxu0 0.0
        %2053 = vmatprep.subr.mxu0 0.0
        %2054 = vmatpush1.msra.mxu0 0.0
        %2055 = vmatprep.subr.mxu0 0.0
        %2056 = vmatpush1.msra.mxu0 0.0
        %2057 = vmatprep.subr.mxu0 0.0
        %2058 = vmatpush1.msra.mxu0 0.0
        %2059 = vmatprep.subr.mxu0 0.0
        %2060 = vmatpush1.msra.mxu0 0.0
        %2061 = vmatprep.subr.mxu0 0.0
        %2062 = vmatpush1.msra.mxu0 0.0
        %2063 = vmatprep.subr.mxu0 0.0
        %2064 = vmatpush1.msra.mxu0 0.0
        %2065 = vmatprep.subr.mxu0 0.0
        %2066 = vmatpush1.msra.mxu0 0.0
        %2067 = vmatprep.subr.mxu0 0.0
        %2068 = vmatpush1.msra.mxu0 0.0
        %2069 = vmatprep.subr.mxu0 0.0
        %2070 = vmatpush1.msra.mxu0 0.0
        %2071 = vmatprep.subr.mxu0 0.0
        %2072 = vmatpush1.msra.mxu0 0.0
        %2073 = vmatprep.subr.mxu0 0.0
        %2074 = vmatpush1.msra.mxu0 0.0
        %2075 = vmatprep.subr.mxu0 0.0
        %2076 = vmatpush1.msra.mxu0 0.0
        %2077 = vmatprep.subr.mxu0 0.0
        %2078 = vmatpush1.msra.mxu0 0.0
        %2079 = vmatprep.subr.mxu0 0.0
        %2080 = vmatpush1.msra.mxu0 0.0
        %2081 = vmatprep.subr.mxu0 0.0
        %2082 = vmatpush1.msra.mxu0 0.0
        %2083 = vmatprep.subr.mxu0 0.0
        %2084 = vmatpush1.msra.mxu0 0.0
        %2085 = vmatprep.mubr.f32.mxu0 0.0
        %2086 = vmatmul.mubr.f32.gmra.mrb[0].mxu0 %v2016
        %v2087 = vpop.f32.mrb[0].mxu0
        %v2088 = vadd.f32 0.0, %v2087
        %v2089 = vpop.f32.mrb[0].mxu0
        %2090 = vdwg.mxu0
        %v2091 = vld [vmem:[%s7] sm:$0xff]
        %v2092 = vld [vmem:[%s7 + $0x8] sm:$0xff]
        %v2093 = vld [vmem:[%s7 + $0x10] sm:$0xff]
        %v2094 = vld [vmem:[%s7 + $0x18] sm:$0xff]
        %v2095 = vld [vmem:[%s7 + $0x20] sm:$0xff]
        %v2096 = vld [vmem:[%s7 + $0x28] sm:$0xff]
        %v2097 = vld [vmem:[%s7 + $0x30] sm:$0xff]
        %v2098 = vld [vmem:[%s7 + $0x38] sm:$0xff]
        %v2099 = vld [vmem:[%s7 + $0x40] sm:$0xff]
        %v2100 = vld [vmem:[%s7 + $0x48] sm:$0xff]
        %v2101 = vld [vmem:[%s7 + $0x50] sm:$0xff]
        %v2102 = vld [vmem:[%s7 + $0x58] sm:$0xff]
        %v2103 = vld [vmem:[%s7 + $0x60] sm:$0xff]
        %v2104 = vld [vmem:[%s7 + $0x68] sm:$0xff]
        %v2105 = vld [vmem:[%s7 + $0x70] sm:$0xff]
        %v2106 = vld [vmem:[%s7 + $0x78] sm:$0xff]
        %s2107 = scalar_lea.vmem %s6, 8
        %v2108 = vld [vmem:[%s2107] sm:$0xff]
        %v2110 = vsel %vm412, %v2108, 0
        %2112 = vmatprep.subr.mxu0 0.0
        %2113 = vmatpush1.msra.mxu0 %v2019
        %2114 = vmatprep.subr.mxu0 0.0
        %2115 = vmatpush1.msra.mxu0 0.0
        %2116 = vmatprep.subr.mxu0 0.0
        %2117 = vmatpush1.msra.mxu0 0.0
        %2118 = vmatprep.subr.mxu0 0.0
        %2119 = vmatpush1.msra.mxu0 0.0
        %2120 = vmatprep.subr.mxu0 0.0
        %2121 = vmatpush1.msra.mxu0 0.0
        %2122 = vmatprep.subr.mxu0 0.0
        %2123 = vmatpush1.msra.mxu0 0.0
        %2124 = vmatprep.subr.mxu0 0.0
        %2125 = vmatpush1.msra.mxu0 0.0
        %2126 = vmatprep.subr.mxu0 0.0
        %2127 = vmatpush1.msra.mxu0 0.0
        %2128 = vmatprep.subr.mxu0 0.0
        %2129 = vmatpush1.msra.mxu0 0.0
        %2130 = vmatprep.subr.mxu0 0.0
        %2131 = vmatpush1.msra.mxu0 0.0
        %2132 = vmatprep.subr.mxu0 0.0
        %2133 = vmatpush1.msra.mxu0 0.0
        %2134 = vmatprep.subr.mxu0 0.0
        %2135 = vmatpush1.msra.mxu0 0.0
        %2136 = vmatprep.subr.mxu0 0.0
        %2137 = vmatpush1.msra.mxu0 0.0
        %2138 = vmatprep.subr.mxu0 0.0
        %2139 = vmatpush1.msra.mxu0 0.0
        %2140 = vmatprep.subr.mxu0 0.0
        %2141 = vmatpush1.msra.mxu0 0.0
        %2142 = vmatprep.subr.mxu0 0.0
        %2143 = vmatpush1.msra.mxu0 0.0
        %2144 = vmatprep.subr.mxu0 0.0
        %2145 = vmatpush1.msra.mxu0 0.0
        %2146 = vmatprep.subr.mxu0 0.0
        %2147 = vmatpush1.msra.mxu0 0.0
        %2148 = vmatprep.subr.mxu0 0.0
        %2149 = vmatpush1.msra.mxu0 0.0
        %2150 = vmatprep.subr.mxu0 0.0
        %2151 = vmatpush1.msra.mxu0 0.0
        %2152 = vmatprep.subr.mxu0 0.0
        %2153 = vmatpush1.msra.mxu0 0.0
        %2154 = vmatprep.subr.mxu0 0.0
        %2155 = vmatpush1.msra.mxu0 0.0
        %2156 = vmatprep.subr.mxu0 0.0
        %2157 = vmatpush1.msra.mxu0 0.0
        %2158 = vmatprep.subr.mxu0 0.0
        %2159 = vmatpush1.msra.mxu0 0.0
        %2160 = vmatprep.subr.mxu0 0.0
        %2161 = vmatpush1.msra.mxu0 0.0
        %2162 = vmatprep.subr.mxu0 0.0
        %2163 = vmatpush1.msra.mxu0 0.0
        %2164 = vmatprep.subr.mxu0 0.0
        %2165 = vmatpush1.msra.mxu0 0.0
        %2166 = vmatprep.subr.mxu0 0.0
        %2167 = vmatpush1.msra.mxu0 0.0
        %2168 = vmatprep.subr.mxu0 0.0
        %2169 = vmatpush1.msra.mxu0 0.0
        %2170 = vmatprep.subr.mxu0 0.0
        %2171 = vmatpush1.msra.mxu0 0.0
        %2172 = vmatprep.subr.mxu0 0.0
        %2173 = vmatpush1.msra.mxu0 0.0
        %2174 = vmatprep.subr.mxu0 0.0
        %2175 = vmatpush1.msra.mxu0 0.0
        %2176 = vmatprep.mubr.f32.mxu0 0.0
        %2177 = vmatmul.mubr.f32.gmra.mrb[0].mxu0 %v2110
        %v2178 = vpop.f32.mrb[0].mxu0
        %v2179 = vadd.f32 0.0, %v2178
        %v2180 = vpop.f32.mrb[0].mxu0
        %2181 = vdwg.mxu0
        %s2182 = scalar_lea.vmem %s7, 128
        %v2183 = vld [vmem:[%s2182] sm:$0xff]
        %v2184 = vld [vmem:[%s2182 + $0x8] sm:$0xff]
        %v2185 = vld [vmem:[%s2182 + $0x10] sm:$0xff]
        %v2186 = vld [vmem:[%s2182 + $0x18] sm:$0xff]
        %v2187 = vld [vmem:[%s2182 + $0x20] sm:$0xff]
        %v2188 = vld [vmem:[%s2182 + $0x28] sm:$0xff]
        %v2189 = vld [vmem:[%s2182 + $0x30] sm:$0xff]
        %v2190 = vld [vmem:[%s2182 + $0x38] sm:$0xff]
        %v2191 = vld [vmem:[%s2182 + $0x40] sm:$0xff]
        %v2192 = vld [vmem:[%s2182 + $0x48] sm:$0xff]
        %v2193 = vld [vmem:[%s2182 + $0x50] sm:$0xff]
        %v2194 = vld [vmem:[%s2182 + $0x58] sm:$0xff]
        %v2195 = vld [vmem:[%s2182 + $0x60] sm:$0xff]
        %v2196 = vld [vmem:[%s2182 + $0x68] sm:$0xff]
        %v2197 = vld [vmem:[%s2182 + $0x70] sm:$0xff]
        %v2198 = vld [vmem:[%s2182 + $0x78] sm:$0xff]
        %2199 = vmatprep.subr.mxu0 0.0
        %2200 = vmatpush1.msra.mxu0 %v2183
        %2201 = vmatprep.subr.mxu0 0.0
        %2202 = vmatpush1.msra.mxu0 %v2184
        %2203 = vmatprep.subr.mxu0 0.0
        %2204 = vmatpush1.msra.mxu0 %v2185
        %2205 = vmatprep.subr.mxu0 0.0
        %2206 = vmatpush1.msra.mxu0 %v2186
        %2207 = vmatprep.subr.mxu0 0.0
        %2208 = vmatpush1.msra.mxu0 %v2187
        %2209 = vmatprep.subr.mxu0 0.0
        %2210 = vmatpush1.msra.mxu0 %v2188
        %2211 = vmatprep.subr.mxu0 0.0
        %2212 = vmatpush1.msra.mxu0 %v2189
        %2213 = vmatprep.subr.mxu0 0.0
        %2214 = vmatpush1.msra.mxu0 %v2190
        %2215 = vmatprep.subr.mxu0 0.0
        %2216 = vmatpush1.msra.mxu0 %v2191
        %2217 = vmatprep.subr.mxu0 0.0
        %2218 = vmatpush1.msra.mxu0 %v2192
        %2219 = vmatprep.subr.mxu0 0.0
        %2220 = vmatpush1.msra.mxu0 %v2193
        %2221 = vmatprep.subr.mxu0 0.0
        %2222 = vmatpush1.msra.mxu0 %v2194
        %2223 = vmatprep.subr.mxu0 0.0
        %2224 = vmatpush1.msra.mxu0 %v2195
        %2225 = vmatprep.subr.mxu0 0.0
        %2226 = vmatpush1.msra.mxu0 %v2196
        %2227 = vmatprep.subr.mxu0 0.0
        %2228 = vmatpush1.msra.mxu0 %v2197
        %2229 = vmatprep.subr.mxu0 0.0
        %2230 = vmatpush1.msra.mxu0 %v2198
        %2231 = vmatprep.subr.mxu0 0.0
        %2232 = vmatpush1.msra.mxu0 0.0
        %2233 = vmatprep.subr.mxu0 0.0
        %2234 = vmatpush1.msra.mxu0 0.0
        %2235 = vmatprep.subr.mxu0 0.0
        %2236 = vmatpush1.msra.mxu0 0.0
        %2237 = vmatprep.subr.mxu0 0.0
        %2238 = vmatpush1.msra.mxu0 0.0
        %2239 = vmatprep.subr.mxu0 0.0
        %2240 = vmatpush1.msra.mxu0 0.0
        %2241 = vmatprep.subr.mxu0 0.0
        %2242 = vmatpush1.msra.mxu0 0.0
        %2243 = vmatprep.subr.mxu0 0.0
        %2244 = vmatpush1.msra.mxu0 0.0
        %2245 = vmatprep.subr.mxu0 0.0
        %2246 = vmatpush1.msra.mxu0 0.0
        %2247 = vmatprep.subr.mxu0 0.0
        %2248 = vmatpush1.msra.mxu0 0.0
        %2249 = vmatprep.subr.mxu0 0.0
        %2250 = vmatpush1.msra.mxu0 0.0
        %2251 = vmatprep.subr.mxu0 0.0
        %2252 = vmatpush1.msra.mxu0 0.0
        %2253 = vmatprep.subr.mxu0 0.0
        %2254 = vmatpush1.msra.mxu0 0.0
        %2255 = vmatprep.subr.mxu0 0.0
        %2256 = vmatpush1.msra.mxu0 0.0
        %2257 = vmatprep.subr.mxu0 0.0
        %2258 = vmatpush1.msra.mxu0 0.0
        %2259 = vmatprep.subr.mxu0 0.0
        %2260 = vmatpush1.msra.mxu0 0.0
        %2261 = vmatprep.subr.mxu0 0.0
        %2262 = vmatpush1.msra.mxu0 0.0
        %2263 = vmatprep.mubr.f32.mxu0 0.0
        %2264 = vmatmul.mubr.f32.gmra.mrb[0].mxu0 %v2179
        %v2265 = vpop.f32.mrb[0].mxu0
        %v2266 = vadd.f32 0.0, %v2265
        %v2267 = vpop.f32.mrb[0].mxu0
        %2268 = vdwg.mxu0
        %2269 = vmatprep.subr.mxu0 0.0
        %2270 = vmatpush1.msra.mxu0 %v2091
        %2271 = vmatprep.subr.mxu0 0.0
        %2272 = vmatpush1.msra.mxu0 %v2092
        %2273 = vmatprep.subr.mxu0 0.0
        %2274 = vmatpush1.msra.mxu0 %v2093
        %2275 = vmatprep.subr.mxu0 0.0
        %2276 = vmatpush1.msra.mxu0 %v2094
        %2277 = vmatprep.subr.mxu0 0.0
        %2278 = vmatpush1.msra.mxu0 %v2095
        %2279 = vmatprep.subr.mxu0 0.0
        %2280 = vmatpush1.msra.mxu0 %v2096
        %2281 = vmatprep.subr.mxu0 0.0
        %2282 = vmatpush1.msra.mxu0 %v2097
        %2283 = vmatprep.subr.mxu0 0.0
        %2284 = vmatpush1.msra.mxu0 %v2098
        %2285 = vmatprep.subr.mxu0 0.0
        %2286 = vmatpush1.msra.mxu0 %v2099
        %2287 = vmatprep.subr.mxu0 0.0
        %2288 = vmatpush1.msra.mxu0 %v2100
        %2289 = vmatprep.subr.mxu0 0.0
        %2290 = vmatpush1.msra.mxu0 %v2101
        %2291 = vmatprep.subr.mxu0 0.0
        %2292 = vmatpush1.msra.mxu0 %v2102
        %2293 = vmatprep.subr.mxu0 0.0
        %2294 = vmatpush1.msra.mxu0 %v2103
        %2295 = vmatprep.subr.mxu0 0.0
        %2296 = vmatpush1.msra.mxu0 %v2104
        %2297 = vmatprep.subr.mxu0 0.0
        %2298 = vmatpush1.msra.mxu0 %v2105
        %2299 = vmatprep.subr.mxu0 0.0
        %2300 = vmatpush1.msra.mxu0 %v2106
        %2301 = vmatprep.subr.mxu0 0.0
        %2302 = vmatpush1.msra.mxu0 0.0
        %2303 = vmatprep.subr.mxu0 0.0
        %2304 = vmatpush1.msra.mxu0 0.0
        %2305 = vmatprep.subr.mxu0 0.0
        %2306 = vmatpush1.msra.mxu0 0.0
        %2307 = vmatprep.subr.mxu0 0.0
        %2308 = vmatpush1.msra.mxu0 0.0
        %2309 = vmatprep.subr.mxu0 0.0
        %2310 = vmatpush1.msra.mxu0 0.0
        %2311 = vmatprep.subr.mxu0 0.0
        %2312 = vmatpush1.msra.mxu0 0.0
        %2313 = vmatprep.subr.mxu0 0.0
        %2314 = vmatpush1.msra.mxu0 0.0
        %2315 = vmatprep.subr.mxu0 0.0
        %2316 = vmatpush1.msra.mxu0 0.0
        %2317 = vmatprep.subr.mxu0 0.0
        %2318 = vmatpush1.msra.mxu0 0.0
        %2319 = vmatprep.subr.mxu0 0.0
        %2320 = vmatpush1.msra.mxu0 0.0
        %2321 = vmatprep.subr.mxu0 0.0
        %2322 = vmatpush1.msra.mxu0 0.0
        %2323 = vmatprep.subr.mxu0 0.0
        %2324 = vmatpush1.msra.mxu0 0.0
        %2325 = vmatprep.subr.mxu0 0.0
        %2326 = vmatpush1.msra.mxu0 0.0
        %2327 = vmatprep.subr.mxu0 0.0
        %2328 = vmatpush1.msra.mxu0 0.0
        %2329 = vmatprep.subr.mxu0 0.0
        %2330 = vmatpush1.msra.mxu0 0.0
        %2331 = vmatprep.subr.mxu0 0.0
        %2332 = vmatpush1.msra.mxu0 0.0
        %2333 = vmatprep.mubr.f32.mxu0 0.0
        %2334 = vmatmul.mubr.f32.gmra.mrb[0].mxu0 %v2088
        %v2335 = vpop.f32.mrb[0].mxu0
        %v2336 = vadd.f32 %v2266, %v2335
        %v2337 = vpop.f32.mrb[0].mxu0
        %2338 = vdwg.mxu0
        %s2339 = scalar_lea.vmem %s6, 16
        %v2340 = vld [vmem:[%s2339] sm:$0xff]
        %v2342 = vsel %vm412, %v2340, 0
        %2344 = vmatprep.subr.mxu0 0.0
        %2345 = vmatpush1.msra.mxu0 %v2019
        %2346 = vmatprep.subr.mxu0 0.0
        %2347 = vmatpush1.msra.mxu0 0.0
        %2348 = vmatprep.subr.mxu0 0.0
        %2349 = vmatpush1.msra.mxu0 0.0
        %2350 = vmatprep.subr.mxu0 0.0
        %2351 = vmatpush1.msra.mxu0 0.0
        %2352 = vmatprep.subr.mxu0 0.0
        %2353 = vmatpush1.msra.mxu0 0.0
        %2354 = vmatprep.subr.mxu0 0.0
        %2355 = vmatpush1.msra.mxu0 0.0
        %2356 = vmatprep.subr.mxu0 0.0
        %2357 = vmatpush1.msra.mxu0 0.0
        %2358 = vmatprep.subr.mxu0 0.0
        %2359 = vmatpush1.msra.mxu0 0.0
        %2360 = vmatprep.subr.mxu0 0.0
        %2361 = vmatpush1.msra.mxu0 0.0
        %2362 = vmatprep.subr.mxu0 0.0
        %2363 = vmatpush1.msra.mxu0 0.0
        %2364 = vmatprep.subr.mxu0 0.0
        %2365 = vmatpush1.msra.mxu0 0.0
        %2366 = vmatprep.subr.mxu0 0.0
        %2367 = vmatpush1.msra.mxu0 0.0
        %2368 = vmatprep.subr.mxu0 0.0
        %2369 = vmatpush1.msra.mxu0 0.0
        %2370 = vmatprep.subr.mxu0 0.0
        %2371 = vmatpush1.msra.mxu0 0.0
        %2372 = vmatprep.subr.mxu0 0.0
        %2373 = vmatpush1.msra.mxu0 0.0
        %2374 = vmatprep.subr.mxu0 0.0
        %2375 = vmatpush1.msra.mxu0 0.0
        %2376 = vmatprep.subr.mxu0 0.0
        %2377 = vmatpush1.msra.mxu0 0.0
        %2378 = vmatprep.subr.mxu0 0.0
        %2379 = vmatpush1.msra.mxu0 0.0
        %2380 = vmatprep.subr.mxu0 0.0
        %2381 = vmatpush1.msra.mxu0 0.0
        %2382 = vmatprep.subr.mxu0 0.0
        %2383 = vmatpush1.msra.mxu0 0.0
        %2384 = vmatprep.subr.mxu0 0.0
        %2385 = vmatpush1.msra.mxu0 0.0
        %2386 = vmatprep.subr.mxu0 0.0
        %2387 = vmatpush1.msra.mxu0 0.0
        %2388 = vmatprep.subr.mxu0 0.0
        %2389 = vmatpush1.msra.mxu0 0.0
        %2390 = vmatprep.subr.mxu0 0.0
        %2391 = vmatpush1.msra.mxu0 0.0
        %2392 = vmatprep.subr.mxu0 0.0
        %2393 = vmatpush1.msra.mxu0 0.0
        %2394 = vmatprep.subr.mxu0 0.0
        %2395 = vmatpush1.msra.mxu0 0.0
        %2396 = vmatprep.subr.mxu0 0.0
        %2397 = vmatpush1.msra.mxu0 0.0
        %2398 = vmatprep.subr.mxu0 0.0
        %2399 = vmatpush1.msra.mxu0 0.0
        %2400 = vmatprep.subr.mxu0 0.0
        %2401 = vmatpush1.msra.mxu0 0.0
        %2402 = vmatprep.subr.mxu0 0.0
        %2403 = vmatpush1.msra.mxu0 0.0
        %2404 = vmatprep.subr.mxu0 0.0
        %2405 = vmatpush1.msra.mxu0 0.0
        %2406 = vmatprep.subr.mxu0 0.0
        %2407 = vmatpush1.msra.mxu0 0.0
        %2408 = vmatprep.mubr.f32.mxu0 0.0
        %2409 = vmatmul.mubr.f32.gmra.mrb[0].mxu0 %v2342
        %v2410 = vpop.f32.mrb[0].mxu0
        %v2411 = vadd.f32 0.0, %v2410
        %v2412 = vpop.f32.mrb[0].mxu0
        %2413 = vdwg.mxu0
        %s2414 = scalar_lea.vmem %s7, 256
        %v2415 = vld [vmem:[%s2414] sm:$0xff]
        %v2416 = vld [vmem:[%s2414 + $0x8] sm:$0xff]
        %v2417 = vld [vmem:[%s2414 + $0x10] sm:$0xff]
        %v2418 = vld [vmem:[%s2414 + $0x18] sm:$0xff]
        %v2419 = vld [vmem:[%s2414 + $0x20] sm:$0xff]
        %v2420 = vld [vmem:[%s2414 + $0x28] sm:$0xff]
        %v2421 = vld [vmem:[%s2414 + $0x30] sm:$0xff]
        %v2422 = vld [vmem:[%s2414 + $0x38] sm:$0xff]
        %v2423 = vld [vmem:[%s2414 + $0x40] sm:$0xff]
        %v2424 = vld [vmem:[%s2414 + $0x48] sm:$0xff]
        %v2425 = vld [vmem:[%s2414 + $0x50] sm:$0xff]
        %v2426 = vld [vmem:[%s2414 + $0x58] sm:$0xff]
        %v2427 = vld [vmem:[%s2414 + $0x60] sm:$0xff]
        %v2428 = vld [vmem:[%s2414 + $0x68] sm:$0xff]
        %v2429 = vld [vmem:[%s2414 + $0x70] sm:$0xff]
        %v2430 = vld [vmem:[%s2414 + $0x78] sm:$0xff]
        %2431 = vmatprep.subr.mxu0 0.0
        %2432 = vmatpush1.msra.mxu0 %v2415
        %2433 = vmatprep.subr.mxu0 0.0
        %2434 = vmatpush1.msra.mxu0 %v2416
        %2435 = vmatprep.subr.mxu0 0.0
        %2436 = vmatpush1.msra.mxu0 %v2417
        %2437 = vmatprep.subr.mxu0 0.0
        %2438 = vmatpush1.msra.mxu0 %v2418
        %2439 = vmatprep.subr.mxu0 0.0
        %2440 = vmatpush1.msra.mxu0 %v2419
        %2441 = vmatprep.subr.mxu0 0.0
        %2442 = vmatpush1.msra.mxu0 %v2420
        %2443 = vmatprep.subr.mxu0 0.0
        %2444 = vmatpush1.msra.mxu0 %v2421
        %2445 = vmatprep.subr.mxu0 0.0
        %2446 = vmatpush1.msra.mxu0 %v2422
        %2447 = vmatprep.subr.mxu0 0.0
        %2448 = vmatpush1.msra.mxu0 %v2423
        %2449 = vmatprep.subr.mxu0 0.0
        %2450 = vmatpush1.msra.mxu0 %v2424
        %2451 = vmatprep.subr.mxu0 0.0
        %2452 = vmatpush1.msra.mxu0 %v2425
        %2453 = vmatprep.subr.mxu0 0.0
        %2454 = vmatpush1.msra.mxu0 %v2426
        %2455 = vmatprep.subr.mxu0 0.0
        %2456 = vmatpush1.msra.mxu0 %v2427
        %2457 = vmatprep.subr.mxu0 0.0
        %2458 = vmatpush1.msra.mxu0 %v2428
        %2459 = vmatprep.subr.mxu0 0.0
        %2460 = vmatpush1.msra.mxu0 %v2429
        %2461 = vmatprep.subr.mxu0 0.0
        %2462 = vmatpush1.msra.mxu0 %v2430
        %2463 = vmatprep.subr.mxu0 0.0
        %2464 = vmatpush1.msra.mxu0 0.0
        %2465 = vmatprep.subr.mxu0 0.0
        %2466 = vmatpush1.msra.mxu0 0.0
        %2467 = vmatprep.subr.mxu0 0.0
        %2468 = vmatpush1.msra.mxu0 0.0
        %2469 = vmatprep.subr.mxu0 0.0
        %2470 = vmatpush1.msra.mxu0 0.0
        %2471 = vmatprep.subr.mxu0 0.0
        %2472 = vmatpush1.msra.mxu0 0.0
        %2473 = vmatprep.subr.mxu0 0.0
        %2474 = vmatpush1.msra.mxu0 0.0
        %2475 = vmatprep.subr.mxu0 0.0
        %2476 = vmatpush1.msra.mxu0 0.0
        %2477 = vmatprep.subr.mxu0 0.0
        %2478 = vmatpush1.msra.mxu0 0.0
        %2479 = vmatprep.subr.mxu0 0.0
        %2480 = vmatpush1.msra.mxu0 0.0
        %2481 = vmatprep.subr.mxu0 0.0
        %2482 = vmatpush1.msra.mxu0 0.0
        %2483 = vmatprep.subr.mxu0 0.0
        %2484 = vmatpush1.msra.mxu0 0.0
        %2485 = vmatprep.subr.mxu0 0.0
        %2486 = vmatpush1.msra.mxu0 0.0
        %2487 = vmatprep.subr.mxu0 0.0
        %2488 = vmatpush1.msra.mxu0 0.0
        %2489 = vmatprep.subr.mxu0 0.0
        %2490 = vmatpush1.msra.mxu0 0.0
        %2491 = vmatprep.subr.mxu0 0.0
        %2492 = vmatpush1.msra.mxu0 0.0
        %2493 = vmatprep.subr.mxu0 0.0
        %2494 = vmatpush1.msra.mxu0 0.0
        %2495 = vmatprep.mubr.f32.mxu0 0.0
        %2496 = vmatmul.mubr.f32.gmra.mrb[0].mxu0 %v2411
        %v2497 = vpop.f32.mrb[0].mxu0
        %v2498 = vadd.f32 0.0, %v2497
        %v2499 = vpop.f32.mrb[0].mxu0
        %2500 = vdwg.mxu0
        %v2501 = vadd.f32 %v2336, %v2498
        %s2502 = scalar_lea.vmem %s6, 24
        %v2503 = vld [vmem:[%s2502] sm:$0xff]
        %v2505 = vsel %vm412, %v2503, 0
        %2507 = vmatprep.subr.mxu0 0.0
        %2508 = vmatpush1.msra.mxu0 %v2019
        %2509 = vmatprep.subr.mxu0 0.0
        %2510 = vmatpush1.msra.mxu0 0.0
        %2511 = vmatprep.subr.mxu0 0.0
        %2512 = vmatpush1.msra.mxu0 0.0
        %2513 = vmatprep.subr.mxu0 0.0
        %2514 = vmatpush1.msra.mxu0 0.0
        %2515 = vmatprep.subr.mxu0 0.0
        %2516 = vmatpush1.msra.mxu0 0.0
        %2517 = vmatprep.subr.mxu0 0.0
        %2518 = vmatpush1.msra.mxu0 0.0
        %2519 = vmatprep.subr.mxu0 0.0
        %2520 = vmatpush1.msra.mxu0 0.0
        %2521 = vmatprep.subr.mxu0 0.0
        %2522 = vmatpush1.msra.mxu0 0.0
        %2523 = vmatprep.subr.mxu0 0.0
        %2524 = vmatpush1.msra.mxu0 0.0
        %2525 = vmatprep.subr.mxu0 0.0
        %2526 = vmatpush1.msra.mxu0 0.0
        %2527 = vmatprep.subr.mxu0 0.0
        %2528 = vmatpush1.msra.mxu0 0.0
        %2529 = vmatprep.subr.mxu0 0.0
        %2530 = vmatpush1.msra.mxu0 0.0
        %2531 = vmatprep.subr.mxu0 0.0
        %2532 = vmatpush1.msra.mxu0 0.0
        %2533 = vmatprep.subr.mxu0 0.0
        %2534 = vmatpush1.msra.mxu0 0.0
        %2535 = vmatprep.subr.mxu0 0.0
        %2536 = vmatpush1.msra.mxu0 0.0
        %2537 = vmatprep.subr.mxu0 0.0
        %2538 = vmatpush1.msra.mxu0 0.0
        %2539 = vmatprep.subr.mxu0 0.0
        %2540 = vmatpush1.msra.mxu0 0.0
        %2541 = vmatprep.subr.mxu0 0.0
        %2542 = vmatpush1.msra.mxu0 0.0
        %2543 = vmatprep.subr.mxu0 0.0
        %2544 = vmatpush1.msra.mxu0 0.0
        %2545 = vmatprep.subr.mxu0 0.0
        %2546 = vmatpush1.msra.mxu0 0.0
        %2547 = vmatprep.subr.mxu0 0.0
        %2548 = vmatpush1.msra.mxu0 0.0
        %2549 = vmatprep.subr.mxu0 0.0
        %2550 = vmatpush1.msra.mxu0 0.0
        %2551 = vmatprep.subr.mxu0 0.0
        %2552 = vmatpush1.msra.mxu0 0.0
        %2553 = vmatprep.subr.mxu0 0.0
        %2554 = vmatpush1.msra.mxu0 0.0
        %2555 = vmatprep.subr.mxu0 0.0
        %2556 = vmatpush1.msra.mxu0 0.0
        %2557 = vmatprep.subr.mxu0 0.0
        %2558 = vmatpush1.msra.mxu0 0.0
        %2559 = vmatprep.subr.mxu0 0.0
        %2560 = vmatpush1.msra.mxu0 0.0
        %2561 = vmatprep.subr.mxu0 0.0
        %2562 = vmatpush1.msra.mxu0 0.0
        %2563 = vmatprep.subr.mxu0 0.0
        %2564 = vmatpush1.msra.mxu0 0.0
        %2565 = vmatprep.subr.mxu0 0.0
        %2566 = vmatpush1.msra.mxu0 0.0
        %2567 = vmatprep.subr.mxu0 0.0
        %2568 = vmatpush1.msra.mxu0 0.0
        %2569 = vmatprep.subr.mxu0 0.0
        %2570 = vmatpush1.msra.mxu0 0.0
        %2571 = vmatprep.mubr.f32.mxu0 0.0
        %2572 = vmatmul.mubr.f32.gmra.mrb[0].mxu0 %v2505
        %v2573 = vpop.f32.mrb[0].mxu0
        %v2574 = vadd.f32 0.0, %v2573
        %v2575 = vpop.f32.mrb[0].mxu0
        %2576 = vdwg.mxu0
        %s2577 = scalar_lea.vmem %s7, 384
        %v2578 = vld [vmem:[%s2577] sm:$0xff]
        %v2579 = vld [vmem:[%s2577 + $0x8] sm:$0xff]
        %v2580 = vld [vmem:[%s2577 + $0x10] sm:$0xff]
        %v2581 = vld [vmem:[%s2577 + $0x18] sm:$0xff]
        %v2582 = vld [vmem:[%s2577 + $0x20] sm:$0xff]
        %v2583 = vld [vmem:[%s2577 + $0x28] sm:$0xff]
        %v2584 = vld [vmem:[%s2577 + $0x30] sm:$0xff]
        %v2585 = vld [vmem:[%s2577 + $0x38] sm:$0xff]
        %v2586 = vld [vmem:[%s2577 + $0x40] sm:$0xff]
        %v2587 = vld [vmem:[%s2577 + $0x48] sm:$0xff]
        %v2588 = vld [vmem:[%s2577 + $0x50] sm:$0xff]
        %v2589 = vld [vmem:[%s2577 + $0x58] sm:$0xff]
        %v2590 = vld [vmem:[%s2577 + $0x60] sm:$0xff]
        %v2591 = vld [vmem:[%s2577 + $0x68] sm:$0xff]
        %v2592 = vld [vmem:[%s2577 + $0x70] sm:$0xff]
        %v2593 = vld [vmem:[%s2577 + $0x78] sm:$0xff]
        %2594 = vmatprep.subr.mxu0 0.0
        %2595 = vmatpush1.msra.mxu0 %v2578
        %2596 = vmatprep.subr.mxu0 0.0
        %2597 = vmatpush1.msra.mxu0 %v2579
        %2598 = vmatprep.subr.mxu0 0.0
        %2599 = vmatpush1.msra.mxu0 %v2580
        %2600 = vmatprep.subr.mxu0 0.0
        %2601 = vmatpush1.msra.mxu0 %v2581
        %2602 = vmatprep.subr.mxu0 0.0
        %2603 = vmatpush1.msra.mxu0 %v2582
        %2604 = vmatprep.subr.mxu0 0.0
        %2605 = vmatpush1.msra.mxu0 %v2583
        %2606 = vmatprep.subr.mxu0 0.0
        %2607 = vmatpush1.msra.mxu0 %v2584
        %2608 = vmatprep.subr.mxu0 0.0
        %2609 = vmatpush1.msra.mxu0 %v2585
        %2610 = vmatprep.subr.mxu0 0.0
        %2611 = vmatpush1.msra.mxu0 %v2586
        %2612 = vmatprep.subr.mxu0 0.0
        %2613 = vmatpush1.msra.mxu0 %v2587
        %2614 = vmatprep.subr.mxu0 0.0
        %2615 = vmatpush1.msra.mxu0 %v2588
        %2616 = vmatprep.subr.mxu0 0.0
        %2617 = vmatpush1.msra.mxu0 %v2589
        %2618 = vmatprep.subr.mxu0 0.0
        %2619 = vmatpush1.msra.mxu0 %v2590
        %2620 = vmatprep.subr.mxu0 0.0
        %2621 = vmatpush1.msra.mxu0 %v2591
        %2622 = vmatprep.subr.mxu0 0.0
        %2623 = vmatpush1.msra.mxu0 %v2592
        %2624 = vmatprep.subr.mxu0 0.0
        %2625 = vmatpush1.msra.mxu0 %v2593
        %2626 = vmatprep.subr.mxu0 0.0
        %2627 = vmatpush1.msra.mxu0 0.0
        %2628 = vmatprep.subr.mxu0 0.0
        %2629 = vmatpush1.msra.mxu0 0.0
        %2630 = vmatprep.subr.mxu0 0.0
        %2631 = vmatpush1.msra.mxu0 0.0
        %2632 = vmatprep.subr.mxu0 0.0
        %2633 = vmatpush1.msra.mxu0 0.0
        %2634 = vmatprep.subr.mxu0 0.0
        %2635 = vmatpush1.msra.mxu0 0.0
        %2636 = vmatprep.subr.mxu0 0.0
        %2637 = vmatpush1.msra.mxu0 0.0
        %2638 = vmatprep.subr.mxu0 0.0
        %2639 = vmatpush1.msra.mxu0 0.0
        %2640 = vmatprep.subr.mxu0 0.0
        %2641 = vmatpush1.msra.mxu0 0.0
        %2642 = vmatprep.subr.mxu0 0.0
        %2643 = vmatpush1.msra.mxu0 0.0
        %2644 = vmatprep.subr.mxu0 0.0
        %2645 = vmatpush1.msra.mxu0 0.0
        %2646 = vmatprep.subr.mxu0 0.0
        %2647 = vmatpush1.msra.mxu0 0.0
        %2648 = vmatprep.subr.mxu0 0.0
        %2649 = vmatpush1.msra.mxu0 0.0
        %2650 = vmatprep.subr.mxu0 0.0
        %2651 = vmatpush1.msra.mxu0 0.0
        %2652 = vmatprep.subr.mxu0 0.0
        %2653 = vmatpush1.msra.mxu0 0.0
        %2654 = vmatprep.subr.mxu0 0.0
        %2655 = vmatpush1.msra.mxu0 0.0
        %2656 = vmatprep.subr.mxu0 0.0
        %2657 = vmatpush1.msra.mxu0 0.0
        %2658 = vmatprep.mubr.f32.mxu0 0.0
        %2659 = vmatmul.mubr.f32.gmra.mrb[0].mxu0 %v2574
        %v2660 = vpop.f32.mrb[0].mxu0
        %v2661 = vadd.f32 0.0, %v2660
        %v2662 = vpop.f32.mrb[0].mxu0
        %2663 = vdwg.mxu0
        %v2664 = vadd.f32 %v2501, %v2661
        %v2666 = vlaneseq
        %v2667 = vshrl.u32 %v2666, 7
        %v2668 = vsub.s32 0, %v2667
        %v2669 = vrot.slane %v2013, %v2668
        %v2671 = vadd.f32 %v2664, %v2669
        %v2672 = vmax.f32 %v2671, 0.0
        %v2673 = vld [vmem:[%s11] sm:$0x1]
        %v2674 = vld [vmem:[%s9] sm:$0xff]
        %v2675 = vld [vmem:[%s9 + $0x8] sm:$0xff]
        %vm2676 = vcmask 64512
        %v2678 = vsel %vm2676, %v2674, 0
        %v2681 = vsel %vm2676, %v2675, 0
        %2683 = vmatprep.subr.mxu0 0.0
        %2684 = vmatpush1.msra.mxu0 %v2672
        %2685 = vmatprep.subr.mxu0 0.0
        %2686 = vmatpush1.msra.mxu0 0.0
        %2687 = vmatprep.subr.mxu0 0.0
        %2688 = vmatpush1.msra.mxu0 0.0
        %2689 = vmatprep.subr.mxu0 0.0
        %2690 = vmatpush1.msra.mxu0 0.0
        %2691 = vmatprep.subr.mxu0 0.0
        %2692 = vmatpush1.msra.mxu0 0.0
        %2693 = vmatprep.subr.mxu0 0.0
        %2694 = vmatpush1.msra.mxu0 0.0
        %2695 = vmatprep.subr.mxu0 0.0
        %2696 = vmatpush1.msra.mxu0 0.0
        %2697 = vmatprep.subr.mxu0 0.0
        %2698 = vmatpush1.msra.mxu0 0.0
        %2699 = vmatprep.subr.mxu0 0.0
        %2700 = vmatpush1.msra.mxu0 0.0
        %2701 = vmatprep.subr.mxu0 0.0
        %2702 = vmatpush1.msra.mxu0 0.0
        %2703 = vmatprep.subr.mxu0 0.0
        %2704 = vmatpush1.msra.mxu0 0.0
        %2705 = vmatprep.subr.mxu0 0.0
        %2706 = vmatpush1.msra.mxu0 0.0
        %2707 = vmatprep.subr.mxu0 0.0
        %2708 = vmatpush1.msra.mxu0 0.0
        %2709 = vmatprep.subr.mxu0 0.0
        %2710 = vmatpush1.msra.mxu0 0.0
        %2711 = vmatprep.subr.mxu0 0.0
        %2712 = vmatpush1.msra.mxu0 0.0
        %2713 = vmatprep.subr.mxu0 0.0
        %2714 = vmatpush1.msra.mxu0 0.0
        %2715 = vmatprep.subr.mxu0 0.0
        %2716 = vmatpush1.msra.mxu0 0.0
        %2717 = vmatprep.subr.mxu0 0.0
        %2718 = vmatpush1.msra.mxu0 0.0
        %2719 = vmatprep.subr.mxu0 0.0
        %2720 = vmatpush1.msra.mxu0 0.0
        %2721 = vmatprep.subr.mxu0 0.0
        %2722 = vmatpush1.msra.mxu0 0.0
        %2723 = vmatprep.subr.mxu0 0.0
        %2724 = vmatpush1.msra.mxu0 0.0
        %2725 = vmatprep.subr.mxu0 0.0
        %2726 = vmatpush1.msra.mxu0 0.0
        %2727 = vmatprep.subr.mxu0 0.0
        %2728 = vmatpush1.msra.mxu0 0.0
        %2729 = vmatprep.subr.mxu0 0.0
        %2730 = vmatpush1.msra.mxu0 0.0
        %2731 = vmatprep.subr.mxu0 0.0
        %2732 = vmatpush1.msra.mxu0 0.0
        %2733 = vmatprep.subr.mxu0 0.0
        %2734 = vmatpush1.msra.mxu0 0.0
        %2735 = vmatprep.subr.mxu0 0.0
        %2736 = vmatpush1.msra.mxu0 0.0
        %2737 = vmatprep.subr.mxu0 0.0
        %2738 = vmatpush1.msra.mxu0 0.0
        %2739 = vmatprep.subr.mxu0 0.0
        %2740 = vmatpush1.msra.mxu0 0.0
        %2741 = vmatprep.subr.mxu0 0.0
        %2742 = vmatpush1.msra.mxu0 0.0
        %2743 = vmatprep.subr.mxu0 0.0
        %2744 = vmatpush1.msra.mxu0 0.0
        %2745 = vmatprep.subr.mxu0 0.0
        %2746 = vmatpush1.msra.mxu0 0.0
        %2747 = vmatprep.mubr.f32.mxu0 0.0
        %2748 = vmatmul.mubr.f32.gmra.mrb[0].mxu0 %v2678
        %v2749 = vpop.f32.mrb[0].mxu0
        %v2750 = vadd.f32 0.0, %v2749
        %v2751 = vpop.f32.mrb[0].mxu0
        %2752 = vmatprep.mubr.f32.mxu0 0.0
        %2753 = vmatmul.mubr.f32.gmra.mrb[0].mxu0 %v2681
        %v2754 = vpop.f32.mrb[0].mxu0
        %v2755 = vadd.f32 0.0, %v2754
        %v2756 = vpop.f32.mrb[0].mxu0
        %2757 = vdwg.mxu0
        %v2758 = vld [vmem:[%s10] sm:$0xff]
        %v2759 = vld [vmem:[%s10 + $0x8] sm:$0xff]
        %v2760 = vld [vmem:[%s10 + $0x10] sm:$0xff]
        %v2761 = vld [vmem:[%s10 + $0x18] sm:$0xff]
        %v2762 = vld [vmem:[%s10 + $0x20] sm:$0xff]
        %v2763 = vld [vmem:[%s10 + $0x28] sm:$0xff]
        %v2764 = vld [vmem:[%s10 + $0x30] sm:$0xff]
        %v2765 = vld [vmem:[%s10 + $0x38] sm:$0xff]
        %v2766 = vld [vmem:[%s10 + $0x40] sm:$0xff]
        %v2767 = vld [vmem:[%s10 + $0x48] sm:$0xff]
        %v2768 = vld [vmem:[%s10 + $0x50] sm:$0xff]
        %v2769 = vld [vmem:[%s10 + $0x58] sm:$0xff]
        %v2770 = vld [vmem:[%s10 + $0x60] sm:$0xff]
        %v2771 = vld [vmem:[%s10 + $0x68] sm:$0xff]
        %v2772 = vld [vmem:[%s10 + $0x70] sm:$0xff]
        %v2773 = vld [vmem:[%s10 + $0x78] sm:$0xff]
        %s2774 = scalar_lea.vmem %s9, 16
        %v2775 = vld [vmem:[%s2774] sm:$0xff]
        %v2776 = vld [vmem:[%s2774 + $0x8] sm:$0xff]
        %v2778 = vsel %vm2676, %v2775, 0
        %v2781 = vsel %vm2676, %v2776, 0
        %2783 = vmatprep.subr.mxu0 0.0
        %2784 = vmatpush1.msra.mxu0 %v2672
        %2785 = vmatprep.subr.mxu0 0.0
        %2786 = vmatpush1.msra.mxu0 0.0
        %2787 = vmatprep.subr.mxu0 0.0
        %2788 = vmatpush1.msra.mxu0 0.0
        %2789 = vmatprep.subr.mxu0 0.0
        %2790 = vmatpush1.msra.mxu0 0.0
        %2791 = vmatprep.subr.mxu0 0.0
        %2792 = vmatpush1.msra.mxu0 0.0
        %2793 = vmatprep.subr.mxu0 0.0
        %2794 = vmatpush1.msra.mxu0 0.0
        %2795 = vmatprep.subr.mxu0 0.0
        %2796 = vmatpush1.msra.mxu0 0.0
        %2797 = vmatprep.subr.mxu0 0.0
        %2798 = vmatpush1.msra.mxu0 0.0
        %2799 = vmatprep.subr.mxu0 0.0
        %2800 = vmatpush1.msra.mxu0 0.0
        %2801 = vmatprep.subr.mxu0 0.0
        %2802 = vmatpush1.msra.mxu0 0.0
        %2803 = vmatprep.subr.mxu0 0.0
        %2804 = vmatpush1.msra.mxu0 0.0
        %2805 = vmatprep.subr.mxu0 0.0
        %2806 = vmatpush1.msra.mxu0 0.0
        %2807 = vmatprep.subr.mxu0 0.0
        %2808 = vmatpush1.msra.mxu0 0.0
        %2809 = vmatprep.subr.mxu0 0.0
        %2810 = vmatpush1.msra.mxu0 0.0
        %2811 = vmatprep.subr.mxu0 0.0
        %2812 = vmatpush1.msra.mxu0 0.0
        %2813 = vmatprep.subr.mxu0 0.0
        %2814 = vmatpush1.msra.mxu0 0.0
        %2815 = vmatprep.subr.mxu0 0.0
        %2816 = vmatpush1.msra.mxu0 0.0
        %2817 = vmatprep.subr.mxu0 0.0
        %2818 = vmatpush1.msra.mxu0 0.0
        %2819 = vmatprep.subr.mxu0 0.0
        %2820 = vmatpush1.msra.mxu0 0.0
        %2821 = vmatprep.subr.mxu0 0.0
        %2822 = vmatpush1.msra.mxu0 0.0
        %2823 = vmatprep.subr.mxu0 0.0
        %2824 = vmatpush1.msra.mxu0 0.0
        %2825 = vmatprep.subr.mxu0 0.0
        %2826 = vmatpush1.msra.mxu0 0.0
        %2827 = vmatprep.subr.mxu0 0.0
        %2828 = vmatpush1.msra.mxu0 0.0
        %2829 = vmatprep.subr.mxu0 0.0
        %2830 = vmatpush1.msra.mxu0 0.0
        %2831 = vmatprep.subr.mxu0 0.0
        %2832 = vmatpush1.msra.mxu0 0.0
        %2833 = vmatprep.subr.mxu0 0.0
        %2834 = vmatpush1.msra.mxu0 0.0
        %2835 = vmatprep.subr.mxu0 0.0
        %2836 = vmatpush1.msra.mxu0 0.0
        %2837 = vmatprep.subr.mxu0 0.0
        %2838 = vmatpush1.msra.mxu0 0.0
        %2839 = vmatprep.subr.mxu0 0.0
        %2840 = vmatpush1.msra.mxu0 0.0
        %2841 = vmatprep.subr.mxu0 0.0
        %2842 = vmatpush1.msra.mxu0 0.0
        %2843 = vmatprep.subr.mxu0 0.0
        %2844 = vmatpush1.msra.mxu0 0.0
        %2845 = vmatprep.subr.mxu0 0.0
        %2846 = vmatpush1.msra.mxu0 0.0
        %2847 = vmatprep.mubr.f32.mxu0 0.0
        %2848 = vmatmul.mubr.f32.gmra.mrb[0].mxu0 %v2778
        %v2849 = vpop.f32.mrb[0].mxu0
        %v2850 = vadd.f32 0.0, %v2849
        %v2851 = vpop.f32.mrb[0].mxu0
        %2852 = vmatprep.mubr.f32.mxu0 0.0
        %2853 = vmatmul.mubr.f32.gmra.mrb[0].mxu0 %v2781
        %v2854 = vpop.f32.mrb[0].mxu0
        %v2855 = vadd.f32 0.0, %v2854
        %v2856 = vpop.f32.mrb[0].mxu0
        %2857 = vdwg.mxu0
        %s2858 = scalar_lea.vmem %s10, 128
        %v2859 = vld [vmem:[%s2858] sm:$0xff]
        %v2860 = vld [vmem:[%s2858 + $0x8] sm:$0xff]
        %v2861 = vld [vmem:[%s2858 + $0x10] sm:$0xff]
        %v2862 = vld [vmem:[%s2858 + $0x18] sm:$0xff]
        %v2863 = vld [vmem:[%s2858 + $0x20] sm:$0xff]
        %v2864 = vld [vmem:[%s2858 + $0x28] sm:$0xff]
        %v2865 = vld [vmem:[%s2858 + $0x30] sm:$0xff]
        %v2866 = vld [vmem:[%s2858 + $0x38] sm:$0xff]
        %v2867 = vld [vmem:[%s2858 + $0x40] sm:$0xff]
        %v2868 = vld [vmem:[%s2858 + $0x48] sm:$0xff]
        %v2869 = vld [vmem:[%s2858 + $0x50] sm:$0xff]
        %v2870 = vld [vmem:[%s2858 + $0x58] sm:$0xff]
        %v2871 = vld [vmem:[%s2858 + $0x60] sm:$0xff]
        %v2872 = vld [vmem:[%s2858 + $0x68] sm:$0xff]
        %v2873 = vld [vmem:[%s2858 + $0x70] sm:$0xff]
        %v2874 = vld [vmem:[%s2858 + $0x78] sm:$0xff]
        %2875 = vmatprep.subr.mxu0 0.0
        %2876 = vmatpush1.msra.mxu0 %v2859
        %2877 = vmatprep.subr.mxu0 0.0
        %2878 = vmatpush1.msra.mxu0 %v2860
        %2879 = vmatprep.subr.mxu0 0.0
        %2880 = vmatpush1.msra.mxu0 %v2861
        %2881 = vmatprep.subr.mxu0 0.0
        %2882 = vmatpush1.msra.mxu0 %v2862
        %2883 = vmatprep.subr.mxu0 0.0
        %2884 = vmatpush1.msra.mxu0 %v2863
        %2885 = vmatprep.subr.mxu0 0.0
        %2886 = vmatpush1.msra.mxu0 %v2864
        %2887 = vmatprep.subr.mxu0 0.0
        %2888 = vmatpush1.msra.mxu0 %v2865
        %2889 = vmatprep.subr.mxu0 0.0
        %2890 = vmatpush1.msra.mxu0 %v2866
        %2891 = vmatprep.subr.mxu0 0.0
        %2892 = vmatpush1.msra.mxu0 %v2867
        %2893 = vmatprep.subr.mxu0 0.0
        %2894 = vmatpush1.msra.mxu0 %v2868
        %2895 = vmatprep.subr.mxu0 0.0
        %2896 = vmatpush1.msra.mxu0 %v2869
        %2897 = vmatprep.subr.mxu0 0.0
        %2898 = vmatpush1.msra.mxu0 %v2870
        %2899 = vmatprep.subr.mxu0 0.0
        %2900 = vmatpush1.msra.mxu0 %v2871
        %2901 = vmatprep.subr.mxu0 0.0
        %2902 = vmatpush1.msra.mxu0 %v2872
        %2903 = vmatprep.subr.mxu0 0.0
        %2904 = vmatpush1.msra.mxu0 %v2873
        %2905 = vmatprep.subr.mxu0 0.0
        %2906 = vmatpush1.msra.mxu0 %v2874
        %2907 = vmatprep.subr.mxu0 0.0
        %2908 = vmatpush1.msra.mxu0 0.0
        %2909 = vmatprep.subr.mxu0 0.0
        %2910 = vmatpush1.msra.mxu0 0.0
        %2911 = vmatprep.subr.mxu0 0.0
        %2912 = vmatpush1.msra.mxu0 0.0
        %2913 = vmatprep.subr.mxu0 0.0
        %2914 = vmatpush1.msra.mxu0 0.0
        %2915 = vmatprep.subr.mxu0 0.0
        %2916 = vmatpush1.msra.mxu0 0.0
        %2917 = vmatprep.subr.mxu0 0.0
        %2918 = vmatpush1.msra.mxu0 0.0
        %2919 = vmatprep.subr.mxu0 0.0
        %2920 = vmatpush1.msra.mxu0 0.0
        %2921 = vmatprep.subr.mxu0 0.0
        %2922 = vmatpush1.msra.mxu0 0.0
        %2923 = vmatprep.subr.mxu0 0.0
        %2924 = vmatpush1.msra.mxu0 0.0
        %2925 = vmatprep.subr.mxu0 0.0
        %2926 = vmatpush1.msra.mxu0 0.0
        %2927 = vmatprep.subr.mxu0 0.0
        %2928 = vmatpush1.msra.mxu0 0.0
        %2929 = vmatprep.subr.mxu0 0.0
        %2930 = vmatpush1.msra.mxu0 0.0
        %2931 = vmatprep.subr.mxu0 0.0
        %2932 = vmatpush1.msra.mxu0 0.0
        %2933 = vmatprep.subr.mxu0 0.0
        %2934 = vmatpush1.msra.mxu0 0.0
        %2935 = vmatprep.subr.mxu0 0.0
        %2936 = vmatpush1.msra.mxu0 0.0
        %2937 = vmatprep.subr.mxu0 0.0
        %2938 = vmatpush1.msra.mxu0 0.0
        %2939 = vmatprep.mubr.f32.mxu0 0.0
        %2940 = vmatmul.mubr.f32.gmra.mrb[0].mxu0 %v2850
        %v2941 = vpop.f32.mrb[0].mxu0
        %v2942 = vadd.f32 0.0, %v2941
        %v2943 = vpop.f32.mrb[0].mxu0
        %2944 = vmatprep.mubr.f32.mxu0 0.0
        %2945 = vmatmul.mubr.f32.gmra.mrb[0].mxu0 %v2855
        %v2946 = vpop.f32.mrb[0].mxu0
        %v2947 = vadd.f32 0.0, %v2946
        %v2948 = vpop.f32.mrb[0].mxu0
        %2949 = vdwg.mxu0
        %2950 = vmatprep.subr.mxu0 0.0
        %2951 = vmatpush1.msra.mxu0 %v2758
        %2952 = vmatprep.subr.mxu0 0.0
        %2953 = vmatpush1.msra.mxu0 %v2759
        %2954 = vmatprep.subr.mxu0 0.0
        %2955 = vmatpush1.msra.mxu0 %v2760
        %2956 = vmatprep.subr.mxu0 0.0
        %2957 = vmatpush1.msra.mxu0 %v2761
        %2958 = vmatprep.subr.mxu0 0.0
        %2959 = vmatpush1.msra.mxu0 %v2762
        %2960 = vmatprep.subr.mxu0 0.0
        %2961 = vmatpush1.msra.mxu0 %v2763
        %2962 = vmatprep.subr.mxu0 0.0
        %2963 = vmatpush1.msra.mxu0 %v2764
        %2964 = vmatprep.subr.mxu0 0.0
        %2965 = vmatpush1.msra.mxu0 %v2765
        %2966 = vmatprep.subr.mxu0 0.0
        %2967 = vmatpush1.msra.mxu0 %v2766
        %2968 = vmatprep.subr.mxu0 0.0
        %2969 = vmatpush1.msra.mxu0 %v2767
        %2970 = vmatprep.subr.mxu0 0.0
        %2971 = vmatpush1.msra.mxu0 %v2768
        %2972 = vmatprep.subr.mxu0 0.0
        %2973 = vmatpush1.msra.mxu0 %v2769
        %2974 = vmatprep.subr.mxu0 0.0
        %2975 = vmatpush1.msra.mxu0 %v2770
        %2976 = vmatprep.subr.mxu0 0.0
        %2977 = vmatpush1.msra.mxu0 %v2771
        %2978 = vmatprep.subr.mxu0 0.0
        %2979 = vmatpush1.msra.mxu0 %v2772
        %2980 = vmatprep.subr.mxu0 0.0
        %2981 = vmatpush1.msra.mxu0 %v2773
        %2982 = vmatprep.subr.mxu0 0.0
        %2983 = vmatpush1.msra.mxu0 0.0
        %2984 = vmatprep.subr.mxu0 0.0
        %2985 = vmatpush1.msra.mxu0 0.0
        %2986 = vmatprep.subr.mxu0 0.0
        %2987 = vmatpush1.msra.mxu0 0.0
        %2988 = vmatprep.subr.mxu0 0.0
        %2989 = vmatpush1.msra.mxu0 0.0
        %2990 = vmatprep.subr.mxu0 0.0
        %2991 = vmatpush1.msra.mxu0 0.0
        %2992 = vmatprep.subr.mxu0 0.0
        %2993 = vmatpush1.msra.mxu0 0.0
        %2994 = vmatprep.subr.mxu0 0.0
        %2995 = vmatpush1.msra.mxu0 0.0
        %2996 = vmatprep.subr.mxu0 0.0
        %2997 = vmatpush1.msra.mxu0 0.0
        %2998 = vmatprep.subr.mxu0 0.0
        %2999 = vmatpush1.msra.mxu0 0.0
        %3000 = vmatprep.subr.mxu0 0.0
        %3001 = vmatpush1.msra.mxu0 0.0
        %3002 = vmatprep.subr.mxu0 0.0
        %3003 = vmatpush1.msra.mxu0 0.0
        %3004 = vmatprep.subr.mxu0 0.0
        %3005 = vmatpush1.msra.mxu0 0.0
        %3006 = vmatprep.subr.mxu0 0.0
        %3007 = vmatpush1.msra.mxu0 0.0
        %3008 = vmatprep.subr.mxu0 0.0
        %3009 = vmatpush1.msra.mxu0 0.0
        %3010 = vmatprep.subr.mxu0 0.0
        %3011 = vmatpush1.msra.mxu0 0.0
        %3012 = vmatprep.subr.mxu0 0.0
        %3013 = vmatpush1.msra.mxu0 0.0
        %3014 = vmatprep.mubr.f32.mxu0 0.0
        %3015 = vmatmul.mubr.f32.gmra.mrb[0].mxu0 %v2750
        %v3016 = vpop.f32.mrb[0].mxu0
        %v3017 = vadd.f32 %v2942, %v3016
        %v3018 = vpop.f32.mrb[0].mxu0
        %3019 = vmatprep.mubr.f32.mxu0 0.0
        %3020 = vmatmul.mubr.f32.gmra.mrb[0].mxu0 %v2755
        %v3021 = vpop.f32.mrb[0].mxu0
        %v3022 = vadd.f32 %v2947, %v3021
        %v3023 = vpop.f32.mrb[0].mxu0
        %3024 = vdwg.mxu0
        %s3025 = scalar_lea.vmem %s9, 32
        %v3026 = vld [vmem:[%s3025] sm:$0xff]
        %v3027 = vld [vmem:[%s3025 + $0x8] sm:$0xff]
        %v3029 = vsel %vm2676, %v3026, 0
        %v3032 = vsel %vm2676, %v3027, 0
        %3034 = vmatprep.subr.mxu0 0.0
        %3035 = vmatpush1.msra.mxu0 %v2672
        %3036 = vmatprep.subr.mxu0 0.0
        %3037 = vmatpush1.msra.mxu0 0.0
        %3038 = vmatprep.subr.mxu0 0.0
        %3039 = vmatpush1.msra.mxu0 0.0
        %3040 = vmatprep.subr.mxu0 0.0
        %3041 = vmatpush1.msra.mxu0 0.0
        %3042 = vmatprep.subr.mxu0 0.0
        %3043 = vmatpush1.msra.mxu0 0.0
        %3044 = vmatprep.subr.mxu0 0.0
        %3045 = vmatpush1.msra.mxu0 0.0
        %3046 = vmatprep.subr.mxu0 0.0
        %3047 = vmatpush1.msra.mxu0 0.0
        %3048 = vmatprep.subr.mxu0 0.0
        %3049 = vmatpush1.msra.mxu0 0.0
        %3050 = vmatprep.subr.mxu0 0.0
        %3051 = vmatpush1.msra.mxu0 0.0
        %3052 = vmatprep.subr.mxu0 0.0
        %3053 = vmatpush1.msra.mxu0 0.0
        %3054 = vmatprep.subr.mxu0 0.0
        %3055 = vmatpush1.msra.mxu0 0.0
        %3056 = vmatprep.subr.mxu0 0.0
        %3057 = vmatpush1.msra.mxu0 0.0
        %3058 = vmatprep.subr.mxu0 0.0
        %3059 = vmatpush1.msra.mxu0 0.0
        %3060 = vmatprep.subr.mxu0 0.0
        %3061 = vmatpush1.msra.mxu0 0.0
        %3062 = vmatprep.subr.mxu0 0.0
        %3063 = vmatpush1.msra.mxu0 0.0
        %3064 = vmatprep.subr.mxu0 0.0
        %3065 = vmatpush1.msra.mxu0 0.0
        %3066 = vmatprep.subr.mxu0 0.0
        %3067 = vmatpush1.msra.mxu0 0.0
        %3068 = vmatprep.subr.mxu0 0.0
        %3069 = vmatpush1.msra.mxu0 0.0
        %3070 = vmatprep.subr.mxu0 0.0
        %3071 = vmatpush1.msra.mxu0 0.0
        %3072 = vmatprep.subr.mxu0 0.0
        %3073 = vmatpush1.msra.mxu0 0.0
        %3074 = vmatprep.subr.mxu0 0.0
        %3075 = vmatpush1.msra.mxu0 0.0
        %3076 = vmatprep.subr.mxu0 0.0
        %3077 = vmatpush1.msra.mxu0 0.0
        %3078 = vmatprep.subr.mxu0 0.0
        %3079 = vmatpush1.msra.mxu0 0.0
        %3080 = vmatprep.subr.mxu0 0.0
        %3081 = vmatpush1.msra.mxu0 0.0
        %3082 = vmatprep.subr.mxu0 0.0
        %3083 = vmatpush1.msra.mxu0 0.0
        %3084 = vmatprep.subr.mxu0 0.0
        %3085 = vmatpush1.msra.mxu0 0.0
        %3086 = vmatprep.subr.mxu0 0.0
        %3087 = vmatpush1.msra.mxu0 0.0
        %3088 = vmatprep.subr.mxu0 0.0
        %3089 = vmatpush1.msra.mxu0 0.0
        %3090 = vmatprep.subr.mxu0 0.0
        %3091 = vmatpush1.msra.mxu0 0.0
        %3092 = vmatprep.subr.mxu0 0.0
        %3093 = vmatpush1.msra.mxu0 0.0
        %3094 = vmatprep.subr.mxu0 0.0
        %3095 = vmatpush1.msra.mxu0 0.0
        %3096 = vmatprep.subr.mxu0 0.0
        %3097 = vmatpush1.msra.mxu0 0.0
        %3098 = vmatprep.mubr.f32.mxu0 0.0
        %3099 = vmatmul.mubr.f32.gmra.mrb[0].mxu0 %v3029
        %v3100 = vpop.f32.mrb[0].mxu0
        %v3101 = vadd.f32 0.0, %v3100
        %v3102 = vpop.f32.mrb[0].mxu0
        %3103 = vmatprep.mubr.f32.mxu0 0.0
        %3104 = vmatmul.mubr.f32.gmra.mrb[0].mxu0 %v3032
        %v3105 = vpop.f32.mrb[0].mxu0
        %v3106 = vadd.f32 0.0, %v3105
        %v3107 = vpop.f32.mrb[0].mxu0
        %3108 = vdwg.mxu0
        %s3109 = scalar_lea.vmem %s10, 256
        %v3110 = vld [vmem:[%s3109] sm:$0xff]
        %v3111 = vld [vmem:[%s3109 + $0x8] sm:$0xff]
        %v3112 = vld [vmem:[%s3109 + $0x10] sm:$0xff]
        %v3113 = vld [vmem:[%s3109 + $0x18] sm:$0xff]
        %v3114 = vld [vmem:[%s3109 + $0x20] sm:$0xff]
        %v3115 = vld [vmem:[%s3109 + $0x28] sm:$0xff]
        %v3116 = vld [vmem:[%s3109 + $0x30] sm:$0xff]
        %v3117 = vld [vmem:[%s3109 + $0x38] sm:$0xff]
        %v3118 = vld [vmem:[%s3109 + $0x40] sm:$0xff]
        %v3119 = vld [vmem:[%s3109 + $0x48] sm:$0xff]
        %v3120 = vld [vmem:[%s3109 + $0x50] sm:$0xff]
        %v3121 = vld [vmem:[%s3109 + $0x58] sm:$0xff]
        %v3122 = vld [vmem:[%s3109 + $0x60] sm:$0xff]
        %v3123 = vld [vmem:[%s3109 + $0x68] sm:$0xff]
        %v3124 = vld [vmem:[%s3109 + $0x70] sm:$0xff]
        %v3125 = vld [vmem:[%s3109 + $0x78] sm:$0xff]
        %3126 = vmatprep.subr.mxu0 0.0
        %3127 = vmatpush1.msra.mxu0 %v3110
        %3128 = vmatprep.subr.mxu0 0.0
        %3129 = vmatpush1.msra.mxu0 %v3111
        %3130 = vmatprep.subr.mxu0 0.0
        %3131 = vmatpush1.msra.mxu0 %v3112
        %3132 = vmatprep.subr.mxu0 0.0
        %3133 = vmatpush1.msra.mxu0 %v3113
        %3134 = vmatprep.subr.mxu0 0.0
        %3135 = vmatpush1.msra.mxu0 %v3114
        %3136 = vmatprep.subr.mxu0 0.0
        %3137 = vmatpush1.msra.mxu0 %v3115
        %3138 = vmatprep.subr.mxu0 0.0
        %3139 = vmatpush1.msra.mxu0 %v3116
        %3140 = vmatprep.subr.mxu0 0.0
        %3141 = vmatpush1.msra.mxu0 %v3117
        %3142 = vmatprep.subr.mxu0 0.0
        %3143 = vmatpush1.msra.mxu0 %v3118
        %3144 = vmatprep.subr.mxu0 0.0
        %3145 = vmatpush1.msra.mxu0 %v3119
        %3146 = vmatprep.subr.mxu0 0.0
        %3147 = vmatpush1.msra.mxu0 %v3120
        %3148 = vmatprep.subr.mxu0 0.0
        %3149 = vmatpush1.msra.mxu0 %v3121
        %3150 = vmatprep.subr.mxu0 0.0
        %3151 = vmatpush1.msra.mxu0 %v3122
        %3152 = vmatprep.subr.mxu0 0.0
        %3153 = vmatpush1.msra.mxu0 %v3123
        %3154 = vmatprep.subr.mxu0 0.0
        %3155 = vmatpush1.msra.mxu0 %v3124
        %3156 = vmatprep.subr.mxu0 0.0
        %3157 = vmatpush1.msra.mxu0 %v3125
        %3158 = vmatprep.subr.mxu0 0.0
        %3159 = vmatpush1.msra.mxu0 0.0
        %3160 = vmatprep.subr.mxu0 0.0
        %3161 = vmatpush1.msra.mxu0 0.0
        %3162 = vmatprep.subr.mxu0 0.0
        %3163 = vmatpush1.msra.mxu0 0.0
        %3164 = vmatprep.subr.mxu0 0.0
        %3165 = vmatpush1.msra.mxu0 0.0
        %3166 = vmatprep.subr.mxu0 0.0
        %3167 = vmatpush1.msra.mxu0 0.0
        %3168 = vmatprep.subr.mxu0 0.0
        %3169 = vmatpush1.msra.mxu0 0.0
        %3170 = vmatprep.subr.mxu0 0.0
        %3171 = vmatpush1.msra.mxu0 0.0
        %3172 = vmatprep.subr.mxu0 0.0
        %3173 = vmatpush1.msra.mxu0 0.0
        %3174 = vmatprep.subr.mxu0 0.0
        %3175 = vmatpush1.msra.mxu0 0.0
        %3176 = vmatprep.subr.mxu0 0.0
        %3177 = vmatpush1.msra.mxu0 0.0
        %3178 = vmatprep.subr.mxu0 0.0
        %3179 = vmatpush1.msra.mxu0 0.0
        %3180 = vmatprep.subr.mxu0 0.0
        %3181 = vmatpush1.msra.mxu0 0.0
        %3182 = vmatprep.subr.mxu0 0.0
        %3183 = vmatpush1.msra.mxu0 0.0
        %3184 = vmatprep.subr.mxu0 0.0
        %3185 = vmatpush1.msra.mxu0 0.0
        %3186 = vmatprep.subr.mxu0 0.0
        %3187 = vmatpush1.msra.mxu0 0.0
        %3188 = vmatprep.subr.mxu0 0.0
        %3189 = vmatpush1.msra.mxu0 0.0
        %3190 = vmatprep.mubr.f32.mxu0 0.0
        %3191 = vmatmul.mubr.f32.gmra.mrb[0].mxu0 %v3101
        %v3192 = vpop.f32.mrb[0].mxu0
        %v3193 = vadd.f32 0.0, %v3192
        %v3194 = vpop.f32.mrb[0].mxu0
        %3195 = vmatprep.mubr.f32.mxu0 0.0
        %3196 = vmatmul.mubr.f32.gmra.mrb[0].mxu0 %v3106
        %v3197 = vpop.f32.mrb[0].mxu0
        %v3198 = vadd.f32 0.0, %v3197
        %v3199 = vpop.f32.mrb[0].mxu0
        %3200 = vdwg.mxu0
        %v3201 = vadd.f32 %v3017, %v3193
        %v3202 = vadd.f32 %v3022, %v3198
        %s3203 = scalar_lea.vmem %s9, 48
        %v3204 = vld [vmem:[%s3203] sm:$0xff]
        %v3205 = vld [vmem:[%s3203 + $0x8] sm:$0xff]
        %v3207 = vsel %vm2676, %v3204, 0
        %v3210 = vsel %vm2676, %v3205, 0
        %3212 = vmatprep.subr.mxu0 0.0
        %3213 = vmatpush1.msra.mxu0 %v2672
        %3214 = vmatprep.subr.mxu0 0.0
        %3215 = vmatpush1.msra.mxu0 0.0
        %3216 = vmatprep.subr.mxu0 0.0
        %3217 = vmatpush1.msra.mxu0 0.0
        %3218 = vmatprep.subr.mxu0 0.0
        %3219 = vmatpush1.msra.mxu0 0.0
        %3220 = vmatprep.subr.mxu0 0.0
        %3221 = vmatpush1.msra.mxu0 0.0
        %3222 = vmatprep.subr.mxu0 0.0
        %3223 = vmatpush1.msra.mxu0 0.0
        %3224 = vmatprep.subr.mxu0 0.0
        %3225 = vmatpush1.msra.mxu0 0.0
        %3226 = vmatprep.subr.mxu0 0.0
        %3227 = vmatpush1.msra.mxu0 0.0
        %3228 = vmatprep.subr.mxu0 0.0
        %3229 = vmatpush1.msra.mxu0 0.0
        %3230 = vmatprep.subr.mxu0 0.0
        %3231 = vmatpush1.msra.mxu0 0.0
        %3232 = vmatprep.subr.mxu0 0.0
        %3233 = vmatpush1.msra.mxu0 0.0
        %3234 = vmatprep.subr.mxu0 0.0
        %3235 = vmatpush1.msra.mxu0 0.0
        %3236 = vmatprep.subr.mxu0 0.0
        %3237 = vmatpush1.msra.mxu0 0.0
        %3238 = vmatprep.subr.mxu0 0.0
        %3239 = vmatpush1.msra.mxu0 0.0
        %3240 = vmatprep.subr.mxu0 0.0
        %3241 = vmatpush1.msra.mxu0 0.0
        %3242 = vmatprep.subr.mxu0 0.0
        %3243 = vmatpush1.msra.mxu0 0.0
        %3244 = vmatprep.subr.mxu0 0.0
        %3245 = vmatpush1.msra.mxu0 0.0
        %3246 = vmatprep.subr.mxu0 0.0
        %3247 = vmatpush1.msra.mxu0 0.0
        %3248 = vmatprep.subr.mxu0 0.0
        %3249 = vmatpush1.msra.mxu0 0.0
        %3250 = vmatprep.subr.mxu0 0.0
        %3251 = vmatpush1.msra.mxu0 0.0
        %3252 = vmatprep.subr.mxu0 0.0
        %3253 = vmatpush1.msra.mxu0 0.0
        %3254 = vmatprep.subr.mxu0 0.0
        %3255 = vmatpush1.msra.mxu0 0.0
        %3256 = vmatprep.subr.mxu0 0.0
        %3257 = vmatpush1.msra.mxu0 0.0
        %3258 = vmatprep.subr.mxu0 0.0
        %3259 = vmatpush1.msra.mxu0 0.0
        %3260 = vmatprep.subr.mxu0 0.0
        %3261 = vmatpush1.msra.mxu0 0.0
        %3262 = vmatprep.subr.mxu0 0.0
        %3263 = vmatpush1.msra.mxu0 0.0
        %3264 = vmatprep.subr.mxu0 0.0
        %3265 = vmatpush1.msra.mxu0 0.0
        %3266 = vmatprep.subr.mxu0 0.0
        %3267 = vmatpush1.msra.mxu0 0.0
        %3268 = vmatprep.subr.mxu0 0.0
        %3269 = vmatpush1.msra.mxu0 0.0
        %3270 = vmatprep.subr.mxu0 0.0
        %3271 = vmatpush1.msra.mxu0 0.0
        %3272 = vmatprep.subr.mxu0 0.0
        %3273 = vmatpush1.msra.mxu0 0.0
        %3274 = vmatprep.subr.mxu0 0.0
        %3275 = vmatpush1.msra.mxu0 0.0
        %3276 = vmatprep.mubr.f32.mxu0 0.0
        %3277 = vmatmul.mubr.f32.gmra.mrb[0].mxu0 %v3207
        %v3278 = vpop.f32.mrb[0].mxu0
        %v3279 = vadd.f32 0.0, %v3278
        %v3280 = vpop.f32.mrb[0].mxu0
        %3281 = vmatprep.mubr.f32.mxu0 0.0
        %3282 = vmatmul.mubr.f32.gmra.mrb[0].mxu0 %v3210
        %v3283 = vpop.f32.mrb[0].mxu0
        %v3284 = vadd.f32 0.0, %v3283
        %v3285 = vpop.f32.mrb[0].mxu0
        %3286 = vdwg.mxu0
        %s3287 = scalar_lea.vmem %s10, 384
        %v3288 = vld [vmem:[%s3287] sm:$0xff]
        %v3289 = vld [vmem:[%s3287 + $0x8] sm:$0xff]
        %v3290 = vld [vmem:[%s3287 + $0x10] sm:$0xff]
        %v3291 = vld [vmem:[%s3287 + $0x18] sm:$0xff]
        %v3292 = vld [vmem:[%s3287 + $0x20] sm:$0xff]
        %v3293 = vld [vmem:[%s3287 + $0x28] sm:$0xff]
        %v3294 = vld [vmem:[%s3287 + $0x30] sm:$0xff]
        %v3295 = vld [vmem:[%s3287 + $0x38] sm:$0xff]
        %v3296 = vld [vmem:[%s3287 + $0x40] sm:$0xff]
        %v3297 = vld [vmem:[%s3287 + $0x48] sm:$0xff]
        %v3298 = vld [vmem:[%s3287 + $0x50] sm:$0xff]
        %v3299 = vld [vmem:[%s3287 + $0x58] sm:$0xff]
        %v3300 = vld [vmem:[%s3287 + $0x60] sm:$0xff]
        %v3301 = vld [vmem:[%s3287 + $0x68] sm:$0xff]
        %v3302 = vld [vmem:[%s3287 + $0x70] sm:$0xff]
        %v3303 = vld [vmem:[%s3287 + $0x78] sm:$0xff]
        %3304 = vmatprep.subr.mxu0 0.0
        %3305 = vmatpush1.msra.mxu0 %v3288
        %3306 = vmatprep.subr.mxu0 0.0
        %3307 = vmatpush1.msra.mxu0 %v3289
        %3308 = vmatprep.subr.mxu0 0.0
        %3309 = vmatpush1.msra.mxu0 %v3290
        %3310 = vmatprep.subr.mxu0 0.0
        %3311 = vmatpush1.msra.mxu0 %v3291
        %3312 = vmatprep.subr.mxu0 0.0
        %3313 = vmatpush1.msra.mxu0 %v3292
        %3314 = vmatprep.subr.mxu0 0.0
        %3315 = vmatpush1.msra.mxu0 %v3293
        %3316 = vmatprep.subr.mxu0 0.0
        %3317 = vmatpush1.msra.mxu0 %v3294
        %3318 = vmatprep.subr.mxu0 0.0
        %3319 = vmatpush1.msra.mxu0 %v3295
        %3320 = vmatprep.subr.mxu0 0.0
        %3321 = vmatpush1.msra.mxu0 %v3296
        %3322 = vmatprep.subr.mxu0 0.0
        %3323 = vmatpush1.msra.mxu0 %v3297
        %3324 = vmatprep.subr.mxu0 0.0
        %3325 = vmatpush1.msra.mxu0 %v3298
        %3326 = vmatprep.subr.mxu0 0.0
        %3327 = vmatpush1.msra.mxu0 %v3299
        %3328 = vmatprep.subr.mxu0 0.0
        %3329 = vmatpush1.msra.mxu0 %v3300
        %3330 = vmatprep.subr.mxu0 0.0
        %3331 = vmatpush1.msra.mxu0 %v3301
        %3332 = vmatprep.subr.mxu0 0.0
        %3333 = vmatpush1.msra.mxu0 %v3302
        %3334 = vmatprep.subr.mxu0 0.0
        %3335 = vmatpush1.msra.mxu0 %v3303
        %3336 = vmatprep.subr.mxu0 0.0
        %3337 = vmatpush1.msra.mxu0 0.0
        %3338 = vmatprep.subr.mxu0 0.0
        %3339 = vmatpush1.msra.mxu0 0.0
        %3340 = vmatprep.subr.mxu0 0.0
        %3341 = vmatpush1.msra.mxu0 0.0
        %3342 = vmatprep.subr.mxu0 0.0
        %3343 = vmatpush1.msra.mxu0 0.0
        %3344 = vmatprep.subr.mxu0 0.0
        %3345 = vmatpush1.msra.mxu0 0.0
        %3346 = vmatprep.subr.mxu0 0.0
        %3347 = vmatpush1.msra.mxu0 0.0
        %3348 = vmatprep.subr.mxu0 0.0
        %3349 = vmatpush1.msra.mxu0 0.0
        %3350 = vmatprep.subr.mxu0 0.0
        %3351 = vmatpush1.msra.mxu0 0.0
        %3352 = vmatprep.subr.mxu0 0.0
        %3353 = vmatpush1.msra.mxu0 0.0
        %3354 = vmatprep.subr.mxu0 0.0
        %3355 = vmatpush1.msra.mxu0 0.0
        %3356 = vmatprep.subr.mxu0 0.0
        %3357 = vmatpush1.msra.mxu0 0.0
        %3358 = vmatprep.subr.mxu0 0.0
        %3359 = vmatpush1.msra.mxu0 0.0
        %3360 = vmatprep.subr.mxu0 0.0
        %3361 = vmatpush1.msra.mxu0 0.0
        %3362 = vmatprep.subr.mxu0 0.0
        %3363 = vmatpush1.msra.mxu0 0.0
        %3364 = vmatprep.subr.mxu0 0.0
        %3365 = vmatpush1.msra.mxu0 0.0
        %3366 = vmatprep.subr.mxu0 0.0
        %3367 = vmatpush1.msra.mxu0 0.0
        %3368 = vmatprep.mubr.f32.mxu0 0.0
        %3369 = vmatmul.mubr.f32.gmra.mrb[0].mxu0 %v3279
        %v3370 = vpop.f32.mrb[0].mxu0
        %v3371 = vadd.f32 0.0, %v3370
        %v3372 = vpop.f32.mrb[0].mxu0
        %3373 = vmatprep.mubr.f32.mxu0 0.0
        %3374 = vmatmul.mubr.f32.gmra.mrb[0].mxu0 %v3284
        %v3375 = vpop.f32.mrb[0].mxu0
        %v3376 = vadd.f32 0.0, %v3375
        %v3377 = vpop.f32.mrb[0].mxu0
        %3378 = vdwg.mxu0
        %v3379 = vadd.f32 %v3201, %v3371
        %v3380 = vadd.f32 %v3202, %v3376
        %v3382 = vlaneseq
        %v3383 = vshrl.u32 %v3382, 7
        %v3384 = vsub.s32 0, %v3383
        %v3385 = vrot.slane %v2673, %v3384
        %v3387 = vadd.f32 %v3379, %v3385
        %v3388 = vadd.f32 %v3380, %v3385
        %vm3389 = vcmask 130048
        %3390 = vst.msk [vmem:[%s404] sm:$0xff] %vm3389, %v3387
        %3391 = vst.msk [vmem:[%s404 + $0x8] sm:$0xff] %vm3389, %v3388
        %s3392 = sand.u32 %s291, 1
        %s3393 = scalar_lea.sflag [#allocation3], %s3392
        %s3394 = sand.u32 %s291, 1
        %s3395 = smul.addr %s3394, 16
        %s3396 = scalar_lea.vmem [#allocation2], %s3395
        // Predicated region
        $region69: #{vqvae_forward.5} parent=67 // pred_check
          %p3397 = pneg %p301
        $region70: #{vqvae_forward.5} parent=67 // pred_check_branch
          %3399 = sbr.rel (%p3397) target = $region72
        $region71: #{vqvae_forward.5} parent=67 // pred_region
          %s3401 = ssub.s32 256, 256
          %3402 = vsyncadd %s3393, %s3401
          %s3403 = smul.addr %s26, 2
          %s3404 = smul.addr %s3403, 128
          %s3405 = scalar_lea.hbm %s12, %s3404
          %s3406 = sshll.u32 %s3396, 4
          %s3407 = int_to_ptr.vmem [resolvable:$true] %s3406
          %3412 = dma.vmem_to_hbm [thread:$0]  %s3407, 256, %s3405, %s3393, 128, 128, 8
        $region72: #{vqvae_forward.5} parent=67 // pred_fallthru
          _
      $region68: #{vqvae_forward.5} parent=5 // pred_fallthru
        _
      %p3413 = scmp.le.s32.totalorder 2, %s21
      // Predicated region
      $region73: #{vqvae_forward.5} parent=5 // pred_check
        %p3414 = pneg %p3413
      $region74: #{vqvae_forward.5} parent=5 // pred_check_branch
        %3416 = sbr.rel (%p3414) target = $region76
      $region75: #{vqvae_forward.5} parent=5 // pred_region
        %s3417 = ssub.s32 %s21, 2
        // Predicated region
        $region77: #{vqvae_forward.5} parent=75 // pred_check
          %p3418 = pneg %p307
        $region78: #{vqvae_forward.5} parent=75 // pred_check_branch
          %3420 = sbr.rel (%p3418) target = $region80
        $region79: #{vqvae_forward.5} parent=75 // pred_region
          %s3421 = sand.u32 %s292, 1
          %s3422 = scalar_lea.sflag [#allocation3], %s3421
          %s3423 = sand.u32 %s292, 1
          %s3424 = smul.addr %s3423, 16
          %s3425 = scalar_lea.vmem [#allocation2], %s3424
          %3426 = dma.done %s3422, 256
        $region80: #{vqvae_forward.5} parent=75 // pred_fallthru
          _
      $region76: #{vqvae_forward.5} parent=5 // pred_fallthru
        _
    $region6: #{vqvae_forward.5} parent=1 // loop_footer
      %s25 = sadd.s32 1, %s21
    $region7: #{vqvae_forward.5} parent=1 // loop_footer_branch
      %20 = sbr.rel target = $region3
    $region8: #{vqvae_forward.5} parent=1 // loop_exit
      _
    %3427 = vsyncpa [#allocation3], 1
    %s3428 = scalar_lea.sflag [#allocation3], 1
    %3429 = vsyncpa %s3428, 1

</llo_original>
